<compile_context>
chip_gen: v5e
topology: v5e:2x2
jax: 0.10.0
libtpu: 0.0.40
codegen_flags: <defaults>
</compile_context>

<pallas_src>
import jax
import jax.numpy as jnp
from jax.experimental import pallas as pl
from jax.experimental.pallas import tpu as pltpu

H = W = 14          # spatial size implied by fc1 = 64 * 7 * 7 after one 2x2 pool
HP = WP = 7         # pooled spatial size
C1 = 32             # conv1 out channels
C2 = 64             # conv2 out channels
FEAT = HP * WP * C2 # 3136
HID = 128           # fc1 width
OUT = 10            # fc2 width
OUT_PAD = 128       # fc2 width padded to a full lane register


# ---------------------------------------------------------------------------
# Kernel 1: fused conv1 -> relu -> conv2 -> relu -> 2x2 maxpool (one image/step)
# ---------------------------------------------------------------------------
def _conv_pool_kernel(x_ref, w1_ref, b1_ref, w2_ref, b2_ref, o_ref, xp_ref, a1p_ref):
    # Zero-pad the 14x14x1 input into a (16,16,1) VMEM scratch (padding=1).
    xp_ref[...] = jnp.zeros_like(xp_ref)
    xp_ref[1:1 + H, 1:1 + W, :] = x_ref[0]

    # conv1 (Cin=1, contraction depth 9): 9 shifted-slice FMAs on the VPU.
    acc1 = jnp.zeros((H, W, C1), jnp.float32)
    for k in range(9):
        dy, dx = k // 3, k % 3
        acc1 = acc1 + xp_ref[dy:dy + H, dx:dx + W, :] * w1_ref[k]   # (14,14,1)*(1,1,32)
    a1 = jnp.maximum(acc1 + b1_ref[...], 0.0)                       # (14,14,32)

    # Zero-pad conv1 output into a (16,16,32) VMEM scratch for conv2's taps.
    a1p_ref[...] = jnp.zeros_like(a1p_ref)
    a1p_ref[1:1 + H, 1:1 + W, :] = a1

    # conv2: 9 per-tap MXU contractions (K=32) over shifted VMEM slices, f32 acc.
    acc2 = jnp.zeros((H, W, C2), jnp.float32)
    for k in range(9):
        dy, dx = k // 3, k % 3
        patch = a1p_ref[dy:dy + H, dx:dx + W, :]                    # (14,14,32)
        wk = jnp.broadcast_to(w2_ref[k], (H, C1, C2))               # (14,32,64)
        acc2 = acc2 + jnp.einsum('hwc,hcd->hwd', patch, wk,
                                 preferred_element_type=jnp.float32)
    a2 = jnp.maximum(acc2 + b2_ref[...], 0.0)                       # (14,14,64)

    # 2x2 / stride-2 max-pool fused in the epilogue.  h-pairs via static row
    # indexing; the stride-2 w selection uses tiny 0/1 selection matmuls so no
    # strided/gather loads are needed.  Rows are written directly in the
    # (i*7 + j, c) flatten order the pre-permuted fc1 weight expects.
    iota_j = jax.lax.broadcasted_iota(jnp.int32, (HP, W), 0)
    iota_w = jax.lax.broadcasted_iota(jnp.int32, (HP, W), 1)
    s_even = (iota_w == 2 * iota_j).astype(jnp.float32)             # (7,14)
    s_odd = (iota_w == 2 * iota_j + 1).astype(jnp.float32)
    for i in range(HP):
        r = jnp.maximum(a2[2 * i], a2[2 * i + 1])                   # (14,64) h-pooled
        pe = jnp.dot(s_even, r, preferred_element_type=jnp.float32)  # (7,64) w even
        po = jnp.dot(s_odd, r, preferred_element_type=jnp.float32)   # (7,64) w odd
        o_ref[:, i * WP:(i + 1) * WP, :] = jnp.maximum(pe, po)[None]


def conv_pool(x4, w1g, b1g, w2g, b2g):
    n = x4.shape[0]
    return pl.pallas_call(
        _conv_pool_kernel,
        out_shape=jax.ShapeDtypeStruct((n, HP * WP, C2), jnp.float32),
        grid=(n,),
        in_specs=[
            pl.BlockSpec((1, H, W, 1), lambda i: (i, 0, 0, 0)),
            pl.BlockSpec((9, 1, 1, C1), lambda i: (0, 0, 0, 0)),
            pl.BlockSpec((1, 1, C1), lambda i: (0, 0, 0)),
            pl.BlockSpec((9, C1, C2), lambda i: (0, 0, 0)),
            pl.BlockSpec((1, 1, C2), lambda i: (0, 0, 0)),
        ],
        out_specs=pl.BlockSpec((1, HP * WP, C2), lambda i: (i, 0, 0)),
        scratch_shapes=[
            pltpu.VMEM((H + 2, W + 2, 1), jnp.float32),
            pltpu.VMEM((H + 2, W + 2, C1), jnp.float32),
        ],
        compiler_params=pltpu.CompilerParams(dimension_semantics=("parallel",)),
    )(x4, w1g, b1g, w2g, b2g)


# ---------------------------------------------------------------------------
# Kernel 2: fused fc1 -> relu -> (dropout eval identity) -> fc2, N-tiled grid
# ---------------------------------------------------------------------------
def _mlp_kernel(x_ref, w1_ref, b1_ref, w2_ref, b2_ref, o_ref):
    h = jnp.dot(x_ref[...].astype(jnp.bfloat16), w1_ref[...],
                preferred_element_type=jnp.float32)
    h = jnp.maximum(h + b1_ref[...], 0.0)
    # TODO(synk): nn.Dropout(0.2) is applied as eval-mode identity (no masking/scaling).
    y = jnp.dot(h.astype(jnp.bfloat16), w2_ref[...],
                preferred_element_type=jnp.float32)
    o_ref[...] = y + b2_ref[...]


def _mlp_tile(n):
    if n <= 256:
        return n
    for t in (256, 128, 64, 32, 16, 8):
        if n % t == 0:
            return t
    return n


def mlp(flat, w1p, b1f, w2p, b2f):
    n = flat.shape[0]
    tn = _mlp_tile(n)
    return pl.pallas_call(
        _mlp_kernel,
        out_shape=jax.ShapeDtypeStruct((n, OUT_PAD), jnp.float32),
        grid=(n // tn,),
        in_specs=[
            pl.BlockSpec((tn, FEAT), lambda i: (i, 0)),
            pl.BlockSpec((FEAT, HID), lambda i: (0, 0)),
            pl.BlockSpec((1, HID), lambda i: (0, 0)),
            pl.BlockSpec((HID, OUT_PAD), lambda i: (0, 0)),
            pl.BlockSpec((1, OUT_PAD), lambda i: (0, 0)),
        ],
        out_specs=pl.BlockSpec((tn, OUT_PAD), lambda i: (i, 0)),
        compiler_params=pltpu.CompilerParams(dimension_semantics=("parallel",)),
    )(flat, w1p, b1f, w2p, b2f)


# ---------------------------------------------------------------------------
# Parameter setup (PyTorch-style init) and one-time weight relayout
# ---------------------------------------------------------------------------
def init_params(key):
    ks = jax.random.split(key, 8)

    def u(k, shape, fan_in):
        lim = 1.0 / jnp.sqrt(float(fan_in))
        return jax.random.uniform(k, shape, jnp.float32, -lim, lim)

    return {
        "w_conv1": u(ks[0], (C1, 1, 3, 3), 1 * 9),
        "b_conv1": u(ks[1], (C1,), 1 * 9),
        "w_conv2": u(ks[2], (C2, C1, 3, 3), C1 * 9),
        "b_conv2": u(ks[3], (C2,), C1 * 9),
        "w_fc1": u(ks[4], (HID, FEAT), FEAT),
        "b_fc1": u(ks[5], (HID,), FEAT),
        "w_fc2": u(ks[6], (OUT, HID), HID),
        "b_fc2": u(ks[7], (OUT,), HID),
    }


def prepare_params(params):
    """One-time weight relayout, done OUTSIDE the forward:
       - conv weights to tap-major (k=dy*3+dx, Cin, Cout) form,
       - fc1 rows permuted from torch's NCHW flatten (c*49+i*7+j) to the kernel's
         pooled flatten ((i*7+j)*64+c), cast to bf16,
       - fc2 transposed and zero-padded to 128 output lanes (lane-dense store)."""
    w1g = jnp.transpose(params["w_conv1"], (2, 3, 1, 0)).reshape(9, 1, 1, C1)
    b1g = params["b_conv1"].reshape(1, 1, C1)
    w2g = jnp.transpose(params["w_conv2"], (2, 3, 1, 0)).reshape(9, C1, C2)
    b2g = params["b_conv2"].reshape(1, 1, C2)
    wf1 = params["w_fc1"].reshape(HID, C2, HP, WP)
    w1p = jnp.transpose(wf1, (2, 3, 1, 0)).reshape(FEAT, HID).astype(jnp.bfloat16)
    b1f = params["b_fc1"].reshape(1, HID)
    w2t = jnp.transpose(params["w_fc2"])  # (128, 10)
    w2p = jnp.zeros((HID, OUT_PAD), jnp.float32).at[:, :OUT].set(w2t).astype(jnp.bfloat16)
    b2f = jnp.zeros((1, OUT_PAD), jnp.float32).at[0, :OUT].set(params["b_fc2"])
    return {"w1g": w1g, "b1g": b1g, "w2g": w2g, "b2g": b2g,
            "w1p": w1p, "b1f": b1f, "w2p": w2p, "b2f": b2f}


@jax.jit
def cnn_forward(x_nchw, prep):
    n, cin, hx, wx = x_nchw.shape
    assert (cin, hx, wx) == (1, H, W)
    x4 = x_nchw.reshape(n, H, W, 1)          # free: NCHW with C=1 == NHWC
    feats = conv_pool(x4, prep["w1g"], prep["b1g"], prep["w2g"], prep["b2g"])
    flat = feats.reshape(n, FEAT)            # contiguous merge -> free reshape
    logits_pad = mlp(flat, prep["w1p"], prep["b1f"], prep["w2p"], prep["b2f"])
    return logits_pad[:, :OUT]


# ---------------------------------------------------------------------------
# Pure-JAX reference (for self-check only)
# ---------------------------------------------------------------------------
def cnn_reference(x_nchw, params):
    dn = ('NCHW', 'OIHW', 'NCHW')
    y = jax.lax.conv_general_dilated(x_nchw, params["w_conv1"], (1, 1), 'SAME',
                                     dimension_numbers=dn)
    y = jax.nn.relu(y + params["b_conv1"][None, :, None, None])
    y = jax.lax.conv_general_dilated(y, params["w_conv2"], (1, 1), 'SAME',
                                     dimension_numbers=dn)
    y = jax.nn.relu(y + params["b_conv2"][None, :, None, None])
    n = y.shape[0]
    y = y.reshape(n, C2, HP, 2, WP, 2).max(axis=(3, 5))
    flat = y.reshape(n, C2 * HP * WP)
    h = jax.nn.relu(flat @ params["w_fc1"].T + params["b_fc1"])
    return h @ params["w_fc2"].T + params["b_fc2"]


if __name__ == "__main__":
    key = jax.random.PRNGKey(0)
    k_x, k_p = jax.random.split(key)
    x = jax.random.normal(k_x, (2, 1, H, W), jnp.float32)   # NCHW, like PyTorch
    params = init_params(k_p)
    prep = prepare_params(params)                           # one-time weight relayout

    out = jax.block_until_ready(cnn_forward(x, prep))

    assert out.shape == (2, OUT), out.shape
    assert bool(jnp.all(jnp.isfinite(out)))

    ref = cnn_reference(x, params)
    max_err = float(jnp.max(jnp.abs(out - ref)))
    assert bool(jnp.allclose(out, ref, atol=5e-2, rtol=5e-2)), max_err

    print("KERNEL_OK")
</pallas_src>

<mosaic_0001>
module attributes {stable_mosaic.version = 11 : i64} {
  func.func @_conv_pool_kernel(%arg0: i32, %arg1: memref<1x14x14x1xf32, #tpu.memory_space<vmem>>, %arg2: memref<9x1x1x32xf32, #tpu.memory_space<vmem>>, %arg3: memref<1x1x32xf32, #tpu.memory_space<vmem>>, %arg4: memref<9x32x64xf32, #tpu.memory_space<vmem>>, %arg5: memref<1x1x64xf32, #tpu.memory_space<vmem>>, %arg6: memref<1x49x64xf32, #tpu.memory_space<vmem>>, %arg7: memref<16x16x1xf32, #tpu.memory_space<vmem>>, %arg8: memref<16x16x32xf32, #tpu.memory_space<vmem>>) attributes {dimension_semantics = [#tpu.dimension_semantics<parallel>], iteration_bounds = array<i64: 2>, scalar_prefetch = 0 : i64, scratch_operands = 2 : i64, tpu.core_type = #tpu.core_type<tc>, window_params = [{transform_indices = @transform_0, window_bounds = array<i64: 1, 14, 14, 1>}, {pipeline_mode = #tpu.pipeline_mode<synchronous>, transform_indices = @transform_1, window_bounds = array<i64: 9, 1, 1, 32>}, {pipeline_mode = #tpu.pipeline_mode<synchronous>, transform_indices = @transform_2, window_bounds = array<i64: 1, 1, 32>}, {pipeline_mode = #tpu.pipeline_mode<synchronous>, transform_indices = @transform_3, window_bounds = array<i64: 9, 32, 64>}, {pipeline_mode = #tpu.pipeline_mode<synchronous>, transform_indices = @transform_4, window_bounds = array<i64: 1, 1, 64>}, {transform_indices = @transform_5, window_bounds = array<i64: 1, 49, 64>}]} {
    %cst = arith.constant 0.000000e+00 : f32
    %0 = vector.broadcast %cst : f32 to vector<16x16x1xf32>
    %c0 = arith.constant 0 : index
    %c0_0 = arith.constant 0 : index
    %c0_1 = arith.constant 0 : index
    %1 = vector.load %arg7[%c0, %c0_0, %c0_1] : memref<16x16x1xf32, #tpu.memory_space<vmem>>, vector<16x16x1xf32>
    tpu.vector_store %arg7[%c0, %c0_0, %c0_1], %0 {strides = array<i32>} : memref<16x16x1xf32, #tpu.memory_space<vmem>>, vector<16x16x1xf32>,
    %c0_2 = arith.constant 0 : index
    %c0_3 = arith.constant 0 : index
    %c0_4 = arith.constant 0 : index
    %c0_5 = arith.constant 0 : index
    %2 = vector.load %arg1[%c0_2, %c0_3, %c0_4, %c0_5] : memref<1x14x14x1xf32, #tpu.memory_space<vmem>>, vector<1x14x14x1xf32>
    %3 = vector.shape_cast %2 : vector<1x14x14x1xf32> to vector<14x14x1xf32>
    %c1 = arith.constant 1 : index
    %c1_6 = arith.constant 1 : index
    %c0_7 = arith.constant 0 : index
    %4 = vector.load %arg7[%c1, %c1_6, %c0_7] : memref<16x16x1xf32, #tpu.memory_space<vmem>>, vector<14x14x1xf32>
    tpu.vector_store %arg7[%c1, %c1_6, %c0_7], %3 {strides = array<i32>} : memref<16x16x1xf32, #tpu.memory_space<vmem>>, vector<14x14x1xf32>,
    %cst_8 = arith.constant 0.000000e+00 : f32
    %5 = vector.broadcast %cst_8 : f32 to vector<14x14x32xf32>
    %c0_9 = arith.constant 0 : index
    %c0_10 = arith.constant 0 : index
    %c0_11 = arith.constant 0 : index
    %6 = vector.load %arg7[%c0_9, %c0_10, %c0_11] : memref<16x16x1xf32, #tpu.memory_space<vmem>>, vector<14x14x1xf32>
    %c0_12 = arith.constant 0 : index
    %c0_13 = arith.constant 0 : index
    %c0_14 = arith.constant 0 : index
    %c0_15 = arith.constant 0 : index
    %7 = vector.load %arg2[%c0_12, %c0_13, %c0_14, %c0_15] : memref<9x1x1x32xf32, #tpu.memory_space<vmem>>, vector<1x1x1x32xf32>
    %8 = vector.shape_cast %7 : vector<1x1x1x32xf32> to vector<1x1x32xf32>
    %9 = vector.broadcast %6 : vector<14x14x1xf32> to vector<14x14x32xf32>
    %10 = vector.broadcast %8 : vector<1x1x32xf32> to vector<14x14x32xf32>
    %11 = arith.mulf %9, %10 : vector<14x14x32xf32>
    %12 = arith.addf %5, %11 : vector<14x14x32xf32>
    %c0_16 = arith.constant 0 : index
    %c1_17 = arith.constant 1 : index
    %c0_18 = arith.constant 0 : index
    %13 = vector.load %arg7[%c0_16, %c1_17, %c0_18] : memref<16x16x1xf32, #tpu.memory_space<vmem>>, vector<14x14x1xf32>
    %c1_19 = arith.constant 1 : index
    %c0_20 = arith.constant 0 : index
    %c0_21 = arith.constant 0 : index
    %c0_22 = arith.constant 0 : index
    %14 = vector.load %arg2[%c1_19, %c0_20, %c0_21, %c0_22] : memref<9x1x1x32xf32, #tpu.memory_space<vmem>>, vector<1x1x1x32xf32>
    %15 = vector.shape_cast %14 : vector<1x1x1x32xf32> to vector<1x1x32xf32>
    %16 = vector.broadcast %13 : vector<14x14x1xf32> to vector<14x14x32xf32>
    %17 = vector.broadcast %15 : vector<1x1x32xf32> to vector<14x14x32xf32>
    %18 = arith.mulf %16, %17 : vector<14x14x32xf32>
    %19 = arith.addf %12, %18 : vector<14x14x32xf32>
    %c0_23 = arith.constant 0 : index
    %c2 = arith.constant 2 : index
    %c0_24 = arith.constant 0 : index
    %20 = vector.load %arg7[%c0_23, %c2, %c0_24] : memref<16x16x1xf32, #tpu.memory_space<vmem>>, vector<14x14x1xf32>
    %c2_25 = arith.constant 2 : index
    %c0_26 = arith.constant 0 : index
    %c0_27 = arith.constant 0 : index
    %c0_28 = arith.constant 0 : index
    %21 = vector.load %arg2[%c2_25, %c0_26, %c0_27, %c0_28] : memref<9x1x1x32xf32, #tpu.memory_space<vmem>>, vector<1x1x1x32xf32>
    %22 = vector.shape_cast %21 : vector<1x1x1x32xf32> to vector<1x1x32xf32>
    %23 = vector.broadcast %20 : vector<14x14x1xf32> to vector<14x14x32xf32>
    %24 = vector.broadcast %22 : vector<1x1x32xf32> to vector<14x14x32xf32>
    %25 = arith.mulf %23, %24 : vector<14x14x32xf32>
    %26 = arith.addf %19, %25 : vector<14x14x32xf32>
    %c1_29 = arith.constant 1 : index
    %c0_30 = arith.constant 0 : index
    %c0_31 = arith.constant 0 : index
    %27 = vector.load %arg7[%c1_29, %c0_30, %c0_31] : memref<16x16x1xf32, #tpu.memory_space<vmem>>, vector<14x14x1xf32>
    %c3 = arith.constant 3 : index
    %c0_32 = arith.constant 0 : index
    %c0_33 = arith.constant 0 : index
    %c0_34 = arith.constant 0 : index
    %28 = vector.load %arg2[%c3, %c0_32, %c0_33, %c0_34] : memref<9x1x1x32xf32, #tpu.memory_space<vmem>>, vector<1x1x1x32xf32>
    %29 = vector.shape_cast %28 : vector<1x1x1x32xf32> to vector<1x1x32xf32>
    %30 = vector.broadcast %27 : vector<14x14x1xf32> to vector<14x14x32xf32>
    %31 = vector.broadcast %29 : vector<1x1x32xf32> to vector<14x14x32xf32>
    %32 = arith.mulf %30, %31 : vector<14x14x32xf32>
    %33 = arith.addf %26, %32 : vector<14x14x32xf32>
    %c1_35 = arith.constant 1 : index
    %c1_36 = arith.constant 1 : index
    %c0_37 = arith.constant 0 : index
    %34 = vector.load %arg7[%c1_35, %c1_36, %c0_37] : memref<16x16x1xf32, #tpu.memory_space<vmem>>, vector<14x14x1xf32>
    %c4 = arith.constant 4 : index
    %c0_38 = arith.constant 0 : index
    %c0_39 = arith.constant 0 : index
    %c0_40 = arith.constant 0 : index
    %35 = vector.load %arg2[%c4, %c0_38, %c0_39, %c0_40] : memref<9x1x1x32xf32, #tpu.memory_space<vmem>>, vector<1x1x1x32xf32>
    %36 = vector.shape_cast %35 : vector<1x1x1x32xf32> to vector<1x1x32xf32>
    %37 = vector.broadcast %34 : vector<14x14x1xf32> to vector<14x14x32xf32>
    %38 = vector.broadcast %36 : vector<1x1x32xf32> to vector<14x14x32xf32>
    %39 = arith.mulf %37, %38 : vector<14x14x32xf32>
    %40 = arith.addf %33, %39 : vector<14x14x32xf32>
    %c1_41 = arith.constant 1 : index
    %c2_42 = arith.constant 2 : index
    %c0_43 = arith.constant 0 : index
    %41 = vector.load %arg7[%c1_41, %c2_42, %c0_43] : memref<16x16x1xf32, #tpu.memory_space<vmem>>, vector<14x14x1xf32>
    %c5 = arith.constant 5 : index
    %c0_44 = arith.constant 0 : index
    %c0_45 = arith.constant 0 : index
    %c0_46 = arith.constant 0 : index
    %42 = vector.load %arg2[%c5, %c0_44, %c0_45, %c0_46] : memref<9x1x1x32xf32, #tpu.memory_space<vmem>>, vector<1x1x1x32xf32>
    %43 = vector.shape_cast %42 : vector<1x1x1x32xf32> to vector<1x1x32xf32>
    %44 = vector.broadcast %41 : vector<14x14x1xf32> to vector<14x14x32xf32>
    %45 = vector.broadcast %43 : vector<1x1x32xf32> to vector<14x14x32xf32>
    %46 = arith.mulf %44, %45 : vector<14x14x32xf32>
    %47 = arith.addf %40, %46 : vector<14x14x32xf32>
    %c2_47 = arith.constant 2 : index
    %c0_48 = arith.constant 0 : index
    %c0_49 = arith.constant 0 : index
    %48 = vector.load %arg7[%c2_47, %c0_48, %c0_49] : memref<16x16x1xf32, #tpu.memory_space<vmem>>, vector<14x14x1xf32>
    %c6 = arith.constant 6 : index
    %c0_50 = arith.constant 0 : index
    %c0_51 = arith.constant 0 : index
    %c0_52 = arith.constant 0 : index
    %49 = vector.load %arg2[%c6, %c0_50, %c0_51, %c0_52] : memref<9x1x1x32xf32, #tpu.memory_space<vmem>>, vector<1x1x1x32xf32>
    %50 = vector.shape_cast %49 : vector<1x1x1x32xf32> to vector<1x1x32xf32>
    %51 = vector.broadcast %48 : vector<14x14x1xf32> to vector<14x14x32xf32>
    %52 = vector.broadcast %50 : vector<1x1x32xf32> to vector<14x14x32xf32>
    %53 = arith.mulf %51, %52 : vector<14x14x32xf32>
    %54 = arith.addf %47, %53 : vector<14x14x32xf32>
    %c2_53 = arith.constant 2 : index
    %c1_54 = arith.constant 1 : index
    %c0_55 = arith.constant 0 : index
    %55 = vector.load %arg7[%c2_53, %c1_54, %c0_55] : memref<16x16x1xf32, #tpu.memory_space<vmem>>, vector<14x14x1xf32>
    %c7 = arith.constant 7 : index
    %c0_56 = arith.constant 0 : index
    %c0_57 = arith.constant 0 : index
    %c0_58 = arith.constant 0 : index
    %56 = vector.load %arg2[%c7, %c0_56, %c0_57, %c0_58] : memref<9x1x1x32xf32, #tpu.memory_space<vmem>>, vector<1x1x1x32xf32>
    %57 = vector.shape_cast %56 : vector<1x1x1x32xf32> to vector<1x1x32xf32>
    %58 = vector.broadcast %55 : vector<14x14x1xf32> to vector<14x14x32xf32>
    %59 = vector.broadcast %57 : vector<1x1x32xf32> to vector<14x14x32xf32>
    %60 = arith.mulf %58, %59 : vector<14x14x32xf32>
    %61 = arith.addf %54, %60 : vector<14x14x32xf32>
    %c2_59 = arith.constant 2 : index
    %c2_60 = arith.constant 2 : index
    %c0_61 = arith.constant 0 : index
    %62 = vector.load %arg7[%c2_59, %c2_60, %c0_61] : memref<16x16x1xf32, #tpu.memory_space<vmem>>, vector<14x14x1xf32>
    %c8 = arith.constant 8 : index
    %c0_62 = arith.constant 0 : index
    %c0_63 = arith.constant 0 : index
    %c0_64 = arith.constant 0 : index
    %63 = vector.load %arg2[%c8, %c0_62, %c0_63, %c0_64] : memref<9x1x1x32xf32, #tpu.memory_space<vmem>>, vector<1x1x1x32xf32>
    %64 = vector.shape_cast %63 : vector<1x1x1x32xf32> to vector<1x1x32xf32>
    %65 = vector.broadcast %62 : vector<14x14x1xf32> to vector<14x14x32xf32>
    %66 = vector.broadcast %64 : vector<1x1x32xf32> to vector<14x14x32xf32>
    %67 = arith.mulf %65, %66 : vector<14x14x32xf32>
    %68 = arith.addf %61, %67 : vector<14x14x32xf32>
    %c0_65 = arith.constant 0 : index
    %c0_66 = arith.constant 0 : index
    %c0_67 = arith.constant 0 : index
    %69 = vector.load %arg3[%c0_65, %c0_66, %c0_67] : memref<1x1x32xf32, #tpu.memory_space<vmem>>, vector<1x1x32xf32>
    %70 = vector.broadcast %69 : vector<1x1x32xf32> to vector<14x14x32xf32>
    %71 = arith.addf %68, %70 : vector<14x14x32xf32>
    %cst_68 = arith.constant 0.000000e+00 : f32
    %72 = vector.broadcast %cst_68 : f32 to vector<14x14x32xf32>
    %73 = arith.maximumf %71, %72 : vector<14x14x32xf32>
    %cst_69 = arith.constant 0.000000e+00 : f32
    %74 = vector.broadcast %cst_69 : f32 to vector<16x16x32xf32>
    %c0_70 = arith.constant 0 : index
    %c0_71 = arith.constant 0 : index
    %c0_72 = arith.constant 0 : index
    %75 = vector.load %arg8[%c0_70, %c0_71, %c0_72] : memref<16x16x32xf32, #tpu.memory_space<vmem>>, vector<16x16x32xf32>
    tpu.vector_store %arg8[%c0_70, %c0_71, %c0_72], %74 {strides = array<i32>} : memref<16x16x32xf32, #tpu.memory_space<vmem>>, vector<16x16x32xf32>,
    %c1_73 = arith.constant 1 : index
    %c1_74 = arith.constant 1 : index
    %c0_75 = arith.constant 0 : index
    %76 = vector.load %arg8[%c1_73, %c1_74, %c0_75] : memref<16x16x32xf32, #tpu.memory_space<vmem>>, vector<14x14x32xf32>
    tpu.vector_store %arg8[%c1_73, %c1_74, %c0_75], %73 {strides = array<i32>} : memref<16x16x32xf32, #tpu.memory_space<vmem>>, vector<14x14x32xf32>,
    %cst_76 = arith.constant 0.000000e+00 : f32
    %77 = vector.broadcast %cst_76 : f32 to vector<14x14x64xf32>
    %c0_77 = arith.constant 0 : index
    %c0_78 = arith.constant 0 : index
    %c0_79 = arith.constant 0 : index
    %78 = vector.load %arg8[%c0_77, %c0_78, %c0_79] : memref<16x16x32xf32, #tpu.memory_space<vmem>>, vector<14x14x32xf32>
    %c0_80 = arith.constant 0 : index
    %c0_81 = arith.constant 0 : index
    %c0_82 = arith.constant 0 : index
    %79 = vector.load %arg4[%c0_80, %c0_81, %c0_82] : memref<9x32x64xf32, #tpu.memory_space<vmem>>, vector<1x32x64xf32>
    %80 = vector.shape_cast %79 : vector<1x32x64xf32> to vector<32x64xf32>
    %81 = vector.shape_cast %80 : vector<32x64xf32> to vector<1x32x64xf32>
    %82 = vector.broadcast %81 : vector<1x32x64xf32> to vector<14x32x64xf32>
    "tpu.trace_start"() <{level = 10 : i32, message = "hwc,hcd->hwd"}> : () -> ()
    %cst_83 = arith.constant dense<0.000000e+00> : vector<14x14x64xf32>
    %83 = tpu.matmul %78, %82, %cst_83 {dimension_numbers = #tpu.dot_dimension_numbers<[2], [1], [1], [2], [0, 0, 0, 1, 1, 2], [0], [0]>} : vector<14x14x32xf32>, vector<14x32x64xf32>, vector<14x14x64xf32> -> vector<14x14x64xf32>
    "tpu.trace_stop"() : () -> ()
    %84 = arith.addf %77, %83 : vector<14x14x64xf32>
    %c0_84 = arith.constant 0 : index
    %c1_85 = arith.constant 1 : index
    %c0_86 = arith.constant 0 : index
    %85 = vector.load %arg8[%c0_84, %c1_85, %c0_86] : memref<16x16x32xf32, #tpu.memory_space<vmem>>, vector<14x14x32xf32>
    %c1_87 = arith.constant 1 : index
    %c0_88 = arith.constant 0 : index
    %c0_89 = arith.constant 0 : index
    %86 = vector.load %arg4[%c1_87, %c0_88, %c0_89] : memref<9x32x64xf32, #tpu.memory_space<vmem>>, vector<1x32x64xf32>
    %87 = vector.shape_cast %86 : vector<1x32x64xf32> to vector<32x64xf32>
    %88 = vector.shape_cast %87 : vector<32x64xf32> to vector<1x32x64xf32>
    %89 = vector.broadcast %88 : vector<1x32x64xf32> to vector<14x32x64xf32>
    "tpu.trace_start"() <{level = 10 : i32, message = "hwc,hcd->hwd"}> : () -> ()
    %cst_90 = arith.constant dense<0.000000e+00> : vector<14x14x64xf32>
    %90 = tpu.matmul %85, %89, %cst_90 {dimension_numbers = #tpu.dot_dimension_numbers<[2], [1], [1], [2], [0, 0, 0, 1, 1, 2], [0], [0]>} : vector<14x14x32xf32>, vector<14x32x64xf32>, vector<14x14x64xf32> -> vector<14x14x64xf32>
    "tpu.trace_stop"() : () -> ()
    %91 = arith.addf %84, %90 : vector<14x14x64xf32>
    %c0_91 = arith.constant 0 : index
    %c2_92 = arith.constant 2 : index
    %c0_93 = arith.constant 0 : index
    %92 = vector.load %arg8[%c0_91, %c2_92, %c0_93] : memref<16x16x32xf32, #tpu.memory_space<vmem>>, vector<14x14x32xf32>
    %c2_94 = arith.constant 2 : index
    %c0_95 = arith.constant 0 : index
    %c0_96 = arith.constant 0 : index
    %93 = vector.load %arg4[%c2_94, %c0_95, %c0_96] : memref<9x32x64xf32, #tpu.memory_space<vmem>>, vector<1x32x64xf32>
    %94 = vector.shape_cast %93 : vector<1x32x64xf32> to vector<32x64xf32>
    %95 = vector.shape_cast %94 : vector<32x64xf32> to vector<1x32x64xf32>
    %96 = vector.broadcast %95 : vector<1x32x64xf32> to vector<14x32x64xf32>
    "tpu.trace_start"() <{level = 10 : i32, message = "hwc,hcd->hwd"}> : () -> ()
    %cst_97 = arith.constant dense<0.000000e+00> : vector<14x14x64xf32>
    %97 = tpu.matmul %92, %96, %cst_97 {dimension_numbers = #tpu.dot_dimension_numbers<[2], [1], [1], [2], [0, 0, 0, 1, 1, 2], [0], [0]>} : vector<14x14x32xf32>, vector<14x32x64xf32>, vector<14x14x64xf32> -> vector<14x14x64xf32>
    "tpu.trace_stop"() : () -> ()
    %98 = arith.addf %91, %97 : vector<14x14x64xf32>
    %c1_98 = arith.constant 1 : index
    %c0_99 = arith.constant 0 : index
    %c0_100 = arith.constant 0 : index
    %99 = vector.load %arg8[%c1_98, %c0_99, %c0_100] : memref<16x16x32xf32, #tpu.memory_space<vmem>>, vector<14x14x32xf32>
    %c3_101 = arith.constant 3 : index
    %c0_102 = arith.constant 0 : index
    %c0_103 = arith.constant 0 : index
    %100 = vector.load %arg4[%c3_101, %c0_102, %c0_103] : memref<9x32x64xf32, #tpu.memory_space<vmem>>, vector<1x32x64xf32>
    %101 = vector.shape_cast %100 : vector<1x32x64xf32> to vector<32x64xf32>
    %102 = vector.shape_cast %101 : vector<32x64xf32> to vector<1x32x64xf32>
    %103 = vector.broadcast %102 : vector<1x32x64xf32> to vector<14x32x64xf32>
    "tpu.trace_start"() <{level = 10 : i32, message = "hwc,hcd->hwd"}> : () -> ()
    %cst_104 = arith.constant dense<0.000000e+00> : vector<14x14x64xf32>
    %104 = tpu.matmul %99, %103, %cst_104 {dimension_numbers = #tpu.dot_dimension_numbers<[2], [1], [1], [2], [0, 0, 0, 1, 1, 2], [0], [0]>} : vector<14x14x32xf32>, vector<14x32x64xf32>, vector<14x14x64xf32> -> vector<14x14x64xf32>
    "tpu.trace_stop"() : () -> ()
    %105 = arith.addf %98, %104 : vector<14x14x64xf32>
    %c1_105 = arith.constant 1 : index
    %c1_106 = arith.constant 1 : index
    %c0_107 = arith.constant 0 : index
    %106 = vector.load %arg8[%c1_105, %c1_106, %c0_107] : memref<16x16x32xf32, #tpu.memory_space<vmem>>, vector<14x14x32xf32>
    %c4_108 = arith.constant 4 : index
    %c0_109 = arith.constant 0 : index
    %c0_110 = arith.constant 0 : index
    %107 = vector.load %arg4[%c4_108, %c0_109, %c0_110] : memref<9x32x64xf32, #tpu.memory_space<vmem>>, vector<1x32x64xf32>
    %108 = vector.shape_cast %107 : vector<1x32x64xf32> to vector<32x64xf32>
    %109 = vector.shape_cast %108 : vector<32x64xf32> to vector<1x32x64xf32>
    %110 = vector.broadcast %109 : vector<1x32x64xf32> to vector<14x32x64xf32>
    "tpu.trace_start"() <{level = 10 : i32, message = "hwc,hcd->hwd"}> : () -> ()
    %cst_111 = arith.constant dense<0.000000e+00> : vector<14x14x64xf32>
    %111 = tpu.matmul %106, %110, %cst_111 {dimension_numbers = #tpu.dot_dimension_numbers<[2], [1], [1], [2], [0, 0, 0, 1, 1, 2], [0], [0]>} : vector<14x14x32xf32>, vector<14x32x64xf32>, vector<14x14x64xf32> -> vector<14x14x64xf32>
    "tpu.trace_stop"() : () -> ()
    %112 = arith.addf %105, %111 : vector<14x14x64xf32>
    %c1_112 = arith.constant 1 : index
    %c2_113 = arith.constant 2 : index
    %c0_114 = arith.constant 0 : index
    %113 = vector.load %arg8[%c1_112, %c2_113, %c0_114] : memref<16x16x32xf32, #tpu.memory_space<vmem>>, vector<14x14x32xf32>
    %c5_115 = arith.constant 5 : index
    %c0_116 = arith.constant 0 : index
    %c0_117 = arith.constant 0 : index
    %114 = vector.load %arg4[%c5_115, %c0_116, %c0_117] : memref<9x32x64xf32, #tpu.memory_space<vmem>>, vector<1x32x64xf32>
    %115 = vector.shape_cast %114 : vector<1x32x64xf32> to vector<32x64xf32>
    %116 = vector.shape_cast %115 : vector<32x64xf32> to vector<1x32x64xf32>
    %117 = vector.broadcast %116 : vector<1x32x64xf32> to vector<14x32x64xf32>
    "tpu.trace_start"() <{level = 10 : i32, message = "hwc,hcd->hwd"}> : () -> ()
    %cst_118 = arith.constant dense<0.000000e+00> : vector<14x14x64xf32>
    %118 = tpu.matmul %113, %117, %cst_118 {dimension_numbers = #tpu.dot_dimension_numbers<[2], [1], [1], [2], [0, 0, 0, 1, 1, 2], [0], [0]>} : vector<14x14x32xf32>, vector<14x32x64xf32>, vector<14x14x64xf32> -> vector<14x14x64xf32>
    "tpu.trace_stop"() : () -> ()
    %119 = arith.addf %112, %118 : vector<14x14x64xf32>
    %c2_119 = arith.constant 2 : index
    %c0_120 = arith.constant 0 : index
    %c0_121 = arith.constant 0 : index
    %120 = vector.load %arg8[%c2_119, %c0_120, %c0_121] : memref<16x16x32xf32, #tpu.memory_space<vmem>>, vector<14x14x32xf32>
    %c6_122 = arith.constant 6 : index
    %c0_123 = arith.constant 0 : index
    %c0_124 = arith.constant 0 : index
    %121 = vector.load %arg4[%c6_122, %c0_123, %c0_124] : memref<9x32x64xf32, #tpu.memory_space<vmem>>, vector<1x32x64xf32>
    %122 = vector.shape_cast %121 : vector<1x32x64xf32> to vector<32x64xf32>
    %123 = vector.shape_cast %122 : vector<32x64xf32> to vector<1x32x64xf32>
    %124 = vector.broadcast %123 : vector<1x32x64xf32> to vector<14x32x64xf32>
    "tpu.trace_start"() <{level = 10 : i32, message = "hwc,hcd->hwd"}> : () -> ()
    %cst_125 = arith.constant dense<0.000000e+00> : vector<14x14x64xf32>
    %125 = tpu.matmul %120, %124, %cst_125 {dimension_numbers = #tpu.dot_dimension_numbers<[2], [1], [1], [2], [0, 0, 0, 1, 1, 2], [0], [0]>} : vector<14x14x32xf32>, vector<14x32x64xf32>, vector<14x14x64xf32> -> vector<14x14x64xf32>
    "tpu.trace_stop"() : () -> ()
    %126 = arith.addf %119, %125 : vector<14x14x64xf32>
    %c2_126 = arith.constant 2 : index
    %c1_127 = arith.constant 1 : index
    %c0_128 = arith.constant 0 : index
    %127 = vector.load %arg8[%c2_126, %c1_127, %c0_128] : memref<16x16x32xf32, #tpu.memory_space<vmem>>, vector<14x14x32xf32>
    %c7_129 = arith.constant 7 : index
    %c0_130 = arith.constant 0 : index
    %c0_131 = arith.constant 0 : index
    %128 = vector.load %arg4[%c7_129, %c0_130, %c0_131] : memref<9x32x64xf32, #tpu.memory_space<vmem>>, vector<1x32x64xf32>
    %129 = vector.shape_cast %128 : vector<1x32x64xf32> to vector<32x64xf32>
    %130 = vector.shape_cast %129 : vector<32x64xf32> to vector<1x32x64xf32>
    %131 = vector.broadcast %130 : vector<1x32x64xf32> to vector<14x32x64xf32>
    "tpu.trace_start"() <{level = 10 : i32, message = "hwc,hcd->hwd"}> : () -> ()
    %cst_132 = arith.constant dense<0.000000e+00> : vector<14x14x64xf32>
    %132 = tpu.matmul %127, %131, %cst_132 {dimension_numbers = #tpu.dot_dimension_numbers<[2], [1], [1], [2], [0, 0, 0, 1, 1, 2], [0], [0]>} : vector<14x14x32xf32>, vector<14x32x64xf32>, vector<14x14x64xf32> -> vector<14x14x64xf32>
    "tpu.trace_stop"() : () -> ()
    %133 = arith.addf %126, %132 : vector<14x14x64xf32>
    %c2_133 = arith.constant 2 : index
    %c2_134 = arith.constant 2 : index
    %c0_135 = arith.constant 0 : index
    %134 = vector.load %arg8[%c2_133, %c2_134, %c0_135] : memref<16x16x32xf32, #tpu.memory_space<vmem>>, vector<14x14x32xf32>
    %c8_136 = arith.constant 8 : index
    %c0_137 = arith.constant 0 : index
    %c0_138 = arith.constant 0 : index
    %135 = vector.load %arg4[%c8_136, %c0_137, %c0_138] : memref<9x32x64xf32, #tpu.memory_space<vmem>>, vector<1x32x64xf32>
    %136 = vector.shape_cast %135 : vector<1x32x64xf32> to vector<32x64xf32>
    %137 = vector.shape_cast %136 : vector<32x64xf32> to vector<1x32x64xf32>
    %138 = vector.broadcast %137 : vector<1x32x64xf32> to vector<14x32x64xf32>
    "tpu.trace_start"() <{level = 10 : i32, message = "hwc,hcd->hwd"}> : () -> ()
    %cst_139 = arith.constant dense<0.000000e+00> : vector<14x14x64xf32>
    %139 = tpu.matmul %134, %138, %cst_139 {dimension_numbers = #tpu.dot_dimension_numbers<[2], [1], [1], [2], [0, 0, 0, 1, 1, 2], [0], [0]>} : vector<14x14x32xf32>, vector<14x32x64xf32>, vector<14x14x64xf32> -> vector<14x14x64xf32>
    "tpu.trace_stop"() : () -> ()
    %140 = arith.addf %133, %139 : vector<14x14x64xf32>
    %c0_140 = arith.constant 0 : index
    %c0_141 = arith.constant 0 : index
    %c0_142 = arith.constant 0 : index
    %141 = vector.load %arg5[%c0_140, %c0_141, %c0_142] : memref<1x1x64xf32, #tpu.memory_space<vmem>>, vector<1x1x64xf32>
    %142 = vector.broadcast %141 : vector<1x1x64xf32> to vector<14x14x64xf32>
    %143 = arith.addf %140, %142 : vector<14x14x64xf32>
    %cst_143 = arith.constant 0.000000e+00 : f32
    %144 = vector.broadcast %cst_143 : f32 to vector<14x14x64xf32>
    %145 = arith.maximumf %143, %144 : vector<14x14x64xf32>
    %146 = tpu.iota {dimensions = array<i32: 0>} : vector<7x14xi32>
    %147 = tpu.iota {dimensions = array<i32: 1>} : vector<7x14xi32>
    %c2_i32 = arith.constant 2 : i32
    %148 = vector.broadcast %c2_i32 : i32 to vector<7x14xi32>
    %149 = arith.muli %148, %146 : vector<7x14xi32>
    %150 = arith.cmpi eq, %147, %149 : vector<7x14xi32>
    %151 = arith.extui %150 : vector<7x14xi1> to vector<7x14xi32>
    %152 = arith.sitofp %151 : vector<7x14xi32> to vector<7x14xf32>
    %c2_i32_144 = arith.constant 2 : i32
    %153 = vector.broadcast %c2_i32_144 : i32 to vector<7x14xi32>
    %154 = arith.muli %153, %146 : vector<7x14xi32>
    %c1_i32 = arith.constant 1 : i32
    %155 = vector.broadcast %c1_i32 : i32 to vector<7x14xi32>
    %156 = arith.addi %154, %155 : vector<7x14xi32>
    %157 = arith.cmpi eq, %147, %156 : vector<7x14xi32>
    %158 = arith.extui %157 : vector<7x14xi1> to vector<7x14xi32>
    %159 = arith.sitofp %158 : vector<7x14xi32> to vector<7x14xf32>
    %160 = vector.extract_strided_slice %145 {offsets = [0, 0, 0], sizes = [1, 14, 64], strides = [1, 1, 1]} : vector<14x14x64xf32> to vector<1x14x64xf32>
    %161 = vector.shape_cast %160 : vector<1x14x64xf32> to vector<14x64xf32>
    %162 = vector.extract_strided_slice %145 {offsets = [1, 0, 0], sizes = [1, 14, 64], strides = [1, 1, 1]} : vector<14x14x64xf32> to vector<1x14x64xf32>
    %163 = vector.shape_cast %162 : vector<1x14x64xf32> to vector<14x64xf32>
    %164 = arith.maximumf %161, %163 : vector<14x64xf32>
    %cst_145 = arith.constant dense<0.000000e+00> : vector<7x64xf32>
    %165 = tpu.matmul %152, %164, %cst_145 {dimension_numbers = #tpu.dot_dimension_numbers<[1], [0], [0], [1], [0, 0, 1, 1], [], []>} : vector<7x14xf32>, vector<14x64xf32>, vector<7x64xf32> -> vector<7x64xf32>
    %cst_146 = arith.constant dense<0.000000e+00> : vector<7x64xf32>
    %166 = tpu.matmul %159, %164, %cst_146 {dimension_numbers = #tpu.dot_dimension_numbers<[1], [0], [0], [1], [0, 0, 1, 1], [], []>} : vector<7x14xf32>, vector<14x64xf32>, vector<7x64xf32> -> vector<7x64xf32>
    %167 = arith.maximumf %165, %166 : vector<7x64xf32>
    %168 = vector.shape_cast %167 : vector<7x64xf32> to vector<1x7x64xf32>
    %c0_147 = arith.constant 0 : index
    %c0_148 = arith.constant 0 : index
    %c0_149 = arith.constant 0 : index
    %169 = vector.load %arg6[%c0_147, %c0_148, %c0_149] : memref<1x49x64xf32, #tpu.memory_space<vmem>>, vector<1x7x64xf32>
    tpu.vector_store %arg6[%c0_147, %c0_148, %c0_149], %168 {strides = array<i32>} : memref<1x49x64xf32, #tpu.memory_space<vmem>>, vector<1x7x64xf32>,
    %170 = vector.extract_strided_slice %145 {offsets = [2, 0, 0], sizes = [1, 14, 64], strides = [1, 1, 1]} : vector<14x14x64xf32> to vector<1x14x64xf32>
    %171 = vector.shape_cast %170 : vector<1x14x64xf32> to vector<14x64xf32>
    %172 = vector.extract_strided_slice %145 {offsets = [3, 0, 0], sizes = [1, 14, 64], strides = [1, 1, 1]} : vector<14x14x64xf32> to vector<1x14x64xf32>
    %173 = vector.shape_cast %172 : vector<1x14x64xf32> to vector<14x64xf32>
    %174 = arith.maximumf %171, %173 : vector<14x64xf32>
    %cst_150 = arith.constant dense<0.000000e+00> : vector<7x64xf32>
    %175 = tpu.matmul %152, %174, %cst_150 {dimension_numbers = #tpu.dot_dimension_numbers<[1], [0], [0], [1], [0, 0, 1, 1], [], []>} : vector<7x14xf32>, vector<14x64xf32>, vector<7x64xf32> -> vector<7x64xf32>
    %cst_151 = arith.constant dense<0.000000e+00> : vector<7x64xf32>
    %176 = tpu.matmul %159, %174, %cst_151 {dimension_numbers = #tpu.dot_dimension_numbers<[1], [0], [0], [1], [0, 0, 1, 1], [], []>} : vector<7x14xf32>, vector<14x64xf32>, vector<7x64xf32> -> vector<7x64xf32>
    %177 = arith.maximumf %175, %176 : vector<7x64xf32>
    %178 = vector.shape_cast %177 : vector<7x64xf32> to vector<1x7x64xf32>
    %c0_152 = arith.constant 0 : index
    %c7_153 = arith.constant 7 : index
    %c0_154 = arith.constant 0 : index
    %179 = vector.load %arg6[%c0_152, %c7_153, %c0_154] : memref<1x49x64xf32, #tpu.memory_space<vmem>>, vector<1x7x64xf32>
    tpu.vector_store %arg6[%c0_152, %c7_153, %c0_154], %178 {strides = array<i32>} : memref<1x49x64xf32, #tpu.memory_space<vmem>>, vector<1x7x64xf32>,
    %180 = vector.extract_strided_slice %145 {offsets = [4, 0, 0], sizes = [1, 14, 64], strides = [1, 1, 1]} : vector<14x14x64xf32> to vector<1x14x64xf32>
    %181 = vector.shape_cast %180 : vector<1x14x64xf32> to vector<14x64xf32>
    %182 = vector.extract_strided_slice %145 {offsets = [5, 0, 0], sizes = [1, 14, 64], strides = [1, 1, 1]} : vector<14x14x64xf32> to vector<1x14x64xf32>
    %183 = vector.shape_cast %182 : vector<1x14x64xf32> to vector<14x64xf32>
    %184 = arith.maximumf %181, %183 : vector<14x64xf32>
    %cst_155 = arith.constant dense<0.000000e+00> : vector<7x64xf32>
    %185 = tpu.matmul %152, %184, %cst_155 {dimension_numbers = #tpu.dot_dimension_numbers<[1], [0], [0], [1], [0, 0, 1, 1], [], []>} : vector<7x14xf32>, vector<14x64xf32>, vector<7x64xf32> -> vector<7x64xf32>
    %cst_156 = arith.constant dense<0.000000e+00> : vector<7x64xf32>
    %186 = tpu.matmul %159, %184, %cst_156 {dimension_numbers = #tpu.dot_dimension_numbers<[1], [0], [0], [1], [0, 0, 1, 1], [], []>} : vector<7x14xf32>, vector<14x64xf32>, vector<7x64xf32> -> vector<7x64xf32>
    %187 = arith.maximumf %185, %186 : vector<7x64xf32>
    %188 = vector.shape_cast %187 : vector<7x64xf32> to vector<1x7x64xf32>
    %c0_157 = arith.constant 0 : index
    %c14 = arith.constant 14 : index
    %c0_158 = arith.constant 0 : index
    %189 = vector.load %arg6[%c0_157, %c14, %c0_158] : memref<1x49x64xf32, #tpu.memory_space<vmem>>, vector<1x7x64xf32>
    tpu.vector_store %arg6[%c0_157, %c14, %c0_158], %188 {strides = array<i32>} : memref<1x49x64xf32, #tpu.memory_space<vmem>>, vector<1x7x64xf32>,
    %190 = vector.extract_strided_slice %145 {offsets = [6, 0, 0], sizes = [1, 14, 64], strides = [1, 1, 1]} : vector<14x14x64xf32> to vector<1x14x64xf32>
    %191 = vector.shape_cast %190 : vector<1x14x64xf32> to vector<14x64xf32>
    %192 = vector.extract_strided_slice %145 {offsets = [7, 0, 0], sizes = [1, 14, 64], strides = [1, 1, 1]} : vector<14x14x64xf32> to vector<1x14x64xf32>
    %193 = vector.shape_cast %192 : vector<1x14x64xf32> to vector<14x64xf32>
    %194 = arith.maximumf %191, %193 : vector<14x64xf32>
    %cst_159 = arith.constant dense<0.000000e+00> : vector<7x64xf32>
    %195 = tpu.matmul %152, %194, %cst_159 {dimension_numbers = #tpu.dot_dimension_numbers<[1], [0], [0], [1], [0, 0, 1, 1], [], []>} : vector<7x14xf32>, vector<14x64xf32>, vector<7x64xf32> -> vector<7x64xf32>
    %cst_160 = arith.constant dense<0.000000e+00> : vector<7x64xf32>
    %196 = tpu.matmul %159, %194, %cst_160 {dimension_numbers = #tpu.dot_dimension_numbers<[1], [0], [0], [1], [0, 0, 1, 1], [], []>} : vector<7x14xf32>, vector<14x64xf32>, vector<7x64xf32> -> vector<7x64xf32>
    %197 = arith.maximumf %195, %196 : vector<7x64xf32>
    %198 = vector.shape_cast %197 : vector<7x64xf32> to vector<1x7x64xf32>
    %c0_161 = arith.constant 0 : index
    %c21 = arith.constant 21 : index
    %c0_162 = arith.constant 0 : index
    %199 = vector.load %arg6[%c0_161, %c21, %c0_162] : memref<1x49x64xf32, #tpu.memory_space<vmem>>, vector<1x7x64xf32>
    tpu.vector_store %arg6[%c0_161, %c21, %c0_162], %198 {strides = array<i32>} : memref<1x49x64xf32, #tpu.memory_space<vmem>>, vector<1x7x64xf32>,
    %200 = vector.extract_strided_slice %145 {offsets = [8, 0, 0], sizes = [1, 14, 64], strides = [1, 1, 1]} : vector<14x14x64xf32> to vector<1x14x64xf32>
    %201 = vector.shape_cast %200 : vector<1x14x64xf32> to vector<14x64xf32>
    %202 = vector.extract_strided_slice %145 {offsets = [9, 0, 0], sizes = [1, 14, 64], strides = [1, 1, 1]} : vector<14x14x64xf32> to vector<1x14x64xf32>
    %203 = vector.shape_cast %202 : vector<1x14x64xf32> to vector<14x64xf32>
    %204 = arith.maximumf %201, %203 : vector<14x64xf32>
    %cst_163 = arith.constant dense<0.000000e+00> : vector<7x64xf32>
    %205 = tpu.matmul %152, %204, %cst_163 {dimension_numbers = #tpu.dot_dimension_numbers<[1], [0], [0], [1], [0, 0, 1, 1], [], []>} : vector<7x14xf32>, vector<14x64xf32>, vector<7x64xf32> -> vector<7x64xf32>
    %cst_164 = arith.constant dense<0.000000e+00> : vector<7x64xf32>
    %206 = tpu.matmul %159, %204, %cst_164 {dimension_numbers = #tpu.dot_dimension_numbers<[1], [0], [0], [1], [0, 0, 1, 1], [], []>} : vector<7x14xf32>, vector<14x64xf32>, vector<7x64xf32> -> vector<7x64xf32>
    %207 = arith.maximumf %205, %206 : vector<7x64xf32>
    %208 = vector.shape_cast %207 : vector<7x64xf32> to vector<1x7x64xf32>
    %c0_165 = arith.constant 0 : index
    %c28 = arith.constant 28 : index
    %c0_166 = arith.constant 0 : index
    %209 = vector.load %arg6[%c0_165, %c28, %c0_166] : memref<1x49x64xf32, #tpu.memory_space<vmem>>, vector<1x7x64xf32>
    tpu.vector_store %arg6[%c0_165, %c28, %c0_166], %208 {strides = array<i32>} : memref<1x49x64xf32, #tpu.memory_space<vmem>>, vector<1x7x64xf32>,
    %210 = vector.extract_strided_slice %145 {offsets = [10, 0, 0], sizes = [1, 14, 64], strides = [1, 1, 1]} : vector<14x14x64xf32> to vector<1x14x64xf32>
    %211 = vector.shape_cast %210 : vector<1x14x64xf32> to vector<14x64xf32>
    %212 = vector.extract_strided_slice %145 {offsets = [11, 0, 0], sizes = [1, 14, 64], strides = [1, 1, 1]} : vector<14x14x64xf32> to vector<1x14x64xf32>
    %213 = vector.shape_cast %212 : vector<1x14x64xf32> to vector<14x64xf32>
    %214 = arith.maximumf %211, %213 : vector<14x64xf32>
    %cst_167 = arith.constant dense<0.000000e+00> : vector<7x64xf32>
    %215 = tpu.matmul %152, %214, %cst_167 {dimension_numbers = #tpu.dot_dimension_numbers<[1], [0], [0], [1], [0, 0, 1, 1], [], []>} : vector<7x14xf32>, vector<14x64xf32>, vector<7x64xf32> -> vector<7x64xf32>
    %cst_168 = arith.constant dense<0.000000e+00> : vector<7x64xf32>
    %216 = tpu.matmul %159, %214, %cst_168 {dimension_numbers = #tpu.dot_dimension_numbers<[1], [0], [0], [1], [0, 0, 1, 1], [], []>} : vector<7x14xf32>, vector<14x64xf32>, vector<7x64xf32> -> vector<7x64xf32>
    %217 = arith.maximumf %215, %216 : vector<7x64xf32>
    %218 = vector.shape_cast %217 : vector<7x64xf32> to vector<1x7x64xf32>
    %c0_169 = arith.constant 0 : index
    %c35 = arith.constant 35 : index
    %c0_170 = arith.constant 0 : index
    %219 = vector.load %arg6[%c0_169, %c35, %c0_170] : memref<1x49x64xf32, #tpu.memory_space<vmem>>, vector<1x7x64xf32>
    tpu.vector_store %arg6[%c0_169, %c35, %c0_170], %218 {strides = array<i32>} : memref<1x49x64xf32, #tpu.memory_space<vmem>>, vector<1x7x64xf32>,
    %220 = vector.extract_strided_slice %145 {offsets = [12, 0, 0], sizes = [1, 14, 64], strides = [1, 1, 1]} : vector<14x14x64xf32> to vector<1x14x64xf32>
    %221 = vector.shape_cast %220 : vector<1x14x64xf32> to vector<14x64xf32>
    %222 = vector.extract_strided_slice %145 {offsets = [13, 0, 0], sizes = [1, 14, 64], strides = [1, 1, 1]} : vector<14x14x64xf32> to vector<1x14x64xf32>
    %223 = vector.shape_cast %222 : vector<1x14x64xf32> to vector<14x64xf32>
    %224 = arith.maximumf %221, %223 : vector<14x64xf32>
    %cst_171 = arith.constant dense<0.000000e+00> : vector<7x64xf32>
    %225 = tpu.matmul %152, %224, %cst_171 {dimension_numbers = #tpu.dot_dimension_numbers<[1], [0], [0], [1], [0, 0, 1, 1], [], []>} : vector<7x14xf32>, vector<14x64xf32>, vector<7x64xf32> -> vector<7x64xf32>
    %cst_172 = arith.constant dense<0.000000e+00> : vector<7x64xf32>
    %226 = tpu.matmul %159, %224, %cst_172 {dimension_numbers = #tpu.dot_dimension_numbers<[1], [0], [0], [1], [0, 0, 1, 1], [], []>} : vector<7x14xf32>, vector<14x64xf32>, vector<7x64xf32> -> vector<7x64xf32>
    %227 = arith.maximumf %225, %226 : vector<7x64xf32>
    %228 = vector.shape_cast %227 : vector<7x64xf32> to vector<1x7x64xf32>
    %c0_173 = arith.constant 0 : index
    %c42 = arith.constant 42 : index
    %c0_174 = arith.constant 0 : index
    %229 = vector.load %arg6[%c0_173, %c42, %c0_174] : memref<1x49x64xf32, #tpu.memory_space<vmem>>, vector<1x7x64xf32>
    tpu.vector_store %arg6[%c0_173, %c42, %c0_174], %228 {strides = array<i32>} : memref<1x49x64xf32, #tpu.memory_space<vmem>>, vector<1x7x64xf32>,
    return
  }
  func.func @transform_0(%arg0: i32) -> (i32, i32, i32, i32) {
    %c0_i32 = arith.constant 0 : i32
    %c0_i32_0 = arith.constant 0 : i32
    %c0_i32_1 = arith.constant 0 : i32
    %c0_i32_2 = arith.constant 0 : i32
    return %arg0, %c0_i32, %c0_i32_0, %c0_i32_1 : i32, i32, i32, i32
  }
  func.func @transform_1(%arg0: i32) -> (i32, i32, i32, i32) {
    %c0_i32 = arith.constant 0 : i32
    %c0_i32_0 = arith.constant 0 : i32
    %c0_i32_1 = arith.constant 0 : i32
    %c0_i32_2 = arith.constant 0 : i32
    %c0_i32_3 = arith.constant 0 : i32
    return %c0_i32, %c0_i32_0, %c0_i32_1, %c0_i32_2 : i32, i32, i32, i32
  }
  func.func @transform_2(%arg0: i32) -> (i32, i32, i32) {
    %c0_i32 = arith.constant 0 : i32
    %c0_i32_0 = arith.constant 0 : i32
    %c0_i32_1 = arith.constant 0 : i32
    %c0_i32_2 = arith.constant 0 : i32
    return %c0_i32, %c0_i32_0, %c0_i32_1 : i32, i32, i32
  }
  func.func @transform_3(%arg0: i32) -> (i32, i32, i32) {
    %c0_i32 = arith.constant 0 : i32
    %c0_i32_0 = arith.constant 0 : i32
    %c0_i32_1 = arith.constant 0 : i32
    %c0_i32_2 = arith.constant 0 : i32
    return %c0_i32, %c0_i32_0, %c0_i32_1 : i32, i32, i32
  }
  func.func @transform_4(%arg0: i32) -> (i32, i32, i32) {
    %c0_i32 = arith.constant 0 : i32
    %c0_i32_0 = arith.constant 0 : i32
    %c0_i32_1 = arith.constant 0 : i32
    %c0_i32_2 = arith.constant 0 : i32
    return %c0_i32, %c0_i32_0, %c0_i32_1 : i32, i32, i32
  }
  func.func @transform_5(%arg0: i32) -> (i32, i32, i32) {
    %c0_i32 = arith.constant 0 : i32
    %c0_i32_0 = arith.constant 0 : i32
    %c0_i32_1 = arith.constant 0 : i32
    return %arg0, %c0_i32, %c0_i32_0 : i32, i32, i32
  }
}

module attributes {stable_mosaic.version = 11 : i64} {
  func.func @_mlp_kernel(%arg0: i32, %arg1: memref<2x3136xf32, #tpu.memory_space<vmem>>, %arg2: memref<3136x128xbf16, #tpu.memory_space<vmem>>, %arg3: memref<1x128xf32, #tpu.memory_space<vmem>>, %arg4: memref<128x128xbf16, #tpu.memory_space<vmem>>, %arg5: memref<1x128xf32, #tpu.memory_space<vmem>>, %arg6: memref<2x128xf32, #tpu.memory_space<vmem>>) attributes {dimension_semantics = [#tpu.dimension_semantics<parallel>], iteration_bounds = array<i64: 1>, scalar_prefetch = 0 : i64, scratch_operands = 0 : i64, tpu.core_type = #tpu.core_type<tc>, window_params = [{transform_indices = @transform_0, window_bounds = array<i64: 2, 3136>}, {pipeline_mode = #tpu.pipeline_mode<synchronous>, transform_indices = @transform_1, window_bounds = array<i64: 3136, 128>}, {pipeline_mode = #tpu.pipeline_mode<synchronous>, transform_indices = @transform_2, window_bounds = array<i64: 1, 128>}, {pipeline_mode = #tpu.pipeline_mode<synchronous>, transform_indices = @transform_3, window_bounds = array<i64: 128, 128>}, {pipeline_mode = #tpu.pipeline_mode<synchronous>, transform_indices = @transform_4, window_bounds = array<i64: 1, 128>}, {transform_indices = @transform_5, window_bounds = array<i64: 2, 128>}]} {
    %c0 = arith.constant 0 : index
    %c0_0 = arith.constant 0 : index
    %0 = vector.load %arg1[%c0, %c0_0] : memref<2x3136xf32, #tpu.memory_space<vmem>>, vector<2x3136xf32>
    %1 = arith.truncf %0 : vector<2x3136xf32> to vector<2x3136xbf16>
    %c0_1 = arith.constant 0 : index
    %c0_2 = arith.constant 0 : index
    %2 = vector.load %arg2[%c0_1, %c0_2] : memref<3136x128xbf16, #tpu.memory_space<vmem>>, vector<3136x128xbf16>
    %cst = arith.constant dense<0.000000e+00> : vector<2x128xf32>
    %3 = tpu.matmul %1, %2, %cst {dimension_numbers = #tpu.dot_dimension_numbers<[1], [0], [0], [1], [0, 0, 1, 1], [], []>} : vector<2x3136xbf16>, vector<3136x128xbf16>, vector<2x128xf32> -> vector<2x128xf32>
    %c0_3 = arith.constant 0 : index
    %c0_4 = arith.constant 0 : index
    %4 = vector.load %arg3[%c0_3, %c0_4] : memref<1x128xf32, #tpu.memory_space<vmem>>, vector<1x128xf32>
    %5 = vector.broadcast %4 : vector<1x128xf32> to vector<2x128xf32>
    %6 = arith.addf %3, %5 : vector<2x128xf32>
    %cst_5 = arith.constant 0.000000e+00 : f32
    %7 = vector.broadcast %cst_5 : f32 to vector<2x128xf32>
    %8 = arith.maximumf %6, %7 : vector<2x128xf32>
    %9 = arith.truncf %8 : vector<2x128xf32> to vector<2x128xbf16>
    %c0_6 = arith.constant 0 : index
    %c0_7 = arith.constant 0 : index
    %10 = vector.load %arg4[%c0_6, %c0_7] : memref<128x128xbf16, #tpu.memory_space<vmem>>, vector<128x128xbf16>
    %cst_8 = arith.constant dense<0.000000e+00> : vector<2x128xf32>
    %11 = tpu.matmul %9, %10, %cst_8 {dimension_numbers = #tpu.dot_dimension_numbers<[1], [0], [0], [1], [0, 0, 1, 1], [], []>} : vector<2x128xbf16>, vector<128x128xbf16>, vector<2x128xf32> -> vector<2x128xf32>
    %c0_9 = arith.constant 0 : index
    %c0_10 = arith.constant 0 : index
    %12 = vector.load %arg5[%c0_9, %c0_10] : memref<1x128xf32, #tpu.memory_space<vmem>>, vector<1x128xf32>
    %13 = vector.broadcast %12 : vector<1x128xf32> to vector<2x128xf32>
    %14 = arith.addf %11, %13 : vector<2x128xf32>
    %c0_11 = arith.constant 0 : index
    %c0_12 = arith.constant 0 : index
    %15 = vector.load %arg6[%c0_11, %c0_12] : memref<2x128xf32, #tpu.memory_space<vmem>>, vector<2x128xf32>
    tpu.vector_store %arg6[%c0_11, %c0_12], %14 {strides = array<i32>} : memref<2x128xf32, #tpu.memory_space<vmem>>, vector<2x128xf32>,
    return
  }
  func.func @transform_0(%arg0: i32) -> (i32, i32) {
    %c0_i32 = arith.constant 0 : i32
    %c0_i32_0 = arith.constant 0 : i32
    return %arg0, %c0_i32 : i32, i32
  }
  func.func @transform_1(%arg0: i32) -> (i32, i32) {
    %c0_i32 = arith.constant 0 : i32
    %c0_i32_0 = arith.constant 0 : i32
    %c0_i32_1 = arith.constant 0 : i32
    return %c0_i32, %c0_i32_0 : i32, i32
  }
  func.func @transform_2(%arg0: i32) -> (i32, i32) {
    %c0_i32 = arith.constant 0 : i32
    %c0_i32_0 = arith.constant 0 : i32
    %c0_i32_1 = arith.constant 0 : i32
    return %c0_i32, %c0_i32_0 : i32, i32
  }
  func.func @transform_3(%arg0: i32) -> (i32, i32) {
    %c0_i32 = arith.constant 0 : i32
    %c0_i32_0 = arith.constant 0 : i32
    %c0_i32_1 = arith.constant 0 : i32
    return %c0_i32, %c0_i32_0 : i32, i32
  }
  func.func @transform_4(%arg0: i32) -> (i32, i32) {
    %c0_i32 = arith.constant 0 : i32
    %c0_i32_0 = arith.constant 0 : i32
    %c0_i32_1 = arith.constant 0 : i32
    return %c0_i32, %c0_i32_0 : i32, i32
  }
  func.func @transform_5(%arg0: i32) -> (i32, i32) {
    %c0_i32 = arith.constant 0 : i32
    %c0_i32_0 = arith.constant 0 : i32
    return %arg0, %c0_i32 : i32, i32
  }
}

</mosaic_0001>

<llo_original>
// kernel: cnn_forward.3
$region0: #{cnn_forward.3}
  #allocation0 [shape = 'u32[]', space=smem, size = 0x4, offset = 0x4, fixed_abs, tag = 'smem constant byte address 0x4 - core index']
  #allocation1 [shape = 'u32[72,128]{1,0:T(1,128)}', space=vmem, size = 0x9000, scoped, tag = 'internal scratch']
  %s0 = inlined_call_operand.vmem [shape: f32[2,3136], index: 0, kind: input, shape index: {}]
  %s1 = inlined_call_operand.hbm [shape: bf16[3136,128], index: 1, kind: input, shape index: {}]
  %s2 = inlined_call_operand.vmem [shape: f32[1,128], index: 2, kind: input, shape index: {}]
  %s3 = inlined_call_operand.vmem [shape: bf16[128,128], index: 3, kind: input, shape index: {}]
  %s4 = inlined_call_operand.vmem [shape: f32[1,128], index: 4, kind: input, shape index: {}]
  %s5 = inlined_call_operand.hbm [shape: f32[2,128], index: 5, kind: output, shape index: {}]
  %s6 = sld [smem:[#allocation0]]
  $region34: #{cnn_forward.3} parent=0
    _
  %s8 = ssub.s32 1, %s6
  %s9 = scalar_select 0, %s8, %s6
  $region1: #{cnn_forward.3} parent=0
    #allocation2 [shape = 'u8[802816]{0}', space=vmem, size = 0xc4000, scoped, tag = 'input window, operand 1, single buffered']
    #allocation3 [shape = 's32[1]{0}', space=sflag, size = 0x4, scoped, tag = 'scoped memory for cnn_forward.3']
    #allocation4 [shape = 's32[1]{0}', space=sflag, size = 0x4, scoped, tag = 'scoped memory for cnn_forward.3']
    #allocation5 [shape = 'u8[1024]{0}', space=vmem, size = 0x400, scoped, tag = 'output window, operand 0, single buffered']
    %10 = vsyncpa [#allocation3], 0
    %11 = vsyncpa [#allocation4], 0
    // Predicated region
    $region2: #{cnn_forward.3} parent=1 // pred_check
      _
    $region3: #{cnn_forward.3} parent=1 // pred_check_branch
      %13 = sbr.rel (0) target = $region5
    $region4: #{cnn_forward.3} parent=1 // pred_region
      _
    $region5: #{cnn_forward.3} parent=1 // pred_fallthru
      _
    // Predicated region
    $region6: #{cnn_forward.3} parent=1 // pred_check
      _
    $region7: #{cnn_forward.3} parent=1 // pred_check_branch
      %15 = sbr.rel (0) target = $region9
    $region8: #{cnn_forward.3} parent=1 // pred_region
      %17 = vsyncadd [#allocation3], 0
      %s18 = sshll.u32 %s1, 4
      %s19 = int_to_ptr.hbm [resolvable:$true] %s18
      %s20 = sshll.u32 [#allocation2], 4
      %s21 = int_to_ptr.vmem [resolvable:$true] %s20
      %26 = dma.hbm_to_vmem [thread:$0]  %s19, 25088, %s21, [#allocation3], 64, 64, 4
    $region9: #{cnn_forward.3} parent=1 // pred_fallthru
      _
    // Predicated region
    $region10: #{cnn_forward.3} parent=1 // pred_check
      _
    $region11: #{cnn_forward.3} parent=1 // pred_check_branch
      %28 = sbr.rel (0) target = $region13
    $region12: #{cnn_forward.3} parent=1 // pred_region
      _
    $region13: #{cnn_forward.3} parent=1 // pred_fallthru
      _
    // Predicated region
    $region14: #{cnn_forward.3} parent=1 // pred_check
      _
    $region15: #{cnn_forward.3} parent=1 // pred_check_branch
      %30 = sbr.rel (0) target = $region17
    $region16: #{cnn_forward.3} parent=1 // pred_region
      _
    $region17: #{cnn_forward.3} parent=1 // pred_fallthru
      _
    // Predicated region
    $region18: #{cnn_forward.3} parent=1 // pred_check
      _
    $region19: #{cnn_forward.3} parent=1 // pred_check_branch
      %32 = sbr.rel (0) target = $region21
    $region20: #{cnn_forward.3} parent=1 // pred_region
      _
    $region21: #{cnn_forward.3} parent=1 // pred_fallthru
      _
    // Predicated region
    $region22: #{cnn_forward.3} parent=1 // pred_check
      _
    $region23: #{cnn_forward.3} parent=1 // pred_check_branch
      %34 = sbr.rel (0) target = $region25
    $region24: #{cnn_forward.3} parent=1 // pred_region
      %36 = dma.done [#allocation3], 25088
    $region25: #{cnn_forward.3} parent=1 // pred_fallthru
      _
    %v38 = vld [vmem:[%s0] sm:$0xff]
    %v39 = vld [vmem:[%s0 + $0x8] sm:$0xff]
    %v40 = vld [vmem:[%s0 + $0x10] sm:$0xff]
    %v41 = vld [vmem:[%s0 + $0x18] sm:$0xff]
    %v42 = vld [vmem:[%s0 + $0x20] sm:$0xff]
    %v43 = vld [vmem:[%s0 + $0x28] sm:$0xff]
    %v44 = vld [vmem:[%s0 + $0x30] sm:$0x3]
    %52 = vst [vmem:[#allocation1] ss:$4 sm:$0xff] %v38
    %s53 = scalar_lea.vmem [#allocation1], 32
    %54 = vst [vmem:[%s53] ss:$4 sm:$0xff] %v39
    %v55 = vld.sshfl [vmem:[#allocation1] sm:$0xff pattern:$0x73625140]
    %v56 = vld.sshfl [vmem:[#allocation1 + $0x8] sm:$0xff pattern:$0x73625140]
    %v57 = vld.sshfl [vmem:[#allocation1 + $0x10] sm:$0xff pattern:$0x73625140]
    %v58 = vld.sshfl [vmem:[#allocation1 + $0x18] sm:$0xff pattern:$0x73625140]
    %v59 = vld.sshfl [vmem:[#allocation1 + $0x20] sm:$0xff pattern:$0x73625140]
    %v60 = vld.sshfl [vmem:[#allocation1 + $0x28] sm:$0xff pattern:$0x73625140]
    %v61 = vld.sshfl [vmem:[#allocation1 + $0x30] sm:$0xff pattern:$0x73625140]
    %v62 = vld.sshfl [vmem:[#allocation1 + $0x38] sm:$0xff pattern:$0x73625140]
    %63 = vst [vmem:[#allocation1] ss:$4 sm:$0xff] %v40
    %64 = vst [vmem:[%s53] ss:$4 sm:$0xff] %v41
    %v65 = vld.sshfl [vmem:[#allocation1] sm:$0xff pattern:$0x73625140]
    %v66 = vld.sshfl [vmem:[#allocation1 + $0x8] sm:$0xff pattern:$0x73625140]
    %v67 = vld.sshfl [vmem:[#allocation1 + $0x10] sm:$0xff pattern:$0x73625140]
    %v68 = vld.sshfl [vmem:[#allocation1 + $0x18] sm:$0xff pattern:$0x73625140]
    %v69 = vld.sshfl [vmem:[#allocation1 + $0x20] sm:$0xff pattern:$0x73625140]
    %v70 = vld.sshfl [vmem:[#allocation1 + $0x28] sm:$0xff pattern:$0x73625140]
    %v71 = vld.sshfl [vmem:[#allocation1 + $0x30] sm:$0xff pattern:$0x73625140]
    %v72 = vld.sshfl [vmem:[#allocation1 + $0x38] sm:$0xff pattern:$0x73625140]
    %73 = vst [vmem:[#allocation1] ss:$4 sm:$0xff] %v42
    %74 = vst [vmem:[%s53] ss:$4 sm:$0xff] %v43
    %v75 = vld.sshfl [vmem:[#allocation1] sm:$0xff pattern:$0x73625140]
    %v76 = vld.sshfl [vmem:[#allocation1 + $0x8] sm:$0xff pattern:$0x73625140]
    %v77 = vld.sshfl [vmem:[#allocation1 + $0x10] sm:$0xff pattern:$0x73625140]
    %v78 = vld.sshfl [vmem:[#allocation1 + $0x18] sm:$0xff pattern:$0x73625140]
    %v79 = vld.sshfl [vmem:[#allocation1 + $0x20] sm:$0xff pattern:$0x73625140]
    %v80 = vld.sshfl [vmem:[#allocation1 + $0x28] sm:$0xff pattern:$0x73625140]
    %v81 = vld.sshfl [vmem:[#allocation1 + $0x30] sm:$0xff pattern:$0x73625140]
    %v82 = vld.sshfl [vmem:[#allocation1 + $0x38] sm:$0xff pattern:$0x73625140]
    %83 = vst [vmem:[#allocation1] ss:$4 sm:$0xff] %v44
    %v84 = vld.sshfl [vmem:[#allocation1] sm:$0xff pattern:$0x73625140]
    %v110 = vpack.c.bf16 %v55, %v55
    %v111 = vpack.c.bf16 %v56, %v56
    %v112 = vpack.c.bf16 %v57, %v57
    %v113 = vpack.c.bf16 %v58, %v58
    %v114 = vpack.c.bf16 %v59, %v59
    %v115 = vpack.c.bf16 %v60, %v60
    %v116 = vpack.c.bf16 %v61, %v61
    %v117 = vpack.c.bf16 %v62, %v62
    %v118 = vpack.c.bf16 %v65, %v65
    %v119 = vpack.c.bf16 %v66, %v66
    %v120 = vpack.c.bf16 %v67, %v67
    %v121 = vpack.c.bf16 %v68, %v68
    %v122 = vpack.c.bf16 %v69, %v69
    %v123 = vpack.c.bf16 %v70, %v70
    %v124 = vpack.c.bf16 %v71, %v71
    %v125 = vpack.c.bf16 %v72, %v72
    %v126 = vpack.c.bf16 %v75, %v75
    %v127 = vpack.c.bf16 %v76, %v76
    %v128 = vpack.c.bf16 %v77, %v77
    %v129 = vpack.c.bf16 %v78, %v78
    %v130 = vpack.c.bf16 %v79, %v79
    %v131 = vpack.c.bf16 %v80, %v80
    %v132 = vpack.c.bf16 %v81, %v81
    %v133 = vpack.c.bf16 %v82, %v82
    %v134 = vpack.c.bf16 %v84, %v84
    %v135 = vld [vmem:[#allocation2] sm:$0xf]
    %v136 = vld [vmem:[#allocation2 + $0x4] sm:$0xf]
    %v137 = vld [vmem:[#allocation2 + $0x8] sm:$0xf]
    %v138 = vld [vmem:[#allocation2 + $0xc] sm:$0xf]
    %v139 = vld [vmem:[#allocation2 + $0x10] sm:$0xf]
    %v140 = vld [vmem:[#allocation2 + $0x14] sm:$0xf]
    %v141 = vld [vmem:[#allocation2 + $0x18] sm:$0xf]
    %v142 = vld [vmem:[#allocation2 + $0x1c] sm:$0xf]
    %v143 = vld [vmem:[#allocation2 + $0x20] sm:$0xf]
    %v144 = vld [vmem:[#allocation2 + $0x24] sm:$0xf]
    %v145 = vld [vmem:[#allocation2 + $0x28] sm:$0xf]
    %v146 = vld [vmem:[#allocation2 + $0x2c] sm:$0xf]
    %v147 = vld [vmem:[#allocation2 + $0x30] sm:$0xf]
    %v148 = vld [vmem:[#allocation2 + $0x34] sm:$0xf]
    %v149 = vld [vmem:[#allocation2 + $0x38] sm:$0xf]
    %v150 = vld [vmem:[#allocation2 + $0x3c] sm:$0xf]
    %v151 = vld [vmem:[#allocation2 + $0x40] sm:$0xf]
    %v152 = vld [vmem:[#allocation2 + $0x44] sm:$0xf]
    %v153 = vld [vmem:[#allocation2 + $0x48] sm:$0xf]
    %v154 = vld [vmem:[#allocation2 + $0x4c] sm:$0xf]
    %v155 = vld [vmem:[#allocation2 + $0x50] sm:$0xf]
    %v156 = vld [vmem:[#allocation2 + $0x54] sm:$0xf]
    %v157 = vld [vmem:[#allocation2 + $0x58] sm:$0xf]
    %v158 = vld [vmem:[#allocation2 + $0x5c] sm:$0xf]
    %v159 = vld [vmem:[#allocation2 + $0x60] sm:$0xf]
    %v160 = vld [vmem:[#allocation2 + $0x64] sm:$0xf]
    %v161 = vld [vmem:[#allocation2 + $0x68] sm:$0xf]
    %v162 = vld [vmem:[#allocation2 + $0x6c] sm:$0xf]
    %v163 = vld [vmem:[#allocation2 + $0x70] sm:$0xf]
    %v164 = vld [vmem:[#allocation2 + $0x74] sm:$0xf]
    %v165 = vld [vmem:[#allocation2 + $0x78] sm:$0xf]
    %v166 = vld [vmem:[#allocation2 + $0x7c] sm:$0xf]
    %v167 = vld [vmem:[#allocation2 + $0x80] sm:$0xf]
    %v168 = vld [vmem:[#allocation2 + $0x84] sm:$0xf]
    %v169 = vld [vmem:[#allocation2 + $0x88] sm:$0xf]
    %v170 = vld [vmem:[#allocation2 + $0x8c] sm:$0xf]
    %v171 = vld [vmem:[#allocation2 + $0x90] sm:$0xf]
    %v172 = vld [vmem:[#allocation2 + $0x94] sm:$0xf]
    %v173 = vld [vmem:[#allocation2 + $0x98] sm:$0xf]
    %v174 = vld [vmem:[#allocation2 + $0x9c] sm:$0xf]
    %v175 = vld [vmem:[#allocation2 + $0xa0] sm:$0xf]
    %v176 = vld [vmem:[#allocation2 + $0xa4] sm:$0xf]
    %v177 = vld [vmem:[#allocation2 + $0xa8] sm:$0xf]
    %v178 = vld [vmem:[#allocation2 + $0xac] sm:$0xf]
    %v179 = vld [vmem:[#allocation2 + $0xb0] sm:$0xf]
    %v180 = vld [vmem:[#allocation2 + $0xb4] sm:$0xf]
    %v181 = vld [vmem:[#allocation2 + $0xb8] sm:$0xf]
    %v182 = vld [vmem:[#allocation2 + $0xbc] sm:$0xf]
    %v183 = vld [vmem:[#allocation2 + $0xc0] sm:$0xf]
    %v184 = vld [vmem:[#allocation2 + $0xc4] sm:$0xf]
    %v185 = vld [vmem:[#allocation2 + $0xc8] sm:$0xf]
    %v186 = vld [vmem:[#allocation2 + $0xcc] sm:$0xf]
    %v187 = vld [vmem:[#allocation2 + $0xd0] sm:$0xf]
    %v188 = vld [vmem:[#allocation2 + $0xd4] sm:$0xf]
    %v189 = vld [vmem:[#allocation2 + $0xd8] sm:$0xf]
    %v190 = vld [vmem:[#allocation2 + $0xdc] sm:$0xf]
    %v191 = vld [vmem:[#allocation2 + $0xe0] sm:$0xf]
    %v192 = vld [vmem:[#allocation2 + $0xe4] sm:$0xf]
    %v193 = vld [vmem:[#allocation2 + $0xe8] sm:$0xf]
    %v194 = vld [vmem:[#allocation2 + $0xec] sm:$0xf]
    %v195 = vld [vmem:[#allocation2 + $0xf0] sm:$0xf]
    %v196 = vld [vmem:[#allocation2 + $0xf4] sm:$0xf]
    %v197 = vld [vmem:[#allocation2 + $0xf8] sm:$0xf]
    %v198 = vld [vmem:[#allocation2 + $0xfc] sm:$0xf]
    %v199 = vld [vmem:[#allocation2 + $0x100] sm:$0xf]
    %v200 = vld [vmem:[#allocation2 + $0x104] sm:$0xf]
    %v201 = vld [vmem:[#allocation2 + $0x108] sm:$0xf]
    %v202 = vld [vmem:[#allocation2 + $0x10c] sm:$0xf]
    %v203 = vld [vmem:[#allocation2 + $0x110] sm:$0xf]
    %v204 = vld [vmem:[#allocation2 + $0x114] sm:$0xf]
    %v205 = vld [vmem:[#allocation2 + $0x118] sm:$0xf]
    %v206 = vld [vmem:[#allocation2 + $0x11c] sm:$0xf]
    %v207 = vld [vmem:[#allocation2 + $0x120] sm:$0xf]
    %v208 = vld [vmem:[#allocation2 + $0x124] sm:$0xf]
    %v209 = vld [vmem:[#allocation2 + $0x128] sm:$0xf]
    %v210 = vld [vmem:[#allocation2 + $0x12c] sm:$0xf]
    %v211 = vld [vmem:[#allocation2 + $0x130] sm:$0xf]
    %v212 = vld [vmem:[#allocation2 + $0x134] sm:$0xf]
    %v213 = vld [vmem:[#allocation2 + $0x138] sm:$0xf]
    %v214 = vld [vmem:[#allocation2 + $0x13c] sm:$0xf]
    %v215 = vld [vmem:[#allocation2 + $0x140] sm:$0xf]
    %v216 = vld [vmem:[#allocation2 + $0x144] sm:$0xf]
    %v217 = vld [vmem:[#allocation2 + $0x148] sm:$0xf]
    %v218 = vld [vmem:[#allocation2 + $0x14c] sm:$0xf]
    %v219 = vld [vmem:[#allocation2 + $0x150] sm:$0xf]
    %v220 = vld [vmem:[#allocation2 + $0x154] sm:$0xf]
    %v221 = vld [vmem:[#allocation2 + $0x158] sm:$0xf]
    %v222 = vld [vmem:[#allocation2 + $0x15c] sm:$0xf]
    %v223 = vld [vmem:[#allocation2 + $0x160] sm:$0xf]
    %v224 = vld [vmem:[#allocation2 + $0x164] sm:$0xf]
    %v225 = vld [vmem:[#allocation2 + $0x168] sm:$0xf]
    %v226 = vld [vmem:[#allocation2 + $0x16c] sm:$0xf]
    %v227 = vld [vmem:[#allocation2 + $0x170] sm:$0xf]
    %v228 = vld [vmem:[#allocation2 + $0x174] sm:$0xf]
    %v229 = vld [vmem:[#allocation2 + $0x178] sm:$0xf]
    %v230 = vld [vmem:[#allocation2 + $0x17c] sm:$0xf]
    %v231 = vld [vmem:[#allocation2 + $0x180] sm:$0xf]
    %v232 = vld [vmem:[#allocation2 + $0x184] sm:$0xf]
    %v233 = vld [vmem:[#allocation2 + $0x188] sm:$0xf]
    %v234 = vld [vmem:[#allocation2 + $0x18c] sm:$0xf]
    %v235 = vld [vmem:[#allocation2 + $0x190] sm:$0xf]
    %v236 = vld [vmem:[#allocation2 + $0x194] sm:$0xf]
    %v237 = vld [vmem:[#allocation2 + $0x198] sm:$0xf]
    %v238 = vld [vmem:[#allocation2 + $0x19c] sm:$0xf]
    %v239 = vld [vmem:[#allocation2 + $0x1a0] sm:$0xf]
    %v240 = vld [vmem:[#allocation2 + $0x1a4] sm:$0xf]
    %v241 = vld [vmem:[#allocation2 + $0x1a8] sm:$0xf]
    %v242 = vld [vmem:[#allocation2 + $0x1ac] sm:$0xf]
    %v243 = vld [vmem:[#allocation2 + $0x1b0] sm:$0xf]
    %v244 = vld [vmem:[#allocation2 + $0x1b4] sm:$0xf]
    %v245 = vld [vmem:[#allocation2 + $0x1b8] sm:$0xf]
    %v246 = vld [vmem:[#allocation2 + $0x1bc] sm:$0xf]
    %v247 = vld [vmem:[#allocation2 + $0x1c0] sm:$0xf]
    %v248 = vld [vmem:[#allocation2 + $0x1c4] sm:$0xf]
    %v249 = vld [vmem:[#allocation2 + $0x1c8] sm:$0xf]
    %v250 = vld [vmem:[#allocation2 + $0x1cc] sm:$0xf]
    %v251 = vld [vmem:[#allocation2 + $0x1d0] sm:$0xf]
    %v252 = vld [vmem:[#allocation2 + $0x1d4] sm:$0xf]
    %v253 = vld [vmem:[#allocation2 + $0x1d8] sm:$0xf]
    %v254 = vld [vmem:[#allocation2 + $0x1dc] sm:$0xf]
    %v255 = vld [vmem:[#allocation2 + $0x1e0] sm:$0xf]
    %v256 = vld [vmem:[#allocation2 + $0x1e4] sm:$0xf]
    %v257 = vld [vmem:[#allocation2 + $0x1e8] sm:$0xf]
    %v258 = vld [vmem:[#allocation2 + $0x1ec] sm:$0xf]
    %v259 = vld [vmem:[#allocation2 + $0x1f0] sm:$0xf]
    %v260 = vld [vmem:[#allocation2 + $0x1f4] sm:$0xf]
    %v261 = vld [vmem:[#allocation2 + $0x1f8] sm:$0xf]
    %v262 = vld [vmem:[#allocation2 + $0x1fc] sm:$0xf]
    %v263 = vld [vmem:[#allocation2 + $0x200] sm:$0xf]
    %v264 = vld [vmem:[#allocation2 + $0x204] sm:$0xf]
    %v265 = vld [vmem:[#allocation2 + $0x208] sm:$0xf]
    %v266 = vld [vmem:[#allocation2 + $0x20c] sm:$0xf]
    %v267 = vld [vmem:[#allocation2 + $0x210] sm:$0xf]
    %v268 = vld [vmem:[#allocation2 + $0x214] sm:$0xf]
    %v269 = vld [vmem:[#allocation2 + $0x218] sm:$0xf]
    %v270 = vld [vmem:[#allocation2 + $0x21c] sm:$0xf]
    %v271 = vld [vmem:[#allocation2 + $0x220] sm:$0xf]
    %v272 = vld [vmem:[#allocation2 + $0x224] sm:$0xf]
    %v273 = vld [vmem:[#allocation2 + $0x228] sm:$0xf]
    %v274 = vld [vmem:[#allocation2 + $0x22c] sm:$0xf]
    %v275 = vld [vmem:[#allocation2 + $0x230] sm:$0xf]
    %v276 = vld [vmem:[#allocation2 + $0x234] sm:$0xf]
    %v277 = vld [vmem:[#allocation2 + $0x238] sm:$0xf]
    %v278 = vld [vmem:[#allocation2 + $0x23c] sm:$0xf]
    %v279 = vld [vmem:[#allocation2 + $0x240] sm:$0xf]
    %v280 = vld [vmem:[#allocation2 + $0x244] sm:$0xf]
    %v281 = vld [vmem:[#allocation2 + $0x248] sm:$0xf]
    %v282 = vld [vmem:[#allocation2 + $0x24c] sm:$0xf]
    %v283 = vld [vmem:[#allocation2 + $0x250] sm:$0xf]
    %v284 = vld [vmem:[#allocation2 + $0x254] sm:$0xf]
    %v285 = vld [vmem:[#allocation2 + $0x258] sm:$0xf]
    %v286 = vld [vmem:[#allocation2 + $0x25c] sm:$0xf]
    %v287 = vld [vmem:[#allocation2 + $0x260] sm:$0xf]
    %v288 = vld [vmem:[#allocation2 + $0x264] sm:$0xf]
    %v289 = vld [vmem:[#allocation2 + $0x268] sm:$0xf]
    %v290 = vld [vmem:[#allocation2 + $0x26c] sm:$0xf]
    %v291 = vld [vmem:[#allocation2 + $0x270] sm:$0xf]
    %v292 = vld [vmem:[#allocation2 + $0x274] sm:$0xf]
    %v293 = vld [vmem:[#allocation2 + $0x278] sm:$0xf]
    %v294 = vld [vmem:[#allocation2 + $0x27c] sm:$0xf]
    %v295 = vld [vmem:[#allocation2 + $0x280] sm:$0xf]
    %v296 = vld [vmem:[#allocation2 + $0x284] sm:$0xf]
    %v297 = vld [vmem:[#allocation2 + $0x288] sm:$0xf]
    %v298 = vld [vmem:[#allocation2 + $0x28c] sm:$0xf]
    %v299 = vld [vmem:[#allocation2 + $0x290] sm:$0xf]
    %v300 = vld [vmem:[#allocation2 + $0x294] sm:$0xf]
    %v301 = vld [vmem:[#allocation2 + $0x298] sm:$0xf]
    %v302 = vld [vmem:[#allocation2 + $0x29c] sm:$0xf]
    %v303 = vld [vmem:[#allocation2 + $0x2a0] sm:$0xf]
    %v304 = vld [vmem:[#allocation2 + $0x2a4] sm:$0xf]
    %v305 = vld [vmem:[#allocation2 + $0x2a8] sm:$0xf]
    %v306 = vld [vmem:[#allocation2 + $0x2ac] sm:$0xf]
    %v307 = vld [vmem:[#allocation2 + $0x2b0] sm:$0xf]
    %v308 = vld [vmem:[#allocation2 + $0x2b4] sm:$0xf]
    %v309 = vld [vmem:[#allocation2 + $0x2b8] sm:$0xf]
    %v310 = vld [vmem:[#allocation2 + $0x2bc] sm:$0xf]
    %v311 = vld [vmem:[#allocation2 + $0x2c0] sm:$0xf]
    %v312 = vld [vmem:[#allocation2 + $0x2c4] sm:$0xf]
    %v313 = vld [vmem:[#allocation2 + $0x2c8] sm:$0xf]
    %v314 = vld [vmem:[#allocation2 + $0x2cc] sm:$0xf]
    %v315 = vld [vmem:[#allocation2 + $0x2d0] sm:$0xf]
    %v316 = vld [vmem:[#allocation2 + $0x2d4] sm:$0xf]
    %v317 = vld [vmem:[#allocation2 + $0x2d8] sm:$0xf]
    %v318 = vld [vmem:[#allocation2 + $0x2dc] sm:$0xf]
    %v319 = vld [vmem:[#allocation2 + $0x2e0] sm:$0xf]
    %v320 = vld [vmem:[#allocation2 + $0x2e4] sm:$0xf]
    %v321 = vld [vmem:[#allocation2 + $0x2e8] sm:$0xf]
    %v322 = vld [vmem:[#allocation2 + $0x2ec] sm:$0xf]
    %v323 = vld [vmem:[#allocation2 + $0x2f0] sm:$0xf]
    %v324 = vld [vmem:[#allocation2 + $0x2f4] sm:$0xf]
    %v325 = vld [vmem:[#allocation2 + $0x2f8] sm:$0xf]
    %v326 = vld [vmem:[#allocation2 + $0x2fc] sm:$0xf]
    %v327 = vld [vmem:[#allocation2 + $0x300] sm:$0xf]
    %v328 = vld [vmem:[#allocation2 + $0x304] sm:$0xf]
    %v329 = vld [vmem:[#allocation2 + $0x308] sm:$0xf]
    %v330 = vld [vmem:[#allocation2 + $0x30c] sm:$0xf]
    %v331 = vld [vmem:[#allocation2 + $0x310] sm:$0xf]
    %v332 = vld [vmem:[#allocation2 + $0x314] sm:$0xf]
    %v333 = vld [vmem:[#allocation2 + $0x318] sm:$0xf]
    %v334 = vld [vmem:[#allocation2 + $0x31c] sm:$0xf]
    %v335 = vld [vmem:[#allocation2 + $0x320] sm:$0xf]
    %v336 = vld [vmem:[#allocation2 + $0x324] sm:$0xf]
    %v337 = vld [vmem:[#allocation2 + $0x328] sm:$0xf]
    %v338 = vld [vmem:[#allocation2 + $0x32c] sm:$0xf]
    %v339 = vld [vmem:[#allocation2 + $0x330] sm:$0xf]
    %v340 = vld [vmem:[#allocation2 + $0x334] sm:$0xf]
    %v341 = vld [vmem:[#allocation2 + $0x338] sm:$0xf]
    %v342 = vld [vmem:[#allocation2 + $0x33c] sm:$0xf]
    %v343 = vld [vmem:[#allocation2 + $0x340] sm:$0xf]
    %v344 = vld [vmem:[#allocation2 + $0x344] sm:$0xf]
    %v345 = vld [vmem:[#allocation2 + $0x348] sm:$0xf]
    %v346 = vld [vmem:[#allocation2 + $0x34c] sm:$0xf]
    %v347 = vld [vmem:[#allocation2 + $0x350] sm:$0xf]
    %v348 = vld [vmem:[#allocation2 + $0x354] sm:$0xf]
    %v349 = vld [vmem:[#allocation2 + $0x358] sm:$0xf]
    %v350 = vld [vmem:[#allocation2 + $0x35c] sm:$0xf]
    %v351 = vld [vmem:[#allocation2 + $0x360] sm:$0xf]
    %v352 = vld [vmem:[#allocation2 + $0x364] sm:$0xf]
    %v353 = vld [vmem:[#allocation2 + $0x368] sm:$0xf]
    %v354 = vld [vmem:[#allocation2 + $0x36c] sm:$0xf]
    %v355 = vld [vmem:[#allocation2 + $0x370] sm:$0xf]
    %v356 = vld [vmem:[#allocation2 + $0x374] sm:$0xf]
    %v357 = vld [vmem:[#allocation2 + $0x378] sm:$0xf]
    %v358 = vld [vmem:[#allocation2 + $0x37c] sm:$0xf]
    %v359 = vld [vmem:[#allocation2 + $0x380] sm:$0xf]
    %v360 = vld [vmem:[#allocation2 + $0x384] sm:$0xf]
    %v361 = vld [vmem:[#allocation2 + $0x388] sm:$0xf]
    %v362 = vld [vmem:[#allocation2 + $0x38c] sm:$0xf]
    %v363 = vld [vmem:[#allocation2 + $0x390] sm:$0xf]
    %v364 = vld [vmem:[#allocation2 + $0x394] sm:$0xf]
    %v365 = vld [vmem:[#allocation2 + $0x398] sm:$0xf]
    %v366 = vld [vmem:[#allocation2 + $0x39c] sm:$0xf]
    %v367 = vld [vmem:[#allocation2 + $0x3a0] sm:$0xf]
    %v368 = vld [vmem:[#allocation2 + $0x3a4] sm:$0xf]
    %v369 = vld [vmem:[#allocation2 + $0x3a8] sm:$0xf]
    %v370 = vld [vmem:[#allocation2 + $0x3ac] sm:$0xf]
    %v371 = vld [vmem:[#allocation2 + $0x3b0] sm:$0xf]
    %v372 = vld [vmem:[#allocation2 + $0x3b4] sm:$0xf]
    %v373 = vld [vmem:[#allocation2 + $0x3b8] sm:$0xf]
    %v374 = vld [vmem:[#allocation2 + $0x3bc] sm:$0xf]
    %v375 = vld [vmem:[#allocation2 + $0x3c0] sm:$0xf]
    %v376 = vld [vmem:[#allocation2 + $0x3c4] sm:$0xf]
    %v377 = vld [vmem:[#allocation2 + $0x3c8] sm:$0xf]
    %v378 = vld [vmem:[#allocation2 + $0x3cc] sm:$0xf]
    %v379 = vld [vmem:[#allocation2 + $0x3d0] sm:$0xf]
    %v380 = vld [vmem:[#allocation2 + $0x3d4] sm:$0xf]
    %v381 = vld [vmem:[#allocation2 + $0x3d8] sm:$0xf]
    %v382 = vld [vmem:[#allocation2 + $0x3dc] sm:$0xf]
    %v383 = vld [vmem:[#allocation2 + $0x3e0] sm:$0xf]
    %v384 = vld [vmem:[#allocation2 + $0x3e4] sm:$0xf]
    %v385 = vld [vmem:[#allocation2 + $0x3e8] sm:$0xf]
    %v386 = vld [vmem:[#allocation2 + $0x3ec] sm:$0xf]
    %v387 = vld [vmem:[#allocation2 + $0x3f0] sm:$0xf]
    %v388 = vld [vmem:[#allocation2 + $0x3f4] sm:$0xf]
    %v389 = vld [vmem:[#allocation2 + $0x3f8] sm:$0xf]
    %v390 = vld [vmem:[#allocation2 + $0x3fc] sm:$0xf]
    %v391 = vld [vmem:[#allocation2 + $0x400] sm:$0xf]
    %v392 = vld [vmem:[#allocation2 + $0x404] sm:$0xf]
    %v393 = vld [vmem:[#allocation2 + $0x408] sm:$0xf]
    %v394 = vld [vmem:[#allocation2 + $0x40c] sm:$0xf]
    %v395 = vld [vmem:[#allocation2 + $0x410] sm:$0xf]
    %v396 = vld [vmem:[#allocation2 + $0x414] sm:$0xf]
    %v397 = vld [vmem:[#allocation2 + $0x418] sm:$0xf]
    %v398 = vld [vmem:[#allocation2 + $0x41c] sm:$0xf]
    %v399 = vld [vmem:[#allocation2 + $0x420] sm:$0xf]
    %v400 = vld [vmem:[#allocation2 + $0x424] sm:$0xf]
    %v401 = vld [vmem:[#allocation2 + $0x428] sm:$0xf]
    %v402 = vld [vmem:[#allocation2 + $0x42c] sm:$0xf]
    %v403 = vld [vmem:[#allocation2 + $0x430] sm:$0xf]
    %v404 = vld [vmem:[#allocation2 + $0x434] sm:$0xf]
    %v405 = vld [vmem:[#allocation2 + $0x438] sm:$0xf]
    %v406 = vld [vmem:[#allocation2 + $0x43c] sm:$0xf]
    %v407 = vld [vmem:[#allocation2 + $0x440] sm:$0xf]
    %v408 = vld [vmem:[#allocation2 + $0x444] sm:$0xf]
    %v409 = vld [vmem:[#allocation2 + $0x448] sm:$0xf]
    %v410 = vld [vmem:[#allocation2 + $0x44c] sm:$0xf]
    %v411 = vld [vmem:[#allocation2 + $0x450] sm:$0xf]
    %v412 = vld [vmem:[#allocation2 + $0x454] sm:$0xf]
    %v413 = vld [vmem:[#allocation2 + $0x458] sm:$0xf]
    %v414 = vld [vmem:[#allocation2 + $0x45c] sm:$0xf]
    %v415 = vld [vmem:[#allocation2 + $0x460] sm:$0xf]
    %v416 = vld [vmem:[#allocation2 + $0x464] sm:$0xf]
    %v417 = vld [vmem:[#allocation2 + $0x468] sm:$0xf]
    %v418 = vld [vmem:[#allocation2 + $0x46c] sm:$0xf]
    %v419 = vld [vmem:[#allocation2 + $0x470] sm:$0xf]
    %v420 = vld [vmem:[#allocation2 + $0x474] sm:$0xf]
    %v421 = vld [vmem:[#allocation2 + $0x478] sm:$0xf]
    %v422 = vld [vmem:[#allocation2 + $0x47c] sm:$0xf]
    %v423 = vld [vmem:[#allocation2 + $0x480] sm:$0xf]
    %v424 = vld [vmem:[#allocation2 + $0x484] sm:$0xf]
    %v425 = vld [vmem:[#allocation2 + $0x488] sm:$0xf]
    %v426 = vld [vmem:[#allocation2 + $0x48c] sm:$0xf]
    %v427 = vld [vmem:[#allocation2 + $0x490] sm:$0xf]
    %v428 = vld [vmem:[#allocation2 + $0x494] sm:$0xf]
    %v429 = vld [vmem:[#allocation2 + $0x498] sm:$0xf]
    %v430 = vld [vmem:[#allocation2 + $0x49c] sm:$0xf]
    %v431 = vld [vmem:[#allocation2 + $0x4a0] sm:$0xf]
    %v432 = vld [vmem:[#allocation2 + $0x4a4] sm:$0xf]
    %v433 = vld [vmem:[#allocation2 + $0x4a8] sm:$0xf]
    %v434 = vld [vmem:[#allocation2 + $0x4ac] sm:$0xf]
    %v435 = vld [vmem:[#allocation2 + $0x4b0] sm:$0xf]
    %v436 = vld [vmem:[#allocation2 + $0x4b4] sm:$0xf]
    %v437 = vld [vmem:[#allocation2 + $0x4b8] sm:$0xf]
    %v438 = vld [vmem:[#allocation2 + $0x4bc] sm:$0xf]
    %v439 = vld [vmem:[#allocation2 + $0x4c0] sm:$0xf]
    %v440 = vld [vmem:[#allocation2 + $0x4c4] sm:$0xf]
    %v441 = vld [vmem:[#allocation2 + $0x4c8] sm:$0xf]
    %v442 = vld [vmem:[#allocation2 + $0x4cc] sm:$0xf]
    %v443 = vld [vmem:[#allocation2 + $0x4d0] sm:$0xf]
    %v444 = vld [vmem:[#allocation2 + $0x4d4] sm:$0xf]
    %v445 = vld [vmem:[#allocation2 + $0x4d8] sm:$0xf]
    %v446 = vld [vmem:[#allocation2 + $0x4dc] sm:$0xf]
    %v447 = vld [vmem:[#allocation2 + $0x4e0] sm:$0xf]
    %v448 = vld [vmem:[#allocation2 + $0x4e4] sm:$0xf]
    %v449 = vld [vmem:[#allocation2 + $0x4e8] sm:$0xf]
    %v450 = vld [vmem:[#allocation2 + $0x4ec] sm:$0xf]
    %v451 = vld [vmem:[#allocation2 + $0x4f0] sm:$0xf]
    %v452 = vld [vmem:[#allocation2 + $0x4f4] sm:$0xf]
    %v453 = vld [vmem:[#allocation2 + $0x4f8] sm:$0xf]
    %v454 = vld [vmem:[#allocation2 + $0x4fc] sm:$0xf]
    %v455 = vld [vmem:[#allocation2 + $0x500] sm:$0xf]
    %v456 = vld [vmem:[#allocation2 + $0x504] sm:$0xf]
    %v457 = vld [vmem:[#allocation2 + $0x508] sm:$0xf]
    %v458 = vld [vmem:[#allocation2 + $0x50c] sm:$0xf]
    %v459 = vld [vmem:[#allocation2 + $0x510] sm:$0xf]
    %v460 = vld [vmem:[#allocation2 + $0x514] sm:$0xf]
    %v461 = vld [vmem:[#allocation2 + $0x518] sm:$0xf]
    %v462 = vld [vmem:[#allocation2 + $0x51c] sm:$0xf]
    %v463 = vld [vmem:[#allocation2 + $0x520] sm:$0xf]
    %v464 = vld [vmem:[#allocation2 + $0x524] sm:$0xf]
    %v465 = vld [vmem:[#allocation2 + $0x528] sm:$0xf]
    %v466 = vld [vmem:[#allocation2 + $0x52c] sm:$0xf]
    %v467 = vld [vmem:[#allocation2 + $0x530] sm:$0xf]
    %v468 = vld [vmem:[#allocation2 + $0x534] sm:$0xf]
    %v469 = vld [vmem:[#allocation2 + $0x538] sm:$0xf]
    %v470 = vld [vmem:[#allocation2 + $0x53c] sm:$0xf]
    %v471 = vld [vmem:[#allocation2 + $0x540] sm:$0xf]
    %v472 = vld [vmem:[#allocation2 + $0x544] sm:$0xf]
    %v473 = vld [vmem:[#allocation2 + $0x548] sm:$0xf]
    %v474 = vld [vmem:[#allocation2 + $0x54c] sm:$0xf]
    %v475 = vld [vmem:[#allocation2 + $0x550] sm:$0xf]
    %v476 = vld [vmem:[#allocation2 + $0x554] sm:$0xf]
    %v477 = vld [vmem:[#allocation2 + $0x558] sm:$0xf]
    %v478 = vld [vmem:[#allocation2 + $0x55c] sm:$0xf]
    %v479 = vld [vmem:[#allocation2 + $0x560] sm:$0xf]
    %v480 = vld [vmem:[#allocation2 + $0x564] sm:$0xf]
    %v481 = vld [vmem:[#allocation2 + $0x568] sm:$0xf]
    %v482 = vld [vmem:[#allocation2 + $0x56c] sm:$0xf]
    %v483 = vld [vmem:[#allocation2 + $0x570] sm:$0xf]
    %v484 = vld [vmem:[#allocation2 + $0x574] sm:$0xf]
    %v485 = vld [vmem:[#allocation2 + $0x578] sm:$0xf]
    %v486 = vld [vmem:[#allocation2 + $0x57c] sm:$0xf]
    %v487 = vld [vmem:[#allocation2 + $0x580] sm:$0xf]
    %v488 = vld [vmem:[#allocation2 + $0x584] sm:$0xf]
    %v489 = vld [vmem:[#allocation2 + $0x588] sm:$0xf]
    %v490 = vld [vmem:[#allocation2 + $0x58c] sm:$0xf]
    %v491 = vld [vmem:[#allocation2 + $0x590] sm:$0xf]
    %v492 = vld [vmem:[#allocation2 + $0x594] sm:$0xf]
    %v493 = vld [vmem:[#allocation2 + $0x598] sm:$0xf]
    %v494 = vld [vmem:[#allocation2 + $0x59c] sm:$0xf]
    %v495 = vld [vmem:[#allocation2 + $0x5a0] sm:$0xf]
    %v496 = vld [vmem:[#allocation2 + $0x5a4] sm:$0xf]
    %v497 = vld [vmem:[#allocation2 + $0x5a8] sm:$0xf]
    %v498 = vld [vmem:[#allocation2 + $0x5ac] sm:$0xf]
    %v499 = vld [vmem:[#allocation2 + $0x5b0] sm:$0xf]
    %v500 = vld [vmem:[#allocation2 + $0x5b4] sm:$0xf]
    %v501 = vld [vmem:[#allocation2 + $0x5b8] sm:$0xf]
    %v502 = vld [vmem:[#allocation2 + $0x5bc] sm:$0xf]
    %v503 = vld [vmem:[#allocation2 + $0x5c0] sm:$0xf]
    %v504 = vld [vmem:[#allocation2 + $0x5c4] sm:$0xf]
    %v505 = vld [vmem:[#allocation2 + $0x5c8] sm:$0xf]
    %v506 = vld [vmem:[#allocation2 + $0x5cc] sm:$0xf]
    %v507 = vld [vmem:[#allocation2 + $0x5d0] sm:$0xf]
    %v508 = vld [vmem:[#allocation2 + $0x5d4] sm:$0xf]
    %v509 = vld [vmem:[#allocation2 + $0x5d8] sm:$0xf]
    %v510 = vld [vmem:[#allocation2 + $0x5dc] sm:$0xf]
    %v511 = vld [vmem:[#allocation2 + $0x5e0] sm:$0xf]
    %v512 = vld [vmem:[#allocation2 + $0x5e4] sm:$0xf]
    %v513 = vld [vmem:[#allocation2 + $0x5e8] sm:$0xf]
    %v514 = vld [vmem:[#allocation2 + $0x5ec] sm:$0xf]
    %v515 = vld [vmem:[#allocation2 + $0x5f0] sm:$0xf]
    %v516 = vld [vmem:[#allocation2 + $0x5f4] sm:$0xf]
    %v517 = vld [vmem:[#allocation2 + $0x5f8] sm:$0xf]
    %v518 = vld [vmem:[#allocation2 + $0x5fc] sm:$0xf]
    %v519 = vld [vmem:[#allocation2 + $0x600] sm:$0xf]
    %v520 = vld [vmem:[#allocation2 + $0x604] sm:$0xf]
    %v521 = vld [vmem:[#allocation2 + $0x608] sm:$0xf]
    %v522 = vld [vmem:[#allocation2 + $0x60c] sm:$0xf]
    %v523 = vld [vmem:[#allocation2 + $0x610] sm:$0xf]
    %v524 = vld [vmem:[#allocation2 + $0x614] sm:$0xf]
    %v525 = vld [vmem:[#allocation2 + $0x618] sm:$0xf]
    %v526 = vld [vmem:[#allocation2 + $0x61c] sm:$0xf]
    %v527 = vld [vmem:[%s2] sm:$0x1]
    %v529 = vperm.slane %v527, 0
    %v923 = vunpack.c.l.b16 %v135
    %v924 = vunpack.c.l.b16 %v136
    %v925 = vunpack.c.l.b16 %v137
    %v926 = vunpack.c.l.b16 %v138
    %v927 = vunpack.c.l.b16 %v139
    %v928 = vunpack.c.l.b16 %v140
    %v929 = vunpack.c.l.b16 %v141
    %v930 = vunpack.c.l.b16 %v142
    %v931 = vunpack.c.l.b16 %v143
    %v932 = vunpack.c.l.b16 %v144
    %v933 = vunpack.c.l.b16 %v145
    %v934 = vunpack.c.l.b16 %v146
    %v935 = vunpack.c.l.b16 %v147
    %v936 = vunpack.c.l.b16 %v148
    %v937 = vunpack.c.l.b16 %v149
    %v938 = vunpack.c.l.b16 %v150
    %v939 = vunpack.c.l.b16 %v151
    %v940 = vunpack.c.l.b16 %v152
    %v941 = vunpack.c.l.b16 %v153
    %v942 = vunpack.c.l.b16 %v154
    %v943 = vunpack.c.l.b16 %v155
    %v944 = vunpack.c.l.b16 %v156
    %v945 = vunpack.c.l.b16 %v157
    %v946 = vunpack.c.l.b16 %v158
    %v947 = vunpack.c.l.b16 %v159
    %v948 = vunpack.c.l.b16 %v160
    %v949 = vunpack.c.l.b16 %v161
    %v950 = vunpack.c.l.b16 %v162
    %v951 = vunpack.c.l.b16 %v163
    %v952 = vunpack.c.l.b16 %v164
    %v953 = vunpack.c.l.b16 %v165
    %v954 = vunpack.c.l.b16 %v166
    %v955 = vunpack.c.l.b16 %v167
    %v956 = vunpack.c.l.b16 %v168
    %v957 = vunpack.c.l.b16 %v169
    %v958 = vunpack.c.l.b16 %v170
    %v959 = vunpack.c.l.b16 %v171
    %v960 = vunpack.c.l.b16 %v172
    %v961 = vunpack.c.l.b16 %v173
    %v962 = vunpack.c.l.b16 %v174
    %v963 = vunpack.c.l.b16 %v175
    %v964 = vunpack.c.l.b16 %v176
    %v965 = vunpack.c.l.b16 %v177
    %v966 = vunpack.c.l.b16 %v178
    %v967 = vunpack.c.l.b16 %v179
    %v968 = vunpack.c.l.b16 %v180
    %v969 = vunpack.c.l.b16 %v181
    %v970 = vunpack.c.l.b16 %v182
    %v971 = vunpack.c.l.b16 %v183
    %v972 = vunpack.c.l.b16 %v184
    %v973 = vunpack.c.l.b16 %v185
    %v974 = vunpack.c.l.b16 %v186
    %v975 = vunpack.c.l.b16 %v187
    %v976 = vunpack.c.l.b16 %v188
    %v977 = vunpack.c.l.b16 %v189
    %v978 = vunpack.c.l.b16 %v190
    %v979 = vunpack.c.l.b16 %v191
    %v980 = vunpack.c.l.b16 %v192
    %v981 = vunpack.c.l.b16 %v193
    %v982 = vunpack.c.l.b16 %v194
    %v983 = vunpack.c.l.b16 %v195
    %v984 = vunpack.c.l.b16 %v196
    %v985 = vunpack.c.l.b16 %v197
    %v986 = vunpack.c.l.b16 %v198
    %v987 = vunpack.c.l.b16 %v199
    %v988 = vunpack.c.l.b16 %v200
    %v989 = vunpack.c.l.b16 %v201
    %v990 = vunpack.c.l.b16 %v202
    %v991 = vunpack.c.l.b16 %v203
    %v992 = vunpack.c.l.b16 %v204
    %v993 = vunpack.c.l.b16 %v205
    %v994 = vunpack.c.l.b16 %v206
    %v995 = vunpack.c.l.b16 %v207
    %v996 = vunpack.c.l.b16 %v208
    %v997 = vunpack.c.l.b16 %v209
    %v998 = vunpack.c.l.b16 %v210
    %v999 = vunpack.c.l.b16 %v211
    %v1000 = vunpack.c.l.b16 %v212
    %v1001 = vunpack.c.l.b16 %v213
    %v1002 = vunpack.c.l.b16 %v214
    %v1003 = vunpack.c.l.b16 %v215
    %v1004 = vunpack.c.l.b16 %v216
    %v1005 = vunpack.c.l.b16 %v217
    %v1006 = vunpack.c.l.b16 %v218
    %v1007 = vunpack.c.l.b16 %v219
    %v1008 = vunpack.c.l.b16 %v220
    %v1009 = vunpack.c.l.b16 %v221
    %v1010 = vunpack.c.l.b16 %v222
    %v1011 = vunpack.c.l.b16 %v223
    %v1012 = vunpack.c.l.b16 %v224
    %v1013 = vunpack.c.l.b16 %v225
    %v1014 = vunpack.c.l.b16 %v226
    %v1015 = vunpack.c.l.b16 %v227
    %v1016 = vunpack.c.l.b16 %v228
    %v1017 = vunpack.c.l.b16 %v229
    %v1018 = vunpack.c.l.b16 %v230
    %v1019 = vunpack.c.l.b16 %v231
    %v1020 = vunpack.c.l.b16 %v232
    %v1021 = vunpack.c.l.b16 %v233
    %v1022 = vunpack.c.l.b16 %v234
    %v1023 = vunpack.c.l.b16 %v235
    %v1024 = vunpack.c.l.b16 %v236
    %v1025 = vunpack.c.l.b16 %v237
    %v1026 = vunpack.c.l.b16 %v238
    %v1027 = vunpack.c.l.b16 %v239
    %v1028 = vunpack.c.l.b16 %v240
    %v1029 = vunpack.c.l.b16 %v241
    %v1030 = vunpack.c.l.b16 %v242
    %v1031 = vunpack.c.l.b16 %v243
    %v1032 = vunpack.c.l.b16 %v244
    %v1033 = vunpack.c.l.b16 %v245
    %v1034 = vunpack.c.l.b16 %v246
    %v1035 = vunpack.c.l.b16 %v247
    %v1036 = vunpack.c.l.b16 %v248
    %v1037 = vunpack.c.l.b16 %v249
    %v1038 = vunpack.c.l.b16 %v250
    %v1039 = vunpack.c.l.b16 %v251
    %v1040 = vunpack.c.l.b16 %v252
    %v1041 = vunpack.c.l.b16 %v253
    %v1042 = vunpack.c.l.b16 %v254
    %v1043 = vunpack.c.l.b16 %v255
    %v1044 = vunpack.c.l.b16 %v256
    %v1045 = vunpack.c.l.b16 %v257
    %v1046 = vunpack.c.l.b16 %v258
    %v1047 = vunpack.c.l.b16 %v259
    %v1048 = vunpack.c.l.b16 %v260
    %v1049 = vunpack.c.l.b16 %v261
    %v1050 = vunpack.c.l.b16 %v262
    %v1051 = vunpack.c.l.b16 %v263
    %v1052 = vunpack.c.l.b16 %v264
    %v1053 = vunpack.c.l.b16 %v265
    %v1054 = vunpack.c.l.b16 %v266
    %v1055 = vunpack.c.l.b16 %v267
    %v1056 = vunpack.c.l.b16 %v268
    %v1057 = vunpack.c.l.b16 %v269
    %v1058 = vunpack.c.l.b16 %v270
    %v1059 = vunpack.c.l.b16 %v271
    %v1060 = vunpack.c.l.b16 %v272
    %v1061 = vunpack.c.l.b16 %v273
    %v1062 = vunpack.c.l.b16 %v274
    %v1063 = vunpack.c.l.b16 %v275
    %v1064 = vunpack.c.l.b16 %v276
    %v1065 = vunpack.c.l.b16 %v277
    %v1066 = vunpack.c.l.b16 %v278
    %v1067 = vunpack.c.l.b16 %v279
    %v1068 = vunpack.c.l.b16 %v280
    %v1069 = vunpack.c.l.b16 %v281
    %v1070 = vunpack.c.l.b16 %v282
    %v1071 = vunpack.c.l.b16 %v283
    %v1072 = vunpack.c.l.b16 %v284
    %v1073 = vunpack.c.l.b16 %v285
    %v1074 = vunpack.c.l.b16 %v286
    %v1075 = vunpack.c.l.b16 %v287
    %v1076 = vunpack.c.l.b16 %v288
    %v1077 = vunpack.c.l.b16 %v289
    %v1078 = vunpack.c.l.b16 %v290
    %v1079 = vunpack.c.l.b16 %v291
    %v1080 = vunpack.c.l.b16 %v292
    %v1081 = vunpack.c.l.b16 %v293
    %v1082 = vunpack.c.l.b16 %v294
    %v1083 = vunpack.c.l.b16 %v295
    %v1084 = vunpack.c.l.b16 %v296
    %v1085 = vunpack.c.l.b16 %v297
    %v1086 = vunpack.c.l.b16 %v298
    %v1087 = vunpack.c.l.b16 %v299
    %v1088 = vunpack.c.l.b16 %v300
    %v1089 = vunpack.c.l.b16 %v301
    %v1090 = vunpack.c.l.b16 %v302
    %v1091 = vunpack.c.l.b16 %v303
    %v1092 = vunpack.c.l.b16 %v304
    %v1093 = vunpack.c.l.b16 %v305
    %v1094 = vunpack.c.l.b16 %v306
    %v1095 = vunpack.c.l.b16 %v307
    %v1096 = vunpack.c.l.b16 %v308
    %v1097 = vunpack.c.l.b16 %v309
    %v1098 = vunpack.c.l.b16 %v310
    %v1099 = vunpack.c.l.b16 %v311
    %v1100 = vunpack.c.l.b16 %v312
    %v1101 = vunpack.c.l.b16 %v313
    %v1102 = vunpack.c.l.b16 %v314
    %v1103 = vunpack.c.l.b16 %v315
    %v1104 = vunpack.c.l.b16 %v316
    %v1105 = vunpack.c.l.b16 %v317
    %v1106 = vunpack.c.l.b16 %v318
    %v1107 = vunpack.c.l.b16 %v319
    %v1108 = vunpack.c.l.b16 %v320
    %v1109 = vunpack.c.l.b16 %v321
    %v1110 = vunpack.c.l.b16 %v322
    %v1111 = vunpack.c.l.b16 %v323
    %v1112 = vunpack.c.l.b16 %v324
    %v1113 = vunpack.c.l.b16 %v325
    %v1114 = vunpack.c.l.b16 %v326
    %v1115 = vunpack.c.l.b16 %v327
    %v1116 = vunpack.c.l.b16 %v328
    %v1117 = vunpack.c.l.b16 %v329
    %v1118 = vunpack.c.l.b16 %v330
    %v1119 = vunpack.c.l.b16 %v331
    %v1120 = vunpack.c.l.b16 %v332
    %v1121 = vunpack.c.l.b16 %v333
    %v1122 = vunpack.c.l.b16 %v334
    %v1123 = vunpack.c.l.b16 %v335
    %v1124 = vunpack.c.l.b16 %v336
    %v1125 = vunpack.c.l.b16 %v337
    %v1126 = vunpack.c.l.b16 %v338
    %v1127 = vunpack.c.l.b16 %v339
    %v1128 = vunpack.c.l.b16 %v340
    %v1129 = vunpack.c.l.b16 %v341
    %v1130 = vunpack.c.l.b16 %v342
    %v1131 = vunpack.c.l.b16 %v343
    %v1132 = vunpack.c.l.b16 %v344
    %v1133 = vunpack.c.l.b16 %v345
    %v1134 = vunpack.c.l.b16 %v346
    %v1135 = vunpack.c.l.b16 %v347
    %v1136 = vunpack.c.l.b16 %v348
    %v1137 = vunpack.c.l.b16 %v349
    %v1138 = vunpack.c.l.b16 %v350
    %v1139 = vunpack.c.l.b16 %v351
    %v1140 = vunpack.c.l.b16 %v352
    %v1141 = vunpack.c.l.b16 %v353
    %v1142 = vunpack.c.l.b16 %v354
    %v1143 = vunpack.c.l.b16 %v355
    %v1144 = vunpack.c.l.b16 %v356
    %v1145 = vunpack.c.l.b16 %v357
    %v1146 = vunpack.c.l.b16 %v358
    %v1147 = vunpack.c.l.b16 %v359
    %v1148 = vunpack.c.l.b16 %v360
    %v1149 = vunpack.c.l.b16 %v361
    %v1150 = vunpack.c.l.b16 %v362
    %v1151 = vunpack.c.l.b16 %v363
    %v1152 = vunpack.c.l.b16 %v364
    %v1153 = vunpack.c.l.b16 %v365
    %v1154 = vunpack.c.l.b16 %v366
    %v1155 = vunpack.c.l.b16 %v367
    %v1156 = vunpack.c.l.b16 %v368
    %v1157 = vunpack.c.l.b16 %v369
    %v1158 = vunpack.c.l.b16 %v370
    %v1159 = vunpack.c.l.b16 %v371
    %v1160 = vunpack.c.l.b16 %v372
    %v1161 = vunpack.c.l.b16 %v373
    %v1162 = vunpack.c.l.b16 %v374
    %v1163 = vunpack.c.l.b16 %v375
    %v1164 = vunpack.c.l.b16 %v376
    %v1165 = vunpack.c.l.b16 %v377
    %v1166 = vunpack.c.l.b16 %v378
    %v1167 = vunpack.c.l.b16 %v379
    %v1168 = vunpack.c.l.b16 %v380
    %v1169 = vunpack.c.l.b16 %v381
    %v1170 = vunpack.c.l.b16 %v382
    %v1171 = vunpack.c.l.b16 %v383
    %v1172 = vunpack.c.l.b16 %v384
    %v1173 = vunpack.c.l.b16 %v385
    %v1174 = vunpack.c.l.b16 %v386
    %v1175 = vunpack.c.l.b16 %v387
    %v1176 = vunpack.c.l.b16 %v388
    %v1177 = vunpack.c.l.b16 %v389
    %v1178 = vunpack.c.l.b16 %v390
    %v1179 = vunpack.c.l.b16 %v391
    %v1180 = vunpack.c.l.b16 %v392
    %v1181 = vunpack.c.l.b16 %v393
    %v1182 = vunpack.c.l.b16 %v394
    %v1183 = vunpack.c.l.b16 %v395
    %v1184 = vunpack.c.l.b16 %v396
    %v1185 = vunpack.c.l.b16 %v397
    %v1186 = vunpack.c.l.b16 %v398
    %v1187 = vunpack.c.l.b16 %v399
    %v1188 = vunpack.c.l.b16 %v400
    %v1189 = vunpack.c.l.b16 %v401
    %v1190 = vunpack.c.l.b16 %v402
    %v1191 = vunpack.c.l.b16 %v403
    %v1192 = vunpack.c.l.b16 %v404
    %v1193 = vunpack.c.l.b16 %v405
    %v1194 = vunpack.c.l.b16 %v406
    %v1195 = vunpack.c.l.b16 %v407
    %v1196 = vunpack.c.l.b16 %v408
    %v1197 = vunpack.c.l.b16 %v409
    %v1198 = vunpack.c.l.b16 %v410
    %v1199 = vunpack.c.l.b16 %v411
    %v1200 = vunpack.c.l.b16 %v412
    %v1201 = vunpack.c.l.b16 %v413
    %v1202 = vunpack.c.l.b16 %v414
    %v1203 = vunpack.c.l.b16 %v415
    %v1204 = vunpack.c.l.b16 %v416
    %v1205 = vunpack.c.l.b16 %v417
    %v1206 = vunpack.c.l.b16 %v418
    %v1207 = vunpack.c.l.b16 %v419
    %v1208 = vunpack.c.l.b16 %v420
    %v1209 = vunpack.c.l.b16 %v421
    %v1210 = vunpack.c.l.b16 %v422
    %v1211 = vunpack.c.l.b16 %v423
    %v1212 = vunpack.c.l.b16 %v424
    %v1213 = vunpack.c.l.b16 %v425
    %v1214 = vunpack.c.l.b16 %v426
    %v1215 = vunpack.c.l.b16 %v427
    %v1216 = vunpack.c.l.b16 %v428
    %v1217 = vunpack.c.l.b16 %v429
    %v1218 = vunpack.c.l.b16 %v430
    %v1219 = vunpack.c.l.b16 %v431
    %v1220 = vunpack.c.l.b16 %v432
    %v1221 = vunpack.c.l.b16 %v433
    %v1222 = vunpack.c.l.b16 %v434
    %v1223 = vunpack.c.l.b16 %v435
    %v1224 = vunpack.c.l.b16 %v436
    %v1225 = vunpack.c.l.b16 %v437
    %v1226 = vunpack.c.l.b16 %v438
    %v1227 = vunpack.c.l.b16 %v439
    %v1228 = vunpack.c.l.b16 %v440
    %v1229 = vunpack.c.l.b16 %v441
    %v1230 = vunpack.c.l.b16 %v442
    %v1231 = vunpack.c.l.b16 %v443
    %v1232 = vunpack.c.l.b16 %v444
    %v1233 = vunpack.c.l.b16 %v445
    %v1234 = vunpack.c.l.b16 %v446
    %v1235 = vunpack.c.l.b16 %v447
    %v1236 = vunpack.c.l.b16 %v448
    %v1237 = vunpack.c.l.b16 %v449
    %v1238 = vunpack.c.l.b16 %v450
    %v1239 = vunpack.c.l.b16 %v451
    %v1240 = vunpack.c.l.b16 %v452
    %v1241 = vunpack.c.l.b16 %v453
    %v1242 = vunpack.c.l.b16 %v454
    %v1243 = vunpack.c.l.b16 %v455
    %v1244 = vunpack.c.l.b16 %v456
    %v1245 = vunpack.c.l.b16 %v457
    %v1246 = vunpack.c.l.b16 %v458
    %v1247 = vunpack.c.l.b16 %v459
    %v1248 = vunpack.c.l.b16 %v460
    %v1249 = vunpack.c.l.b16 %v461
    %v1250 = vunpack.c.l.b16 %v462
    %v1251 = vunpack.c.l.b16 %v463
    %v1252 = vunpack.c.l.b16 %v464
    %v1253 = vunpack.c.l.b16 %v465
    %v1254 = vunpack.c.l.b16 %v466
    %v1255 = vunpack.c.l.b16 %v467
    %v1256 = vunpack.c.l.b16 %v468
    %v1257 = vunpack.c.l.b16 %v469
    %v1258 = vunpack.c.l.b16 %v470
    %v1259 = vunpack.c.l.b16 %v471
    %v1260 = vunpack.c.l.b16 %v472
    %v1261 = vunpack.c.l.b16 %v473
    %v1262 = vunpack.c.l.b16 %v474
    %v1263 = vunpack.c.l.b16 %v475
    %v1264 = vunpack.c.l.b16 %v476
    %v1265 = vunpack.c.l.b16 %v477
    %v1266 = vunpack.c.l.b16 %v478
    %v1267 = vunpack.c.l.b16 %v479
    %v1268 = vunpack.c.l.b16 %v480
    %v1269 = vunpack.c.l.b16 %v481
    %v1270 = vunpack.c.l.b16 %v482
    %v1271 = vunpack.c.l.b16 %v483
    %v1272 = vunpack.c.l.b16 %v484
    %v1273 = vunpack.c.l.b16 %v485
    %v1274 = vunpack.c.l.b16 %v486
    %v1275 = vunpack.c.l.b16 %v487
    %v1276 = vunpack.c.l.b16 %v488
    %v1277 = vunpack.c.l.b16 %v489
    %v1278 = vunpack.c.l.b16 %v490
    %v1279 = vunpack.c.l.b16 %v491
    %v1280 = vunpack.c.l.b16 %v492
    %v1281 = vunpack.c.l.b16 %v493
    %v1282 = vunpack.c.l.b16 %v494
    %v1283 = vunpack.c.l.b16 %v495
    %v1284 = vunpack.c.l.b16 %v496
    %v1285 = vunpack.c.l.b16 %v497
    %v1286 = vunpack.c.l.b16 %v498
    %v1287 = vunpack.c.l.b16 %v499
    %v1288 = vunpack.c.l.b16 %v500
    %v1289 = vunpack.c.l.b16 %v501
    %v1290 = vunpack.c.l.b16 %v502
    %v1291 = vunpack.c.l.b16 %v503
    %v1292 = vunpack.c.l.b16 %v504
    %v1293 = vunpack.c.l.b16 %v505
    %v1294 = vunpack.c.l.b16 %v506
    %v1295 = vunpack.c.l.b16 %v507
    %v1296 = vunpack.c.l.b16 %v508
    %v1297 = vunpack.c.l.b16 %v509
    %v1298 = vunpack.c.l.b16 %v510
    %v1299 = vunpack.c.l.b16 %v511
    %v1300 = vunpack.c.l.b16 %v512
    %v1301 = vunpack.c.l.b16 %v513
    %v1302 = vunpack.c.l.b16 %v514
    %v1303 = vunpack.c.l.b16 %v515
    %v1304 = vunpack.c.l.b16 %v516
    %v1305 = vunpack.c.l.b16 %v517
    %v1306 = vunpack.c.l.b16 %v518
    %v1307 = vunpack.c.l.b16 %v519
    %v1308 = vunpack.c.l.b16 %v520
    %v1309 = vunpack.c.l.b16 %v521
    %v1310 = vunpack.c.l.b16 %v522
    %v1311 = vunpack.c.l.b16 %v523
    %v1312 = vunpack.c.l.b16 %v524
    %v1313 = vunpack.c.l.b16 %v525
    %v1314 = vunpack.c.l.b16 %v526
    %v1315 = vpack.c.b16 %v924, %v923
    %v1316 = vpack.c.b16 %v926, %v925
    %v1317 = vpack.c.b16 %v928, %v927
    %v1318 = vpack.c.b16 %v930, %v929
    %v1319 = vpack.c.b16 %v932, %v931
    %v1320 = vpack.c.b16 %v934, %v933
    %v1321 = vpack.c.b16 %v936, %v935
    %v1322 = vpack.c.b16 %v938, %v937
    %v1323 = vpack.c.b16 %v940, %v939
    %v1324 = vpack.c.b16 %v942, %v941
    %v1325 = vpack.c.b16 %v944, %v943
    %v1326 = vpack.c.b16 %v946, %v945
    %v1327 = vpack.c.b16 %v948, %v947
    %v1328 = vpack.c.b16 %v950, %v949
    %v1329 = vpack.c.b16 %v952, %v951
    %v1330 = vpack.c.b16 %v954, %v953
    %v1331 = vpack.c.b16 %v956, %v955
    %v1332 = vpack.c.b16 %v958, %v957
    %v1333 = vpack.c.b16 %v960, %v959
    %v1334 = vpack.c.b16 %v962, %v961
    %v1335 = vpack.c.b16 %v964, %v963
    %v1336 = vpack.c.b16 %v966, %v965
    %v1337 = vpack.c.b16 %v968, %v967
    %v1338 = vpack.c.b16 %v970, %v969
    %v1339 = vpack.c.b16 %v972, %v971
    %v1340 = vpack.c.b16 %v974, %v973
    %v1341 = vpack.c.b16 %v976, %v975
    %v1342 = vpack.c.b16 %v978, %v977
    %v1343 = vpack.c.b16 %v980, %v979
    %v1344 = vpack.c.b16 %v982, %v981
    %v1345 = vpack.c.b16 %v984, %v983
    %v1346 = vpack.c.b16 %v986, %v985
    %v1347 = vpack.c.b16 %v988, %v987
    %v1348 = vpack.c.b16 %v990, %v989
    %v1349 = vpack.c.b16 %v992, %v991
    %v1350 = vpack.c.b16 %v994, %v993
    %v1351 = vpack.c.b16 %v996, %v995
    %v1352 = vpack.c.b16 %v998, %v997
    %v1353 = vpack.c.b16 %v1000, %v999
    %v1354 = vpack.c.b16 %v1002, %v1001
    %v1355 = vpack.c.b16 %v1004, %v1003
    %v1356 = vpack.c.b16 %v1006, %v1005
    %v1357 = vpack.c.b16 %v1008, %v1007
    %v1358 = vpack.c.b16 %v1010, %v1009
    %v1359 = vpack.c.b16 %v1012, %v1011
    %v1360 = vpack.c.b16 %v1014, %v1013
    %v1361 = vpack.c.b16 %v1016, %v1015
    %v1362 = vpack.c.b16 %v1018, %v1017
    %v1363 = vpack.c.b16 %v1020, %v1019
    %v1364 = vpack.c.b16 %v1022, %v1021
    %v1365 = vpack.c.b16 %v1024, %v1023
    %v1366 = vpack.c.b16 %v1026, %v1025
    %v1367 = vpack.c.b16 %v1028, %v1027
    %v1368 = vpack.c.b16 %v1030, %v1029
    %v1369 = vpack.c.b16 %v1032, %v1031
    %v1370 = vpack.c.b16 %v1034, %v1033
    %v1371 = vpack.c.b16 %v1036, %v1035
    %v1372 = vpack.c.b16 %v1038, %v1037
    %v1373 = vpack.c.b16 %v1040, %v1039
    %v1374 = vpack.c.b16 %v1042, %v1041
    %v1375 = vpack.c.b16 %v1044, %v1043
    %v1376 = vpack.c.b16 %v1046, %v1045
    %v1377 = vpack.c.b16 %v1048, %v1047
    %v1378 = vpack.c.b16 %v1050, %v1049
    %v1379 = vpack.c.b16 %v1052, %v1051
    %v1380 = vpack.c.b16 %v1054, %v1053
    %v1381 = vpack.c.b16 %v1056, %v1055
    %v1382 = vpack.c.b16 %v1058, %v1057
    %v1383 = vpack.c.b16 %v1060, %v1059
    %v1384 = vpack.c.b16 %v1062, %v1061
    %v1385 = vpack.c.b16 %v1064, %v1063
    %v1386 = vpack.c.b16 %v1066, %v1065
    %v1387 = vpack.c.b16 %v1068, %v1067
    %v1388 = vpack.c.b16 %v1070, %v1069
    %v1389 = vpack.c.b16 %v1072, %v1071
    %v1390 = vpack.c.b16 %v1074, %v1073
    %v1391 = vpack.c.b16 %v1076, %v1075
    %v1392 = vpack.c.b16 %v1078, %v1077
    %v1393 = vpack.c.b16 %v1080, %v1079
    %v1394 = vpack.c.b16 %v1082, %v1081
    %v1395 = vpack.c.b16 %v1084, %v1083
    %v1396 = vpack.c.b16 %v1086, %v1085
    %v1397 = vpack.c.b16 %v1088, %v1087
    %v1398 = vpack.c.b16 %v1090, %v1089
    %v1399 = vpack.c.b16 %v1092, %v1091
    %v1400 = vpack.c.b16 %v1094, %v1093
    %v1401 = vpack.c.b16 %v1096, %v1095
    %v1402 = vpack.c.b16 %v1098, %v1097
    %v1403 = vpack.c.b16 %v1100, %v1099
    %v1404 = vpack.c.b16 %v1102, %v1101
    %v1405 = vpack.c.b16 %v1104, %v1103
    %v1406 = vpack.c.b16 %v1106, %v1105
    %v1407 = vpack.c.b16 %v1108, %v1107
    %v1408 = vpack.c.b16 %v1110, %v1109
    %v1409 = vpack.c.b16 %v1112, %v1111
    %v1410 = vpack.c.b16 %v1114, %v1113
    %v1411 = vpack.c.b16 %v1116, %v1115
    %v1412 = vpack.c.b16 %v1118, %v1117
    %v1413 = vpack.c.b16 %v1120, %v1119
    %v1414 = vpack.c.b16 %v1122, %v1121
    %v1415 = vpack.c.b16 %v1124, %v1123
    %v1416 = vpack.c.b16 %v1126, %v1125
    %v1417 = vpack.c.b16 %v1128, %v1127
    %v1418 = vpack.c.b16 %v1130, %v1129
    %v1419 = vpack.c.b16 %v1132, %v1131
    %v1420 = vpack.c.b16 %v1134, %v1133
    %v1421 = vpack.c.b16 %v1136, %v1135
    %v1422 = vpack.c.b16 %v1138, %v1137
    %v1423 = vpack.c.b16 %v1140, %v1139
    %v1424 = vpack.c.b16 %v1142, %v1141
    %v1425 = vpack.c.b16 %v1144, %v1143
    %v1426 = vpack.c.b16 %v1146, %v1145
    %v1427 = vpack.c.b16 %v1148, %v1147
    %v1428 = vpack.c.b16 %v1150, %v1149
    %v1429 = vpack.c.b16 %v1152, %v1151
    %v1430 = vpack.c.b16 %v1154, %v1153
    %v1431 = vpack.c.b16 %v1156, %v1155
    %v1432 = vpack.c.b16 %v1158, %v1157
    %v1433 = vpack.c.b16 %v1160, %v1159
    %v1434 = vpack.c.b16 %v1162, %v1161
    %v1435 = vpack.c.b16 %v1164, %v1163
    %v1436 = vpack.c.b16 %v1166, %v1165
    %v1437 = vpack.c.b16 %v1168, %v1167
    %v1438 = vpack.c.b16 %v1170, %v1169
    %v1439 = vpack.c.b16 %v1172, %v1171
    %v1440 = vpack.c.b16 %v1174, %v1173
    %v1441 = vpack.c.b16 %v1176, %v1175
    %v1442 = vpack.c.b16 %v1178, %v1177
    %v1443 = vpack.c.b16 %v1180, %v1179
    %v1444 = vpack.c.b16 %v1182, %v1181
    %v1445 = vpack.c.b16 %v1184, %v1183
    %v1446 = vpack.c.b16 %v1186, %v1185
    %v1447 = vpack.c.b16 %v1188, %v1187
    %v1448 = vpack.c.b16 %v1190, %v1189
    %v1449 = vpack.c.b16 %v1192, %v1191
    %v1450 = vpack.c.b16 %v1194, %v1193
    %v1451 = vpack.c.b16 %v1196, %v1195
    %v1452 = vpack.c.b16 %v1198, %v1197
    %v1453 = vpack.c.b16 %v1200, %v1199
    %v1454 = vpack.c.b16 %v1202, %v1201
    %v1455 = vpack.c.b16 %v1204, %v1203
    %v1456 = vpack.c.b16 %v1206, %v1205
    %v1457 = vpack.c.b16 %v1208, %v1207
    %v1458 = vpack.c.b16 %v1210, %v1209
    %v1459 = vpack.c.b16 %v1212, %v1211
    %v1460 = vpack.c.b16 %v1214, %v1213
    %v1461 = vpack.c.b16 %v1216, %v1215
    %v1462 = vpack.c.b16 %v1218, %v1217
    %v1463 = vpack.c.b16 %v1220, %v1219
    %v1464 = vpack.c.b16 %v1222, %v1221
    %v1465 = vpack.c.b16 %v1224, %v1223
    %v1466 = vpack.c.b16 %v1226, %v1225
    %v1467 = vpack.c.b16 %v1228, %v1227
    %v1468 = vpack.c.b16 %v1230, %v1229
    %v1469 = vpack.c.b16 %v1232, %v1231
    %v1470 = vpack.c.b16 %v1234, %v1233
    %v1471 = vpack.c.b16 %v1236, %v1235
    %v1472 = vpack.c.b16 %v1238, %v1237
    %v1473 = vpack.c.b16 %v1240, %v1239
    %v1474 = vpack.c.b16 %v1242, %v1241
    %v1475 = vpack.c.b16 %v1244, %v1243
    %v1476 = vpack.c.b16 %v1246, %v1245
    %v1477 = vpack.c.b16 %v1248, %v1247
    %v1478 = vpack.c.b16 %v1250, %v1249
    %v1479 = vpack.c.b16 %v1252, %v1251
    %v1480 = vpack.c.b16 %v1254, %v1253
    %v1481 = vpack.c.b16 %v1256, %v1255
    %v1482 = vpack.c.b16 %v1258, %v1257
    %v1483 = vpack.c.b16 %v1260, %v1259
    %v1484 = vpack.c.b16 %v1262, %v1261
    %v1485 = vpack.c.b16 %v1264, %v1263
    %v1486 = vpack.c.b16 %v1266, %v1265
    %v1487 = vpack.c.b16 %v1268, %v1267
    %v1488 = vpack.c.b16 %v1270, %v1269
    %v1489 = vpack.c.b16 %v1272, %v1271
    %v1490 = vpack.c.b16 %v1274, %v1273
    %v1491 = vpack.c.b16 %v1276, %v1275
    %v1492 = vpack.c.b16 %v1278, %v1277
    %v1493 = vpack.c.b16 %v1280, %v1279
    %v1494 = vpack.c.b16 %v1282, %v1281
    %v1495 = vpack.c.b16 %v1284, %v1283
    %v1496 = vpack.c.b16 %v1286, %v1285
    %v1497 = vpack.c.b16 %v1288, %v1287
    %v1498 = vpack.c.b16 %v1290, %v1289
    %v1499 = vpack.c.b16 %v1292, %v1291
    %v1500 = vpack.c.b16 %v1294, %v1293
    %v1501 = vpack.c.b16 %v1296, %v1295
    %v1502 = vpack.c.b16 %v1298, %v1297
    %v1503 = vpack.c.b16 %v1300, %v1299
    %v1504 = vpack.c.b16 %v1302, %v1301
    %v1505 = vpack.c.b16 %v1304, %v1303
    %v1506 = vpack.c.b16 %v1306, %v1305
    %v1507 = vpack.c.b16 %v1308, %v1307
    %v1508 = vpack.c.b16 %v1310, %v1309
    %v1509 = vpack.c.b16 %v1312, %v1311
    %v1510 = vpack.c.b16 %v1314, %v1313
    %vm1707 = vcmask 523264
    %v1709 = vsel %vm1707, %v134, 0
    %1711 = vmatpush.bf16.msra.mxu0 %v1322
    %1712 = vmatpush.bf16.msra.mxu0 %v1321
    %1713 = vmatpush.bf16.msra.mxu0 %v1320
    %1714 = vmatpush.bf16.msra.mxu0 %v1319
    %1715 = vmatpush.bf16.msra.mxu0 %v1318
    %1716 = vmatpush.bf16.msra.mxu0 %v1317
    %1717 = vmatpush.bf16.msra.mxu0 %v1316
    %1718 = vmatpush.bf16.msra.mxu0 %v1315
    %1719 = vmatmul.bf16.gmra.mxu0 %v110
    %v1720 = vpop.f32.mrf.mxu0
    %v1721 = vadd.f32 %v529, %v1720
    %v1722 = vpop.f32.mrf.mxu0
    %1723 = vdwg.mxu0
    %1724 = vmatpush.bf16.msra.mxu0 %v1330
    %1725 = vmatpush.bf16.msra.mxu0 %v1329
    %1726 = vmatpush.bf16.msra.mxu0 %v1328
    %1727 = vmatpush.bf16.msra.mxu0 %v1327
    %1728 = vmatpush.bf16.msra.mxu0 %v1326
    %1729 = vmatpush.bf16.msra.mxu0 %v1325
    %1730 = vmatpush.bf16.msra.mxu0 %v1324
    %1731 = vmatpush.bf16.msra.mxu0 %v1323
    %1732 = vmatmul.bf16.gmra.mxu0 %v111
    %v1733 = vpop.f32.mrf.mxu0
    %v1734 = vadd.f32 %v1721, %v1733
    %v1735 = vpop.f32.mrf.mxu0
    %1736 = vdwg.mxu0
    %1737 = vmatpush.bf16.msra.mxu0 %v1338
    %1738 = vmatpush.bf16.msra.mxu0 %v1337
    %1739 = vmatpush.bf16.msra.mxu0 %v1336
    %1740 = vmatpush.bf16.msra.mxu0 %v1335
    %1741 = vmatpush.bf16.msra.mxu0 %v1334
    %1742 = vmatpush.bf16.msra.mxu0 %v1333
    %1743 = vmatpush.bf16.msra.mxu0 %v1332
    %1744 = vmatpush.bf16.msra.mxu0 %v1331
    %1745 = vmatmul.bf16.gmra.mxu0 %v112
    %v1746 = vpop.f32.mrf.mxu0
    %v1747 = vadd.f32 %v1734, %v1746
    %v1748 = vpop.f32.mrf.mxu0
    %1749 = vdwg.mxu0
    %1750 = vmatpush.bf16.msra.mxu0 %v1346
    %1751 = vmatpush.bf16.msra.mxu0 %v1345
    %1752 = vmatpush.bf16.msra.mxu0 %v1344
    %1753 = vmatpush.bf16.msra.mxu0 %v1343
    %1754 = vmatpush.bf16.msra.mxu0 %v1342
    %1755 = vmatpush.bf16.msra.mxu0 %v1341
    %1756 = vmatpush.bf16.msra.mxu0 %v1340
    %1757 = vmatpush.bf16.msra.mxu0 %v1339
    %1758 = vmatmul.bf16.gmra.mxu0 %v113
    %v1759 = vpop.f32.mrf.mxu0
    %v1760 = vadd.f32 %v1747, %v1759
    %v1761 = vpop.f32.mrf.mxu0
    %1762 = vdwg.mxu0
    %1763 = vmatpush.bf16.msra.mxu0 %v1354
    %1764 = vmatpush.bf16.msra.mxu0 %v1353
    %1765 = vmatpush.bf16.msra.mxu0 %v1352
    %1766 = vmatpush.bf16.msra.mxu0 %v1351
    %1767 = vmatpush.bf16.msra.mxu0 %v1350
    %1768 = vmatpush.bf16.msra.mxu0 %v1349
    %1769 = vmatpush.bf16.msra.mxu0 %v1348
    %1770 = vmatpush.bf16.msra.mxu0 %v1347
    %1771 = vmatmul.bf16.gmra.mxu0 %v114
    %v1772 = vpop.f32.mrf.mxu0
    %v1773 = vadd.f32 %v1760, %v1772
    %v1774 = vpop.f32.mrf.mxu0
    %1775 = vdwg.mxu0
    %1776 = vmatpush.bf16.msra.mxu0 %v1362
    %1777 = vmatpush.bf16.msra.mxu0 %v1361
    %1778 = vmatpush.bf16.msra.mxu0 %v1360
    %1779 = vmatpush.bf16.msra.mxu0 %v1359
    %1780 = vmatpush.bf16.msra.mxu0 %v1358
    %1781 = vmatpush.bf16.msra.mxu0 %v1357
    %1782 = vmatpush.bf16.msra.mxu0 %v1356
    %1783 = vmatpush.bf16.msra.mxu0 %v1355
    %1784 = vmatmul.bf16.gmra.mxu0 %v115
    %v1785 = vpop.f32.mrf.mxu0
    %v1786 = vadd.f32 %v1773, %v1785
    %v1787 = vpop.f32.mrf.mxu0
    %1788 = vdwg.mxu0
    %1789 = vmatpush.bf16.msra.mxu0 %v1370
    %1790 = vmatpush.bf16.msra.mxu0 %v1369
    %1791 = vmatpush.bf16.msra.mxu0 %v1368
    %1792 = vmatpush.bf16.msra.mxu0 %v1367
    %1793 = vmatpush.bf16.msra.mxu0 %v1366
    %1794 = vmatpush.bf16.msra.mxu0 %v1365
    %1795 = vmatpush.bf16.msra.mxu0 %v1364
    %1796 = vmatpush.bf16.msra.mxu0 %v1363
    %1797 = vmatmul.bf16.gmra.mxu0 %v116
    %v1798 = vpop.f32.mrf.mxu0
    %v1799 = vadd.f32 %v1786, %v1798
    %v1800 = vpop.f32.mrf.mxu0
    %1801 = vdwg.mxu0
    %1802 = vmatpush.bf16.msra.mxu0 %v1378
    %1803 = vmatpush.bf16.msra.mxu0 %v1377
    %1804 = vmatpush.bf16.msra.mxu0 %v1376
    %1805 = vmatpush.bf16.msra.mxu0 %v1375
    %1806 = vmatpush.bf16.msra.mxu0 %v1374
    %1807 = vmatpush.bf16.msra.mxu0 %v1373
    %1808 = vmatpush.bf16.msra.mxu0 %v1372
    %1809 = vmatpush.bf16.msra.mxu0 %v1371
    %1810 = vmatmul.bf16.gmra.mxu0 %v117
    %v1811 = vpop.f32.mrf.mxu0
    %v1812 = vadd.f32 %v1799, %v1811
    %v1813 = vpop.f32.mrf.mxu0
    %1814 = vdwg.mxu0
    %1815 = vmatpush.bf16.msra.mxu0 %v1386
    %1816 = vmatpush.bf16.msra.mxu0 %v1385
    %1817 = vmatpush.bf16.msra.mxu0 %v1384
    %1818 = vmatpush.bf16.msra.mxu0 %v1383
    %1819 = vmatpush.bf16.msra.mxu0 %v1382
    %1820 = vmatpush.bf16.msra.mxu0 %v1381
    %1821 = vmatpush.bf16.msra.mxu0 %v1380
    %1822 = vmatpush.bf16.msra.mxu0 %v1379
    %1823 = vmatmul.bf16.gmra.mxu0 %v118
    %v1824 = vpop.f32.mrf.mxu0
    %v1825 = vadd.f32 %v1812, %v1824
    %v1826 = vpop.f32.mrf.mxu0
    %1827 = vdwg.mxu0
    %1828 = vmatpush.bf16.msra.mxu0 %v1394
    %1829 = vmatpush.bf16.msra.mxu0 %v1393
    %1830 = vmatpush.bf16.msra.mxu0 %v1392
    %1831 = vmatpush.bf16.msra.mxu0 %v1391
    %1832 = vmatpush.bf16.msra.mxu0 %v1390
    %1833 = vmatpush.bf16.msra.mxu0 %v1389
    %1834 = vmatpush.bf16.msra.mxu0 %v1388
    %1835 = vmatpush.bf16.msra.mxu0 %v1387
    %1836 = vmatmul.bf16.gmra.mxu0 %v119
    %v1837 = vpop.f32.mrf.mxu0
    %v1838 = vadd.f32 %v1825, %v1837
    %v1839 = vpop.f32.mrf.mxu0
    %1840 = vdwg.mxu0
    %1841 = vmatpush.bf16.msra.mxu0 %v1402
    %1842 = vmatpush.bf16.msra.mxu0 %v1401
    %1843 = vmatpush.bf16.msra.mxu0 %v1400
    %1844 = vmatpush.bf16.msra.mxu0 %v1399
    %1845 = vmatpush.bf16.msra.mxu0 %v1398
    %1846 = vmatpush.bf16.msra.mxu0 %v1397
    %1847 = vmatpush.bf16.msra.mxu0 %v1396
    %1848 = vmatpush.bf16.msra.mxu0 %v1395
    %1849 = vmatmul.bf16.gmra.mxu0 %v120
    %v1850 = vpop.f32.mrf.mxu0
    %v1851 = vadd.f32 %v1838, %v1850
    %v1852 = vpop.f32.mrf.mxu0
    %1853 = vdwg.mxu0
    %1854 = vmatpush.bf16.msra.mxu0 %v1410
    %1855 = vmatpush.bf16.msra.mxu0 %v1409
    %1856 = vmatpush.bf16.msra.mxu0 %v1408
    %1857 = vmatpush.bf16.msra.mxu0 %v1407
    %1858 = vmatpush.bf16.msra.mxu0 %v1406
    %1859 = vmatpush.bf16.msra.mxu0 %v1405
    %1860 = vmatpush.bf16.msra.mxu0 %v1404
    %1861 = vmatpush.bf16.msra.mxu0 %v1403
    %1862 = vmatmul.bf16.gmra.mxu0 %v121
    %v1863 = vpop.f32.mrf.mxu0
    %v1864 = vadd.f32 %v1851, %v1863
    %v1865 = vpop.f32.mrf.mxu0
    %1866 = vdwg.mxu0
    %1867 = vmatpush.bf16.msra.mxu0 %v1418
    %1868 = vmatpush.bf16.msra.mxu0 %v1417
    %1869 = vmatpush.bf16.msra.mxu0 %v1416
    %1870 = vmatpush.bf16.msra.mxu0 %v1415
    %1871 = vmatpush.bf16.msra.mxu0 %v1414
    %1872 = vmatpush.bf16.msra.mxu0 %v1413
    %1873 = vmatpush.bf16.msra.mxu0 %v1412
    %1874 = vmatpush.bf16.msra.mxu0 %v1411
    %1875 = vmatmul.bf16.gmra.mxu0 %v122
    %v1876 = vpop.f32.mrf.mxu0
    %v1877 = vadd.f32 %v1864, %v1876
    %v1878 = vpop.f32.mrf.mxu0
    %1879 = vdwg.mxu0
    %1880 = vmatpush.bf16.msra.mxu0 %v1426
    %1881 = vmatpush.bf16.msra.mxu0 %v1425
    %1882 = vmatpush.bf16.msra.mxu0 %v1424
    %1883 = vmatpush.bf16.msra.mxu0 %v1423
    %1884 = vmatpush.bf16.msra.mxu0 %v1422
    %1885 = vmatpush.bf16.msra.mxu0 %v1421
    %1886 = vmatpush.bf16.msra.mxu0 %v1420
    %1887 = vmatpush.bf16.msra.mxu0 %v1419
    %1888 = vmatmul.bf16.gmra.mxu0 %v123
    %v1889 = vpop.f32.mrf.mxu0
    %v1890 = vadd.f32 %v1877, %v1889
    %v1891 = vpop.f32.mrf.mxu0
    %1892 = vdwg.mxu0
    %1893 = vmatpush.bf16.msra.mxu0 %v1434
    %1894 = vmatpush.bf16.msra.mxu0 %v1433
    %1895 = vmatpush.bf16.msra.mxu0 %v1432
    %1896 = vmatpush.bf16.msra.mxu0 %v1431
    %1897 = vmatpush.bf16.msra.mxu0 %v1430
    %1898 = vmatpush.bf16.msra.mxu0 %v1429
    %1899 = vmatpush.bf16.msra.mxu0 %v1428
    %1900 = vmatpush.bf16.msra.mxu0 %v1427
    %1901 = vmatmul.bf16.gmra.mxu0 %v124
    %v1902 = vpop.f32.mrf.mxu0
    %v1903 = vadd.f32 %v1890, %v1902
    %v1904 = vpop.f32.mrf.mxu0
    %1905 = vdwg.mxu0
    %1906 = vmatpush.bf16.msra.mxu0 %v1442
    %1907 = vmatpush.bf16.msra.mxu0 %v1441
    %1908 = vmatpush.bf16.msra.mxu0 %v1440
    %1909 = vmatpush.bf16.msra.mxu0 %v1439
    %1910 = vmatpush.bf16.msra.mxu0 %v1438
    %1911 = vmatpush.bf16.msra.mxu0 %v1437
    %1912 = vmatpush.bf16.msra.mxu0 %v1436
    %1913 = vmatpush.bf16.msra.mxu0 %v1435
    %1914 = vmatmul.bf16.gmra.mxu0 %v125
    %v1915 = vpop.f32.mrf.mxu0
    %v1916 = vadd.f32 %v1903, %v1915
    %v1917 = vpop.f32.mrf.mxu0
    %1918 = vdwg.mxu0
    %1919 = vmatpush.bf16.msra.mxu0 %v1450
    %1920 = vmatpush.bf16.msra.mxu0 %v1449
    %1921 = vmatpush.bf16.msra.mxu0 %v1448
    %1922 = vmatpush.bf16.msra.mxu0 %v1447
    %1923 = vmatpush.bf16.msra.mxu0 %v1446
    %1924 = vmatpush.bf16.msra.mxu0 %v1445
    %1925 = vmatpush.bf16.msra.mxu0 %v1444
    %1926 = vmatpush.bf16.msra.mxu0 %v1443
    %1927 = vmatmul.bf16.gmra.mxu0 %v126
    %v1928 = vpop.f32.mrf.mxu0
    %v1929 = vadd.f32 %v1916, %v1928
    %v1930 = vpop.f32.mrf.mxu0
    %1931 = vdwg.mxu0
    %1932 = vmatpush.bf16.msra.mxu0 %v1458
    %1933 = vmatpush.bf16.msra.mxu0 %v1457
    %1934 = vmatpush.bf16.msra.mxu0 %v1456
    %1935 = vmatpush.bf16.msra.mxu0 %v1455
    %1936 = vmatpush.bf16.msra.mxu0 %v1454
    %1937 = vmatpush.bf16.msra.mxu0 %v1453
    %1938 = vmatpush.bf16.msra.mxu0 %v1452
    %1939 = vmatpush.bf16.msra.mxu0 %v1451
    %1940 = vmatmul.bf16.gmra.mxu0 %v127
    %v1941 = vpop.f32.mrf.mxu0
    %v1942 = vadd.f32 %v1929, %v1941
    %v1943 = vpop.f32.mrf.mxu0
    %1944 = vdwg.mxu0
    %1945 = vmatpush.bf16.msra.mxu0 %v1466
    %1946 = vmatpush.bf16.msra.mxu0 %v1465
    %1947 = vmatpush.bf16.msra.mxu0 %v1464
    %1948 = vmatpush.bf16.msra.mxu0 %v1463
    %1949 = vmatpush.bf16.msra.mxu0 %v1462
    %1950 = vmatpush.bf16.msra.mxu0 %v1461
    %1951 = vmatpush.bf16.msra.mxu0 %v1460
    %1952 = vmatpush.bf16.msra.mxu0 %v1459
    %1953 = vmatmul.bf16.gmra.mxu0 %v128
    %v1954 = vpop.f32.mrf.mxu0
    %v1955 = vadd.f32 %v1942, %v1954
    %v1956 = vpop.f32.mrf.mxu0
    %1957 = vdwg.mxu0
    %1958 = vmatpush.bf16.msra.mxu0 %v1474
    %1959 = vmatpush.bf16.msra.mxu0 %v1473
    %1960 = vmatpush.bf16.msra.mxu0 %v1472
    %1961 = vmatpush.bf16.msra.mxu0 %v1471
    %1962 = vmatpush.bf16.msra.mxu0 %v1470
    %1963 = vmatpush.bf16.msra.mxu0 %v1469
    %1964 = vmatpush.bf16.msra.mxu0 %v1468
    %1965 = vmatpush.bf16.msra.mxu0 %v1467
    %1966 = vmatmul.bf16.gmra.mxu0 %v129
    %v1967 = vpop.f32.mrf.mxu0
    %v1968 = vadd.f32 %v1955, %v1967
    %v1969 = vpop.f32.mrf.mxu0
    %1970 = vdwg.mxu0
    %1971 = vmatpush.bf16.msra.mxu0 %v1482
    %1972 = vmatpush.bf16.msra.mxu0 %v1481
    %1973 = vmatpush.bf16.msra.mxu0 %v1480
    %1974 = vmatpush.bf16.msra.mxu0 %v1479
    %1975 = vmatpush.bf16.msra.mxu0 %v1478
    %1976 = vmatpush.bf16.msra.mxu0 %v1477
    %1977 = vmatpush.bf16.msra.mxu0 %v1476
    %1978 = vmatpush.bf16.msra.mxu0 %v1475
    %1979 = vmatmul.bf16.gmra.mxu0 %v130
    %v1980 = vpop.f32.mrf.mxu0
    %v1981 = vadd.f32 %v1968, %v1980
    %v1982 = vpop.f32.mrf.mxu0
    %1983 = vdwg.mxu0
    %1984 = vmatpush.bf16.msra.mxu0 %v1490
    %1985 = vmatpush.bf16.msra.mxu0 %v1489
    %1986 = vmatpush.bf16.msra.mxu0 %v1488
    %1987 = vmatpush.bf16.msra.mxu0 %v1487
    %1988 = vmatpush.bf16.msra.mxu0 %v1486
    %1989 = vmatpush.bf16.msra.mxu0 %v1485
    %1990 = vmatpush.bf16.msra.mxu0 %v1484
    %1991 = vmatpush.bf16.msra.mxu0 %v1483
    %1992 = vmatmul.bf16.gmra.mxu0 %v131
    %v1993 = vpop.f32.mrf.mxu0
    %v1994 = vadd.f32 %v1981, %v1993
    %v1995 = vpop.f32.mrf.mxu0
    %1996 = vdwg.mxu0
    %1997 = vmatpush.bf16.msra.mxu0 %v1498
    %1998 = vmatpush.bf16.msra.mxu0 %v1497
    %1999 = vmatpush.bf16.msra.mxu0 %v1496
    %2000 = vmatpush.bf16.msra.mxu0 %v1495
    %2001 = vmatpush.bf16.msra.mxu0 %v1494
    %2002 = vmatpush.bf16.msra.mxu0 %v1493
    %2003 = vmatpush.bf16.msra.mxu0 %v1492
    %2004 = vmatpush.bf16.msra.mxu0 %v1491
    %2005 = vmatmul.bf16.gmra.mxu0 %v132
    %v2006 = vpop.f32.mrf.mxu0
    %v2007 = vadd.f32 %v1994, %v2006
    %v2008 = vpop.f32.mrf.mxu0
    %2009 = vdwg.mxu0
    %2010 = vmatpush.bf16.msra.mxu0 %v1506
    %2011 = vmatpush.bf16.msra.mxu0 %v1505
    %2012 = vmatpush.bf16.msra.mxu0 %v1504
    %2013 = vmatpush.bf16.msra.mxu0 %v1503
    %2014 = vmatpush.bf16.msra.mxu0 %v1502
    %2015 = vmatpush.bf16.msra.mxu0 %v1501
    %2016 = vmatpush.bf16.msra.mxu0 %v1500
    %2017 = vmatpush.bf16.msra.mxu0 %v1499
    %2018 = vmatmul.bf16.gmra.mxu0 %v133
    %v2019 = vpop.f32.mrf.mxu0
    %v2020 = vadd.f32 %v2007, %v2019
    %v2021 = vpop.f32.mrf.mxu0
    %2022 = vdwg.mxu0
    %2023 = vmatpush.bf16.msra.mxu0 0
    %2024 = vmatpush.bf16.msra.mxu0 0
    %2025 = vmatpush.bf16.msra.mxu0 0
    %2026 = vmatpush.bf16.msra.mxu0 0
    %2027 = vmatpush.bf16.msra.mxu0 %v1510
    %2028 = vmatpush.bf16.msra.mxu0 %v1509
    %2029 = vmatpush.bf16.msra.mxu0 %v1508
    %2030 = vmatpush.bf16.msra.mxu0 %v1507
    %2031 = vmatmul.bf16.gmra.mxu0 %v1709
    %v2032 = vpop.f32.mrf.mxu0
    %v2033 = vadd.f32 %v2020, %v2032
    %v2034 = vpop.f32.mrf.mxu0
    %2035 = vdwg.mxu0
    %v2036 = vmax.f32 %v2033, 0.0
    %v2037 = vpack.c.bf16 %v2036, %v2036
    %v2038 = vld [vmem:[%s3] sm:$0xf]
    %v2039 = vld [vmem:[%s3 + $0x4] sm:$0xf]
    %v2040 = vld [vmem:[%s3 + $0x8] sm:$0xf]
    %v2041 = vld [vmem:[%s3 + $0xc] sm:$0xf]
    %v2042 = vld [vmem:[%s3 + $0x10] sm:$0xf]
    %v2043 = vld [vmem:[%s3 + $0x14] sm:$0xf]
    %v2044 = vld [vmem:[%s3 + $0x18] sm:$0xf]
    %v2045 = vld [vmem:[%s3 + $0x1c] sm:$0xf]
    %v2046 = vld [vmem:[%s3 + $0x20] sm:$0xf]
    %v2047 = vld [vmem:[%s3 + $0x24] sm:$0xf]
    %v2048 = vld [vmem:[%s3 + $0x28] sm:$0xf]
    %v2049 = vld [vmem:[%s3 + $0x2c] sm:$0xf]
    %v2050 = vld [vmem:[%s3 + $0x30] sm:$0xf]
    %v2051 = vld [vmem:[%s3 + $0x34] sm:$0xf]
    %v2052 = vld [vmem:[%s3 + $0x38] sm:$0xf]
    %v2053 = vld [vmem:[%s3 + $0x3c] sm:$0xf]
    %v2054 = vld [vmem:[%s4] sm:$0x1]
    %v2056 = vperm.slane %v2054, 0
    %v2074 = vunpack.c.l.b16 %v2038
    %v2075 = vunpack.c.l.b16 %v2039
    %v2076 = vunpack.c.l.b16 %v2040
    %v2077 = vunpack.c.l.b16 %v2041
    %v2078 = vunpack.c.l.b16 %v2042
    %v2079 = vunpack.c.l.b16 %v2043
    %v2080 = vunpack.c.l.b16 %v2044
    %v2081 = vunpack.c.l.b16 %v2045
    %v2082 = vunpack.c.l.b16 %v2046
    %v2083 = vunpack.c.l.b16 %v2047
    %v2084 = vunpack.c.l.b16 %v2048
    %v2085 = vunpack.c.l.b16 %v2049
    %v2086 = vunpack.c.l.b16 %v2050
    %v2087 = vunpack.c.l.b16 %v2051
    %v2088 = vunpack.c.l.b16 %v2052
    %v2089 = vunpack.c.l.b16 %v2053
    %v2090 = vpack.c.b16 %v2075, %v2074
    %v2091 = vpack.c.b16 %v2077, %v2076
    %v2092 = vpack.c.b16 %v2079, %v2078
    %v2093 = vpack.c.b16 %v2081, %v2080
    %v2094 = vpack.c.b16 %v2083, %v2082
    %v2095 = vpack.c.b16 %v2085, %v2084
    %v2096 = vpack.c.b16 %v2087, %v2086
    %v2097 = vpack.c.b16 %v2089, %v2088
    %2106 = vmatpush.bf16.msra.mxu0 %v2097
    %2107 = vmatpush.bf16.msra.mxu0 %v2096
    %2108 = vmatpush.bf16.msra.mxu0 %v2095
    %2109 = vmatpush.bf16.msra.mxu0 %v2094
    %2110 = vmatpush.bf16.msra.mxu0 %v2093
    %2111 = vmatpush.bf16.msra.mxu0 %v2092
    %2112 = vmatpush.bf16.msra.mxu0 %v2091
    %2113 = vmatpush.bf16.msra.mxu0 %v2090
    %2114 = vmatmul.bf16.gmra.mxu0 %v2037
    %v2115 = vpop.f32.mrf.mxu0
    %v2116 = vadd.f32 %v2056, %v2115
    %v2117 = vpop.f32.mrf.mxu0
    %2118 = vdwg.mxu0
    %2119 = vst [vmem:[#allocation5] sm:$0x3] %v2116
    // Predicated region
    $region26: #{cnn_forward.3} parent=1 // pred_check
      _
    $region27: #{cnn_forward.3} parent=1 // pred_check_branch
      %2121 = sbr.rel (0) target = $region29
    $region28: #{cnn_forward.3} parent=1 // pred_region
      %2123 = vsyncadd [#allocation4], 0
      %s2125 = sshll.u32 [#allocation5], 4
      %s2126 = int_to_ptr.vmem [resolvable:$true] %s2125
      %s2127 = sshll.u32 %s5, 4
      %s2128 = int_to_ptr.hbm [resolvable:$true] %s2127
      %2130 = dma.vmem_to_hbm [thread:$0]  %s2126, 32, %s2128, [#allocation4]
    $region29: #{cnn_forward.3} parent=1 // pred_fallthru
      _
    // Predicated region
    $region30: #{cnn_forward.3} parent=1 // pred_check
      _
    $region31: #{cnn_forward.3} parent=1 // pred_check_branch
      %2132 = sbr.rel (0) target = $region33
    $region32: #{cnn_forward.3} parent=1 // pred_region
      %2134 = dma.done [#allocation4], 32
    $region33: #{cnn_forward.3} parent=1 // pred_fallthru
      _
    %2135 = vsyncpa [#allocation3], 1
    %2136 = vsyncpa [#allocation4], 1

// kernel: cnn_forward.2
$region0: #{cnn_forward.2}
  #allocation0 [shape = 'u32[]', space=smem, size = 0x4, offset = 0x4, fixed_abs, tag = 'smem constant byte address 0x4 - core index']
  #allocation1 [shape = 'u32[72,128]{1,0:T(1,128)}', space=vmem, size = 0x9000, scoped, tag = 'internal scratch']
  #allocation2 [shape = 'f32[16,16,1]{2,1,0:T(8,128)}', space=vmem, size = 0x20000, scoped, tag = 'scratch operand']
  #allocation3 [shape = 'f32[16,16,32]{2,1,0:T(8,128)}', space=vmem, size = 0x20000, scoped, tag = 'scratch operand']
  %s0 = inlined_call_operand.vmem [shape: f32[2,14,14,1], index: 0, kind: input, shape index: {}]
  %s1 = inlined_call_operand.vmem [shape: f32[9,1,1,32], index: 1, kind: input, shape index: {}]
  %s2 = inlined_call_operand.vmem [shape: f32[1,1,32], index: 2, kind: input, shape index: {}]
  %s3 = inlined_call_operand.vmem [shape: f32[9,32,64], index: 3, kind: input, shape index: {}]
  %s4 = inlined_call_operand.vmem [shape: f32[1,1,64], index: 4, kind: input, shape index: {}]
  %s5 = inlined_call_operand.vmem [shape: f32[2,49,64], index: 5, kind: output, shape index: {}]
  %s6 = sld [smem:[#allocation0]]
  $region53: #{cnn_forward.2} parent=0
    _
  %s8 = ssub.s32 1, %s6
  %s9 = scalar_select 0, %s8, %s6
  loop: start=0, step=1, limit=4
  $region2: #{cnn_forward.2} parent=0 // loop_pre_header
    _
  $region3: #{cnn_forward.2} parent=0 // loop_header
    %s11 = sphi 0, %s15
    %p12 = scmp.ge.s32.totalorder %s11, 4
    %s21 = sphi 0, %s23
    %s24 = sphi 0, %s21
    %s25 = sphi 0, %s24
    %s41 = sphi 0, %s25
    %s45 = sphi 0, %s45
    %s47 = sphi 0, %s45
    %s48 = sphi 0, %s47
    %s62 = sphi 0, %s48
    %s66 = sphi 0, %s66
    %s68 = sphi 0, %s66
    %s69 = sphi 0, %s68
    %s83 = sphi 0, %s69
    %s87 = sphi 0, %s87
    %s89 = sphi 0, %s87
    %s90 = sphi 0, %s89
    %s104 = sphi 0, %s90
    %s108 = sphi 0, %s108
    %s110 = sphi 0, %s108
    %s111 = sphi 0, %s110
    %s125 = sphi 0, %s111
    %s131 = sphi 0, %s133
    %s134 = sphi 0, %s131
    %s135 = sphi 0, %s134
    %s151 = sphi 0, %s135
  $region4: #{cnn_forward.2} parent=0 // loop_header_branch
    %14 = sbr.rel (%p12) target = $region8
  $region5: #{cnn_forward.2} parent=0 // loop_body
    %s16 = ssub.s32 %s11, 1
    %s17 = ssub.s32 %s11, 2
    %s18 = sadd.s32 %s11, 1
    %s19 = ssub.s32 %s11, %s18
    %p20 = scmp.eq.s32.totalorder %s19, 0
    %s22 = sadd.s32 %s21, 1
    %s23 = scalar_select %p20, %s21, %s22
    %p26 = pneg %p20
    %p27 = scmp.eq.s32.totalorder %s11, 1
    %p28 = por %p26, %p27
    %p29 = scmp.ne.s32.totalorder %s21, %s24
    %p30 = scmp.eq.s32.totalorder %s11, 0
    %p31 = por %p29, %p30
    %p32 = scmp.ne.s32.totalorder %s21, %s24
    %p33 = scmp.eq.s32.totalorder %s16, 1
    %p34 = por %p32, %p33
    %p35 = scmp.ne.s32.totalorder %s24, %s25
    %p36 = scmp.eq.s32.totalorder %s16, 0
    %p37 = por %p35, %p36
    %p38 = scmp.ne.s32.totalorder %s24, %s25
    %p39 = scmp.eq.s32.totalorder %s17, 1
    %p40 = por %p38, %p39
    %p42 = scmp.ne.s32.totalorder %s25, %s41
    %p43 = scmp.eq.s32.totalorder %s17, 0
    %p44 = por %p42, %p43
    %s46 = sadd.s32 %s45, 1
    %p49 = scmp.eq.s32.totalorder %s11, 1
    %p50 = scmp.ne.s32.totalorder %s45, %s47
    %p51 = scmp.eq.s32.totalorder %s11, 0
    %p52 = por %p50, %p51
    %p53 = scmp.ne.s32.totalorder %s45, %s47
    %p54 = scmp.eq.s32.totalorder %s16, 1
    %p55 = por %p53, %p54
    %p56 = scmp.ne.s32.totalorder %s47, %s48
    %p57 = scmp.eq.s32.totalorder %s16, 0
    %p58 = por %p56, %p57
    %p59 = scmp.ne.s32.totalorder %s47, %s48
    %p60 = scmp.eq.s32.totalorder %s17, 1
    %p61 = por %p59, %p60
    %p63 = scmp.ne.s32.totalorder %s48, %s62
    %p64 = scmp.eq.s32.totalorder %s17, 0
    %p65 = por %p63, %p64
    %s67 = sadd.s32 %s66, 1
    %p70 = scmp.eq.s32.totalorder %s11, 1
    %p71 = scmp.ne.s32.totalorder %s66, %s68
    %p72 = scmp.eq.s32.totalorder %s11, 0
    %p73 = por %p71, %p72
    %p74 = scmp.ne.s32.totalorder %s66, %s68
    %p75 = scmp.eq.s32.totalorder %s16, 1
    %p76 = por %p74, %p75
    %p77 = scmp.ne.s32.totalorder %s68, %s69
    %p78 = scmp.eq.s32.totalorder %s16, 0
    %p79 = por %p77, %p78
    %p80 = scmp.ne.s32.totalorder %s68, %s69
    %p81 = scmp.eq.s32.totalorder %s17, 1
    %p82 = por %p80, %p81
    %p84 = scmp.ne.s32.totalorder %s69, %s83
    %p85 = scmp.eq.s32.totalorder %s17, 0
    %p86 = por %p84, %p85
    %s88 = sadd.s32 %s87, 1
    %p91 = scmp.eq.s32.totalorder %s11, 1
    %p92 = scmp.ne.s32.totalorder %s87, %s89
    %p93 = scmp.eq.s32.totalorder %s11, 0
    %p94 = por %p92, %p93
    %p95 = scmp.ne.s32.totalorder %s87, %s89
    %p96 = scmp.eq.s32.totalorder %s16, 1
    %p97 = por %p95, %p96
    %p98 = scmp.ne.s32.totalorder %s89, %s90
    %p99 = scmp.eq.s32.totalorder %s16, 0
    %p100 = por %p98, %p99
    %p101 = scmp.ne.s32.totalorder %s89, %s90
    %p102 = scmp.eq.s32.totalorder %s17, 1
    %p103 = por %p101, %p102
    %p105 = scmp.ne.s32.totalorder %s90, %s104
    %p106 = scmp.eq.s32.totalorder %s17, 0
    %p107 = por %p105, %p106
    %s109 = sadd.s32 %s108, 1
    %p112 = scmp.eq.s32.totalorder %s11, 1
    %p113 = scmp.ne.s32.totalorder %s108, %s110
    %p114 = scmp.eq.s32.totalorder %s11, 0
    %p115 = por %p113, %p114
    %p116 = scmp.ne.s32.totalorder %s108, %s110
    %p117 = scmp.eq.s32.totalorder %s16, 1
    %p118 = por %p116, %p117
    %p119 = scmp.ne.s32.totalorder %s110, %s111
    %p120 = scmp.eq.s32.totalorder %s16, 0
    %p121 = por %p119, %p120
    %p122 = scmp.ne.s32.totalorder %s110, %s111
    %p123 = scmp.eq.s32.totalorder %s17, 1
    %p124 = por %p122, %p123
    %p126 = scmp.ne.s32.totalorder %s111, %s125
    %p127 = scmp.eq.s32.totalorder %s17, 0
    %p128 = por %p126, %p127
    %s129 = ssub.s32 %s11, %s18
    %p130 = scmp.eq.s32.totalorder %s129, 0
    %s132 = sadd.s32 %s131, 1
    %s133 = scalar_select %p130, %s131, %s132
    %p136 = pneg %p130
    %p137 = scmp.eq.s32.totalorder %s11, 1
    %p138 = por %p136, %p137
    %p139 = scmp.ne.s32.totalorder %s131, %s134
    %p140 = scmp.eq.s32.totalorder %s11, 0
    %p141 = por %p139, %p140
    %p142 = scmp.ne.s32.totalorder %s131, %s134
    %p143 = scmp.eq.s32.totalorder %s16, 1
    %p144 = por %p142, %p143
    %p145 = scmp.ne.s32.totalorder %s134, %s135
    %p146 = scmp.eq.s32.totalorder %s16, 0
    %p147 = por %p145, %p146
    %p148 = scmp.ne.s32.totalorder %s134, %s135
    %p149 = scmp.eq.s32.totalorder %s17, 1
    %p150 = por %p148, %p149
    %p152 = scmp.ne.s32.totalorder %s135, %s151
    %p153 = scmp.eq.s32.totalorder %s17, 0
    %p154 = por %p152, %p153
    %p155 = scmp.le.s32.totalorder 1, %s11
    %p156 = scmp.lt.s32.totalorder %s11, 3
    %p157 = pnand %p155, %p156
    %p158 = pneg %p157
    // Predicated region
    $region9: #{cnn_forward.2} parent=5 // pred_check
      _
    $region10: #{cnn_forward.2} parent=5 // pred_check_branch
      %160 = sbr.rel (%p157) target = $region12
    $region11: #{cnn_forward.2} parent=5 // pred_region
      %s161 = ssub.s32 %s11, 1
      // Predicated region
      $region13: #{cnn_forward.2} parent=11 // pred_check
        %p162 = pneg %p58
      $region14: #{cnn_forward.2} parent=11 // pred_check_branch
        %164 = sbr.rel (%p162) target = $region16
      $region15: #{cnn_forward.2} parent=11 // pred_region
        _
      $region16: #{cnn_forward.2} parent=11 // pred_fallthru
        _
      // Predicated region
      $region17: #{cnn_forward.2} parent=11 // pred_check
        %p165 = pneg %p79
      $region18: #{cnn_forward.2} parent=11 // pred_check_branch
        %167 = sbr.rel (%p165) target = $region20
      $region19: #{cnn_forward.2} parent=11 // pred_region
        _
      $region20: #{cnn_forward.2} parent=11 // pred_fallthru
        _
      // Predicated region
      $region21: #{cnn_forward.2} parent=11 // pred_check
        %p168 = pneg %p100
      $region22: #{cnn_forward.2} parent=11 // pred_check_branch
        %170 = sbr.rel (%p168) target = $region24
      $region23: #{cnn_forward.2} parent=11 // pred_region
        _
      $region24: #{cnn_forward.2} parent=11 // pred_fallthru
        _
      // Predicated region
      $region25: #{cnn_forward.2} parent=11 // pred_check
        %p171 = pneg %p121
      $region26: #{cnn_forward.2} parent=11 // pred_check_branch
        %173 = sbr.rel (%p171) target = $region28
      $region27: #{cnn_forward.2} parent=11 // pred_region
        _
      $region28: #{cnn_forward.2} parent=11 // pred_fallthru
        _
    $region12: #{cnn_forward.2} parent=5 // pred_fallthru
      _
    %p174 = scmp.lt.s32.totalorder %s11, 2
    // Predicated region
    $region29: #{cnn_forward.2} parent=5 // pred_check
      %p175 = pneg %p174
    $region30: #{cnn_forward.2} parent=5 // pred_check_branch
      %177 = sbr.rel (%p175) target = $region32
    $region31: #{cnn_forward.2} parent=5 // pred_region
      // Predicated region
      $region33: #{cnn_forward.2} parent=31 // pred_check
        %p178 = pneg %p31
      $region34: #{cnn_forward.2} parent=31 // pred_check_branch
        %180 = sbr.rel (%p178) target = $region36
      $region35: #{cnn_forward.2} parent=31 // pred_region
        %p181 = scmp.lt.s32.totalorder %s11, 1
        %s182 = scalar_select %p181, %s11, 1
        %s183 = smul.addr %s182, 28
        %s184 = smul.addr %s183, 8
        %s185 = scalar_lea.vmem %s0, %s184
      $region36: #{cnn_forward.2} parent=31 // pred_fallthru
        _
    $region32: #{cnn_forward.2} parent=5 // pred_fallthru
      _
    %p186 = scmp.le.s32.totalorder 1, %s11
    %p187 = scmp.lt.s32.totalorder %s11, 3
    %p188 = pnand %p186, %p187
    %p189 = pneg %p188
    // Predicated region
    $region37: #{cnn_forward.2} parent=5 // pred_check
      _
    $region38: #{cnn_forward.2} parent=5 // pred_check_branch
      %191 = sbr.rel (%p188) target = $region40
    $region39: #{cnn_forward.2} parent=5 // pred_region
      %s192 = ssub.s32 %s11, 1
      %p193 = scmp.lt.s32.totalorder %s16, 1
      %s194 = scalar_select %p193, %s16, 1
      %s195 = smul.addr %s194, 28
      %s196 = smul.addr %s195, 8
      %s197 = scalar_lea.vmem %s0, %s196
      %p198 = pneg %p37
      %p199 = pneg %p34
      %p200 = pneg %p58
      %p201 = pneg %p55
      %p202 = pneg %p79
      %p203 = pneg %p76
      %p204 = pneg %p100
      %p205 = pneg %p97
      %p206 = pneg %p121
      %p207 = pneg %p118
      %p208 = pneg %p147
      %p209 = pneg %p144
      %p210 = scmp.lt.s32.totalorder %s16, 1
      %s211 = scalar_select %p210, %s16, 1
      %s212 = smul.addr %s211, 7
      %s213 = smul.addr %s212, 8
      %s214 = scalar_lea.vmem %s5, %s213
      %p215 = scmp.lt.s32.totalorder %s16, 1
      %s216 = scalar_select %p215, %s16, 1
      %s217 = smul.addr %s216, 28
      %s218 = smul.addr %s217, 8
      %s219 = scalar_lea.vmem %s0, %s218
      %p220 = scmp.lt.s32.totalorder %s16, 1
      %s221 = scalar_select %p220, %s16, 1
      %s222 = smul.addr %s221, 7
      %s223 = smul.addr %s222, 8
      %s224 = scalar_lea.vmem %s5, %s223
      %vm225 = vcmask 7168
      %226 = vst.msk [vmem:[#allocation2] sm:$0xff] %vm225, 0.0
      %227 = vst.msk [vmem:[#allocation2 + $0x8] sm:$0xff] %vm225, 0.0
      %228 = vst.msk [vmem:[#allocation2 + $0x10] sm:$0xff] %vm225, 0.0
      %229 = vst.msk [vmem:[#allocation2 + $0x18] sm:$0xff] %vm225, 0.0
      %230 = vst.msk [vmem:[#allocation2 + $0x20] sm:$0xff] %vm225, 0.0
      %231 = vst.msk [vmem:[#allocation2 + $0x28] sm:$0xff] %vm225, 0.0
      %232 = vst.msk [vmem:[#allocation2 + $0x30] sm:$0xff] %vm225, 0.0
      %233 = vst.msk [vmem:[#allocation2 + $0x38] sm:$0xff] %vm225, 0.0
      %234 = vst.msk [vmem:[#allocation2 + $0x40] sm:$0xff] %vm225, 0.0
      %235 = vst.msk [vmem:[#allocation2 + $0x48] sm:$0xff] %vm225, 0.0
      %236 = vst.msk [vmem:[#allocation2 + $0x50] sm:$0xff] %vm225, 0.0
      %237 = vst.msk [vmem:[#allocation2 + $0x58] sm:$0xff] %vm225, 0.0
      %238 = vst.msk [vmem:[#allocation2 + $0x60] sm:$0xff] %vm225, 0.0
      %239 = vst.msk [vmem:[#allocation2 + $0x68] sm:$0xff] %vm225, 0.0
      %240 = vst.msk [vmem:[#allocation2 + $0x70] sm:$0xff] %vm225, 0.0
      %241 = vst.msk [vmem:[#allocation2 + $0x78] sm:$0xff] %vm225, 0.0
      %242 = vst.msk [vmem:[#allocation2 + $0x80] sm:$0xff] %vm225, 0.0
      %243 = vst.msk [vmem:[#allocation2 + $0x88] sm:$0xff] %vm225, 0.0
      %244 = vst.msk [vmem:[#allocation2 + $0x90] sm:$0xff] %vm225, 0.0
      %245 = vst.msk [vmem:[#allocation2 + $0x98] sm:$0xff] %vm225, 0.0
      %246 = vst.msk [vmem:[#allocation2 + $0xa0] sm:$0xff] %vm225, 0.0
      %247 = vst.msk [vmem:[#allocation2 + $0xa8] sm:$0xff] %vm225, 0.0
      %248 = vst.msk [vmem:[#allocation2 + $0xb0] sm:$0xff] %vm225, 0.0
      %249 = vst.msk [vmem:[#allocation2 + $0xb8] sm:$0xff] %vm225, 0.0
      %250 = vst.msk [vmem:[#allocation2 + $0xc0] sm:$0xff] %vm225, 0.0
      %251 = vst.msk [vmem:[#allocation2 + $0xc8] sm:$0xff] %vm225, 0.0
      %252 = vst.msk [vmem:[#allocation2 + $0xd0] sm:$0xff] %vm225, 0.0
      %253 = vst.msk [vmem:[#allocation2 + $0xd8] sm:$0xff] %vm225, 0.0
      %254 = vst.msk [vmem:[#allocation2 + $0xe0] sm:$0xff] %vm225, 0.0
      %255 = vst.msk [vmem:[#allocation2 + $0xe8] sm:$0xff] %vm225, 0.0
      %256 = vst.msk [vmem:[#allocation2 + $0xf0] sm:$0xff] %vm225, 0.0
      %257 = vst.msk [vmem:[#allocation2 + $0xf8] sm:$0xff] %vm225, 0.0
      %v258 = vld [vmem:[%s219] sm:$0xff]
      %v259 = vld [vmem:[%s219 + $0x8] sm:$0x3f]
      %v260 = vld [vmem:[%s219 + $0x10] sm:$0xff]
      %v261 = vld [vmem:[%s219 + $0x18] sm:$0x3f]
      %v262 = vld [vmem:[%s219 + $0x20] sm:$0xff]
      %v263 = vld [vmem:[%s219 + $0x28] sm:$0x3f]
      %v264 = vld [vmem:[%s219 + $0x30] sm:$0xff]
      %v265 = vld [vmem:[%s219 + $0x38] sm:$0x3f]
      %v266 = vld [vmem:[%s219 + $0x40] sm:$0xff]
      %v267 = vld [vmem:[%s219 + $0x48] sm:$0x3f]
      %v268 = vld [vmem:[%s219 + $0x50] sm:$0xff]
      %v269 = vld [vmem:[%s219 + $0x58] sm:$0x3f]
      %v270 = vld [vmem:[%s219 + $0x60] sm:$0xff]
      %v271 = vld [vmem:[%s219 + $0x68] sm:$0x3f]
      %v272 = vld [vmem:[%s219 + $0x70] sm:$0xff]
      %v273 = vld [vmem:[%s219 + $0x78] sm:$0x3f]
      %v274 = vld [vmem:[%s219 + $0x80] sm:$0xff]
      %v275 = vld [vmem:[%s219 + $0x88] sm:$0x3f]
      %v276 = vld [vmem:[%s219 + $0x90] sm:$0xff]
      %v277 = vld [vmem:[%s219 + $0x98] sm:$0x3f]
      %v278 = vld [vmem:[%s219 + $0xa0] sm:$0xff]
      %v279 = vld [vmem:[%s219 + $0xa8] sm:$0x3f]
      %v280 = vld [vmem:[%s219 + $0xb0] sm:$0xff]
      %v281 = vld [vmem:[%s219 + $0xb8] sm:$0x3f]
      %v282 = vld [vmem:[%s219 + $0xc0] sm:$0xff]
      %v283 = vld [vmem:[%s219 + $0xc8] sm:$0x3f]
      %v284 = vld [vmem:[%s219 + $0xd0] sm:$0xff]
      %v285 = vld [vmem:[%s219 + $0xd8] sm:$0x3f]
      %s286 = scalar_lea.vmem [#allocation2], 16
      %287 = vst.msk [vmem:[%s286 + $0x1] sm:$0xff] %vm225, %v258
      %vm288 = vcmask 5120
      %289 = vst.msk [vmem:[%s286 + $0x9] sm:$0x3f] %vm288, %v259
      %290 = vst.msk [vmem:[%s286 + $0x11] sm:$0xff] %vm225, %v260
      %291 = vst.msk [vmem:[%s286 + $0x19] sm:$0x3f] %vm288, %v261
      %292 = vst.msk [vmem:[%s286 + $0x21] sm:$0xff] %vm225, %v262
      %293 = vst.msk [vmem:[%s286 + $0x29] sm:$0x3f] %vm288, %v263
      %294 = vst.msk [vmem:[%s286 + $0x31] sm:$0xff] %vm225, %v264
      %295 = vst.msk [vmem:[%s286 + $0x39] sm:$0x3f] %vm288, %v265
      %296 = vst.msk [vmem:[%s286 + $0x41] sm:$0xff] %vm225, %v266
      %297 = vst.msk [vmem:[%s286 + $0x49] sm:$0x3f] %vm288, %v267
      %298 = vst.msk [vmem:[%s286 + $0x51] sm:$0xff] %vm225, %v268
      %299 = vst.msk [vmem:[%s286 + $0x59] sm:$0x3f] %vm288, %v269
      %300 = vst.msk [vmem:[%s286 + $0x61] sm:$0xff] %vm225, %v270
      %301 = vst.msk [vmem:[%s286 + $0x69] sm:$0x3f] %vm288, %v271
      %302 = vst.msk [vmem:[%s286 + $0x71] sm:$0xff] %vm225, %v272
      %303 = vst.msk [vmem:[%s286 + $0x79] sm:$0x3f] %vm288, %v273
      %304 = vst.msk [vmem:[%s286 + $0x81] sm:$0xff] %vm225, %v274
      %305 = vst.msk [vmem:[%s286 + $0x89] sm:$0x3f] %vm288, %v275
      %306 = vst.msk [vmem:[%s286 + $0x91] sm:$0xff] %vm225, %v276
      %307 = vst.msk [vmem:[%s286 + $0x99] sm:$0x3f] %vm288, %v277
      %308 = vst.msk [vmem:[%s286 + $0xa1] sm:$0xff] %vm225, %v278
      %309 = vst.msk [vmem:[%s286 + $0xa9] sm:$0x3f] %vm288, %v279
      %310 = vst.msk [vmem:[%s286 + $0xb1] sm:$0xff] %vm225, %v280
      %311 = vst.msk [vmem:[%s286 + $0xb9] sm:$0x3f] %vm288, %v281
      %312 = vst.msk [vmem:[%s286 + $0xc1] sm:$0xff] %vm225, %v282
      %313 = vst.msk [vmem:[%s286 + $0xc9] sm:$0x3f] %vm288, %v283
      %314 = vst.msk [vmem:[%s286 + $0xd1] sm:$0xff] %vm225, %v284
      %315 = vst.msk [vmem:[%s286 + $0xd9] sm:$0x3f] %vm288, %v285
      %v316 = vld [vmem:[#allocation2] sm:$0xff]
      %v317 = vld [vmem:[#allocation2 + $0x8] sm:$0x3f]
      %v318 = vld [vmem:[#allocation2 + $0x10] sm:$0xff]
      %v319 = vld [vmem:[#allocation2 + $0x18] sm:$0x3f]
      %v320 = vld [vmem:[#allocation2 + $0x20] sm:$0xff]
      %v321 = vld [vmem:[#allocation2 + $0x28] sm:$0x3f]
      %v322 = vld [vmem:[#allocation2 + $0x30] sm:$0xff]
      %v323 = vld [vmem:[#allocation2 + $0x38] sm:$0x3f]
      %v324 = vld [vmem:[#allocation2 + $0x40] sm:$0xff]
      %v325 = vld [vmem:[#allocation2 + $0x48] sm:$0x3f]
      %v326 = vld [vmem:[#allocation2 + $0x50] sm:$0xff]
      %v327 = vld [vmem:[#allocation2 + $0x58] sm:$0x3f]
      %v328 = vld [vmem:[#allocation2 + $0x60] sm:$0xff]
      %v329 = vld [vmem:[#allocation2 + $0x68] sm:$0x3f]
      %v330 = vld [vmem:[#allocation2 + $0x70] sm:$0xff]
      %v331 = vld [vmem:[#allocation2 + $0x78] sm:$0x3f]
      %v332 = vld [vmem:[#allocation2 + $0x80] sm:$0xff]
      %v333 = vld [vmem:[#allocation2 + $0x88] sm:$0x3f]
      %v334 = vld [vmem:[#allocation2 + $0x90] sm:$0xff]
      %v335 = vld [vmem:[#allocation2 + $0x98] sm:$0x3f]
      %v336 = vld [vmem:[#allocation2 + $0xa0] sm:$0xff]
      %v337 = vld [vmem:[#allocation2 + $0xa8] sm:$0x3f]
      %v338 = vld [vmem:[#allocation2 + $0xb0] sm:$0xff]
      %v339 = vld [vmem:[#allocation2 + $0xb8] sm:$0x3f]
      %v340 = vld [vmem:[#allocation2 + $0xc0] sm:$0xff]
      %v341 = vld [vmem:[#allocation2 + $0xc8] sm:$0x3f]
      %v342 = vld [vmem:[#allocation2 + $0xd0] sm:$0xff]
      %v343 = vld [vmem:[#allocation2 + $0xd8] sm:$0x3f]
      %v344 = vld [vmem:[%s1] sm:$0x1]
      %346 = vset.pattern.permute.xlu0 0
      %347 = vperm.xlu0 %346, %v316
      %v348 = vpop.permute.xlu0 %347
      %351 = vset.pattern.permute.xlu0 0
      %352 = vperm.xlu0 %351, %v317
      %v353 = vpop.permute.xlu0 %352
      %356 = vset.pattern.permute.xlu0 0
      %357 = vperm.xlu0 %356, %v318
      %v358 = vpop.permute.xlu0 %357
      %361 = vset.pattern.permute.xlu0 0
      %362 = vperm.xlu0 %361, %v319
      %v363 = vpop.permute.xlu0 %362
      %366 = vset.pattern.permute.xlu0 0
      %367 = vperm.xlu0 %366, %v320
      %v368 = vpop.permute.xlu0 %367
      %371 = vset.pattern.permute.xlu0 0
      %372 = vperm.xlu0 %371, %v321
      %v373 = vpop.permute.xlu0 %372
      %376 = vset.pattern.permute.xlu0 0
      %377 = vperm.xlu0 %376, %v322
      %v378 = vpop.permute.xlu0 %377
      %381 = vset.pattern.permute.xlu0 0
      %382 = vperm.xlu0 %381, %v323
      %v383 = vpop.permute.xlu0 %382
      %386 = vset.pattern.permute.xlu0 0
      %387 = vperm.xlu0 %386, %v324
      %v388 = vpop.permute.xlu0 %387
      %391 = vset.pattern.permute.xlu0 0
      %392 = vperm.xlu0 %391, %v325
      %v393 = vpop.permute.xlu0 %392
      %396 = vset.pattern.permute.xlu0 0
      %397 = vperm.xlu0 %396, %v326
      %v398 = vpop.permute.xlu0 %397
      %401 = vset.pattern.permute.xlu0 0
      %402 = vperm.xlu0 %401, %v327
      %v403 = vpop.permute.xlu0 %402
      %406 = vset.pattern.permute.xlu0 0
      %407 = vperm.xlu0 %406, %v328
      %v408 = vpop.permute.xlu0 %407
      %411 = vset.pattern.permute.xlu0 0
      %412 = vperm.xlu0 %411, %v329
      %v413 = vpop.permute.xlu0 %412
      %416 = vset.pattern.permute.xlu0 0
      %417 = vperm.xlu0 %416, %v330
      %v418 = vpop.permute.xlu0 %417
      %421 = vset.pattern.permute.xlu0 0
      %422 = vperm.xlu0 %421, %v331
      %v423 = vpop.permute.xlu0 %422
      %426 = vset.pattern.permute.xlu0 0
      %427 = vperm.xlu0 %426, %v332
      %v428 = vpop.permute.xlu0 %427
      %431 = vset.pattern.permute.xlu0 0
      %432 = vperm.xlu0 %431, %v333
      %v433 = vpop.permute.xlu0 %432
      %436 = vset.pattern.permute.xlu0 0
      %437 = vperm.xlu0 %436, %v334
      %v438 = vpop.permute.xlu0 %437
      %441 = vset.pattern.permute.xlu0 0
      %442 = vperm.xlu0 %441, %v335
      %v443 = vpop.permute.xlu0 %442
      %446 = vset.pattern.permute.xlu0 0
      %447 = vperm.xlu0 %446, %v336
      %v448 = vpop.permute.xlu0 %447
      %451 = vset.pattern.permute.xlu0 0
      %452 = vperm.xlu0 %451, %v337
      %v453 = vpop.permute.xlu0 %452
      %456 = vset.pattern.permute.xlu0 0
      %457 = vperm.xlu0 %456, %v338
      %v458 = vpop.permute.xlu0 %457
      %461 = vset.pattern.permute.xlu0 0
      %462 = vperm.xlu0 %461, %v339
      %v463 = vpop.permute.xlu0 %462
      %466 = vset.pattern.permute.xlu0 0
      %467 = vperm.xlu0 %466, %v340
      %v468 = vpop.permute.xlu0 %467
      %471 = vset.pattern.permute.xlu0 0
      %472 = vperm.xlu0 %471, %v341
      %v473 = vpop.permute.xlu0 %472
      %476 = vset.pattern.permute.xlu0 0
      %477 = vperm.xlu0 %476, %v342
      %v478 = vpop.permute.xlu0 %477
      %481 = vset.pattern.permute.xlu0 0
      %482 = vperm.xlu0 %481, %v343
      %v483 = vpop.permute.xlu0 %482
      %v486 = vperm.slane %v344, 0
      %v488 = vmul.f32 %v348, %v486
      %v489 = vmul.f32 %v353, %v486
      %v490 = vmul.f32 %v358, %v486
      %v491 = vmul.f32 %v363, %v486
      %v492 = vmul.f32 %v368, %v486
      %v493 = vmul.f32 %v373, %v486
      %v494 = vmul.f32 %v378, %v486
      %v495 = vmul.f32 %v383, %v486
      %v496 = vmul.f32 %v388, %v486
      %v497 = vmul.f32 %v393, %v486
      %v498 = vmul.f32 %v398, %v486
      %v499 = vmul.f32 %v403, %v486
      %v500 = vmul.f32 %v408, %v486
      %v501 = vmul.f32 %v413, %v486
      %v502 = vmul.f32 %v418, %v486
      %v503 = vmul.f32 %v423, %v486
      %v504 = vmul.f32 %v428, %v486
      %v505 = vmul.f32 %v433, %v486
      %v506 = vmul.f32 %v438, %v486
      %v507 = vmul.f32 %v443, %v486
      %v508 = vmul.f32 %v448, %v486
      %v509 = vmul.f32 %v453, %v486
      %v510 = vmul.f32 %v458, %v486
      %v511 = vmul.f32 %v463, %v486
      %v512 = vmul.f32 %v468, %v486
      %v513 = vmul.f32 %v473, %v486
      %v514 = vmul.f32 %v478, %v486
      %v515 = vmul.f32 %v483, %v486
      %v516 = vadd.f32 %v488, 0.0
      %v517 = vadd.f32 %v489, 0.0
      %v518 = vadd.f32 %v490, 0.0
      %v519 = vadd.f32 %v491, 0.0
      %v520 = vadd.f32 %v492, 0.0
      %v521 = vadd.f32 %v493, 0.0
      %v522 = vadd.f32 %v494, 0.0
      %v523 = vadd.f32 %v495, 0.0
      %v524 = vadd.f32 %v496, 0.0
      %v525 = vadd.f32 %v497, 0.0
      %v526 = vadd.f32 %v498, 0.0
      %v527 = vadd.f32 %v499, 0.0
      %v528 = vadd.f32 %v500, 0.0
      %v529 = vadd.f32 %v501, 0.0
      %v530 = vadd.f32 %v502, 0.0
      %v531 = vadd.f32 %v503, 0.0
      %v532 = vadd.f32 %v504, 0.0
      %v533 = vadd.f32 %v505, 0.0
      %v534 = vadd.f32 %v506, 0.0
      %v535 = vadd.f32 %v507, 0.0
      %v536 = vadd.f32 %v508, 0.0
      %v537 = vadd.f32 %v509, 0.0
      %v538 = vadd.f32 %v510, 0.0
      %v539 = vadd.f32 %v511, 0.0
      %v540 = vadd.f32 %v512, 0.0
      %v541 = vadd.f32 %v513, 0.0
      %v542 = vadd.f32 %v514, 0.0
      %v543 = vadd.f32 %v515, 0.0
      %v544 = vld [vmem:[#allocation2 + $0x1] sm:$0xff]
      %v545 = vld [vmem:[#allocation2 + $0x9] sm:$0x3f]
      %v546 = vld [vmem:[#allocation2 + $0x11] sm:$0xff]
      %v547 = vld [vmem:[#allocation2 + $0x19] sm:$0x3f]
      %v548 = vld [vmem:[#allocation2 + $0x21] sm:$0xff]
      %v549 = vld [vmem:[#allocation2 + $0x29] sm:$0x3f]
      %v550 = vld [vmem:[#allocation2 + $0x31] sm:$0xff]
      %v551 = vld [vmem:[#allocation2 + $0x39] sm:$0x3f]
      %v552 = vld [vmem:[#allocation2 + $0x41] sm:$0xff]
      %v553 = vld [vmem:[#allocation2 + $0x49] sm:$0x3f]
      %v554 = vld [vmem:[#allocation2 + $0x51] sm:$0xff]
      %v555 = vld [vmem:[#allocation2 + $0x59] sm:$0x3f]
      %v556 = vld [vmem:[#allocation2 + $0x61] sm:$0xff]
      %v557 = vld [vmem:[#allocation2 + $0x69] sm:$0x3f]
      %v558 = vld [vmem:[#allocation2 + $0x71] sm:$0xff]
      %v559 = vld [vmem:[#allocation2 + $0x79] sm:$0x3f]
      %v560 = vld [vmem:[#allocation2 + $0x81] sm:$0xff]
      %v561 = vld [vmem:[#allocation2 + $0x89] sm:$0x3f]
      %v562 = vld [vmem:[#allocation2 + $0x91] sm:$0xff]
      %v563 = vld [vmem:[#allocation2 + $0x99] sm:$0x3f]
      %v564 = vld [vmem:[#allocation2 + $0xa1] sm:$0xff]
      %v565 = vld [vmem:[#allocation2 + $0xa9] sm:$0x3f]
      %v566 = vld [vmem:[#allocation2 + $0xb1] sm:$0xff]
      %v567 = vld [vmem:[#allocation2 + $0xb9] sm:$0x3f]
      %v568 = vld [vmem:[#allocation2 + $0xc1] sm:$0xff]
      %v569 = vld [vmem:[#allocation2 + $0xc9] sm:$0x3f]
      %v570 = vld [vmem:[#allocation2 + $0xd1] sm:$0xff]
      %v571 = vld [vmem:[#allocation2 + $0xd9] sm:$0x3f]
      %s572 = scalar_lea.vmem %s1, 1
      %v573 = vld [vmem:[%s572] sm:$0x1]
      %575 = vset.pattern.permute.xlu0 0
      %576 = vperm.xlu0 %575, %v544
      %v577 = vpop.permute.xlu0 %576
      %580 = vset.pattern.permute.xlu0 0
      %581 = vperm.xlu0 %580, %v545
      %v582 = vpop.permute.xlu0 %581
      %585 = vset.pattern.permute.xlu0 0
      %586 = vperm.xlu0 %585, %v546
      %v587 = vpop.permute.xlu0 %586
      %590 = vset.pattern.permute.xlu0 0
      %591 = vperm.xlu0 %590, %v547
      %v592 = vpop.permute.xlu0 %591
      %595 = vset.pattern.permute.xlu0 0
      %596 = vperm.xlu0 %595, %v548
      %v597 = vpop.permute.xlu0 %596
      %600 = vset.pattern.permute.xlu0 0
      %601 = vperm.xlu0 %600, %v549
      %v602 = vpop.permute.xlu0 %601
      %605 = vset.pattern.permute.xlu0 0
      %606 = vperm.xlu0 %605, %v550
      %v607 = vpop.permute.xlu0 %606
      %610 = vset.pattern.permute.xlu0 0
      %611 = vperm.xlu0 %610, %v551
      %v612 = vpop.permute.xlu0 %611
      %615 = vset.pattern.permute.xlu0 0
      %616 = vperm.xlu0 %615, %v552
      %v617 = vpop.permute.xlu0 %616
      %620 = vset.pattern.permute.xlu0 0
      %621 = vperm.xlu0 %620, %v553
      %v622 = vpop.permute.xlu0 %621
      %625 = vset.pattern.permute.xlu0 0
      %626 = vperm.xlu0 %625, %v554
      %v627 = vpop.permute.xlu0 %626
      %630 = vset.pattern.permute.xlu0 0
      %631 = vperm.xlu0 %630, %v555
      %v632 = vpop.permute.xlu0 %631
      %635 = vset.pattern.permute.xlu0 0
      %636 = vperm.xlu0 %635, %v556
      %v637 = vpop.permute.xlu0 %636
      %640 = vset.pattern.permute.xlu0 0
      %641 = vperm.xlu0 %640, %v557
      %v642 = vpop.permute.xlu0 %641
      %645 = vset.pattern.permute.xlu0 0
      %646 = vperm.xlu0 %645, %v558
      %v647 = vpop.permute.xlu0 %646
      %650 = vset.pattern.permute.xlu0 0
      %651 = vperm.xlu0 %650, %v559
      %v652 = vpop.permute.xlu0 %651
      %655 = vset.pattern.permute.xlu0 0
      %656 = vperm.xlu0 %655, %v560
      %v657 = vpop.permute.xlu0 %656
      %660 = vset.pattern.permute.xlu0 0
      %661 = vperm.xlu0 %660, %v561
      %v662 = vpop.permute.xlu0 %661
      %665 = vset.pattern.permute.xlu0 0
      %666 = vperm.xlu0 %665, %v562
      %v667 = vpop.permute.xlu0 %666
      %670 = vset.pattern.permute.xlu0 0
      %671 = vperm.xlu0 %670, %v563
      %v672 = vpop.permute.xlu0 %671
      %675 = vset.pattern.permute.xlu0 0
      %676 = vperm.xlu0 %675, %v564
      %v677 = vpop.permute.xlu0 %676
      %680 = vset.pattern.permute.xlu0 0
      %681 = vperm.xlu0 %680, %v565
      %v682 = vpop.permute.xlu0 %681
      %685 = vset.pattern.permute.xlu0 0
      %686 = vperm.xlu0 %685, %v566
      %v687 = vpop.permute.xlu0 %686
      %690 = vset.pattern.permute.xlu0 0
      %691 = vperm.xlu0 %690, %v567
      %v692 = vpop.permute.xlu0 %691
      %695 = vset.pattern.permute.xlu0 0
      %696 = vperm.xlu0 %695, %v568
      %v697 = vpop.permute.xlu0 %696
      %700 = vset.pattern.permute.xlu0 0
      %701 = vperm.xlu0 %700, %v569
      %v702 = vpop.permute.xlu0 %701
      %705 = vset.pattern.permute.xlu0 0
      %706 = vperm.xlu0 %705, %v570
      %v707 = vpop.permute.xlu0 %706
      %710 = vset.pattern.permute.xlu0 0
      %711 = vperm.xlu0 %710, %v571
      %v712 = vpop.permute.xlu0 %711
      %v715 = vperm.slane %v573, 0
      %v717 = vmul.f32 %v577, %v715
      %v718 = vmul.f32 %v582, %v715
      %v719 = vmul.f32 %v587, %v715
      %v720 = vmul.f32 %v592, %v715
      %v721 = vmul.f32 %v597, %v715
      %v722 = vmul.f32 %v602, %v715
      %v723 = vmul.f32 %v607, %v715
      %v724 = vmul.f32 %v612, %v715
      %v725 = vmul.f32 %v617, %v715
      %v726 = vmul.f32 %v622, %v715
      %v727 = vmul.f32 %v627, %v715
      %v728 = vmul.f32 %v632, %v715
      %v729 = vmul.f32 %v637, %v715
      %v730 = vmul.f32 %v642, %v715
      %v731 = vmul.f32 %v647, %v715
      %v732 = vmul.f32 %v652, %v715
      %v733 = vmul.f32 %v657, %v715
      %v734 = vmul.f32 %v662, %v715
      %v735 = vmul.f32 %v667, %v715
      %v736 = vmul.f32 %v672, %v715
      %v737 = vmul.f32 %v677, %v715
      %v738 = vmul.f32 %v682, %v715
      %v739 = vmul.f32 %v687, %v715
      %v740 = vmul.f32 %v692, %v715
      %v741 = vmul.f32 %v697, %v715
      %v742 = vmul.f32 %v702, %v715
      %v743 = vmul.f32 %v707, %v715
      %v744 = vmul.f32 %v712, %v715
      %v745 = vadd.f32 %v516, %v717
      %v746 = vadd.f32 %v517, %v718
      %v747 = vadd.f32 %v518, %v719
      %v748 = vadd.f32 %v519, %v720
      %v749 = vadd.f32 %v520, %v721
      %v750 = vadd.f32 %v521, %v722
      %v751 = vadd.f32 %v522, %v723
      %v752 = vadd.f32 %v523, %v724
      %v753 = vadd.f32 %v524, %v725
      %v754 = vadd.f32 %v525, %v726
      %v755 = vadd.f32 %v526, %v727
      %v756 = vadd.f32 %v527, %v728
      %v757 = vadd.f32 %v528, %v729
      %v758 = vadd.f32 %v529, %v730
      %v759 = vadd.f32 %v530, %v731
      %v760 = vadd.f32 %v531, %v732
      %v761 = vadd.f32 %v532, %v733
      %v762 = vadd.f32 %v533, %v734
      %v763 = vadd.f32 %v534, %v735
      %v764 = vadd.f32 %v535, %v736
      %v765 = vadd.f32 %v536, %v737
      %v766 = vadd.f32 %v537, %v738
      %v767 = vadd.f32 %v538, %v739
      %v768 = vadd.f32 %v539, %v740
      %v769 = vadd.f32 %v540, %v741
      %v770 = vadd.f32 %v541, %v742
      %v771 = vadd.f32 %v542, %v743
      %v772 = vadd.f32 %v543, %v744
      %v773 = vld [vmem:[#allocation2 + $0x2] sm:$0xff]
      %v774 = vld [vmem:[#allocation2 + $0xa] sm:$0x3f]
      %v775 = vld [vmem:[#allocation2 + $0x12] sm:$0xff]
      %v776 = vld [vmem:[#allocation2 + $0x1a] sm:$0x3f]
      %v777 = vld [vmem:[#allocation2 + $0x22] sm:$0xff]
      %v778 = vld [vmem:[#allocation2 + $0x2a] sm:$0x3f]
      %v779 = vld [vmem:[#allocation2 + $0x32] sm:$0xff]
      %v780 = vld [vmem:[#allocation2 + $0x3a] sm:$0x3f]
      %v781 = vld [vmem:[#allocation2 + $0x42] sm:$0xff]
      %v782 = vld [vmem:[#allocation2 + $0x4a] sm:$0x3f]
      %v783 = vld [vmem:[#allocation2 + $0x52] sm:$0xff]
      %v784 = vld [vmem:[#allocation2 + $0x5a] sm:$0x3f]
      %v785 = vld [vmem:[#allocation2 + $0x62] sm:$0xff]
      %v786 = vld [vmem:[#allocation2 + $0x6a] sm:$0x3f]
      %v787 = vld [vmem:[#allocation2 + $0x72] sm:$0xff]
      %v788 = vld [vmem:[#allocation2 + $0x7a] sm:$0x3f]
      %v789 = vld [vmem:[#allocation2 + $0x82] sm:$0xff]
      %v790 = vld [vmem:[#allocation2 + $0x8a] sm:$0x3f]
      %v791 = vld [vmem:[#allocation2 + $0x92] sm:$0xff]
      %v792 = vld [vmem:[#allocation2 + $0x9a] sm:$0x3f]
      %v793 = vld [vmem:[#allocation2 + $0xa2] sm:$0xff]
      %v794 = vld [vmem:[#allocation2 + $0xaa] sm:$0x3f]
      %v795 = vld [vmem:[#allocation2 + $0xb2] sm:$0xff]
      %v796 = vld [vmem:[#allocation2 + $0xba] sm:$0x3f]
      %v797 = vld [vmem:[#allocation2 + $0xc2] sm:$0xff]
      %v798 = vld [vmem:[#allocation2 + $0xca] sm:$0x3f]
      %v799 = vld [vmem:[#allocation2 + $0xd2] sm:$0xff]
      %v800 = vld [vmem:[#allocation2 + $0xda] sm:$0x3f]
      %s801 = scalar_lea.vmem %s1, 2
      %v802 = vld [vmem:[%s801] sm:$0x1]
      %804 = vset.pattern.permute.xlu0 0
      %805 = vperm.xlu0 %804, %v773
      %v806 = vpop.permute.xlu0 %805
      %809 = vset.pattern.permute.xlu0 0
      %810 = vperm.xlu0 %809, %v774
      %v811 = vpop.permute.xlu0 %810
      %814 = vset.pattern.permute.xlu0 0
      %815 = vperm.xlu0 %814, %v775
      %v816 = vpop.permute.xlu0 %815
      %819 = vset.pattern.permute.xlu0 0
      %820 = vperm.xlu0 %819, %v776
      %v821 = vpop.permute.xlu0 %820
      %824 = vset.pattern.permute.xlu0 0
      %825 = vperm.xlu0 %824, %v777
      %v826 = vpop.permute.xlu0 %825
      %829 = vset.pattern.permute.xlu0 0
      %830 = vperm.xlu0 %829, %v778
      %v831 = vpop.permute.xlu0 %830
      %834 = vset.pattern.permute.xlu0 0
      %835 = vperm.xlu0 %834, %v779
      %v836 = vpop.permute.xlu0 %835
      %839 = vset.pattern.permute.xlu0 0
      %840 = vperm.xlu0 %839, %v780
      %v841 = vpop.permute.xlu0 %840
      %844 = vset.pattern.permute.xlu0 0
      %845 = vperm.xlu0 %844, %v781
      %v846 = vpop.permute.xlu0 %845
      %849 = vset.pattern.permute.xlu0 0
      %850 = vperm.xlu0 %849, %v782
      %v851 = vpop.permute.xlu0 %850
      %854 = vset.pattern.permute.xlu0 0
      %855 = vperm.xlu0 %854, %v783
      %v856 = vpop.permute.xlu0 %855
      %859 = vset.pattern.permute.xlu0 0
      %860 = vperm.xlu0 %859, %v784
      %v861 = vpop.permute.xlu0 %860
      %864 = vset.pattern.permute.xlu0 0
      %865 = vperm.xlu0 %864, %v785
      %v866 = vpop.permute.xlu0 %865
      %869 = vset.pattern.permute.xlu0 0
      %870 = vperm.xlu0 %869, %v786
      %v871 = vpop.permute.xlu0 %870
      %874 = vset.pattern.permute.xlu0 0
      %875 = vperm.xlu0 %874, %v787
      %v876 = vpop.permute.xlu0 %875
      %879 = vset.pattern.permute.xlu0 0
      %880 = vperm.xlu0 %879, %v788
      %v881 = vpop.permute.xlu0 %880
      %884 = vset.pattern.permute.xlu0 0
      %885 = vperm.xlu0 %884, %v789
      %v886 = vpop.permute.xlu0 %885
      %889 = vset.pattern.permute.xlu0 0
      %890 = vperm.xlu0 %889, %v790
      %v891 = vpop.permute.xlu0 %890
      %894 = vset.pattern.permute.xlu0 0
      %895 = vperm.xlu0 %894, %v791
      %v896 = vpop.permute.xlu0 %895
      %899 = vset.pattern.permute.xlu0 0
      %900 = vperm.xlu0 %899, %v792
      %v901 = vpop.permute.xlu0 %900
      %904 = vset.pattern.permute.xlu0 0
      %905 = vperm.xlu0 %904, %v793
      %v906 = vpop.permute.xlu0 %905
      %909 = vset.pattern.permute.xlu0 0
      %910 = vperm.xlu0 %909, %v794
      %v911 = vpop.permute.xlu0 %910
      %914 = vset.pattern.permute.xlu0 0
      %915 = vperm.xlu0 %914, %v795
      %v916 = vpop.permute.xlu0 %915
      %919 = vset.pattern.permute.xlu0 0
      %920 = vperm.xlu0 %919, %v796
      %v921 = vpop.permute.xlu0 %920
      %924 = vset.pattern.permute.xlu0 0
      %925 = vperm.xlu0 %924, %v797
      %v926 = vpop.permute.xlu0 %925
      %929 = vset.pattern.permute.xlu0 0
      %930 = vperm.xlu0 %929, %v798
      %v931 = vpop.permute.xlu0 %930
      %934 = vset.pattern.permute.xlu0 0
      %935 = vperm.xlu0 %934, %v799
      %v936 = vpop.permute.xlu0 %935
      %939 = vset.pattern.permute.xlu0 0
      %940 = vperm.xlu0 %939, %v800
      %v941 = vpop.permute.xlu0 %940
      %v944 = vperm.slane %v802, 0
      %v946 = vmul.f32 %v806, %v944
      %v947 = vmul.f32 %v811, %v944
      %v948 = vmul.f32 %v816, %v944
      %v949 = vmul.f32 %v821, %v944
      %v950 = vmul.f32 %v826, %v944
      %v951 = vmul.f32 %v831, %v944
      %v952 = vmul.f32 %v836, %v944
      %v953 = vmul.f32 %v841, %v944
      %v954 = vmul.f32 %v846, %v944
      %v955 = vmul.f32 %v851, %v944
      %v956 = vmul.f32 %v856, %v944
      %v957 = vmul.f32 %v861, %v944
      %v958 = vmul.f32 %v866, %v944
      %v959 = vmul.f32 %v871, %v944
      %v960 = vmul.f32 %v876, %v944
      %v961 = vmul.f32 %v881, %v944
      %v962 = vmul.f32 %v886, %v944
      %v963 = vmul.f32 %v891, %v944
      %v964 = vmul.f32 %v896, %v944
      %v965 = vmul.f32 %v901, %v944
      %v966 = vmul.f32 %v906, %v944
      %v967 = vmul.f32 %v911, %v944
      %v968 = vmul.f32 %v916, %v944
      %v969 = vmul.f32 %v921, %v944
      %v970 = vmul.f32 %v926, %v944
      %v971 = vmul.f32 %v931, %v944
      %v972 = vmul.f32 %v936, %v944
      %v973 = vmul.f32 %v941, %v944
      %v974 = vadd.f32 %v745, %v946
      %v975 = vadd.f32 %v746, %v947
      %v976 = vadd.f32 %v747, %v948
      %v977 = vadd.f32 %v748, %v949
      %v978 = vadd.f32 %v749, %v950
      %v979 = vadd.f32 %v750, %v951
      %v980 = vadd.f32 %v751, %v952
      %v981 = vadd.f32 %v752, %v953
      %v982 = vadd.f32 %v753, %v954
      %v983 = vadd.f32 %v754, %v955
      %v984 = vadd.f32 %v755, %v956
      %v985 = vadd.f32 %v756, %v957
      %v986 = vadd.f32 %v757, %v958
      %v987 = vadd.f32 %v758, %v959
      %v988 = vadd.f32 %v759, %v960
      %v989 = vadd.f32 %v760, %v961
      %v990 = vadd.f32 %v761, %v962
      %v991 = vadd.f32 %v762, %v963
      %v992 = vadd.f32 %v763, %v964
      %v993 = vadd.f32 %v764, %v965
      %v994 = vadd.f32 %v765, %v966
      %v995 = vadd.f32 %v766, %v967
      %v996 = vadd.f32 %v767, %v968
      %v997 = vadd.f32 %v768, %v969
      %v998 = vadd.f32 %v769, %v970
      %v999 = vadd.f32 %v770, %v971
      %v1000 = vadd.f32 %v771, %v972
      %v1001 = vadd.f32 %v772, %v973
      %v1002 = vld [vmem:[%s286] sm:$0xff]
      %v1003 = vld [vmem:[%s286 + $0x8] sm:$0x3f]
      %v1004 = vld [vmem:[%s286 + $0x10] sm:$0xff]
      %v1005 = vld [vmem:[%s286 + $0x18] sm:$0x3f]
      %v1006 = vld [vmem:[%s286 + $0x20] sm:$0xff]
      %v1007 = vld [vmem:[%s286 + $0x28] sm:$0x3f]
      %v1008 = vld [vmem:[%s286 + $0x30] sm:$0xff]
      %v1009 = vld [vmem:[%s286 + $0x38] sm:$0x3f]
      %v1010 = vld [vmem:[%s286 + $0x40] sm:$0xff]
      %v1011 = vld [vmem:[%s286 + $0x48] sm:$0x3f]
      %v1012 = vld [vmem:[%s286 + $0x50] sm:$0xff]
      %v1013 = vld [vmem:[%s286 + $0x58] sm:$0x3f]
      %v1014 = vld [vmem:[%s286 + $0x60] sm:$0xff]
      %v1015 = vld [vmem:[%s286 + $0x68] sm:$0x3f]
      %v1016 = vld [vmem:[%s286 + $0x70] sm:$0xff]
      %v1017 = vld [vmem:[%s286 + $0x78] sm:$0x3f]
      %v1018 = vld [vmem:[%s286 + $0x80] sm:$0xff]
      %v1019 = vld [vmem:[%s286 + $0x88] sm:$0x3f]
      %v1020 = vld [vmem:[%s286 + $0x90] sm:$0xff]
      %v1021 = vld [vmem:[%s286 + $0x98] sm:$0x3f]
      %v1022 = vld [vmem:[%s286 + $0xa0] sm:$0xff]
      %v1023 = vld [vmem:[%s286 + $0xa8] sm:$0x3f]
      %v1024 = vld [vmem:[%s286 + $0xb0] sm:$0xff]
      %v1025 = vld [vmem:[%s286 + $0xb8] sm:$0x3f]
      %v1026 = vld [vmem:[%s286 + $0xc0] sm:$0xff]
      %v1027 = vld [vmem:[%s286 + $0xc8] sm:$0x3f]
      %v1028 = vld [vmem:[%s286 + $0xd0] sm:$0xff]
      %v1029 = vld [vmem:[%s286 + $0xd8] sm:$0x3f]
      %s1030 = scalar_lea.vmem %s1, 3
      %v1031 = vld [vmem:[%s1030] sm:$0x1]
      %1033 = vset.pattern.permute.xlu0 0
      %1034 = vperm.xlu0 %1033, %v1002
      %v1035 = vpop.permute.xlu0 %1034
      %1038 = vset.pattern.permute.xlu0 0
      %1039 = vperm.xlu0 %1038, %v1003
      %v1040 = vpop.permute.xlu0 %1039
      %1043 = vset.pattern.permute.xlu0 0
      %1044 = vperm.xlu0 %1043, %v1004
      %v1045 = vpop.permute.xlu0 %1044
      %1048 = vset.pattern.permute.xlu0 0
      %1049 = vperm.xlu0 %1048, %v1005
      %v1050 = vpop.permute.xlu0 %1049
      %1053 = vset.pattern.permute.xlu0 0
      %1054 = vperm.xlu0 %1053, %v1006
      %v1055 = vpop.permute.xlu0 %1054
      %1058 = vset.pattern.permute.xlu0 0
      %1059 = vperm.xlu0 %1058, %v1007
      %v1060 = vpop.permute.xlu0 %1059
      %1063 = vset.pattern.permute.xlu0 0
      %1064 = vperm.xlu0 %1063, %v1008
      %v1065 = vpop.permute.xlu0 %1064
      %1068 = vset.pattern.permute.xlu0 0
      %1069 = vperm.xlu0 %1068, %v1009
      %v1070 = vpop.permute.xlu0 %1069
      %1073 = vset.pattern.permute.xlu0 0
      %1074 = vperm.xlu0 %1073, %v1010
      %v1075 = vpop.permute.xlu0 %1074
      %1078 = vset.pattern.permute.xlu0 0
      %1079 = vperm.xlu0 %1078, %v1011
      %v1080 = vpop.permute.xlu0 %1079
      %1083 = vset.pattern.permute.xlu0 0
      %1084 = vperm.xlu0 %1083, %v1012
      %v1085 = vpop.permute.xlu0 %1084
      %1088 = vset.pattern.permute.xlu0 0
      %1089 = vperm.xlu0 %1088, %v1013
      %v1090 = vpop.permute.xlu0 %1089
      %1093 = vset.pattern.permute.xlu0 0
      %1094 = vperm.xlu0 %1093, %v1014
      %v1095 = vpop.permute.xlu0 %1094
      %1098 = vset.pattern.permute.xlu0 0
      %1099 = vperm.xlu0 %1098, %v1015
      %v1100 = vpop.permute.xlu0 %1099
      %1103 = vset.pattern.permute.xlu0 0
      %1104 = vperm.xlu0 %1103, %v1016
      %v1105 = vpop.permute.xlu0 %1104
      %1108 = vset.pattern.permute.xlu0 0
      %1109 = vperm.xlu0 %1108, %v1017
      %v1110 = vpop.permute.xlu0 %1109
      %1113 = vset.pattern.permute.xlu0 0
      %1114 = vperm.xlu0 %1113, %v1018
      %v1115 = vpop.permute.xlu0 %1114
      %1118 = vset.pattern.permute.xlu0 0
      %1119 = vperm.xlu0 %1118, %v1019
      %v1120 = vpop.permute.xlu0 %1119
      %1123 = vset.pattern.permute.xlu0 0
      %1124 = vperm.xlu0 %1123, %v1020
      %v1125 = vpop.permute.xlu0 %1124
      %1128 = vset.pattern.permute.xlu0 0
      %1129 = vperm.xlu0 %1128, %v1021
      %v1130 = vpop.permute.xlu0 %1129
      %1133 = vset.pattern.permute.xlu0 0
      %1134 = vperm.xlu0 %1133, %v1022
      %v1135 = vpop.permute.xlu0 %1134
      %1138 = vset.pattern.permute.xlu0 0
      %1139 = vperm.xlu0 %1138, %v1023
      %v1140 = vpop.permute.xlu0 %1139
      %1143 = vset.pattern.permute.xlu0 0
      %1144 = vperm.xlu0 %1143, %v1024
      %v1145 = vpop.permute.xlu0 %1144
      %1148 = vset.pattern.permute.xlu0 0
      %1149 = vperm.xlu0 %1148, %v1025
      %v1150 = vpop.permute.xlu0 %1149
      %1153 = vset.pattern.permute.xlu0 0
      %1154 = vperm.xlu0 %1153, %v1026
      %v1155 = vpop.permute.xlu0 %1154
      %1158 = vset.pattern.permute.xlu0 0
      %1159 = vperm.xlu0 %1158, %v1027
      %v1160 = vpop.permute.xlu0 %1159
      %1163 = vset.pattern.permute.xlu0 0
      %1164 = vperm.xlu0 %1163, %v1028
      %v1165 = vpop.permute.xlu0 %1164
      %1168 = vset.pattern.permute.xlu0 0
      %1169 = vperm.xlu0 %1168, %v1029
      %v1170 = vpop.permute.xlu0 %1169
      %v1173 = vperm.slane %v1031, 0
      %v1175 = vmul.f32 %v1035, %v1173
      %v1176 = vmul.f32 %v1040, %v1173
      %v1177 = vmul.f32 %v1045, %v1173
      %v1178 = vmul.f32 %v1050, %v1173
      %v1179 = vmul.f32 %v1055, %v1173
      %v1180 = vmul.f32 %v1060, %v1173
      %v1181 = vmul.f32 %v1065, %v1173
      %v1182 = vmul.f32 %v1070, %v1173
      %v1183 = vmul.f32 %v1075, %v1173
      %v1184 = vmul.f32 %v1080, %v1173
      %v1185 = vmul.f32 %v1085, %v1173
      %v1186 = vmul.f32 %v1090, %v1173
      %v1187 = vmul.f32 %v1095, %v1173
      %v1188 = vmul.f32 %v1100, %v1173
      %v1189 = vmul.f32 %v1105, %v1173
      %v1190 = vmul.f32 %v1110, %v1173
      %v1191 = vmul.f32 %v1115, %v1173
      %v1192 = vmul.f32 %v1120, %v1173
      %v1193 = vmul.f32 %v1125, %v1173
      %v1194 = vmul.f32 %v1130, %v1173
      %v1195 = vmul.f32 %v1135, %v1173
      %v1196 = vmul.f32 %v1140, %v1173
      %v1197 = vmul.f32 %v1145, %v1173
      %v1198 = vmul.f32 %v1150, %v1173
      %v1199 = vmul.f32 %v1155, %v1173
      %v1200 = vmul.f32 %v1160, %v1173
      %v1201 = vmul.f32 %v1165, %v1173
      %v1202 = vmul.f32 %v1170, %v1173
      %v1203 = vadd.f32 %v974, %v1175
      %v1204 = vadd.f32 %v975, %v1176
      %v1205 = vadd.f32 %v976, %v1177
      %v1206 = vadd.f32 %v977, %v1178
      %v1207 = vadd.f32 %v978, %v1179
      %v1208 = vadd.f32 %v979, %v1180
      %v1209 = vadd.f32 %v980, %v1181
      %v1210 = vadd.f32 %v981, %v1182
      %v1211 = vadd.f32 %v982, %v1183
      %v1212 = vadd.f32 %v983, %v1184
      %v1213 = vadd.f32 %v984, %v1185
      %v1214 = vadd.f32 %v985, %v1186
      %v1215 = vadd.f32 %v986, %v1187
      %v1216 = vadd.f32 %v987, %v1188
      %v1217 = vadd.f32 %v988, %v1189
      %v1218 = vadd.f32 %v989, %v1190
      %v1219 = vadd.f32 %v990, %v1191
      %v1220 = vadd.f32 %v991, %v1192
      %v1221 = vadd.f32 %v992, %v1193
      %v1222 = vadd.f32 %v993, %v1194
      %v1223 = vadd.f32 %v994, %v1195
      %v1224 = vadd.f32 %v995, %v1196
      %v1225 = vadd.f32 %v996, %v1197
      %v1226 = vadd.f32 %v997, %v1198
      %v1227 = vadd.f32 %v998, %v1199
      %v1228 = vadd.f32 %v999, %v1200
      %v1229 = vadd.f32 %v1000, %v1201
      %v1230 = vadd.f32 %v1001, %v1202
      %v1231 = vld [vmem:[%s286 + $0x1] sm:$0xff]
      %v1232 = vld [vmem:[%s286 + $0x9] sm:$0x3f]
      %v1233 = vld [vmem:[%s286 + $0x11] sm:$0xff]
      %v1234 = vld [vmem:[%s286 + $0x19] sm:$0x3f]
      %v1235 = vld [vmem:[%s286 + $0x21] sm:$0xff]
      %v1236 = vld [vmem:[%s286 + $0x29] sm:$0x3f]
      %v1237 = vld [vmem:[%s286 + $0x31] sm:$0xff]
      %v1238 = vld [vmem:[%s286 + $0x39] sm:$0x3f]
      %v1239 = vld [vmem:[%s286 + $0x41] sm:$0xff]
      %v1240 = vld [vmem:[%s286 + $0x49] sm:$0x3f]
      %v1241 = vld [vmem:[%s286 + $0x51] sm:$0xff]
      %v1242 = vld [vmem:[%s286 + $0x59] sm:$0x3f]
      %v1243 = vld [vmem:[%s286 + $0x61] sm:$0xff]
      %v1244 = vld [vmem:[%s286 + $0x69] sm:$0x3f]
      %v1245 = vld [vmem:[%s286 + $0x71] sm:$0xff]
      %v1246 = vld [vmem:[%s286 + $0x79] sm:$0x3f]
      %v1247 = vld [vmem:[%s286 + $0x81] sm:$0xff]
      %v1248 = vld [vmem:[%s286 + $0x89] sm:$0x3f]
      %v1249 = vld [vmem:[%s286 + $0x91] sm:$0xff]
      %v1250 = vld [vmem:[%s286 + $0x99] sm:$0x3f]
      %v1251 = vld [vmem:[%s286 + $0xa1] sm:$0xff]
      %v1252 = vld [vmem:[%s286 + $0xa9] sm:$0x3f]
      %v1253 = vld [vmem:[%s286 + $0xb1] sm:$0xff]
      %v1254 = vld [vmem:[%s286 + $0xb9] sm:$0x3f]
      %v1255 = vld [vmem:[%s286 + $0xc1] sm:$0xff]
      %v1256 = vld [vmem:[%s286 + $0xc9] sm:$0x3f]
      %v1257 = vld [vmem:[%s286 + $0xd1] sm:$0xff]
      %v1258 = vld [vmem:[%s286 + $0xd9] sm:$0x3f]
      %s1259 = scalar_lea.vmem %s1, 4
      %v1260 = vld [vmem:[%s1259] sm:$0x1]
      %1262 = vset.pattern.permute.xlu0 0
      %1263 = vperm.xlu0 %1262, %v1231
      %v1264 = vpop.permute.xlu0 %1263
      %1267 = vset.pattern.permute.xlu0 0
      %1268 = vperm.xlu0 %1267, %v1232
      %v1269 = vpop.permute.xlu0 %1268
      %1272 = vset.pattern.permute.xlu0 0
      %1273 = vperm.xlu0 %1272, %v1233
      %v1274 = vpop.permute.xlu0 %1273
      %1277 = vset.pattern.permute.xlu0 0
      %1278 = vperm.xlu0 %1277, %v1234
      %v1279 = vpop.permute.xlu0 %1278
      %1282 = vset.pattern.permute.xlu0 0
      %1283 = vperm.xlu0 %1282, %v1235
      %v1284 = vpop.permute.xlu0 %1283
      %1287 = vset.pattern.permute.xlu0 0
      %1288 = vperm.xlu0 %1287, %v1236
      %v1289 = vpop.permute.xlu0 %1288
      %1292 = vset.pattern.permute.xlu0 0
      %1293 = vperm.xlu0 %1292, %v1237
      %v1294 = vpop.permute.xlu0 %1293
      %1297 = vset.pattern.permute.xlu0 0
      %1298 = vperm.xlu0 %1297, %v1238
      %v1299 = vpop.permute.xlu0 %1298
      %1302 = vset.pattern.permute.xlu0 0
      %1303 = vperm.xlu0 %1302, %v1239
      %v1304 = vpop.permute.xlu0 %1303
      %1307 = vset.pattern.permute.xlu0 0
      %1308 = vperm.xlu0 %1307, %v1240
      %v1309 = vpop.permute.xlu0 %1308
      %1312 = vset.pattern.permute.xlu0 0
      %1313 = vperm.xlu0 %1312, %v1241
      %v1314 = vpop.permute.xlu0 %1313
      %1317 = vset.pattern.permute.xlu0 0
      %1318 = vperm.xlu0 %1317, %v1242
      %v1319 = vpop.permute.xlu0 %1318
      %1322 = vset.pattern.permute.xlu0 0
      %1323 = vperm.xlu0 %1322, %v1243
      %v1324 = vpop.permute.xlu0 %1323
      %1327 = vset.pattern.permute.xlu0 0
      %1328 = vperm.xlu0 %1327, %v1244
      %v1329 = vpop.permute.xlu0 %1328
      %1332 = vset.pattern.permute.xlu0 0
      %1333 = vperm.xlu0 %1332, %v1245
      %v1334 = vpop.permute.xlu0 %1333
      %1337 = vset.pattern.permute.xlu0 0
      %1338 = vperm.xlu0 %1337, %v1246
      %v1339 = vpop.permute.xlu0 %1338
      %1342 = vset.pattern.permute.xlu0 0
      %1343 = vperm.xlu0 %1342, %v1247
      %v1344 = vpop.permute.xlu0 %1343
      %1347 = vset.pattern.permute.xlu0 0
      %1348 = vperm.xlu0 %1347, %v1248
      %v1349 = vpop.permute.xlu0 %1348
      %1352 = vset.pattern.permute.xlu0 0
      %1353 = vperm.xlu0 %1352, %v1249
      %v1354 = vpop.permute.xlu0 %1353
      %1357 = vset.pattern.permute.xlu0 0
      %1358 = vperm.xlu0 %1357, %v1250
      %v1359 = vpop.permute.xlu0 %1358
      %1362 = vset.pattern.permute.xlu0 0
      %1363 = vperm.xlu0 %1362, %v1251
      %v1364 = vpop.permute.xlu0 %1363
      %1367 = vset.pattern.permute.xlu0 0
      %1368 = vperm.xlu0 %1367, %v1252
      %v1369 = vpop.permute.xlu0 %1368
      %1372 = vset.pattern.permute.xlu0 0
      %1373 = vperm.xlu0 %1372, %v1253
      %v1374 = vpop.permute.xlu0 %1373
      %1377 = vset.pattern.permute.xlu0 0
      %1378 = vperm.xlu0 %1377, %v1254
      %v1379 = vpop.permute.xlu0 %1378
      %1382 = vset.pattern.permute.xlu0 0
      %1383 = vperm.xlu0 %1382, %v1255
      %v1384 = vpop.permute.xlu0 %1383
      %1387 = vset.pattern.permute.xlu0 0
      %1388 = vperm.xlu0 %1387, %v1256
      %v1389 = vpop.permute.xlu0 %1388
      %1392 = vset.pattern.permute.xlu0 0
      %1393 = vperm.xlu0 %1392, %v1257
      %v1394 = vpop.permute.xlu0 %1393
      %1397 = vset.pattern.permute.xlu0 0
      %1398 = vperm.xlu0 %1397, %v1258
      %v1399 = vpop.permute.xlu0 %1398
      %v1402 = vperm.slane %v1260, 0
      %v1404 = vmul.f32 %v1264, %v1402
      %v1405 = vmul.f32 %v1269, %v1402
      %v1406 = vmul.f32 %v1274, %v1402
      %v1407 = vmul.f32 %v1279, %v1402
      %v1408 = vmul.f32 %v1284, %v1402
      %v1409 = vmul.f32 %v1289, %v1402
      %v1410 = vmul.f32 %v1294, %v1402
      %v1411 = vmul.f32 %v1299, %v1402
      %v1412 = vmul.f32 %v1304, %v1402
      %v1413 = vmul.f32 %v1309, %v1402
      %v1414 = vmul.f32 %v1314, %v1402
      %v1415 = vmul.f32 %v1319, %v1402
      %v1416 = vmul.f32 %v1324, %v1402
      %v1417 = vmul.f32 %v1329, %v1402
      %v1418 = vmul.f32 %v1334, %v1402
      %v1419 = vmul.f32 %v1339, %v1402
      %v1420 = vmul.f32 %v1344, %v1402
      %v1421 = vmul.f32 %v1349, %v1402
      %v1422 = vmul.f32 %v1354, %v1402
      %v1423 = vmul.f32 %v1359, %v1402
      %v1424 = vmul.f32 %v1364, %v1402
      %v1425 = vmul.f32 %v1369, %v1402
      %v1426 = vmul.f32 %v1374, %v1402
      %v1427 = vmul.f32 %v1379, %v1402
      %v1428 = vmul.f32 %v1384, %v1402
      %v1429 = vmul.f32 %v1389, %v1402
      %v1430 = vmul.f32 %v1394, %v1402
      %v1431 = vmul.f32 %v1399, %v1402
      %v1432 = vadd.f32 %v1203, %v1404
      %v1433 = vadd.f32 %v1204, %v1405
      %v1434 = vadd.f32 %v1205, %v1406
      %v1435 = vadd.f32 %v1206, %v1407
      %v1436 = vadd.f32 %v1207, %v1408
      %v1437 = vadd.f32 %v1208, %v1409
      %v1438 = vadd.f32 %v1209, %v1410
      %v1439 = vadd.f32 %v1210, %v1411
      %v1440 = vadd.f32 %v1211, %v1412
      %v1441 = vadd.f32 %v1212, %v1413
      %v1442 = vadd.f32 %v1213, %v1414
      %v1443 = vadd.f32 %v1214, %v1415
      %v1444 = vadd.f32 %v1215, %v1416
      %v1445 = vadd.f32 %v1216, %v1417
      %v1446 = vadd.f32 %v1217, %v1418
      %v1447 = vadd.f32 %v1218, %v1419
      %v1448 = vadd.f32 %v1219, %v1420
      %v1449 = vadd.f32 %v1220, %v1421
      %v1450 = vadd.f32 %v1221, %v1422
      %v1451 = vadd.f32 %v1222, %v1423
      %v1452 = vadd.f32 %v1223, %v1424
      %v1453 = vadd.f32 %v1224, %v1425
      %v1454 = vadd.f32 %v1225, %v1426
      %v1455 = vadd.f32 %v1226, %v1427
      %v1456 = vadd.f32 %v1227, %v1428
      %v1457 = vadd.f32 %v1228, %v1429
      %v1458 = vadd.f32 %v1229, %v1430
      %v1459 = vadd.f32 %v1230, %v1431
      %v1460 = vld [vmem:[%s286 + $0x2] sm:$0xff]
      %v1461 = vld [vmem:[%s286 + $0xa] sm:$0x3f]
      %v1462 = vld [vmem:[%s286 + $0x12] sm:$0xff]
      %v1463 = vld [vmem:[%s286 + $0x1a] sm:$0x3f]
      %v1464 = vld [vmem:[%s286 + $0x22] sm:$0xff]
      %v1465 = vld [vmem:[%s286 + $0x2a] sm:$0x3f]
      %v1466 = vld [vmem:[%s286 + $0x32] sm:$0xff]
      %v1467 = vld [vmem:[%s286 + $0x3a] sm:$0x3f]
      %v1468 = vld [vmem:[%s286 + $0x42] sm:$0xff]
      %v1469 = vld [vmem:[%s286 + $0x4a] sm:$0x3f]
      %v1470 = vld [vmem:[%s286 + $0x52] sm:$0xff]
      %v1471 = vld [vmem:[%s286 + $0x5a] sm:$0x3f]
      %v1472 = vld [vmem:[%s286 + $0x62] sm:$0xff]
      %v1473 = vld [vmem:[%s286 + $0x6a] sm:$0x3f]
      %v1474 = vld [vmem:[%s286 + $0x72] sm:$0xff]
      %v1475 = vld [vmem:[%s286 + $0x7a] sm:$0x3f]
      %v1476 = vld [vmem:[%s286 + $0x82] sm:$0xff]
      %v1477 = vld [vmem:[%s286 + $0x8a] sm:$0x3f]
      %v1478 = vld [vmem:[%s286 + $0x92] sm:$0xff]
      %v1479 = vld [vmem:[%s286 + $0x9a] sm:$0x3f]
      %v1480 = vld [vmem:[%s286 + $0xa2] sm:$0xff]
      %v1481 = vld [vmem:[%s286 + $0xaa] sm:$0x3f]
      %v1482 = vld [vmem:[%s286 + $0xb2] sm:$0xff]
      %v1483 = vld [vmem:[%s286 + $0xba] sm:$0x3f]
      %v1484 = vld [vmem:[%s286 + $0xc2] sm:$0xff]
      %v1485 = vld [vmem:[%s286 + $0xca] sm:$0x3f]
      %v1486 = vld [vmem:[%s286 + $0xd2] sm:$0xff]
      %v1487 = vld [vmem:[%s286 + $0xda] sm:$0x3f]
      %s1488 = scalar_lea.vmem %s1, 5
      %v1489 = vld [vmem:[%s1488] sm:$0x1]
      %1491 = vset.pattern.permute.xlu0 0
      %1492 = vperm.xlu0 %1491, %v1460
      %v1493 = vpop.permute.xlu0 %1492
      %1496 = vset.pattern.permute.xlu0 0
      %1497 = vperm.xlu0 %1496, %v1461
      %v1498 = vpop.permute.xlu0 %1497
      %1501 = vset.pattern.permute.xlu0 0
      %1502 = vperm.xlu0 %1501, %v1462
      %v1503 = vpop.permute.xlu0 %1502
      %1506 = vset.pattern.permute.xlu0 0
      %1507 = vperm.xlu0 %1506, %v1463
      %v1508 = vpop.permute.xlu0 %1507
      %1511 = vset.pattern.permute.xlu0 0
      %1512 = vperm.xlu0 %1511, %v1464
      %v1513 = vpop.permute.xlu0 %1512
      %1516 = vset.pattern.permute.xlu0 0
      %1517 = vperm.xlu0 %1516, %v1465
      %v1518 = vpop.permute.xlu0 %1517
      %1521 = vset.pattern.permute.xlu0 0
      %1522 = vperm.xlu0 %1521, %v1466
      %v1523 = vpop.permute.xlu0 %1522
      %1526 = vset.pattern.permute.xlu0 0
      %1527 = vperm.xlu0 %1526, %v1467
      %v1528 = vpop.permute.xlu0 %1527
      %1531 = vset.pattern.permute.xlu0 0
      %1532 = vperm.xlu0 %1531, %v1468
      %v1533 = vpop.permute.xlu0 %1532
      %1536 = vset.pattern.permute.xlu0 0
      %1537 = vperm.xlu0 %1536, %v1469
      %v1538 = vpop.permute.xlu0 %1537
      %1541 = vset.pattern.permute.xlu0 0
      %1542 = vperm.xlu0 %1541, %v1470
      %v1543 = vpop.permute.xlu0 %1542
      %1546 = vset.pattern.permute.xlu0 0
      %1547 = vperm.xlu0 %1546, %v1471
      %v1548 = vpop.permute.xlu0 %1547
      %1551 = vset.pattern.permute.xlu0 0
      %1552 = vperm.xlu0 %1551, %v1472
      %v1553 = vpop.permute.xlu0 %1552
      %1556 = vset.pattern.permute.xlu0 0
      %1557 = vperm.xlu0 %1556, %v1473
      %v1558 = vpop.permute.xlu0 %1557
      %1561 = vset.pattern.permute.xlu0 0
      %1562 = vperm.xlu0 %1561, %v1474
      %v1563 = vpop.permute.xlu0 %1562
      %1566 = vset.pattern.permute.xlu0 0
      %1567 = vperm.xlu0 %1566, %v1475
      %v1568 = vpop.permute.xlu0 %1567
      %1571 = vset.pattern.permute.xlu0 0
      %1572 = vperm.xlu0 %1571, %v1476
      %v1573 = vpop.permute.xlu0 %1572
      %1576 = vset.pattern.permute.xlu0 0
      %1577 = vperm.xlu0 %1576, %v1477
      %v1578 = vpop.permute.xlu0 %1577
      %1581 = vset.pattern.permute.xlu0 0
      %1582 = vperm.xlu0 %1581, %v1478
      %v1583 = vpop.permute.xlu0 %1582
      %1586 = vset.pattern.permute.xlu0 0
      %1587 = vperm.xlu0 %1586, %v1479
      %v1588 = vpop.permute.xlu0 %1587
      %1591 = vset.pattern.permute.xlu0 0
      %1592 = vperm.xlu0 %1591, %v1480
      %v1593 = vpop.permute.xlu0 %1592
      %1596 = vset.pattern.permute.xlu0 0
      %1597 = vperm.xlu0 %1596, %v1481
      %v1598 = vpop.permute.xlu0 %1597
      %1601 = vset.pattern.permute.xlu0 0
      %1602 = vperm.xlu0 %1601, %v1482
      %v1603 = vpop.permute.xlu0 %1602
      %1606 = vset.pattern.permute.xlu0 0
      %1607 = vperm.xlu0 %1606, %v1483
      %v1608 = vpop.permute.xlu0 %1607
      %1611 = vset.pattern.permute.xlu0 0
      %1612 = vperm.xlu0 %1611, %v1484
      %v1613 = vpop.permute.xlu0 %1612
      %1616 = vset.pattern.permute.xlu0 0
      %1617 = vperm.xlu0 %1616, %v1485
      %v1618 = vpop.permute.xlu0 %1617
      %1621 = vset.pattern.permute.xlu0 0
      %1622 = vperm.xlu0 %1621, %v1486
      %v1623 = vpop.permute.xlu0 %1622
      %1626 = vset.pattern.permute.xlu0 0
      %1627 = vperm.xlu0 %1626, %v1487
      %v1628 = vpop.permute.xlu0 %1627
      %v1631 = vperm.slane %v1489, 0
      %v1633 = vmul.f32 %v1493, %v1631
      %v1634 = vmul.f32 %v1498, %v1631
      %v1635 = vmul.f32 %v1503, %v1631
      %v1636 = vmul.f32 %v1508, %v1631
      %v1637 = vmul.f32 %v1513, %v1631
      %v1638 = vmul.f32 %v1518, %v1631
      %v1639 = vmul.f32 %v1523, %v1631
      %v1640 = vmul.f32 %v1528, %v1631
      %v1641 = vmul.f32 %v1533, %v1631
      %v1642 = vmul.f32 %v1538, %v1631
      %v1643 = vmul.f32 %v1543, %v1631
      %v1644 = vmul.f32 %v1548, %v1631
      %v1645 = vmul.f32 %v1553, %v1631
      %v1646 = vmul.f32 %v1558, %v1631
      %v1647 = vmul.f32 %v1563, %v1631
      %v1648 = vmul.f32 %v1568, %v1631
      %v1649 = vmul.f32 %v1573, %v1631
      %v1650 = vmul.f32 %v1578, %v1631
      %v1651 = vmul.f32 %v1583, %v1631
      %v1652 = vmul.f32 %v1588, %v1631
      %v1653 = vmul.f32 %v1593, %v1631
      %v1654 = vmul.f32 %v1598, %v1631
      %v1655 = vmul.f32 %v1603, %v1631
      %v1656 = vmul.f32 %v1608, %v1631
      %v1657 = vmul.f32 %v1613, %v1631
      %v1658 = vmul.f32 %v1618, %v1631
      %v1659 = vmul.f32 %v1623, %v1631
      %v1660 = vmul.f32 %v1628, %v1631
      %v1661 = vadd.f32 %v1432, %v1633
      %v1662 = vadd.f32 %v1433, %v1634
      %v1663 = vadd.f32 %v1434, %v1635
      %v1664 = vadd.f32 %v1435, %v1636
      %v1665 = vadd.f32 %v1436, %v1637
      %v1666 = vadd.f32 %v1437, %v1638
      %v1667 = vadd.f32 %v1438, %v1639
      %v1668 = vadd.f32 %v1439, %v1640
      %v1669 = vadd.f32 %v1440, %v1641
      %v1670 = vadd.f32 %v1441, %v1642
      %v1671 = vadd.f32 %v1442, %v1643
      %v1672 = vadd.f32 %v1443, %v1644
      %v1673 = vadd.f32 %v1444, %v1645
      %v1674 = vadd.f32 %v1445, %v1646
      %v1675 = vadd.f32 %v1446, %v1647
      %v1676 = vadd.f32 %v1447, %v1648
      %v1677 = vadd.f32 %v1448, %v1649
      %v1678 = vadd.f32 %v1449, %v1650
      %v1679 = vadd.f32 %v1450, %v1651
      %v1680 = vadd.f32 %v1451, %v1652
      %v1681 = vadd.f32 %v1452, %v1653
      %v1682 = vadd.f32 %v1453, %v1654
      %v1683 = vadd.f32 %v1454, %v1655
      %v1684 = vadd.f32 %v1455, %v1656
      %v1685 = vadd.f32 %v1456, %v1657
      %v1686 = vadd.f32 %v1457, %v1658
      %v1687 = vadd.f32 %v1458, %v1659
      %v1688 = vadd.f32 %v1459, %v1660
      %s1689 = scalar_lea.vmem [#allocation2], 32
      %v1690 = vld [vmem:[%s1689] sm:$0xff]
      %v1691 = vld [vmem:[%s1689 + $0x8] sm:$0x3f]
      %v1692 = vld [vmem:[%s1689 + $0x10] sm:$0xff]
      %v1693 = vld [vmem:[%s1689 + $0x18] sm:$0x3f]
      %v1694 = vld [vmem:[%s1689 + $0x20] sm:$0xff]
      %v1695 = vld [vmem:[%s1689 + $0x28] sm:$0x3f]
      %v1696 = vld [vmem:[%s1689 + $0x30] sm:$0xff]
      %v1697 = vld [vmem:[%s1689 + $0x38] sm:$0x3f]
      %v1698 = vld [vmem:[%s1689 + $0x40] sm:$0xff]
      %v1699 = vld [vmem:[%s1689 + $0x48] sm:$0x3f]
      %v1700 = vld [vmem:[%s1689 + $0x50] sm:$0xff]
      %v1701 = vld [vmem:[%s1689 + $0x58] sm:$0x3f]
      %v1702 = vld [vmem:[%s1689 + $0x60] sm:$0xff]
      %v1703 = vld [vmem:[%s1689 + $0x68] sm:$0x3f]
      %v1704 = vld [vmem:[%s1689 + $0x70] sm:$0xff]
      %v1705 = vld [vmem:[%s1689 + $0x78] sm:$0x3f]
      %v1706 = vld [vmem:[%s1689 + $0x80] sm:$0xff]
      %v1707 = vld [vmem:[%s1689 + $0x88] sm:$0x3f]
      %v1708 = vld [vmem:[%s1689 + $0x90] sm:$0xff]
      %v1709 = vld [vmem:[%s1689 + $0x98] sm:$0x3f]
      %v1710 = vld [vmem:[%s1689 + $0xa0] sm:$0xff]
      %v1711 = vld [vmem:[%s1689 + $0xa8] sm:$0x3f]
      %v1712 = vld [vmem:[%s1689 + $0xb0] sm:$0xff]
      %v1713 = vld [vmem:[%s1689 + $0xb8] sm:$0x3f]
      %v1714 = vld [vmem:[%s1689 + $0xc0] sm:$0xff]
      %v1715 = vld [vmem:[%s1689 + $0xc8] sm:$0x3f]
      %v1716 = vld [vmem:[%s1689 + $0xd0] sm:$0xff]
      %v1717 = vld [vmem:[%s1689 + $0xd8] sm:$0x3f]
      %s1718 = scalar_lea.vmem %s1, 6
      %v1719 = vld [vmem:[%s1718] sm:$0x1]
      %1721 = vset.pattern.permute.xlu0 0
      %1722 = vperm.xlu0 %1721, %v1690
      %v1723 = vpop.permute.xlu0 %1722
      %1726 = vset.pattern.permute.xlu0 0
      %1727 = vperm.xlu0 %1726, %v1691
      %v1728 = vpop.permute.xlu0 %1727
      %1731 = vset.pattern.permute.xlu0 0
      %1732 = vperm.xlu0 %1731, %v1692
      %v1733 = vpop.permute.xlu0 %1732
      %1736 = vset.pattern.permute.xlu0 0
      %1737 = vperm.xlu0 %1736, %v1693
      %v1738 = vpop.permute.xlu0 %1737
      %1741 = vset.pattern.permute.xlu0 0
      %1742 = vperm.xlu0 %1741, %v1694
      %v1743 = vpop.permute.xlu0 %1742
      %1746 = vset.pattern.permute.xlu0 0
      %1747 = vperm.xlu0 %1746, %v1695
      %v1748 = vpop.permute.xlu0 %1747
      %1751 = vset.pattern.permute.xlu0 0
      %1752 = vperm.xlu0 %1751, %v1696
      %v1753 = vpop.permute.xlu0 %1752
      %1756 = vset.pattern.permute.xlu0 0
      %1757 = vperm.xlu0 %1756, %v1697
      %v1758 = vpop.permute.xlu0 %1757
      %1761 = vset.pattern.permute.xlu0 0
      %1762 = vperm.xlu0 %1761, %v1698
      %v1763 = vpop.permute.xlu0 %1762
      %1766 = vset.pattern.permute.xlu0 0
      %1767 = vperm.xlu0 %1766, %v1699
      %v1768 = vpop.permute.xlu0 %1767
      %1771 = vset.pattern.permute.xlu0 0
      %1772 = vperm.xlu0 %1771, %v1700
      %v1773 = vpop.permute.xlu0 %1772
      %1776 = vset.pattern.permute.xlu0 0
      %1777 = vperm.xlu0 %1776, %v1701
      %v1778 = vpop.permute.xlu0 %1777
      %1781 = vset.pattern.permute.xlu0 0
      %1782 = vperm.xlu0 %1781, %v1702
      %v1783 = vpop.permute.xlu0 %1782
      %1786 = vset.pattern.permute.xlu0 0
      %1787 = vperm.xlu0 %1786, %v1703
      %v1788 = vpop.permute.xlu0 %1787
      %1791 = vset.pattern.permute.xlu0 0
      %1792 = vperm.xlu0 %1791, %v1704
      %v1793 = vpop.permute.xlu0 %1792
      %1796 = vset.pattern.permute.xlu0 0
      %1797 = vperm.xlu0 %1796, %v1705
      %v1798 = vpop.permute.xlu0 %1797
      %1801 = vset.pattern.permute.xlu0 0
      %1802 = vperm.xlu0 %1801, %v1706
      %v1803 = vpop.permute.xlu0 %1802
      %1806 = vset.pattern.permute.xlu0 0
      %1807 = vperm.xlu0 %1806, %v1707
      %v1808 = vpop.permute.xlu0 %1807
      %1811 = vset.pattern.permute.xlu0 0
      %1812 = vperm.xlu0 %1811, %v1708
      %v1813 = vpop.permute.xlu0 %1812
      %1816 = vset.pattern.permute.xlu0 0
      %1817 = vperm.xlu0 %1816, %v1709
      %v1818 = vpop.permute.xlu0 %1817
      %1821 = vset.pattern.permute.xlu0 0
      %1822 = vperm.xlu0 %1821, %v1710
      %v1823 = vpop.permute.xlu0 %1822
      %1826 = vset.pattern.permute.xlu0 0
      %1827 = vperm.xlu0 %1826, %v1711
      %v1828 = vpop.permute.xlu0 %1827
      %1831 = vset.pattern.permute.xlu0 0
      %1832 = vperm.xlu0 %1831, %v1712
      %v1833 = vpop.permute.xlu0 %1832
      %1836 = vset.pattern.permute.xlu0 0
      %1837 = vperm.xlu0 %1836, %v1713
      %v1838 = vpop.permute.xlu0 %1837
      %1841 = vset.pattern.permute.xlu0 0
      %1842 = vperm.xlu0 %1841, %v1714
      %v1843 = vpop.permute.xlu0 %1842
      %1846 = vset.pattern.permute.xlu0 0
      %1847 = vperm.xlu0 %1846, %v1715
      %v1848 = vpop.permute.xlu0 %1847
      %1851 = vset.pattern.permute.xlu0 0
      %1852 = vperm.xlu0 %1851, %v1716
      %v1853 = vpop.permute.xlu0 %1852
      %1856 = vset.pattern.permute.xlu0 0
      %1857 = vperm.xlu0 %1856, %v1717
      %v1858 = vpop.permute.xlu0 %1857
      %v1861 = vperm.slane %v1719, 0
      %v1863 = vmul.f32 %v1723, %v1861
      %v1864 = vmul.f32 %v1728, %v1861
      %v1865 = vmul.f32 %v1733, %v1861
      %v1866 = vmul.f32 %v1738, %v1861
      %v1867 = vmul.f32 %v1743, %v1861
      %v1868 = vmul.f32 %v1748, %v1861
      %v1869 = vmul.f32 %v1753, %v1861
      %v1870 = vmul.f32 %v1758, %v1861
      %v1871 = vmul.f32 %v1763, %v1861
      %v1872 = vmul.f32 %v1768, %v1861
      %v1873 = vmul.f32 %v1773, %v1861
      %v1874 = vmul.f32 %v1778, %v1861
      %v1875 = vmul.f32 %v1783, %v1861
      %v1876 = vmul.f32 %v1788, %v1861
      %v1877 = vmul.f32 %v1793, %v1861
      %v1878 = vmul.f32 %v1798, %v1861
      %v1879 = vmul.f32 %v1803, %v1861
      %v1880 = vmul.f32 %v1808, %v1861
      %v1881 = vmul.f32 %v1813, %v1861
      %v1882 = vmul.f32 %v1818, %v1861
      %v1883 = vmul.f32 %v1823, %v1861
      %v1884 = vmul.f32 %v1828, %v1861
      %v1885 = vmul.f32 %v1833, %v1861
      %v1886 = vmul.f32 %v1838, %v1861
      %v1887 = vmul.f32 %v1843, %v1861
      %v1888 = vmul.f32 %v1848, %v1861
      %v1889 = vmul.f32 %v1853, %v1861
      %v1890 = vmul.f32 %v1858, %v1861
      %v1891 = vadd.f32 %v1661, %v1863
      %v1892 = vadd.f32 %v1662, %v1864
      %v1893 = vadd.f32 %v1663, %v1865
      %v1894 = vadd.f32 %v1664, %v1866
      %v1895 = vadd.f32 %v1665, %v1867
      %v1896 = vadd.f32 %v1666, %v1868
      %v1897 = vadd.f32 %v1667, %v1869
      %v1898 = vadd.f32 %v1668, %v1870
      %v1899 = vadd.f32 %v1669, %v1871
      %v1900 = vadd.f32 %v1670, %v1872
      %v1901 = vadd.f32 %v1671, %v1873
      %v1902 = vadd.f32 %v1672, %v1874
      %v1903 = vadd.f32 %v1673, %v1875
      %v1904 = vadd.f32 %v1674, %v1876
      %v1905 = vadd.f32 %v1675, %v1877
      %v1906 = vadd.f32 %v1676, %v1878
      %v1907 = vadd.f32 %v1677, %v1879
      %v1908 = vadd.f32 %v1678, %v1880
      %v1909 = vadd.f32 %v1679, %v1881
      %v1910 = vadd.f32 %v1680, %v1882
      %v1911 = vadd.f32 %v1681, %v1883
      %v1912 = vadd.f32 %v1682, %v1884
      %v1913 = vadd.f32 %v1683, %v1885
      %v1914 = vadd.f32 %v1684, %v1886
      %v1915 = vadd.f32 %v1685, %v1887
      %v1916 = vadd.f32 %v1686, %v1888
      %v1917 = vadd.f32 %v1687, %v1889
      %v1918 = vadd.f32 %v1688, %v1890
      %v1919 = vld [vmem:[%s1689 + $0x1] sm:$0xff]
      %v1920 = vld [vmem:[%s1689 + $0x9] sm:$0x3f]
      %v1921 = vld [vmem:[%s1689 + $0x11] sm:$0xff]
      %v1922 = vld [vmem:[%s1689 + $0x19] sm:$0x3f]
      %v1923 = vld [vmem:[%s1689 + $0x21] sm:$0xff]
      %v1924 = vld [vmem:[%s1689 + $0x29] sm:$0x3f]
      %v1925 = vld [vmem:[%s1689 + $0x31] sm:$0xff]
      %v1926 = vld [vmem:[%s1689 + $0x39] sm:$0x3f]
      %v1927 = vld [vmem:[%s1689 + $0x41] sm:$0xff]
      %v1928 = vld [vmem:[%s1689 + $0x49] sm:$0x3f]
      %v1929 = vld [vmem:[%s1689 + $0x51] sm:$0xff]
      %v1930 = vld [vmem:[%s1689 + $0x59] sm:$0x3f]
      %v1931 = vld [vmem:[%s1689 + $0x61] sm:$0xff]
      %v1932 = vld [vmem:[%s1689 + $0x69] sm:$0x3f]
      %v1933 = vld [vmem:[%s1689 + $0x71] sm:$0xff]
      %v1934 = vld [vmem:[%s1689 + $0x79] sm:$0x3f]
      %v1935 = vld [vmem:[%s1689 + $0x81] sm:$0xff]
      %v1936 = vld [vmem:[%s1689 + $0x89] sm:$0x3f]
      %v1937 = vld [vmem:[%s1689 + $0x91] sm:$0xff]
      %v1938 = vld [vmem:[%s1689 + $0x99] sm:$0x3f]
      %v1939 = vld [vmem:[%s1689 + $0xa1] sm:$0xff]
      %v1940 = vld [vmem:[%s1689 + $0xa9] sm:$0x3f]
      %v1941 = vld [vmem:[%s1689 + $0xb1] sm:$0xff]
      %v1942 = vld [vmem:[%s1689 + $0xb9] sm:$0x3f]
      %v1943 = vld [vmem:[%s1689 + $0xc1] sm:$0xff]
      %v1944 = vld [vmem:[%s1689 + $0xc9] sm:$0x3f]
      %v1945 = vld [vmem:[%s1689 + $0xd1] sm:$0xff]
      %v1946 = vld [vmem:[%s1689 + $0xd9] sm:$0x3f]
      %s1947 = scalar_lea.vmem %s1, 7
      %v1948 = vld [vmem:[%s1947] sm:$0x1]
      %1950 = vset.pattern.permute.xlu0 0
      %1951 = vperm.xlu0 %1950, %v1919
      %v1952 = vpop.permute.xlu0 %1951
      %1955 = vset.pattern.permute.xlu0 0
      %1956 = vperm.xlu0 %1955, %v1920
      %v1957 = vpop.permute.xlu0 %1956
      %1960 = vset.pattern.permute.xlu0 0
      %1961 = vperm.xlu0 %1960, %v1921
      %v1962 = vpop.permute.xlu0 %1961
      %1965 = vset.pattern.permute.xlu0 0
      %1966 = vperm.xlu0 %1965, %v1922
      %v1967 = vpop.permute.xlu0 %1966
      %1970 = vset.pattern.permute.xlu0 0
      %1971 = vperm.xlu0 %1970, %v1923
      %v1972 = vpop.permute.xlu0 %1971
      %1975 = vset.pattern.permute.xlu0 0
      %1976 = vperm.xlu0 %1975, %v1924
      %v1977 = vpop.permute.xlu0 %1976
      %1980 = vset.pattern.permute.xlu0 0
      %1981 = vperm.xlu0 %1980, %v1925
      %v1982 = vpop.permute.xlu0 %1981
      %1985 = vset.pattern.permute.xlu0 0
      %1986 = vperm.xlu0 %1985, %v1926
      %v1987 = vpop.permute.xlu0 %1986
      %1990 = vset.pattern.permute.xlu0 0
      %1991 = vperm.xlu0 %1990, %v1927
      %v1992 = vpop.permute.xlu0 %1991
      %1995 = vset.pattern.permute.xlu0 0
      %1996 = vperm.xlu0 %1995, %v1928
      %v1997 = vpop.permute.xlu0 %1996
      %2000 = vset.pattern.permute.xlu0 0
      %2001 = vperm.xlu0 %2000, %v1929
      %v2002 = vpop.permute.xlu0 %2001
      %2005 = vset.pattern.permute.xlu0 0
      %2006 = vperm.xlu0 %2005, %v1930
      %v2007 = vpop.permute.xlu0 %2006
      %2010 = vset.pattern.permute.xlu0 0
      %2011 = vperm.xlu0 %2010, %v1931
      %v2012 = vpop.permute.xlu0 %2011
      %2015 = vset.pattern.permute.xlu0 0
      %2016 = vperm.xlu0 %2015, %v1932
      %v2017 = vpop.permute.xlu0 %2016
      %2020 = vset.pattern.permute.xlu0 0
      %2021 = vperm.xlu0 %2020, %v1933
      %v2022 = vpop.permute.xlu0 %2021
      %2025 = vset.pattern.permute.xlu0 0
      %2026 = vperm.xlu0 %2025, %v1934
      %v2027 = vpop.permute.xlu0 %2026
      %2030 = vset.pattern.permute.xlu0 0
      %2031 = vperm.xlu0 %2030, %v1935
      %v2032 = vpop.permute.xlu0 %2031
      %2035 = vset.pattern.permute.xlu0 0
      %2036 = vperm.xlu0 %2035, %v1936
      %v2037 = vpop.permute.xlu0 %2036
      %2040 = vset.pattern.permute.xlu0 0
      %2041 = vperm.xlu0 %2040, %v1937
      %v2042 = vpop.permute.xlu0 %2041
      %2045 = vset.pattern.permute.xlu0 0
      %2046 = vperm.xlu0 %2045, %v1938
      %v2047 = vpop.permute.xlu0 %2046
      %2050 = vset.pattern.permute.xlu0 0
      %2051 = vperm.xlu0 %2050, %v1939
      %v2052 = vpop.permute.xlu0 %2051
      %2055 = vset.pattern.permute.xlu0 0
      %2056 = vperm.xlu0 %2055, %v1940
      %v2057 = vpop.permute.xlu0 %2056
      %2060 = vset.pattern.permute.xlu0 0
      %2061 = vperm.xlu0 %2060, %v1941
      %v2062 = vpop.permute.xlu0 %2061
      %2065 = vset.pattern.permute.xlu0 0
      %2066 = vperm.xlu0 %2065, %v1942
      %v2067 = vpop.permute.xlu0 %2066
      %2070 = vset.pattern.permute.xlu0 0
      %2071 = vperm.xlu0 %2070, %v1943
      %v2072 = vpop.permute.xlu0 %2071
      %2075 = vset.pattern.permute.xlu0 0
      %2076 = vperm.xlu0 %2075, %v1944
      %v2077 = vpop.permute.xlu0 %2076
      %2080 = vset.pattern.permute.xlu0 0
      %2081 = vperm.xlu0 %2080, %v1945
      %v2082 = vpop.permute.xlu0 %2081
      %2085 = vset.pattern.permute.xlu0 0
      %2086 = vperm.xlu0 %2085, %v1946
      %v2087 = vpop.permute.xlu0 %2086
      %v2090 = vperm.slane %v1948, 0
      %v2092 = vmul.f32 %v1952, %v2090
      %v2093 = vmul.f32 %v1957, %v2090
      %v2094 = vmul.f32 %v1962, %v2090
      %v2095 = vmul.f32 %v1967, %v2090
      %v2096 = vmul.f32 %v1972, %v2090
      %v2097 = vmul.f32 %v1977, %v2090
      %v2098 = vmul.f32 %v1982, %v2090
      %v2099 = vmul.f32 %v1987, %v2090
      %v2100 = vmul.f32 %v1992, %v2090
      %v2101 = vmul.f32 %v1997, %v2090
      %v2102 = vmul.f32 %v2002, %v2090
      %v2103 = vmul.f32 %v2007, %v2090
      %v2104 = vmul.f32 %v2012, %v2090
      %v2105 = vmul.f32 %v2017, %v2090
      %v2106 = vmul.f32 %v2022, %v2090
      %v2107 = vmul.f32 %v2027, %v2090
      %v2108 = vmul.f32 %v2032, %v2090
      %v2109 = vmul.f32 %v2037, %v2090
      %v2110 = vmul.f32 %v2042, %v2090
      %v2111 = vmul.f32 %v2047, %v2090
      %v2112 = vmul.f32 %v2052, %v2090
      %v2113 = vmul.f32 %v2057, %v2090
      %v2114 = vmul.f32 %v2062, %v2090
      %v2115 = vmul.f32 %v2067, %v2090
      %v2116 = vmul.f32 %v2072, %v2090
      %v2117 = vmul.f32 %v2077, %v2090
      %v2118 = vmul.f32 %v2082, %v2090
      %v2119 = vmul.f32 %v2087, %v2090
      %v2120 = vadd.f32 %v1891, %v2092
      %v2121 = vadd.f32 %v1892, %v2093
      %v2122 = vadd.f32 %v1893, %v2094
      %v2123 = vadd.f32 %v1894, %v2095
      %v2124 = vadd.f32 %v1895, %v2096
      %v2125 = vadd.f32 %v1896, %v2097
      %v2126 = vadd.f32 %v1897, %v2098
      %v2127 = vadd.f32 %v1898, %v2099
      %v2128 = vadd.f32 %v1899, %v2100
      %v2129 = vadd.f32 %v1900, %v2101
      %v2130 = vadd.f32 %v1901, %v2102
      %v2131 = vadd.f32 %v1902, %v2103
      %v2132 = vadd.f32 %v1903, %v2104
      %v2133 = vadd.f32 %v1904, %v2105
      %v2134 = vadd.f32 %v1905, %v2106
      %v2135 = vadd.f32 %v1906, %v2107
      %v2136 = vadd.f32 %v1907, %v2108
      %v2137 = vadd.f32 %v1908, %v2109
      %v2138 = vadd.f32 %v1909, %v2110
      %v2139 = vadd.f32 %v1910, %v2111
      %v2140 = vadd.f32 %v1911, %v2112
      %v2141 = vadd.f32 %v1912, %v2113
      %v2142 = vadd.f32 %v1913, %v2114
      %v2143 = vadd.f32 %v1914, %v2115
      %v2144 = vadd.f32 %v1915, %v2116
      %v2145 = vadd.f32 %v1916, %v2117
      %v2146 = vadd.f32 %v1917, %v2118
      %v2147 = vadd.f32 %v1918, %v2119
      %v2148 = vld [vmem:[%s1689 + $0x2] sm:$0xff]
      %v2149 = vld [vmem:[%s1689 + $0xa] sm:$0x3f]
      %v2150 = vld [vmem:[%s1689 + $0x12] sm:$0xff]
      %v2151 = vld [vmem:[%s1689 + $0x1a] sm:$0x3f]
      %v2152 = vld [vmem:[%s1689 + $0x22] sm:$0xff]
      %v2153 = vld [vmem:[%s1689 + $0x2a] sm:$0x3f]
      %v2154 = vld [vmem:[%s1689 + $0x32] sm:$0xff]
      %v2155 = vld [vmem:[%s1689 + $0x3a] sm:$0x3f]
      %v2156 = vld [vmem:[%s1689 + $0x42] sm:$0xff]
      %v2157 = vld [vmem:[%s1689 + $0x4a] sm:$0x3f]
      %v2158 = vld [vmem:[%s1689 + $0x52] sm:$0xff]
      %v2159 = vld [vmem:[%s1689 + $0x5a] sm:$0x3f]
      %v2160 = vld [vmem:[%s1689 + $0x62] sm:$0xff]
      %v2161 = vld [vmem:[%s1689 + $0x6a] sm:$0x3f]
      %v2162 = vld [vmem:[%s1689 + $0x72] sm:$0xff]
      %v2163 = vld [vmem:[%s1689 + $0x7a] sm:$0x3f]
      %v2164 = vld [vmem:[%s1689 + $0x82] sm:$0xff]
      %v2165 = vld [vmem:[%s1689 + $0x8a] sm:$0x3f]
      %v2166 = vld [vmem:[%s1689 + $0x92] sm:$0xff]
      %v2167 = vld [vmem:[%s1689 + $0x9a] sm:$0x3f]
      %v2168 = vld [vmem:[%s1689 + $0xa2] sm:$0xff]
      %v2169 = vld [vmem:[%s1689 + $0xaa] sm:$0x3f]
      %v2170 = vld [vmem:[%s1689 + $0xb2] sm:$0xff]
      %v2171 = vld [vmem:[%s1689 + $0xba] sm:$0x3f]
      %v2172 = vld [vmem:[%s1689 + $0xc2] sm:$0xff]
      %v2173 = vld [vmem:[%s1689 + $0xca] sm:$0x3f]
      %v2174 = vld [vmem:[%s1689 + $0xd2] sm:$0xff]
      %v2175 = vld [vmem:[%s1689 + $0xda] sm:$0x3f]
      %s2176 = scalar_lea.vmem %s1, 8
      %v2177 = vld [vmem:[%s2176] sm:$0x1]
      %2179 = vset.pattern.permute.xlu0 0
      %2180 = vperm.xlu0 %2179, %v2148
      %v2181 = vpop.permute.xlu0 %2180
      %2184 = vset.pattern.permute.xlu0 0
      %2185 = vperm.xlu0 %2184, %v2149
      %v2186 = vpop.permute.xlu0 %2185
      %2189 = vset.pattern.permute.xlu0 0
      %2190 = vperm.xlu0 %2189, %v2150
      %v2191 = vpop.permute.xlu0 %2190
      %2194 = vset.pattern.permute.xlu0 0
      %2195 = vperm.xlu0 %2194, %v2151
      %v2196 = vpop.permute.xlu0 %2195
      %2199 = vset.pattern.permute.xlu0 0
      %2200 = vperm.xlu0 %2199, %v2152
      %v2201 = vpop.permute.xlu0 %2200
      %2204 = vset.pattern.permute.xlu0 0
      %2205 = vperm.xlu0 %2204, %v2153
      %v2206 = vpop.permute.xlu0 %2205
      %2209 = vset.pattern.permute.xlu0 0
      %2210 = vperm.xlu0 %2209, %v2154
      %v2211 = vpop.permute.xlu0 %2210
      %2214 = vset.pattern.permute.xlu0 0
      %2215 = vperm.xlu0 %2214, %v2155
      %v2216 = vpop.permute.xlu0 %2215
      %2219 = vset.pattern.permute.xlu0 0
      %2220 = vperm.xlu0 %2219, %v2156
      %v2221 = vpop.permute.xlu0 %2220
      %2224 = vset.pattern.permute.xlu0 0
      %2225 = vperm.xlu0 %2224, %v2157
      %v2226 = vpop.permute.xlu0 %2225
      %2229 = vset.pattern.permute.xlu0 0
      %2230 = vperm.xlu0 %2229, %v2158
      %v2231 = vpop.permute.xlu0 %2230
      %2234 = vset.pattern.permute.xlu0 0
      %2235 = vperm.xlu0 %2234, %v2159
      %v2236 = vpop.permute.xlu0 %2235
      %2239 = vset.pattern.permute.xlu0 0
      %2240 = vperm.xlu0 %2239, %v2160
      %v2241 = vpop.permute.xlu0 %2240
      %2244 = vset.pattern.permute.xlu0 0
      %2245 = vperm.xlu0 %2244, %v2161
      %v2246 = vpop.permute.xlu0 %2245
      %2249 = vset.pattern.permute.xlu0 0
      %2250 = vperm.xlu0 %2249, %v2162
      %v2251 = vpop.permute.xlu0 %2250
      %2254 = vset.pattern.permute.xlu0 0
      %2255 = vperm.xlu0 %2254, %v2163
      %v2256 = vpop.permute.xlu0 %2255
      %2259 = vset.pattern.permute.xlu0 0
      %2260 = vperm.xlu0 %2259, %v2164
      %v2261 = vpop.permute.xlu0 %2260
      %2264 = vset.pattern.permute.xlu0 0
      %2265 = vperm.xlu0 %2264, %v2165
      %v2266 = vpop.permute.xlu0 %2265
      %2269 = vset.pattern.permute.xlu0 0
      %2270 = vperm.xlu0 %2269, %v2166
      %v2271 = vpop.permute.xlu0 %2270
      %2274 = vset.pattern.permute.xlu0 0
      %2275 = vperm.xlu0 %2274, %v2167
      %v2276 = vpop.permute.xlu0 %2275
      %2279 = vset.pattern.permute.xlu0 0
      %2280 = vperm.xlu0 %2279, %v2168
      %v2281 = vpop.permute.xlu0 %2280
      %2284 = vset.pattern.permute.xlu0 0
      %2285 = vperm.xlu0 %2284, %v2169
      %v2286 = vpop.permute.xlu0 %2285
      %2289 = vset.pattern.permute.xlu0 0
      %2290 = vperm.xlu0 %2289, %v2170
      %v2291 = vpop.permute.xlu0 %2290
      %2294 = vset.pattern.permute.xlu0 0
      %2295 = vperm.xlu0 %2294, %v2171
      %v2296 = vpop.permute.xlu0 %2295
      %2299 = vset.pattern.permute.xlu0 0
      %2300 = vperm.xlu0 %2299, %v2172
      %v2301 = vpop.permute.xlu0 %2300
      %2304 = vset.pattern.permute.xlu0 0
      %2305 = vperm.xlu0 %2304, %v2173
      %v2306 = vpop.permute.xlu0 %2305
      %2309 = vset.pattern.permute.xlu0 0
      %2310 = vperm.xlu0 %2309, %v2174
      %v2311 = vpop.permute.xlu0 %2310
      %2314 = vset.pattern.permute.xlu0 0
      %2315 = vperm.xlu0 %2314, %v2175
      %v2316 = vpop.permute.xlu0 %2315
      %v2319 = vperm.slane %v2177, 0
      %v2321 = vmul.f32 %v2181, %v2319
      %v2322 = vmul.f32 %v2186, %v2319
      %v2323 = vmul.f32 %v2191, %v2319
      %v2324 = vmul.f32 %v2196, %v2319
      %v2325 = vmul.f32 %v2201, %v2319
      %v2326 = vmul.f32 %v2206, %v2319
      %v2327 = vmul.f32 %v2211, %v2319
      %v2328 = vmul.f32 %v2216, %v2319
      %v2329 = vmul.f32 %v2221, %v2319
      %v2330 = vmul.f32 %v2226, %v2319
      %v2331 = vmul.f32 %v2231, %v2319
      %v2332 = vmul.f32 %v2236, %v2319
      %v2333 = vmul.f32 %v2241, %v2319
      %v2334 = vmul.f32 %v2246, %v2319
      %v2335 = vmul.f32 %v2251, %v2319
      %v2336 = vmul.f32 %v2256, %v2319
      %v2337 = vmul.f32 %v2261, %v2319
      %v2338 = vmul.f32 %v2266, %v2319
      %v2339 = vmul.f32 %v2271, %v2319
      %v2340 = vmul.f32 %v2276, %v2319
      %v2341 = vmul.f32 %v2281, %v2319
      %v2342 = vmul.f32 %v2286, %v2319
      %v2343 = vmul.f32 %v2291, %v2319
      %v2344 = vmul.f32 %v2296, %v2319
      %v2345 = vmul.f32 %v2301, %v2319
      %v2346 = vmul.f32 %v2306, %v2319
      %v2347 = vmul.f32 %v2311, %v2319
      %v2348 = vmul.f32 %v2316, %v2319
      %v2349 = vadd.f32 %v2120, %v2321
      %v2350 = vadd.f32 %v2121, %v2322
      %v2351 = vadd.f32 %v2122, %v2323
      %v2352 = vadd.f32 %v2123, %v2324
      %v2353 = vadd.f32 %v2124, %v2325
      %v2354 = vadd.f32 %v2125, %v2326
      %v2355 = vadd.f32 %v2126, %v2327
      %v2356 = vadd.f32 %v2127, %v2328
      %v2357 = vadd.f32 %v2128, %v2329
      %v2358 = vadd.f32 %v2129, %v2330
      %v2359 = vadd.f32 %v2130, %v2331
      %v2360 = vadd.f32 %v2131, %v2332
      %v2361 = vadd.f32 %v2132, %v2333
      %v2362 = vadd.f32 %v2133, %v2334
      %v2363 = vadd.f32 %v2134, %v2335
      %v2364 = vadd.f32 %v2135, %v2336
      %v2365 = vadd.f32 %v2136, %v2337
      %v2366 = vadd.f32 %v2137, %v2338
      %v2367 = vadd.f32 %v2138, %v2339
      %v2368 = vadd.f32 %v2139, %v2340
      %v2369 = vadd.f32 %v2140, %v2341
      %v2370 = vadd.f32 %v2141, %v2342
      %v2371 = vadd.f32 %v2142, %v2343
      %v2372 = vadd.f32 %v2143, %v2344
      %v2373 = vadd.f32 %v2144, %v2345
      %v2374 = vadd.f32 %v2145, %v2346
      %v2375 = vadd.f32 %v2146, %v2347
      %v2376 = vadd.f32 %v2147, %v2348
      %v2377 = vld [vmem:[%s2] sm:$0x1]
      %v2379 = vperm.slane %v2377, 0
      %v2381 = vadd.f32 %v2349, %v2379
      %v2382 = vadd.f32 %v2350, %v2379
      %v2383 = vadd.f32 %v2351, %v2379
      %v2384 = vadd.f32 %v2352, %v2379
      %v2385 = vadd.f32 %v2353, %v2379
      %v2386 = vadd.f32 %v2354, %v2379
      %v2387 = vadd.f32 %v2355, %v2379
      %v2388 = vadd.f32 %v2356, %v2379
      %v2389 = vadd.f32 %v2357, %v2379
      %v2390 = vadd.f32 %v2358, %v2379
      %v2391 = vadd.f32 %v2359, %v2379
      %v2392 = vadd.f32 %v2360, %v2379
      %v2393 = vadd.f32 %v2361, %v2379
      %v2394 = vadd.f32 %v2362, %v2379
      %v2395 = vadd.f32 %v2363, %v2379
      %v2396 = vadd.f32 %v2364, %v2379
      %v2397 = vadd.f32 %v2365, %v2379
      %v2398 = vadd.f32 %v2366, %v2379
      %v2399 = vadd.f32 %v2367, %v2379
      %v2400 = vadd.f32 %v2368, %v2379
      %v2401 = vadd.f32 %v2369, %v2379
      %v2402 = vadd.f32 %v2370, %v2379
      %v2403 = vadd.f32 %v2371, %v2379
      %v2404 = vadd.f32 %v2372, %v2379
      %v2405 = vadd.f32 %v2373, %v2379
      %v2406 = vadd.f32 %v2374, %v2379
      %v2407 = vadd.f32 %v2375, %v2379
      %v2408 = vadd.f32 %v2376, %v2379
      %v2409 = vmax.f32 %v2381, 0.0
      %v2410 = vmax.f32 %v2382, 0.0
      %v2411 = vmax.f32 %v2383, 0.0
      %v2412 = vmax.f32 %v2384, 0.0
      %v2413 = vmax.f32 %v2385, 0.0
      %v2414 = vmax.f32 %v2386, 0.0
      %v2415 = vmax.f32 %v2387, 0.0
      %v2416 = vmax.f32 %v2388, 0.0
      %v2417 = vmax.f32 %v2389, 0.0
      %v2418 = vmax.f32 %v2390, 0.0
      %v2419 = vmax.f32 %v2391, 0.0
      %v2420 = vmax.f32 %v2392, 0.0
      %v2421 = vmax.f32 %v2393, 0.0
      %v2422 = vmax.f32 %v2394, 0.0
      %v2423 = vmax.f32 %v2395, 0.0
      %v2424 = vmax.f32 %v2396, 0.0
      %v2425 = vmax.f32 %v2397, 0.0
      %v2426 = vmax.f32 %v2398, 0.0
      %v2427 = vmax.f32 %v2399, 0.0
      %v2428 = vmax.f32 %v2400, 0.0
      %v2429 = vmax.f32 %v2401, 0.0
      %v2430 = vmax.f32 %v2402, 0.0
      %v2431 = vmax.f32 %v2403, 0.0
      %v2432 = vmax.f32 %v2404, 0.0
      %v2433 = vmax.f32 %v2405, 0.0
      %v2434 = vmax.f32 %v2406, 0.0
      %v2435 = vmax.f32 %v2407, 0.0
      %v2436 = vmax.f32 %v2408, 0.0
      %vm2437 = vcmask 261120
      %2438 = vst.msk [vmem:[#allocation3] sm:$0xff] %vm2437, 0.0
      %2439 = vst.msk [vmem:[#allocation3 + $0x8] sm:$0xff] %vm2437, 0.0
      %2440 = vst.msk [vmem:[#allocation3 + $0x10] sm:$0xff] %vm2437, 0.0
      %2441 = vst.msk [vmem:[#allocation3 + $0x18] sm:$0xff] %vm2437, 0.0
      %2442 = vst.msk [vmem:[#allocation3 + $0x20] sm:$0xff] %vm2437, 0.0
      %2443 = vst.msk [vmem:[#allocation3 + $0x28] sm:$0xff] %vm2437, 0.0
      %2444 = vst.msk [vmem:[#allocation3 + $0x30] sm:$0xff] %vm2437, 0.0
      %2445 = vst.msk [vmem:[#allocation3 + $0x38] sm:$0xff] %vm2437, 0.0
      %2446 = vst.msk [vmem:[#allocation3 + $0x40] sm:$0xff] %vm2437, 0.0
      %2447 = vst.msk [vmem:[#allocation3 + $0x48] sm:$0xff] %vm2437, 0.0
      %2448 = vst.msk [vmem:[#allocation3 + $0x50] sm:$0xff] %vm2437, 0.0
      %2449 = vst.msk [vmem:[#allocation3 + $0x58] sm:$0xff] %vm2437, 0.0
      %2450 = vst.msk [vmem:[#allocation3 + $0x60] sm:$0xff] %vm2437, 0.0
      %2451 = vst.msk [vmem:[#allocation3 + $0x68] sm:$0xff] %vm2437, 0.0
      %2452 = vst.msk [vmem:[#allocation3 + $0x70] sm:$0xff] %vm2437, 0.0
      %2453 = vst.msk [vmem:[#allocation3 + $0x78] sm:$0xff] %vm2437, 0.0
      %2454 = vst.msk [vmem:[#allocation3 + $0x80] sm:$0xff] %vm2437, 0.0
      %2455 = vst.msk [vmem:[#allocation3 + $0x88] sm:$0xff] %vm2437, 0.0
      %2456 = vst.msk [vmem:[#allocation3 + $0x90] sm:$0xff] %vm2437, 0.0
      %2457 = vst.msk [vmem:[#allocation3 + $0x98] sm:$0xff] %vm2437, 0.0
      %2458 = vst.msk [vmem:[#allocation3 + $0xa0] sm:$0xff] %vm2437, 0.0
      %2459 = vst.msk [vmem:[#allocation3 + $0xa8] sm:$0xff] %vm2437, 0.0
      %2460 = vst.msk [vmem:[#allocation3 + $0xb0] sm:$0xff] %vm2437, 0.0
      %2461 = vst.msk [vmem:[#allocation3 + $0xb8] sm:$0xff] %vm2437, 0.0
      %2462 = vst.msk [vmem:[#allocation3 + $0xc0] sm:$0xff] %vm2437, 0.0
      %2463 = vst.msk [vmem:[#allocation3 + $0xc8] sm:$0xff] %vm2437, 0.0
      %2464 = vst.msk [vmem:[#allocation3 + $0xd0] sm:$0xff] %vm2437, 0.0
      %2465 = vst.msk [vmem:[#allocation3 + $0xd8] sm:$0xff] %vm2437, 0.0
      %2466 = vst.msk [vmem:[#allocation3 + $0xe0] sm:$0xff] %vm2437, 0.0
      %2467 = vst.msk [vmem:[#allocation3 + $0xe8] sm:$0xff] %vm2437, 0.0
      %2468 = vst.msk [vmem:[#allocation3 + $0xf0] sm:$0xff] %vm2437, 0.0
      %2469 = vst.msk [vmem:[#allocation3 + $0xf8] sm:$0xff] %vm2437, 0.0
      %s2470 = scalar_lea.vmem [#allocation3], 16
      %2471 = vst.msk [vmem:[%s2470 + $0x1] sm:$0xff] %vm2437, %v2409
      %vm2472 = vcmask 259072
      %2473 = vst.msk [vmem:[%s2470 + $0x9] sm:$0x3f] %vm2472, %v2410
      %2474 = vst.msk [vmem:[%s2470 + $0x11] sm:$0xff] %vm2437, %v2411
      %2475 = vst.msk [vmem:[%s2470 + $0x19] sm:$0x3f] %vm2472, %v2412
      %2476 = vst.msk [vmem:[%s2470 + $0x21] sm:$0xff] %vm2437, %v2413
      %2477 = vst.msk [vmem:[%s2470 + $0x29] sm:$0x3f] %vm2472, %v2414
      %2478 = vst.msk [vmem:[%s2470 + $0x31] sm:$0xff] %vm2437, %v2415
      %2479 = vst.msk [vmem:[%s2470 + $0x39] sm:$0x3f] %vm2472, %v2416
      %2480 = vst.msk [vmem:[%s2470 + $0x41] sm:$0xff] %vm2437, %v2417
      %2481 = vst.msk [vmem:[%s2470 + $0x49] sm:$0x3f] %vm2472, %v2418
      %2482 = vst.msk [vmem:[%s2470 + $0x51] sm:$0xff] %vm2437, %v2419
      %2483 = vst.msk [vmem:[%s2470 + $0x59] sm:$0x3f] %vm2472, %v2420
      %2484 = vst.msk [vmem:[%s2470 + $0x61] sm:$0xff] %vm2437, %v2421
      %2485 = vst.msk [vmem:[%s2470 + $0x69] sm:$0x3f] %vm2472, %v2422
      %2486 = vst.msk [vmem:[%s2470 + $0x71] sm:$0xff] %vm2437, %v2423
      %2487 = vst.msk [vmem:[%s2470 + $0x79] sm:$0x3f] %vm2472, %v2424
      %2488 = vst.msk [vmem:[%s2470 + $0x81] sm:$0xff] %vm2437, %v2425
      %2489 = vst.msk [vmem:[%s2470 + $0x89] sm:$0x3f] %vm2472, %v2426
      %2490 = vst.msk [vmem:[%s2470 + $0x91] sm:$0xff] %vm2437, %v2427
      %2491 = vst.msk [vmem:[%s2470 + $0x99] sm:$0x3f] %vm2472, %v2428
      %2492 = vst.msk [vmem:[%s2470 + $0xa1] sm:$0xff] %vm2437, %v2429
      %2493 = vst.msk [vmem:[%s2470 + $0xa9] sm:$0x3f] %vm2472, %v2430
      %2494 = vst.msk [vmem:[%s2470 + $0xb1] sm:$0xff] %vm2437, %v2431
      %2495 = vst.msk [vmem:[%s2470 + $0xb9] sm:$0x3f] %vm2472, %v2432
      %2496 = vst.msk [vmem:[%s2470 + $0xc1] sm:$0xff] %vm2437, %v2433
      %2497 = vst.msk [vmem:[%s2470 + $0xc9] sm:$0x3f] %vm2472, %v2434
      %2498 = vst.msk [vmem:[%s2470 + $0xd1] sm:$0xff] %vm2437, %v2435
      %2499 = vst.msk [vmem:[%s2470 + $0xd9] sm:$0x3f] %vm2472, %v2436
      %v2500 = vld [vmem:[#allocation3] sm:$0xff]
      %v2501 = vld [vmem:[#allocation3 + $0x8] sm:$0x3f]
      %v2502 = vld [vmem:[#allocation3 + $0x10] sm:$0xff]
      %v2503 = vld [vmem:[#allocation3 + $0x18] sm:$0x3f]
      %v2504 = vld [vmem:[#allocation3 + $0x20] sm:$0xff]
      %v2505 = vld [vmem:[#allocation3 + $0x28] sm:$0x3f]
      %v2506 = vld [vmem:[#allocation3 + $0x30] sm:$0xff]
      %v2507 = vld [vmem:[#allocation3 + $0x38] sm:$0x3f]
      %v2508 = vld [vmem:[#allocation3 + $0x40] sm:$0xff]
      %v2509 = vld [vmem:[#allocation3 + $0x48] sm:$0x3f]
      %v2510 = vld [vmem:[#allocation3 + $0x50] sm:$0xff]
      %v2511 = vld [vmem:[#allocation3 + $0x58] sm:$0x3f]
      %v2512 = vld [vmem:[#allocation3 + $0x60] sm:$0xff]
      %v2513 = vld [vmem:[#allocation3 + $0x68] sm:$0x3f]
      %v2514 = vld [vmem:[#allocation3 + $0x70] sm:$0xff]
      %v2515 = vld [vmem:[#allocation3 + $0x78] sm:$0x3f]
      %v2516 = vld [vmem:[#allocation3 + $0x80] sm:$0xff]
      %v2517 = vld [vmem:[#allocation3 + $0x88] sm:$0x3f]
      %v2518 = vld [vmem:[#allocation3 + $0x90] sm:$0xff]
      %v2519 = vld [vmem:[#allocation3 + $0x98] sm:$0x3f]
      %v2520 = vld [vmem:[#allocation3 + $0xa0] sm:$0xff]
      %v2521 = vld [vmem:[#allocation3 + $0xa8] sm:$0x3f]
      %v2522 = vld [vmem:[#allocation3 + $0xb0] sm:$0xff]
      %v2523 = vld [vmem:[#allocation3 + $0xb8] sm:$0x3f]
      %v2524 = vld [vmem:[#allocation3 + $0xc0] sm:$0xff]
      %v2525 = vld [vmem:[#allocation3 + $0xc8] sm:$0x3f]
      %v2526 = vld [vmem:[#allocation3 + $0xd0] sm:$0xff]
      %v2527 = vld [vmem:[#allocation3 + $0xd8] sm:$0x3f]
      %v2528 = vld [vmem:[%s3] sm:$0xff]
      %v2529 = vld [vmem:[%s3 + $0x8] sm:$0xff]
      %v2530 = vld [vmem:[%s3 + $0x10] sm:$0xff]
      %v2531 = vld [vmem:[%s3 + $0x18] sm:$0xff]
      %v2532 = vld [vmem:[#allocation3 + $0x1] sm:$0xff]
      %v2533 = vld [vmem:[#allocation3 + $0x9] sm:$0x3f]
      %v2534 = vld [vmem:[#allocation3 + $0x11] sm:$0xff]
      %v2535 = vld [vmem:[#allocation3 + $0x19] sm:$0x3f]
      %v2536 = vld [vmem:[#allocation3 + $0x21] sm:$0xff]
      %v2537 = vld [vmem:[#allocation3 + $0x29] sm:$0x3f]
      %v2538 = vld [vmem:[#allocation3 + $0x31] sm:$0xff]
      %v2539 = vld [vmem:[#allocation3 + $0x39] sm:$0x3f]
      %v2540 = vld [vmem:[#allocation3 + $0x41] sm:$0xff]
      %v2541 = vld [vmem:[#allocation3 + $0x49] sm:$0x3f]
      %v2542 = vld [vmem:[#allocation3 + $0x51] sm:$0xff]
      %v2543 = vld [vmem:[#allocation3 + $0x59] sm:$0x3f]
      %v2544 = vld [vmem:[#allocation3 + $0x61] sm:$0xff]
      %v2545 = vld [vmem:[#allocation3 + $0x69] sm:$0x3f]
      %v2546 = vld [vmem:[#allocation3 + $0x71] sm:$0xff]
      %v2547 = vld [vmem:[#allocation3 + $0x79] sm:$0x3f]
      %v2548 = vld [vmem:[#allocation3 + $0x81] sm:$0xff]
      %v2549 = vld [vmem:[#allocation3 + $0x89] sm:$0x3f]
      %v2550 = vld [vmem:[#allocation3 + $0x91] sm:$0xff]
      %v2551 = vld [vmem:[#allocation3 + $0x99] sm:$0x3f]
      %v2552 = vld [vmem:[#allocation3 + $0xa1] sm:$0xff]
      %v2553 = vld [vmem:[#allocation3 + $0xa9] sm:$0x3f]
      %v2554 = vld [vmem:[#allocation3 + $0xb1] sm:$0xff]
      %v2555 = vld [vmem:[#allocation3 + $0xb9] sm:$0x3f]
      %v2556 = vld [vmem:[#allocation3 + $0xc1] sm:$0xff]
      %v2557 = vld [vmem:[#allocation3 + $0xc9] sm:$0x3f]
      %v2558 = vld [vmem:[#allocation3 + $0xd1] sm:$0xff]
      %v2559 = vld [vmem:[#allocation3 + $0xd9] sm:$0x3f]
      %s2560 = scalar_lea.vmem %s3, 32
      %v2561 = vld [vmem:[%s2560] sm:$0xff]
      %v2562 = vld [vmem:[%s2560 + $0x8] sm:$0xff]
      %v2563 = vld [vmem:[%s2560 + $0x10] sm:$0xff]
      %v2564 = vld [vmem:[%s2560 + $0x18] sm:$0xff]
      %v2566 = vsel %vm2437, %v2532, 0
      %v2569 = vsel %vm2437, %v2533, 0
      %2571 = vmatpush.msra.mxu0 0.0
      %2572 = vmatpush.msra.mxu0 0.0
      %2573 = vmatpush.msra.mxu0 0.0
      %2574 = vmatpush.msra.mxu0 0.0
      %2575 = vmatpush.msra.mxu0 0.0
      %2576 = vmatpush.msra.mxu0 0.0
      %2577 = vmatpush.msra.mxu0 0.0
      %2578 = vmatpush.msra.mxu0 0.0
      %2579 = vmatpush.msra.mxu0 0.0
      %2580 = vmatpush.msra.mxu0 0.0
      %2581 = vmatpush.msra.mxu0 0.0
      %2582 = vmatpush.msra.mxu0 0.0
      %2583 = vmatpush.msra.mxu0 %v2564
      %2584 = vmatpush.msra.mxu0 %v2563
      %2585 = vmatpush.msra.mxu0 %v2562
      %2586 = vmatpush.msra.mxu0 %v2561
      %2587 = vmatmul.f32.gmra.mxu0 %v2566
      %v2588 = vpop.f32.mrf.mxu0
      %v2589 = vadd.f32 0.0, %v2588
      %2590 = vmatmul.f32.gmra.mxu0 %v2569
      %v2591 = vpop.f32.mrf.mxu0
      %v2592 = vadd.f32 0.0, %v2591
      %2593 = vdwg.mxu0
      %v2595 = vsel %vm2437, %v2534, 0
      %v2598 = vsel %vm2437, %v2535, 0
      %2600 = vmatpush.msra.mxu0 0.0
      %2601 = vmatpush.msra.mxu0 0.0
      %2602 = vmatpush.msra.mxu0 0.0
      %2603 = vmatpush.msra.mxu0 0.0
      %2604 = vmatpush.msra.mxu0 0.0
      %2605 = vmatpush.msra.mxu0 0.0
      %2606 = vmatpush.msra.mxu0 0.0
      %2607 = vmatpush.msra.mxu0 0.0
      %2608 = vmatpush.msra.mxu0 0.0
      %2609 = vmatpush.msra.mxu0 0.0
      %2610 = vmatpush.msra.mxu0 0.0
      %2611 = vmatpush.msra.mxu0 0.0
      %2612 = vmatpush.msra.mxu0 %v2564
      %2613 = vmatpush.msra.mxu0 %v2563
      %2614 = vmatpush.msra.mxu0 %v2562
      %2615 = vmatpush.msra.mxu0 %v2561
      %2616 = vmatmul.f32.gmra.mxu0 %v2595
      %v2617 = vpop.f32.mrf.mxu0
      %v2618 = vadd.f32 0.0, %v2617
      %2619 = vmatmul.f32.gmra.mxu0 %v2598
      %v2620 = vpop.f32.mrf.mxu0
      %v2621 = vadd.f32 0.0, %v2620
      %2622 = vdwg.mxu0
      %v2624 = vsel %vm2437, %v2536, 0
      %v2627 = vsel %vm2437, %v2537, 0
      %2629 = vmatpush.msra.mxu0 0.0
      %2630 = vmatpush.msra.mxu0 0.0
      %2631 = vmatpush.msra.mxu0 0.0
      %2632 = vmatpush.msra.mxu0 0.0
      %2633 = vmatpush.msra.mxu0 0.0
      %2634 = vmatpush.msra.mxu0 0.0
      %2635 = vmatpush.msra.mxu0 0.0
      %2636 = vmatpush.msra.mxu0 0.0
      %2637 = vmatpush.msra.mxu0 0.0
      %2638 = vmatpush.msra.mxu0 0.0
      %2639 = vmatpush.msra.mxu0 0.0
      %2640 = vmatpush.msra.mxu0 0.0
      %2641 = vmatpush.msra.mxu0 %v2564
      %2642 = vmatpush.msra.mxu0 %v2563
      %2643 = vmatpush.msra.mxu0 %v2562
      %2644 = vmatpush.msra.mxu0 %v2561
      %2645 = vmatmul.f32.gmra.mxu0 %v2624
      %v2646 = vpop.f32.mrf.mxu0
      %v2647 = vadd.f32 0.0, %v2646
      %2648 = vmatmul.f32.gmra.mxu0 %v2627
      %v2649 = vpop.f32.mrf.mxu0
      %v2650 = vadd.f32 0.0, %v2649
      %2651 = vdwg.mxu0
      %v2653 = vsel %vm2437, %v2538, 0
      %v2656 = vsel %vm2437, %v2539, 0
      %2658 = vmatpush.msra.mxu0 0.0
      %2659 = vmatpush.msra.mxu0 0.0
      %2660 = vmatpush.msra.mxu0 0.0
      %2661 = vmatpush.msra.mxu0 0.0
      %2662 = vmatpush.msra.mxu0 0.0
      %2663 = vmatpush.msra.mxu0 0.0
      %2664 = vmatpush.msra.mxu0 0.0
      %2665 = vmatpush.msra.mxu0 0.0
      %2666 = vmatpush.msra.mxu0 0.0
      %2667 = vmatpush.msra.mxu0 0.0
      %2668 = vmatpush.msra.mxu0 0.0
      %2669 = vmatpush.msra.mxu0 0.0
      %2670 = vmatpush.msra.mxu0 %v2564
      %2671 = vmatpush.msra.mxu0 %v2563
      %2672 = vmatpush.msra.mxu0 %v2562
      %2673 = vmatpush.msra.mxu0 %v2561
      %2674 = vmatmul.f32.gmra.mxu0 %v2653
      %v2675 = vpop.f32.mrf.mxu0
      %v2676 = vadd.f32 0.0, %v2675
      %2677 = vmatmul.f32.gmra.mxu0 %v2656
      %v2678 = vpop.f32.mrf.mxu0
      %v2679 = vadd.f32 0.0, %v2678
      %2680 = vdwg.mxu0
      %v2682 = vsel %vm2437, %v2540, 0
      %v2685 = vsel %vm2437, %v2541, 0
      %2687 = vmatpush.msra.mxu0 0.0
      %2688 = vmatpush.msra.mxu0 0.0
      %2689 = vmatpush.msra.mxu0 0.0
      %2690 = vmatpush.msra.mxu0 0.0
      %2691 = vmatpush.msra.mxu0 0.0
      %2692 = vmatpush.msra.mxu0 0.0
      %2693 = vmatpush.msra.mxu0 0.0
      %2694 = vmatpush.msra.mxu0 0.0
      %2695 = vmatpush.msra.mxu0 0.0
      %2696 = vmatpush.msra.mxu0 0.0
      %2697 = vmatpush.msra.mxu0 0.0
      %2698 = vmatpush.msra.mxu0 0.0
      %2699 = vmatpush.msra.mxu0 %v2564
      %2700 = vmatpush.msra.mxu0 %v2563
      %2701 = vmatpush.msra.mxu0 %v2562
      %2702 = vmatpush.msra.mxu0 %v2561
      %2703 = vmatmul.f32.gmra.mxu0 %v2682
      %v2704 = vpop.f32.mrf.mxu0
      %v2705 = vadd.f32 0.0, %v2704
      %2706 = vmatmul.f32.gmra.mxu0 %v2685
      %v2707 = vpop.f32.mrf.mxu0
      %v2708 = vadd.f32 0.0, %v2707
      %2709 = vdwg.mxu0
      %v2711 = vsel %vm2437, %v2542, 0
      %v2714 = vsel %vm2437, %v2543, 0
      %2716 = vmatpush.msra.mxu0 0.0
      %2717 = vmatpush.msra.mxu0 0.0
      %2718 = vmatpush.msra.mxu0 0.0
      %2719 = vmatpush.msra.mxu0 0.0
      %2720 = vmatpush.msra.mxu0 0.0
      %2721 = vmatpush.msra.mxu0 0.0
      %2722 = vmatpush.msra.mxu0 0.0
      %2723 = vmatpush.msra.mxu0 0.0
      %2724 = vmatpush.msra.mxu0 0.0
      %2725 = vmatpush.msra.mxu0 0.0
      %2726 = vmatpush.msra.mxu0 0.0
      %2727 = vmatpush.msra.mxu0 0.0
      %2728 = vmatpush.msra.mxu0 %v2564
      %2729 = vmatpush.msra.mxu0 %v2563
      %2730 = vmatpush.msra.mxu0 %v2562
      %2731 = vmatpush.msra.mxu0 %v2561
      %2732 = vmatmul.f32.gmra.mxu0 %v2711
      %v2733 = vpop.f32.mrf.mxu0
      %v2734 = vadd.f32 0.0, %v2733
      %2735 = vmatmul.f32.gmra.mxu0 %v2714
      %v2736 = vpop.f32.mrf.mxu0
      %v2737 = vadd.f32 0.0, %v2736
      %2738 = vdwg.mxu0
      %v2740 = vsel %vm2437, %v2544, 0
      %v2743 = vsel %vm2437, %v2545, 0
      %2745 = vmatpush.msra.mxu0 0.0
      %2746 = vmatpush.msra.mxu0 0.0
      %2747 = vmatpush.msra.mxu0 0.0
      %2748 = vmatpush.msra.mxu0 0.0
      %2749 = vmatpush.msra.mxu0 0.0
      %2750 = vmatpush.msra.mxu0 0.0
      %2751 = vmatpush.msra.mxu0 0.0
      %2752 = vmatpush.msra.mxu0 0.0
      %2753 = vmatpush.msra.mxu0 0.0
      %2754 = vmatpush.msra.mxu0 0.0
      %2755 = vmatpush.msra.mxu0 0.0
      %2756 = vmatpush.msra.mxu0 0.0
      %2757 = vmatpush.msra.mxu0 %v2564
      %2758 = vmatpush.msra.mxu0 %v2563
      %2759 = vmatpush.msra.mxu0 %v2562
      %2760 = vmatpush.msra.mxu0 %v2561
      %2761 = vmatmul.f32.gmra.mxu0 %v2740
      %v2762 = vpop.f32.mrf.mxu0
      %v2763 = vadd.f32 0.0, %v2762
      %2764 = vmatmul.f32.gmra.mxu0 %v2743
      %v2765 = vpop.f32.mrf.mxu0
      %v2766 = vadd.f32 0.0, %v2765
      %2767 = vdwg.mxu0
      %v2769 = vsel %vm2437, %v2546, 0
      %v2772 = vsel %vm2437, %v2547, 0
      %2774 = vmatpush.msra.mxu0 0.0
      %2775 = vmatpush.msra.mxu0 0.0
      %2776 = vmatpush.msra.mxu0 0.0
      %2777 = vmatpush.msra.mxu0 0.0
      %2778 = vmatpush.msra.mxu0 0.0
      %2779 = vmatpush.msra.mxu0 0.0
      %2780 = vmatpush.msra.mxu0 0.0
      %2781 = vmatpush.msra.mxu0 0.0
      %2782 = vmatpush.msra.mxu0 0.0
      %2783 = vmatpush.msra.mxu0 0.0
      %2784 = vmatpush.msra.mxu0 0.0
      %2785 = vmatpush.msra.mxu0 0.0
      %2786 = vmatpush.msra.mxu0 %v2564
      %2787 = vmatpush.msra.mxu0 %v2563
      %2788 = vmatpush.msra.mxu0 %v2562
      %2789 = vmatpush.msra.mxu0 %v2561
      %2790 = vmatmul.f32.gmra.mxu0 %v2769
      %v2791 = vpop.f32.mrf.mxu0
      %v2792 = vadd.f32 0.0, %v2791
      %2793 = vmatmul.f32.gmra.mxu0 %v2772
      %v2794 = vpop.f32.mrf.mxu0
      %v2795 = vadd.f32 0.0, %v2794
      %2796 = vdwg.mxu0
      %v2798 = vsel %vm2437, %v2548, 0
      %v2801 = vsel %vm2437, %v2549, 0
      %2803 = vmatpush.msra.mxu0 0.0
      %2804 = vmatpush.msra.mxu0 0.0
      %2805 = vmatpush.msra.mxu0 0.0
      %2806 = vmatpush.msra.mxu0 0.0
      %2807 = vmatpush.msra.mxu0 0.0
      %2808 = vmatpush.msra.mxu0 0.0
      %2809 = vmatpush.msra.mxu0 0.0
      %2810 = vmatpush.msra.mxu0 0.0
      %2811 = vmatpush.msra.mxu0 0.0
      %2812 = vmatpush.msra.mxu0 0.0
      %2813 = vmatpush.msra.mxu0 0.0
      %2814 = vmatpush.msra.mxu0 0.0
      %2815 = vmatpush.msra.mxu0 %v2564
      %2816 = vmatpush.msra.mxu0 %v2563
      %2817 = vmatpush.msra.mxu0 %v2562
      %2818 = vmatpush.msra.mxu0 %v2561
      %2819 = vmatmul.f32.gmra.mxu0 %v2798
      %v2820 = vpop.f32.mrf.mxu0
      %v2821 = vadd.f32 0.0, %v2820
      %2822 = vmatmul.f32.gmra.mxu0 %v2801
      %v2823 = vpop.f32.mrf.mxu0
      %v2824 = vadd.f32 0.0, %v2823
      %2825 = vdwg.mxu0
      %v2827 = vsel %vm2437, %v2550, 0
      %v2830 = vsel %vm2437, %v2551, 0
      %2832 = vmatpush.msra.mxu0 0.0
      %2833 = vmatpush.msra.mxu0 0.0
      %2834 = vmatpush.msra.mxu0 0.0
      %2835 = vmatpush.msra.mxu0 0.0
      %2836 = vmatpush.msra.mxu0 0.0
      %2837 = vmatpush.msra.mxu0 0.0
      %2838 = vmatpush.msra.mxu0 0.0
      %2839 = vmatpush.msra.mxu0 0.0
      %2840 = vmatpush.msra.mxu0 0.0
      %2841 = vmatpush.msra.mxu0 0.0
      %2842 = vmatpush.msra.mxu0 0.0
      %2843 = vmatpush.msra.mxu0 0.0
      %2844 = vmatpush.msra.mxu0 %v2564
      %2845 = vmatpush.msra.mxu0 %v2563
      %2846 = vmatpush.msra.mxu0 %v2562
      %2847 = vmatpush.msra.mxu0 %v2561
      %2848 = vmatmul.f32.gmra.mxu0 %v2827
      %v2849 = vpop.f32.mrf.mxu0
      %v2850 = vadd.f32 0.0, %v2849
      %2851 = vmatmul.f32.gmra.mxu0 %v2830
      %v2852 = vpop.f32.mrf.mxu0
      %v2853 = vadd.f32 0.0, %v2852
      %2854 = vdwg.mxu0
      %v2856 = vsel %vm2437, %v2552, 0
      %v2859 = vsel %vm2437, %v2553, 0
      %2861 = vmatpush.msra.mxu0 0.0
      %2862 = vmatpush.msra.mxu0 0.0
      %2863 = vmatpush.msra.mxu0 0.0
      %2864 = vmatpush.msra.mxu0 0.0
      %2865 = vmatpush.msra.mxu0 0.0
      %2866 = vmatpush.msra.mxu0 0.0
      %2867 = vmatpush.msra.mxu0 0.0
      %2868 = vmatpush.msra.mxu0 0.0
      %2869 = vmatpush.msra.mxu0 0.0
      %2870 = vmatpush.msra.mxu0 0.0
      %2871 = vmatpush.msra.mxu0 0.0
      %2872 = vmatpush.msra.mxu0 0.0
      %2873 = vmatpush.msra.mxu0 %v2564
      %2874 = vmatpush.msra.mxu0 %v2563
      %2875 = vmatpush.msra.mxu0 %v2562
      %2876 = vmatpush.msra.mxu0 %v2561
      %2877 = vmatmul.f32.gmra.mxu0 %v2856
      %v2878 = vpop.f32.mrf.mxu0
      %v2879 = vadd.f32 0.0, %v2878
      %2880 = vmatmul.f32.gmra.mxu0 %v2859
      %v2881 = vpop.f32.mrf.mxu0
      %v2882 = vadd.f32 0.0, %v2881
      %2883 = vdwg.mxu0
      %v2885 = vsel %vm2437, %v2554, 0
      %v2888 = vsel %vm2437, %v2555, 0
      %2890 = vmatpush.msra.mxu0 0.0
      %2891 = vmatpush.msra.mxu0 0.0
      %2892 = vmatpush.msra.mxu0 0.0
      %2893 = vmatpush.msra.mxu0 0.0
      %2894 = vmatpush.msra.mxu0 0.0
      %2895 = vmatpush.msra.mxu0 0.0
      %2896 = vmatpush.msra.mxu0 0.0
      %2897 = vmatpush.msra.mxu0 0.0
      %2898 = vmatpush.msra.mxu0 0.0
      %2899 = vmatpush.msra.mxu0 0.0
      %2900 = vmatpush.msra.mxu0 0.0
      %2901 = vmatpush.msra.mxu0 0.0
      %2902 = vmatpush.msra.mxu0 %v2564
      %2903 = vmatpush.msra.mxu0 %v2563
      %2904 = vmatpush.msra.mxu0 %v2562
      %2905 = vmatpush.msra.mxu0 %v2561
      %2906 = vmatmul.f32.gmra.mxu0 %v2885
      %v2907 = vpop.f32.mrf.mxu0
      %v2908 = vadd.f32 0.0, %v2907
      %2909 = vmatmul.f32.gmra.mxu0 %v2888
      %v2910 = vpop.f32.mrf.mxu0
      %v2911 = vadd.f32 0.0, %v2910
      %2912 = vdwg.mxu0
      %v2914 = vsel %vm2437, %v2556, 0
      %v2917 = vsel %vm2437, %v2557, 0
      %2919 = vmatpush.msra.mxu0 0.0
      %2920 = vmatpush.msra.mxu0 0.0
      %2921 = vmatpush.msra.mxu0 0.0
      %2922 = vmatpush.msra.mxu0 0.0
      %2923 = vmatpush.msra.mxu0 0.0
      %2924 = vmatpush.msra.mxu0 0.0
      %2925 = vmatpush.msra.mxu0 0.0
      %2926 = vmatpush.msra.mxu0 0.0
      %2927 = vmatpush.msra.mxu0 0.0
      %2928 = vmatpush.msra.mxu0 0.0
      %2929 = vmatpush.msra.mxu0 0.0
      %2930 = vmatpush.msra.mxu0 0.0
      %2931 = vmatpush.msra.mxu0 %v2564
      %2932 = vmatpush.msra.mxu0 %v2563
      %2933 = vmatpush.msra.mxu0 %v2562
      %2934 = vmatpush.msra.mxu0 %v2561
      %2935 = vmatmul.f32.gmra.mxu0 %v2914
      %v2936 = vpop.f32.mrf.mxu0
      %v2937 = vadd.f32 0.0, %v2936
      %2938 = vmatmul.f32.gmra.mxu0 %v2917
      %v2939 = vpop.f32.mrf.mxu0
      %v2940 = vadd.f32 0.0, %v2939
      %2941 = vdwg.mxu0
      %v2943 = vsel %vm2437, %v2558, 0
      %v2946 = vsel %vm2437, %v2559, 0
      %2948 = vmatpush.msra.mxu0 0.0
      %2949 = vmatpush.msra.mxu0 0.0
      %2950 = vmatpush.msra.mxu0 0.0
      %2951 = vmatpush.msra.mxu0 0.0
      %2952 = vmatpush.msra.mxu0 0.0
      %2953 = vmatpush.msra.mxu0 0.0
      %2954 = vmatpush.msra.mxu0 0.0
      %2955 = vmatpush.msra.mxu0 0.0
      %2956 = vmatpush.msra.mxu0 0.0
      %2957 = vmatpush.msra.mxu0 0.0
      %2958 = vmatpush.msra.mxu0 0.0
      %2959 = vmatpush.msra.mxu0 0.0
      %2960 = vmatpush.msra.mxu0 %v2564
      %2961 = vmatpush.msra.mxu0 %v2563
      %2962 = vmatpush.msra.mxu0 %v2562
      %2963 = vmatpush.msra.mxu0 %v2561
      %2964 = vmatmul.f32.gmra.mxu0 %v2943
      %v2965 = vpop.f32.mrf.mxu0
      %v2966 = vadd.f32 0.0, %v2965
      %2967 = vmatmul.f32.gmra.mxu0 %v2946
      %v2968 = vpop.f32.mrf.mxu0
      %v2969 = vadd.f32 0.0, %v2968
      %2970 = vdwg.mxu0
      %v2972 = vsel %vm2437, %v2500, 0
      %v2975 = vsel %vm2437, %v2501, 0
      %2977 = vmatpush.msra.mxu0 0.0
      %2978 = vmatpush.msra.mxu0 0.0
      %2979 = vmatpush.msra.mxu0 0.0
      %2980 = vmatpush.msra.mxu0 0.0
      %2981 = vmatpush.msra.mxu0 0.0
      %2982 = vmatpush.msra.mxu0 0.0
      %2983 = vmatpush.msra.mxu0 0.0
      %2984 = vmatpush.msra.mxu0 0.0
      %2985 = vmatpush.msra.mxu0 0.0
      %2986 = vmatpush.msra.mxu0 0.0
      %2987 = vmatpush.msra.mxu0 0.0
      %2988 = vmatpush.msra.mxu0 0.0
      %2989 = vmatpush.msra.mxu0 %v2531
      %2990 = vmatpush.msra.mxu0 %v2530
      %2991 = vmatpush.msra.mxu0 %v2529
      %2992 = vmatpush.msra.mxu0 %v2528
      %2993 = vmatmul.f32.gmra.mxu0 %v2972
      %v2994 = vpop.f32.mrf.mxu0
      %v2995 = vadd.f32 %v2589, %v2994
      %2996 = vmatmul.f32.gmra.mxu0 %v2975
      %v2997 = vpop.f32.mrf.mxu0
      %v2998 = vadd.f32 %v2592, %v2997
      %2999 = vdwg.mxu0
      %v3001 = vsel %vm2437, %v2502, 0
      %v3004 = vsel %vm2437, %v2503, 0
      %3006 = vmatpush.msra.mxu0 0.0
      %3007 = vmatpush.msra.mxu0 0.0
      %3008 = vmatpush.msra.mxu0 0.0
      %3009 = vmatpush.msra.mxu0 0.0
      %3010 = vmatpush.msra.mxu0 0.0
      %3011 = vmatpush.msra.mxu0 0.0
      %3012 = vmatpush.msra.mxu0 0.0
      %3013 = vmatpush.msra.mxu0 0.0
      %3014 = vmatpush.msra.mxu0 0.0
      %3015 = vmatpush.msra.mxu0 0.0
      %3016 = vmatpush.msra.mxu0 0.0
      %3017 = vmatpush.msra.mxu0 0.0
      %3018 = vmatpush.msra.mxu0 %v2531
      %3019 = vmatpush.msra.mxu0 %v2530
      %3020 = vmatpush.msra.mxu0 %v2529
      %3021 = vmatpush.msra.mxu0 %v2528
      %3022 = vmatmul.f32.gmra.mxu0 %v3001
      %v3023 = vpop.f32.mrf.mxu0
      %v3024 = vadd.f32 %v2618, %v3023
      %3025 = vmatmul.f32.gmra.mxu0 %v3004
      %v3026 = vpop.f32.mrf.mxu0
      %v3027 = vadd.f32 %v2621, %v3026
      %3028 = vdwg.mxu0
      %v3030 = vsel %vm2437, %v2504, 0
      %v3033 = vsel %vm2437, %v2505, 0
      %3035 = vmatpush.msra.mxu0 0.0
      %3036 = vmatpush.msra.mxu0 0.0
      %3037 = vmatpush.msra.mxu0 0.0
      %3038 = vmatpush.msra.mxu0 0.0
      %3039 = vmatpush.msra.mxu0 0.0
      %3040 = vmatpush.msra.mxu0 0.0
      %3041 = vmatpush.msra.mxu0 0.0
      %3042 = vmatpush.msra.mxu0 0.0
      %3043 = vmatpush.msra.mxu0 0.0
      %3044 = vmatpush.msra.mxu0 0.0
      %3045 = vmatpush.msra.mxu0 0.0
      %3046 = vmatpush.msra.mxu0 0.0
      %3047 = vmatpush.msra.mxu0 %v2531
      %3048 = vmatpush.msra.mxu0 %v2530
      %3049 = vmatpush.msra.mxu0 %v2529
      %3050 = vmatpush.msra.mxu0 %v2528
      %3051 = vmatmul.f32.gmra.mxu0 %v3030
      %v3052 = vpop.f32.mrf.mxu0
      %v3053 = vadd.f32 %v2647, %v3052
      %3054 = vmatmul.f32.gmra.mxu0 %v3033
      %v3055 = vpop.f32.mrf.mxu0
      %v3056 = vadd.f32 %v2650, %v3055
      %3057 = vdwg.mxu0
      %v3059 = vsel %vm2437, %v2506, 0
      %v3062 = vsel %vm2437, %v2507, 0
      %3064 = vmatpush.msra.mxu0 0.0
      %3065 = vmatpush.msra.mxu0 0.0
      %3066 = vmatpush.msra.mxu0 0.0
      %3067 = vmatpush.msra.mxu0 0.0
      %3068 = vmatpush.msra.mxu0 0.0
      %3069 = vmatpush.msra.mxu0 0.0
      %3070 = vmatpush.msra.mxu0 0.0
      %3071 = vmatpush.msra.mxu0 0.0
      %3072 = vmatpush.msra.mxu0 0.0
      %3073 = vmatpush.msra.mxu0 0.0
      %3074 = vmatpush.msra.mxu0 0.0
      %3075 = vmatpush.msra.mxu0 0.0
      %3076 = vmatpush.msra.mxu0 %v2531
      %3077 = vmatpush.msra.mxu0 %v2530
      %3078 = vmatpush.msra.mxu0 %v2529
      %3079 = vmatpush.msra.mxu0 %v2528
      %3080 = vmatmul.f32.gmra.mxu0 %v3059
      %v3081 = vpop.f32.mrf.mxu0
      %v3082 = vadd.f32 %v2676, %v3081
      %3083 = vmatmul.f32.gmra.mxu0 %v3062
      %v3084 = vpop.f32.mrf.mxu0
      %v3085 = vadd.f32 %v2679, %v3084
      %3086 = vdwg.mxu0
      %v3088 = vsel %vm2437, %v2508, 0
      %v3091 = vsel %vm2437, %v2509, 0
      %3093 = vmatpush.msra.mxu0 0.0
      %3094 = vmatpush.msra.mxu0 0.0
      %3095 = vmatpush.msra.mxu0 0.0
      %3096 = vmatpush.msra.mxu0 0.0
      %3097 = vmatpush.msra.mxu0 0.0
      %3098 = vmatpush.msra.mxu0 0.0
      %3099 = vmatpush.msra.mxu0 0.0
      %3100 = vmatpush.msra.mxu0 0.0
      %3101 = vmatpush.msra.mxu0 0.0
      %3102 = vmatpush.msra.mxu0 0.0
      %3103 = vmatpush.msra.mxu0 0.0
      %3104 = vmatpush.msra.mxu0 0.0
      %3105 = vmatpush.msra.mxu0 %v2531
      %3106 = vmatpush.msra.mxu0 %v2530
      %3107 = vmatpush.msra.mxu0 %v2529
      %3108 = vmatpush.msra.mxu0 %v2528
      %3109 = vmatmul.f32.gmra.mxu0 %v3088
      %v3110 = vpop.f32.mrf.mxu0
      %v3111 = vadd.f32 %v2705, %v3110
      %3112 = vmatmul.f32.gmra.mxu0 %v3091
      %v3113 = vpop.f32.mrf.mxu0
      %v3114 = vadd.f32 %v2708, %v3113
      %3115 = vdwg.mxu0
      %v3117 = vsel %vm2437, %v2510, 0
      %v3120 = vsel %vm2437, %v2511, 0
      %3122 = vmatpush.msra.mxu0 0.0
      %3123 = vmatpush.msra.mxu0 0.0
      %3124 = vmatpush.msra.mxu0 0.0
      %3125 = vmatpush.msra.mxu0 0.0
      %3126 = vmatpush.msra.mxu0 0.0
      %3127 = vmatpush.msra.mxu0 0.0
      %3128 = vmatpush.msra.mxu0 0.0
      %3129 = vmatpush.msra.mxu0 0.0
      %3130 = vmatpush.msra.mxu0 0.0
      %3131 = vmatpush.msra.mxu0 0.0
      %3132 = vmatpush.msra.mxu0 0.0
      %3133 = vmatpush.msra.mxu0 0.0
      %3134 = vmatpush.msra.mxu0 %v2531
      %3135 = vmatpush.msra.mxu0 %v2530
      %3136 = vmatpush.msra.mxu0 %v2529
      %3137 = vmatpush.msra.mxu0 %v2528
      %3138 = vmatmul.f32.gmra.mxu0 %v3117
      %v3139 = vpop.f32.mrf.mxu0
      %v3140 = vadd.f32 %v2734, %v3139
      %3141 = vmatmul.f32.gmra.mxu0 %v3120
      %v3142 = vpop.f32.mrf.mxu0
      %v3143 = vadd.f32 %v2737, %v3142
      %3144 = vdwg.mxu0
      %v3146 = vsel %vm2437, %v2512, 0
      %v3149 = vsel %vm2437, %v2513, 0
      %3151 = vmatpush.msra.mxu0 0.0
      %3152 = vmatpush.msra.mxu0 0.0
      %3153 = vmatpush.msra.mxu0 0.0
      %3154 = vmatpush.msra.mxu0 0.0
      %3155 = vmatpush.msra.mxu0 0.0
      %3156 = vmatpush.msra.mxu0 0.0
      %3157 = vmatpush.msra.mxu0 0.0
      %3158 = vmatpush.msra.mxu0 0.0
      %3159 = vmatpush.msra.mxu0 0.0
      %3160 = vmatpush.msra.mxu0 0.0
      %3161 = vmatpush.msra.mxu0 0.0
      %3162 = vmatpush.msra.mxu0 0.0
      %3163 = vmatpush.msra.mxu0 %v2531
      %3164 = vmatpush.msra.mxu0 %v2530
      %3165 = vmatpush.msra.mxu0 %v2529
      %3166 = vmatpush.msra.mxu0 %v2528
      %3167 = vmatmul.f32.gmra.mxu0 %v3146
      %v3168 = vpop.f32.mrf.mxu0
      %v3169 = vadd.f32 %v2763, %v3168
      %3170 = vmatmul.f32.gmra.mxu0 %v3149
      %v3171 = vpop.f32.mrf.mxu0
      %v3172 = vadd.f32 %v2766, %v3171
      %3173 = vdwg.mxu0
      %v3175 = vsel %vm2437, %v2514, 0
      %v3178 = vsel %vm2437, %v2515, 0
      %3180 = vmatpush.msra.mxu0 0.0
      %3181 = vmatpush.msra.mxu0 0.0
      %3182 = vmatpush.msra.mxu0 0.0
      %3183 = vmatpush.msra.mxu0 0.0
      %3184 = vmatpush.msra.mxu0 0.0
      %3185 = vmatpush.msra.mxu0 0.0
      %3186 = vmatpush.msra.mxu0 0.0
      %3187 = vmatpush.msra.mxu0 0.0
      %3188 = vmatpush.msra.mxu0 0.0
      %3189 = vmatpush.msra.mxu0 0.0
      %3190 = vmatpush.msra.mxu0 0.0
      %3191 = vmatpush.msra.mxu0 0.0
      %3192 = vmatpush.msra.mxu0 %v2531
      %3193 = vmatpush.msra.mxu0 %v2530
      %3194 = vmatpush.msra.mxu0 %v2529
      %3195 = vmatpush.msra.mxu0 %v2528
      %3196 = vmatmul.f32.gmra.mxu0 %v3175
      %v3197 = vpop.f32.mrf.mxu0
      %v3198 = vadd.f32 %v2792, %v3197
      %3199 = vmatmul.f32.gmra.mxu0 %v3178
      %v3200 = vpop.f32.mrf.mxu0
      %v3201 = vadd.f32 %v2795, %v3200
      %3202 = vdwg.mxu0
      %v3204 = vsel %vm2437, %v2516, 0
      %v3207 = vsel %vm2437, %v2517, 0
      %3209 = vmatpush.msra.mxu0 0.0
      %3210 = vmatpush.msra.mxu0 0.0
      %3211 = vmatpush.msra.mxu0 0.0
      %3212 = vmatpush.msra.mxu0 0.0
      %3213 = vmatpush.msra.mxu0 0.0
      %3214 = vmatpush.msra.mxu0 0.0
      %3215 = vmatpush.msra.mxu0 0.0
      %3216 = vmatpush.msra.mxu0 0.0
      %3217 = vmatpush.msra.mxu0 0.0
      %3218 = vmatpush.msra.mxu0 0.0
      %3219 = vmatpush.msra.mxu0 0.0
      %3220 = vmatpush.msra.mxu0 0.0
      %3221 = vmatpush.msra.mxu0 %v2531
      %3222 = vmatpush.msra.mxu0 %v2530
      %3223 = vmatpush.msra.mxu0 %v2529
      %3224 = vmatpush.msra.mxu0 %v2528
      %3225 = vmatmul.f32.gmra.mxu0 %v3204
      %v3226 = vpop.f32.mrf.mxu0
      %v3227 = vadd.f32 %v2821, %v3226
      %3228 = vmatmul.f32.gmra.mxu0 %v3207
      %v3229 = vpop.f32.mrf.mxu0
      %v3230 = vadd.f32 %v2824, %v3229
      %3231 = vdwg.mxu0
      %v3233 = vsel %vm2437, %v2518, 0
      %v3236 = vsel %vm2437, %v2519, 0
      %3238 = vmatpush.msra.mxu0 0.0
      %3239 = vmatpush.msra.mxu0 0.0
      %3240 = vmatpush.msra.mxu0 0.0
      %3241 = vmatpush.msra.mxu0 0.0
      %3242 = vmatpush.msra.mxu0 0.0
      %3243 = vmatpush.msra.mxu0 0.0
      %3244 = vmatpush.msra.mxu0 0.0
      %3245 = vmatpush.msra.mxu0 0.0
      %3246 = vmatpush.msra.mxu0 0.0
      %3247 = vmatpush.msra.mxu0 0.0
      %3248 = vmatpush.msra.mxu0 0.0
      %3249 = vmatpush.msra.mxu0 0.0
      %3250 = vmatpush.msra.mxu0 %v2531
      %3251 = vmatpush.msra.mxu0 %v2530
      %3252 = vmatpush.msra.mxu0 %v2529
      %3253 = vmatpush.msra.mxu0 %v2528
      %3254 = vmatmul.f32.gmra.mxu0 %v3233
      %v3255 = vpop.f32.mrf.mxu0
      %v3256 = vadd.f32 %v2850, %v3255
      %3257 = vmatmul.f32.gmra.mxu0 %v3236
      %v3258 = vpop.f32.mrf.mxu0
      %v3259 = vadd.f32 %v2853, %v3258
      %3260 = vdwg.mxu0
      %v3262 = vsel %vm2437, %v2520, 0
      %v3265 = vsel %vm2437, %v2521, 0
      %3267 = vmatpush.msra.mxu0 0.0
      %3268 = vmatpush.msra.mxu0 0.0
      %3269 = vmatpush.msra.mxu0 0.0
      %3270 = vmatpush.msra.mxu0 0.0
      %3271 = vmatpush.msra.mxu0 0.0
      %3272 = vmatpush.msra.mxu0 0.0
      %3273 = vmatpush.msra.mxu0 0.0
      %3274 = vmatpush.msra.mxu0 0.0
      %3275 = vmatpush.msra.mxu0 0.0
      %3276 = vmatpush.msra.mxu0 0.0
      %3277 = vmatpush.msra.mxu0 0.0
      %3278 = vmatpush.msra.mxu0 0.0
      %3279 = vmatpush.msra.mxu0 %v2531
      %3280 = vmatpush.msra.mxu0 %v2530
      %3281 = vmatpush.msra.mxu0 %v2529
      %3282 = vmatpush.msra.mxu0 %v2528
      %3283 = vmatmul.f32.gmra.mxu0 %v3262
      %v3284 = vpop.f32.mrf.mxu0
      %v3285 = vadd.f32 %v2879, %v3284
      %3286 = vmatmul.f32.gmra.mxu0 %v3265
      %v3287 = vpop.f32.mrf.mxu0
      %v3288 = vadd.f32 %v2882, %v3287
      %3289 = vdwg.mxu0
      %v3291 = vsel %vm2437, %v2522, 0
      %v3294 = vsel %vm2437, %v2523, 0
      %3296 = vmatpush.msra.mxu0 0.0
      %3297 = vmatpush.msra.mxu0 0.0
      %3298 = vmatpush.msra.mxu0 0.0
      %3299 = vmatpush.msra.mxu0 0.0
      %3300 = vmatpush.msra.mxu0 0.0
      %3301 = vmatpush.msra.mxu0 0.0
      %3302 = vmatpush.msra.mxu0 0.0
      %3303 = vmatpush.msra.mxu0 0.0
      %3304 = vmatpush.msra.mxu0 0.0
      %3305 = vmatpush.msra.mxu0 0.0
      %3306 = vmatpush.msra.mxu0 0.0
      %3307 = vmatpush.msra.mxu0 0.0
      %3308 = vmatpush.msra.mxu0 %v2531
      %3309 = vmatpush.msra.mxu0 %v2530
      %3310 = vmatpush.msra.mxu0 %v2529
      %3311 = vmatpush.msra.mxu0 %v2528
      %3312 = vmatmul.f32.gmra.mxu0 %v3291
      %v3313 = vpop.f32.mrf.mxu0
      %v3314 = vadd.f32 %v2908, %v3313
      %3315 = vmatmul.f32.gmra.mxu0 %v3294
      %v3316 = vpop.f32.mrf.mxu0
      %v3317 = vadd.f32 %v2911, %v3316
      %3318 = vdwg.mxu0
      %v3320 = vsel %vm2437, %v2524, 0
      %v3323 = vsel %vm2437, %v2525, 0
      %3325 = vmatpush.msra.mxu0 0.0
      %3326 = vmatpush.msra.mxu0 0.0
      %3327 = vmatpush.msra.mxu0 0.0
      %3328 = vmatpush.msra.mxu0 0.0
      %3329 = vmatpush.msra.mxu0 0.0
      %3330 = vmatpush.msra.mxu0 0.0
      %3331 = vmatpush.msra.mxu0 0.0
      %3332 = vmatpush.msra.mxu0 0.0
      %3333 = vmatpush.msra.mxu0 0.0
      %3334 = vmatpush.msra.mxu0 0.0
      %3335 = vmatpush.msra.mxu0 0.0
      %3336 = vmatpush.msra.mxu0 0.0
      %3337 = vmatpush.msra.mxu0 %v2531
      %3338 = vmatpush.msra.mxu0 %v2530
      %3339 = vmatpush.msra.mxu0 %v2529
      %3340 = vmatpush.msra.mxu0 %v2528
      %3341 = vmatmul.f32.gmra.mxu0 %v3320
      %v3342 = vpop.f32.mrf.mxu0
      %v3343 = vadd.f32 %v2937, %v3342
      %3344 = vmatmul.f32.gmra.mxu0 %v3323
      %v3345 = vpop.f32.mrf.mxu0
      %v3346 = vadd.f32 %v2940, %v3345
      %3347 = vdwg.mxu0
      %v3349 = vsel %vm2437, %v2526, 0
      %v3352 = vsel %vm2437, %v2527, 0
      %3354 = vmatpush.msra.mxu0 0.0
      %3355 = vmatpush.msra.mxu0 0.0
      %3356 = vmatpush.msra.mxu0 0.0
      %3357 = vmatpush.msra.mxu0 0.0
      %3358 = vmatpush.msra.mxu0 0.0
      %3359 = vmatpush.msra.mxu0 0.0
      %3360 = vmatpush.msra.mxu0 0.0
      %3361 = vmatpush.msra.mxu0 0.0
      %3362 = vmatpush.msra.mxu0 0.0
      %3363 = vmatpush.msra.mxu0 0.0
      %3364 = vmatpush.msra.mxu0 0.0
      %3365 = vmatpush.msra.mxu0 0.0
      %3366 = vmatpush.msra.mxu0 %v2531
      %3367 = vmatpush.msra.mxu0 %v2530
      %3368 = vmatpush.msra.mxu0 %v2529
      %3369 = vmatpush.msra.mxu0 %v2528
      %3370 = vmatmul.f32.gmra.mxu0 %v3349
      %v3371 = vpop.f32.mrf.mxu0
      %v3372 = vadd.f32 %v2966, %v3371
      %3373 = vmatmul.f32.gmra.mxu0 %v3352
      %v3374 = vpop.f32.mrf.mxu0
      %v3375 = vadd.f32 %v2969, %v3374
      %3376 = vdwg.mxu0
      %v3377 = vld [vmem:[#allocation3 + $0x2] sm:$0xff]
      %v3378 = vld [vmem:[#allocation3 + $0xa] sm:$0x3f]
      %v3379 = vld [vmem:[#allocation3 + $0x12] sm:$0xff]
      %v3380 = vld [vmem:[#allocation3 + $0x1a] sm:$0x3f]
      %v3381 = vld [vmem:[#allocation3 + $0x22] sm:$0xff]
      %v3382 = vld [vmem:[#allocation3 + $0x2a] sm:$0x3f]
      %v3383 = vld [vmem:[#allocation3 + $0x32] sm:$0xff]
      %v3384 = vld [vmem:[#allocation3 + $0x3a] sm:$0x3f]
      %v3385 = vld [vmem:[#allocation3 + $0x42] sm:$0xff]
      %v3386 = vld [vmem:[#allocation3 + $0x4a] sm:$0x3f]
      %v3387 = vld [vmem:[#allocation3 + $0x52] sm:$0xff]
      %v3388 = vld [vmem:[#allocation3 + $0x5a] sm:$0x3f]
      %v3389 = vld [vmem:[#allocation3 + $0x62] sm:$0xff]
      %v3390 = vld [vmem:[#allocation3 + $0x6a] sm:$0x3f]
      %v3391 = vld [vmem:[#allocation3 + $0x72] sm:$0xff]
      %v3392 = vld [vmem:[#allocation3 + $0x7a] sm:$0x3f]
      %v3393 = vld [vmem:[#allocation3 + $0x82] sm:$0xff]
      %v3394 = vld [vmem:[#allocation3 + $0x8a] sm:$0x3f]
      %v3395 = vld [vmem:[#allocation3 + $0x92] sm:$0xff]
      %v3396 = vld [vmem:[#allocation3 + $0x9a] sm:$0x3f]
      %v3397 = vld [vmem:[#allocation3 + $0xa2] sm:$0xff]
      %v3398 = vld [vmem:[#allocation3 + $0xaa] sm:$0x3f]
      %v3399 = vld [vmem:[#allocation3 + $0xb2] sm:$0xff]
      %v3400 = vld [vmem:[#allocation3 + $0xba] sm:$0x3f]
      %v3401 = vld [vmem:[#allocation3 + $0xc2] sm:$0xff]
      %v3402 = vld [vmem:[#allocation3 + $0xca] sm:$0x3f]
      %v3403 = vld [vmem:[#allocation3 + $0xd2] sm:$0xff]
      %v3404 = vld [vmem:[#allocation3 + $0xda] sm:$0x3f]
      %s3405 = scalar_lea.vmem %s3, 64
      %v3406 = vld [vmem:[%s3405] sm:$0xff]
      %v3407 = vld [vmem:[%s3405 + $0x8] sm:$0xff]
      %v3408 = vld [vmem:[%s3405 + $0x10] sm:$0xff]
      %v3409 = vld [vmem:[%s3405 + $0x18] sm:$0xff]
      %v3411 = vsel %vm2437, %v3377, 0
      %v3414 = vsel %vm2437, %v3378, 0
      %3416 = vmatpush.msra.mxu0 0.0
      %3417 = vmatpush.msra.mxu0 0.0
      %3418 = vmatpush.msra.mxu0 0.0
      %3419 = vmatpush.msra.mxu0 0.0
      %3420 = vmatpush.msra.mxu0 0.0
      %3421 = vmatpush.msra.mxu0 0.0
      %3422 = vmatpush.msra.mxu0 0.0
      %3423 = vmatpush.msra.mxu0 0.0
      %3424 = vmatpush.msra.mxu0 0.0
      %3425 = vmatpush.msra.mxu0 0.0
      %3426 = vmatpush.msra.mxu0 0.0
      %3427 = vmatpush.msra.mxu0 0.0
      %3428 = vmatpush.msra.mxu0 %v3409
      %3429 = vmatpush.msra.mxu0 %v3408
      %3430 = vmatpush.msra.mxu0 %v3407
      %3431 = vmatpush.msra.mxu0 %v3406
      %3432 = vmatmul.f32.gmra.mxu0 %v3411
      %v3433 = vpop.f32.mrf.mxu0
      %v3434 = vadd.f32 0.0, %v3433
      %3435 = vmatmul.f32.gmra.mxu0 %v3414
      %v3436 = vpop.f32.mrf.mxu0
      %v3437 = vadd.f32 0.0, %v3436
      %3438 = vdwg.mxu0
      %v3440 = vsel %vm2437, %v3379, 0
      %v3443 = vsel %vm2437, %v3380, 0
      %3445 = vmatpush.msra.mxu0 0.0
      %3446 = vmatpush.msra.mxu0 0.0
      %3447 = vmatpush.msra.mxu0 0.0
      %3448 = vmatpush.msra.mxu0 0.0
      %3449 = vmatpush.msra.mxu0 0.0
      %3450 = vmatpush.msra.mxu0 0.0
      %3451 = vmatpush.msra.mxu0 0.0
      %3452 = vmatpush.msra.mxu0 0.0
      %3453 = vmatpush.msra.mxu0 0.0
      %3454 = vmatpush.msra.mxu0 0.0
      %3455 = vmatpush.msra.mxu0 0.0
      %3456 = vmatpush.msra.mxu0 0.0
      %3457 = vmatpush.msra.mxu0 %v3409
      %3458 = vmatpush.msra.mxu0 %v3408
      %3459 = vmatpush.msra.mxu0 %v3407
      %3460 = vmatpush.msra.mxu0 %v3406
      %3461 = vmatmul.f32.gmra.mxu0 %v3440
      %v3462 = vpop.f32.mrf.mxu0
      %v3463 = vadd.f32 0.0, %v3462
      %3464 = vmatmul.f32.gmra.mxu0 %v3443
      %v3465 = vpop.f32.mrf.mxu0
      %v3466 = vadd.f32 0.0, %v3465
      %3467 = vdwg.mxu0
      %v3469 = vsel %vm2437, %v3381, 0
      %v3472 = vsel %vm2437, %v3382, 0
      %3474 = vmatpush.msra.mxu0 0.0
      %3475 = vmatpush.msra.mxu0 0.0
      %3476 = vmatpush.msra.mxu0 0.0
      %3477 = vmatpush.msra.mxu0 0.0
      %3478 = vmatpush.msra.mxu0 0.0
      %3479 = vmatpush.msra.mxu0 0.0
      %3480 = vmatpush.msra.mxu0 0.0
      %3481 = vmatpush.msra.mxu0 0.0
      %3482 = vmatpush.msra.mxu0 0.0
      %3483 = vmatpush.msra.mxu0 0.0
      %3484 = vmatpush.msra.mxu0 0.0
      %3485 = vmatpush.msra.mxu0 0.0
      %3486 = vmatpush.msra.mxu0 %v3409
      %3487 = vmatpush.msra.mxu0 %v3408
      %3488 = vmatpush.msra.mxu0 %v3407
      %3489 = vmatpush.msra.mxu0 %v3406
      %3490 = vmatmul.f32.gmra.mxu0 %v3469
      %v3491 = vpop.f32.mrf.mxu0
      %v3492 = vadd.f32 0.0, %v3491
      %3493 = vmatmul.f32.gmra.mxu0 %v3472
      %v3494 = vpop.f32.mrf.mxu0
      %v3495 = vadd.f32 0.0, %v3494
      %3496 = vdwg.mxu0
      %v3498 = vsel %vm2437, %v3383, 0
      %v3501 = vsel %vm2437, %v3384, 0
      %3503 = vmatpush.msra.mxu0 0.0
      %3504 = vmatpush.msra.mxu0 0.0
      %3505 = vmatpush.msra.mxu0 0.0
      %3506 = vmatpush.msra.mxu0 0.0
      %3507 = vmatpush.msra.mxu0 0.0
      %3508 = vmatpush.msra.mxu0 0.0
      %3509 = vmatpush.msra.mxu0 0.0
      %3510 = vmatpush.msra.mxu0 0.0
      %3511 = vmatpush.msra.mxu0 0.0
      %3512 = vmatpush.msra.mxu0 0.0
      %3513 = vmatpush.msra.mxu0 0.0
      %3514 = vmatpush.msra.mxu0 0.0
      %3515 = vmatpush.msra.mxu0 %v3409
      %3516 = vmatpush.msra.mxu0 %v3408
      %3517 = vmatpush.msra.mxu0 %v3407
      %3518 = vmatpush.msra.mxu0 %v3406
      %3519 = vmatmul.f32.gmra.mxu0 %v3498
      %v3520 = vpop.f32.mrf.mxu0
      %v3521 = vadd.f32 0.0, %v3520
      %3522 = vmatmul.f32.gmra.mxu0 %v3501
      %v3523 = vpop.f32.mrf.mxu0
      %v3524 = vadd.f32 0.0, %v3523
      %3525 = vdwg.mxu0
      %v3527 = vsel %vm2437, %v3385, 0
      %v3530 = vsel %vm2437, %v3386, 0
      %3532 = vmatpush.msra.mxu0 0.0
      %3533 = vmatpush.msra.mxu0 0.0
      %3534 = vmatpush.msra.mxu0 0.0
      %3535 = vmatpush.msra.mxu0 0.0
      %3536 = vmatpush.msra.mxu0 0.0
      %3537 = vmatpush.msra.mxu0 0.0
      %3538 = vmatpush.msra.mxu0 0.0
      %3539 = vmatpush.msra.mxu0 0.0
      %3540 = vmatpush.msra.mxu0 0.0
      %3541 = vmatpush.msra.mxu0 0.0
      %3542 = vmatpush.msra.mxu0 0.0
      %3543 = vmatpush.msra.mxu0 0.0
      %3544 = vmatpush.msra.mxu0 %v3409
      %3545 = vmatpush.msra.mxu0 %v3408
      %3546 = vmatpush.msra.mxu0 %v3407
      %3547 = vmatpush.msra.mxu0 %v3406
      %3548 = vmatmul.f32.gmra.mxu0 %v3527
      %v3549 = vpop.f32.mrf.mxu0
      %v3550 = vadd.f32 0.0, %v3549
      %3551 = vmatmul.f32.gmra.mxu0 %v3530
      %v3552 = vpop.f32.mrf.mxu0
      %v3553 = vadd.f32 0.0, %v3552
      %3554 = vdwg.mxu0
      %v3556 = vsel %vm2437, %v3387, 0
      %v3559 = vsel %vm2437, %v3388, 0
      %3561 = vmatpush.msra.mxu0 0.0
      %3562 = vmatpush.msra.mxu0 0.0
      %3563 = vmatpush.msra.mxu0 0.0
      %3564 = vmatpush.msra.mxu0 0.0
      %3565 = vmatpush.msra.mxu0 0.0
      %3566 = vmatpush.msra.mxu0 0.0
      %3567 = vmatpush.msra.mxu0 0.0
      %3568 = vmatpush.msra.mxu0 0.0
      %3569 = vmatpush.msra.mxu0 0.0
      %3570 = vmatpush.msra.mxu0 0.0
      %3571 = vmatpush.msra.mxu0 0.0
      %3572 = vmatpush.msra.mxu0 0.0
      %3573 = vmatpush.msra.mxu0 %v3409
      %3574 = vmatpush.msra.mxu0 %v3408
      %3575 = vmatpush.msra.mxu0 %v3407
      %3576 = vmatpush.msra.mxu0 %v3406
      %3577 = vmatmul.f32.gmra.mxu0 %v3556
      %v3578 = vpop.f32.mrf.mxu0
      %v3579 = vadd.f32 0.0, %v3578
      %3580 = vmatmul.f32.gmra.mxu0 %v3559
      %v3581 = vpop.f32.mrf.mxu0
      %v3582 = vadd.f32 0.0, %v3581
      %3583 = vdwg.mxu0
      %v3585 = vsel %vm2437, %v3389, 0
      %v3588 = vsel %vm2437, %v3390, 0
      %3590 = vmatpush.msra.mxu0 0.0
      %3591 = vmatpush.msra.mxu0 0.0
      %3592 = vmatpush.msra.mxu0 0.0
      %3593 = vmatpush.msra.mxu0 0.0
      %3594 = vmatpush.msra.mxu0 0.0
      %3595 = vmatpush.msra.mxu0 0.0
      %3596 = vmatpush.msra.mxu0 0.0
      %3597 = vmatpush.msra.mxu0 0.0
      %3598 = vmatpush.msra.mxu0 0.0
      %3599 = vmatpush.msra.mxu0 0.0
      %3600 = vmatpush.msra.mxu0 0.0
      %3601 = vmatpush.msra.mxu0 0.0
      %3602 = vmatpush.msra.mxu0 %v3409
      %3603 = vmatpush.msra.mxu0 %v3408
      %3604 = vmatpush.msra.mxu0 %v3407
      %3605 = vmatpush.msra.mxu0 %v3406
      %3606 = vmatmul.f32.gmra.mxu0 %v3585
      %v3607 = vpop.f32.mrf.mxu0
      %v3608 = vadd.f32 0.0, %v3607
      %3609 = vmatmul.f32.gmra.mxu0 %v3588
      %v3610 = vpop.f32.mrf.mxu0
      %v3611 = vadd.f32 0.0, %v3610
      %3612 = vdwg.mxu0
      %v3614 = vsel %vm2437, %v3391, 0
      %v3617 = vsel %vm2437, %v3392, 0
      %3619 = vmatpush.msra.mxu0 0.0
      %3620 = vmatpush.msra.mxu0 0.0
      %3621 = vmatpush.msra.mxu0 0.0
      %3622 = vmatpush.msra.mxu0 0.0
      %3623 = vmatpush.msra.mxu0 0.0
      %3624 = vmatpush.msra.mxu0 0.0
      %3625 = vmatpush.msra.mxu0 0.0
      %3626 = vmatpush.msra.mxu0 0.0
      %3627 = vmatpush.msra.mxu0 0.0
      %3628 = vmatpush.msra.mxu0 0.0
      %3629 = vmatpush.msra.mxu0 0.0
      %3630 = vmatpush.msra.mxu0 0.0
      %3631 = vmatpush.msra.mxu0 %v3409
      %3632 = vmatpush.msra.mxu0 %v3408
      %3633 = vmatpush.msra.mxu0 %v3407
      %3634 = vmatpush.msra.mxu0 %v3406
      %3635 = vmatmul.f32.gmra.mxu0 %v3614
      %v3636 = vpop.f32.mrf.mxu0
      %v3637 = vadd.f32 0.0, %v3636
      %3638 = vmatmul.f32.gmra.mxu0 %v3617
      %v3639 = vpop.f32.mrf.mxu0
      %v3640 = vadd.f32 0.0, %v3639
      %3641 = vdwg.mxu0
      %v3643 = vsel %vm2437, %v3393, 0
      %v3646 = vsel %vm2437, %v3394, 0
      %3648 = vmatpush.msra.mxu0 0.0
      %3649 = vmatpush.msra.mxu0 0.0
      %3650 = vmatpush.msra.mxu0 0.0
      %3651 = vmatpush.msra.mxu0 0.0
      %3652 = vmatpush.msra.mxu0 0.0
      %3653 = vmatpush.msra.mxu0 0.0
      %3654 = vmatpush.msra.mxu0 0.0
      %3655 = vmatpush.msra.mxu0 0.0
      %3656 = vmatpush.msra.mxu0 0.0
      %3657 = vmatpush.msra.mxu0 0.0
      %3658 = vmatpush.msra.mxu0 0.0
      %3659 = vmatpush.msra.mxu0 0.0
      %3660 = vmatpush.msra.mxu0 %v3409
      %3661 = vmatpush.msra.mxu0 %v3408
      %3662 = vmatpush.msra.mxu0 %v3407
      %3663 = vmatpush.msra.mxu0 %v3406
      %3664 = vmatmul.f32.gmra.mxu0 %v3643
      %v3665 = vpop.f32.mrf.mxu0
      %v3666 = vadd.f32 0.0, %v3665
      %3667 = vmatmul.f32.gmra.mxu0 %v3646
      %v3668 = vpop.f32.mrf.mxu0
      %v3669 = vadd.f32 0.0, %v3668
      %3670 = vdwg.mxu0
      %v3672 = vsel %vm2437, %v3395, 0
      %v3675 = vsel %vm2437, %v3396, 0
      %3677 = vmatpush.msra.mxu0 0.0
      %3678 = vmatpush.msra.mxu0 0.0
      %3679 = vmatpush.msra.mxu0 0.0
      %3680 = vmatpush.msra.mxu0 0.0
      %3681 = vmatpush.msra.mxu0 0.0
      %3682 = vmatpush.msra.mxu0 0.0
      %3683 = vmatpush.msra.mxu0 0.0
      %3684 = vmatpush.msra.mxu0 0.0
      %3685 = vmatpush.msra.mxu0 0.0
      %3686 = vmatpush.msra.mxu0 0.0
      %3687 = vmatpush.msra.mxu0 0.0
      %3688 = vmatpush.msra.mxu0 0.0
      %3689 = vmatpush.msra.mxu0 %v3409
      %3690 = vmatpush.msra.mxu0 %v3408
      %3691 = vmatpush.msra.mxu0 %v3407
      %3692 = vmatpush.msra.mxu0 %v3406
      %3693 = vmatmul.f32.gmra.mxu0 %v3672
      %v3694 = vpop.f32.mrf.mxu0
      %v3695 = vadd.f32 0.0, %v3694
      %3696 = vmatmul.f32.gmra.mxu0 %v3675
      %v3697 = vpop.f32.mrf.mxu0
      %v3698 = vadd.f32 0.0, %v3697
      %3699 = vdwg.mxu0
      %v3701 = vsel %vm2437, %v3397, 0
      %v3704 = vsel %vm2437, %v3398, 0
      %3706 = vmatpush.msra.mxu0 0.0
      %3707 = vmatpush.msra.mxu0 0.0
      %3708 = vmatpush.msra.mxu0 0.0
      %3709 = vmatpush.msra.mxu0 0.0
      %3710 = vmatpush.msra.mxu0 0.0
      %3711 = vmatpush.msra.mxu0 0.0
      %3712 = vmatpush.msra.mxu0 0.0
      %3713 = vmatpush.msra.mxu0 0.0
      %3714 = vmatpush.msra.mxu0 0.0
      %3715 = vmatpush.msra.mxu0 0.0
      %3716 = vmatpush.msra.mxu0 0.0
      %3717 = vmatpush.msra.mxu0 0.0
      %3718 = vmatpush.msra.mxu0 %v3409
      %3719 = vmatpush.msra.mxu0 %v3408
      %3720 = vmatpush.msra.mxu0 %v3407
      %3721 = vmatpush.msra.mxu0 %v3406
      %3722 = vmatmul.f32.gmra.mxu0 %v3701
      %v3723 = vpop.f32.mrf.mxu0
      %v3724 = vadd.f32 0.0, %v3723
      %3725 = vmatmul.f32.gmra.mxu0 %v3704
      %v3726 = vpop.f32.mrf.mxu0
      %v3727 = vadd.f32 0.0, %v3726
      %3728 = vdwg.mxu0
      %v3730 = vsel %vm2437, %v3399, 0
      %v3733 = vsel %vm2437, %v3400, 0
      %3735 = vmatpush.msra.mxu0 0.0
      %3736 = vmatpush.msra.mxu0 0.0
      %3737 = vmatpush.msra.mxu0 0.0
      %3738 = vmatpush.msra.mxu0 0.0
      %3739 = vmatpush.msra.mxu0 0.0
      %3740 = vmatpush.msra.mxu0 0.0
      %3741 = vmatpush.msra.mxu0 0.0
      %3742 = vmatpush.msra.mxu0 0.0
      %3743 = vmatpush.msra.mxu0 0.0
      %3744 = vmatpush.msra.mxu0 0.0
      %3745 = vmatpush.msra.mxu0 0.0
      %3746 = vmatpush.msra.mxu0 0.0
      %3747 = vmatpush.msra.mxu0 %v3409
      %3748 = vmatpush.msra.mxu0 %v3408
      %3749 = vmatpush.msra.mxu0 %v3407
      %3750 = vmatpush.msra.mxu0 %v3406
      %3751 = vmatmul.f32.gmra.mxu0 %v3730
      %v3752 = vpop.f32.mrf.mxu0
      %v3753 = vadd.f32 0.0, %v3752
      %3754 = vmatmul.f32.gmra.mxu0 %v3733
      %v3755 = vpop.f32.mrf.mxu0
      %v3756 = vadd.f32 0.0, %v3755
      %3757 = vdwg.mxu0
      %v3759 = vsel %vm2437, %v3401, 0
      %v3762 = vsel %vm2437, %v3402, 0
      %3764 = vmatpush.msra.mxu0 0.0
      %3765 = vmatpush.msra.mxu0 0.0
      %3766 = vmatpush.msra.mxu0 0.0
      %3767 = vmatpush.msra.mxu0 0.0
      %3768 = vmatpush.msra.mxu0 0.0
      %3769 = vmatpush.msra.mxu0 0.0
      %3770 = vmatpush.msra.mxu0 0.0
      %3771 = vmatpush.msra.mxu0 0.0
      %3772 = vmatpush.msra.mxu0 0.0
      %3773 = vmatpush.msra.mxu0 0.0
      %3774 = vmatpush.msra.mxu0 0.0
      %3775 = vmatpush.msra.mxu0 0.0
      %3776 = vmatpush.msra.mxu0 %v3409
      %3777 = vmatpush.msra.mxu0 %v3408
      %3778 = vmatpush.msra.mxu0 %v3407
      %3779 = vmatpush.msra.mxu0 %v3406
      %3780 = vmatmul.f32.gmra.mxu0 %v3759
      %v3781 = vpop.f32.mrf.mxu0
      %v3782 = vadd.f32 0.0, %v3781
      %3783 = vmatmul.f32.gmra.mxu0 %v3762
      %v3784 = vpop.f32.mrf.mxu0
      %v3785 = vadd.f32 0.0, %v3784
      %3786 = vdwg.mxu0
      %v3788 = vsel %vm2437, %v3403, 0
      %v3791 = vsel %vm2437, %v3404, 0
      %3793 = vmatpush.msra.mxu0 0.0
      %3794 = vmatpush.msra.mxu0 0.0
      %3795 = vmatpush.msra.mxu0 0.0
      %3796 = vmatpush.msra.mxu0 0.0
      %3797 = vmatpush.msra.mxu0 0.0
      %3798 = vmatpush.msra.mxu0 0.0
      %3799 = vmatpush.msra.mxu0 0.0
      %3800 = vmatpush.msra.mxu0 0.0
      %3801 = vmatpush.msra.mxu0 0.0
      %3802 = vmatpush.msra.mxu0 0.0
      %3803 = vmatpush.msra.mxu0 0.0
      %3804 = vmatpush.msra.mxu0 0.0
      %3805 = vmatpush.msra.mxu0 %v3409
      %3806 = vmatpush.msra.mxu0 %v3408
      %3807 = vmatpush.msra.mxu0 %v3407
      %3808 = vmatpush.msra.mxu0 %v3406
      %3809 = vmatmul.f32.gmra.mxu0 %v3788
      %v3810 = vpop.f32.mrf.mxu0
      %v3811 = vadd.f32 0.0, %v3810
      %3812 = vmatmul.f32.gmra.mxu0 %v3791
      %v3813 = vpop.f32.mrf.mxu0
      %v3814 = vadd.f32 0.0, %v3813
      %3815 = vdwg.mxu0
      %v3816 = vadd.f32 %v2995, %v3434
      %v3817 = vadd.f32 %v2998, %v3437
      %v3818 = vadd.f32 %v3024, %v3463
      %v3819 = vadd.f32 %v3027, %v3466
      %v3820 = vadd.f32 %v3053, %v3492
      %v3821 = vadd.f32 %v3056, %v3495
      %v3822 = vadd.f32 %v3082, %v3521
      %v3823 = vadd.f32 %v3085, %v3524
      %v3824 = vadd.f32 %v3111, %v3550
      %v3825 = vadd.f32 %v3114, %v3553
      %v3826 = vadd.f32 %v3140, %v3579
      %v3827 = vadd.f32 %v3143, %v3582
      %v3828 = vadd.f32 %v3169, %v3608
      %v3829 = vadd.f32 %v3172, %v3611
      %v3830 = vadd.f32 %v3198, %v3637
      %v3831 = vadd.f32 %v3201, %v3640
      %v3832 = vadd.f32 %v3227, %v3666
      %v3833 = vadd.f32 %v3230, %v3669
      %v3834 = vadd.f32 %v3256, %v3695
      %v3835 = vadd.f32 %v3259, %v3698
      %v3836 = vadd.f32 %v3285, %v3724
      %v3837 = vadd.f32 %v3288, %v3727
      %v3838 = vadd.f32 %v3314, %v3753
      %v3839 = vadd.f32 %v3317, %v3756
      %v3840 = vadd.f32 %v3343, %v3782
      %v3841 = vadd.f32 %v3346, %v3785
      %v3842 = vadd.f32 %v3372, %v3811
      %v3843 = vadd.f32 %v3375, %v3814
      %v3844 = vld [vmem:[%s2470] sm:$0xff]
      %v3845 = vld [vmem:[%s2470 + $0x8] sm:$0x3f]
      %v3846 = vld [vmem:[%s2470 + $0x10] sm:$0xff]
      %v3847 = vld [vmem:[%s2470 + $0x18] sm:$0x3f]
      %v3848 = vld [vmem:[%s2470 + $0x20] sm:$0xff]
      %v3849 = vld [vmem:[%s2470 + $0x28] sm:$0x3f]
      %v3850 = vld [vmem:[%s2470 + $0x30] sm:$0xff]
      %v3851 = vld [vmem:[%s2470 + $0x38] sm:$0x3f]
      %v3852 = vld [vmem:[%s2470 + $0x40] sm:$0xff]
      %v3853 = vld [vmem:[%s2470 + $0x48] sm:$0x3f]
      %v3854 = vld [vmem:[%s2470 + $0x50] sm:$0xff]
      %v3855 = vld [vmem:[%s2470 + $0x58] sm:$0x3f]
      %v3856 = vld [vmem:[%s2470 + $0x60] sm:$0xff]
      %v3857 = vld [vmem:[%s2470 + $0x68] sm:$0x3f]
      %v3858 = vld [vmem:[%s2470 + $0x70] sm:$0xff]
      %v3859 = vld [vmem:[%s2470 + $0x78] sm:$0x3f]
      %v3860 = vld [vmem:[%s2470 + $0x80] sm:$0xff]
      %v3861 = vld [vmem:[%s2470 + $0x88] sm:$0x3f]
      %v3862 = vld [vmem:[%s2470 + $0x90] sm:$0xff]
      %v3863 = vld [vmem:[%s2470 + $0x98] sm:$0x3f]
      %v3864 = vld [vmem:[%s2470 + $0xa0] sm:$0xff]
      %v3865 = vld [vmem:[%s2470 + $0xa8] sm:$0x3f]
      %v3866 = vld [vmem:[%s2470 + $0xb0] sm:$0xff]
      %v3867 = vld [vmem:[%s2470 + $0xb8] sm:$0x3f]
      %v3868 = vld [vmem:[%s2470 + $0xc0] sm:$0xff]
      %v3869 = vld [vmem:[%s2470 + $0xc8] sm:$0x3f]
      %v3870 = vld [vmem:[%s2470 + $0xd0] sm:$0xff]
      %v3871 = vld [vmem:[%s2470 + $0xd8] sm:$0x3f]
      %s3872 = scalar_lea.vmem %s3, 96
      %v3873 = vld [vmem:[%s3872] sm:$0xff]
      %v3874 = vld [vmem:[%s3872 + $0x8] sm:$0xff]
      %v3875 = vld [vmem:[%s3872 + $0x10] sm:$0xff]
      %v3876 = vld [vmem:[%s3872 + $0x18] sm:$0xff]
      %v3878 = vsel %vm2437, %v3844, 0
      %v3881 = vsel %vm2437, %v3845, 0
      %3883 = vmatpush.msra.mxu0 0.0
      %3884 = vmatpush.msra.mxu0 0.0
      %3885 = vmatpush.msra.mxu0 0.0
      %3886 = vmatpush.msra.mxu0 0.0
      %3887 = vmatpush.msra.mxu0 0.0
      %3888 = vmatpush.msra.mxu0 0.0
      %3889 = vmatpush.msra.mxu0 0.0
      %3890 = vmatpush.msra.mxu0 0.0
      %3891 = vmatpush.msra.mxu0 0.0
      %3892 = vmatpush.msra.mxu0 0.0
      %3893 = vmatpush.msra.mxu0 0.0
      %3894 = vmatpush.msra.mxu0 0.0
      %3895 = vmatpush.msra.mxu0 %v3876
      %3896 = vmatpush.msra.mxu0 %v3875
      %3897 = vmatpush.msra.mxu0 %v3874
      %3898 = vmatpush.msra.mxu0 %v3873
      %3899 = vmatmul.f32.gmra.mxu0 %v3878
      %v3900 = vpop.f32.mrf.mxu0
      %v3901 = vadd.f32 0.0, %v3900
      %3902 = vmatmul.f32.gmra.mxu0 %v3881
      %v3903 = vpop.f32.mrf.mxu0
      %v3904 = vadd.f32 0.0, %v3903
      %3905 = vdwg.mxu0
      %v3907 = vsel %vm2437, %v3846, 0
      %v3910 = vsel %vm2437, %v3847, 0
      %3912 = vmatpush.msra.mxu0 0.0
      %3913 = vmatpush.msra.mxu0 0.0
      %3914 = vmatpush.msra.mxu0 0.0
      %3915 = vmatpush.msra.mxu0 0.0
      %3916 = vmatpush.msra.mxu0 0.0
      %3917 = vmatpush.msra.mxu0 0.0
      %3918 = vmatpush.msra.mxu0 0.0
      %3919 = vmatpush.msra.mxu0 0.0
      %3920 = vmatpush.msra.mxu0 0.0
      %3921 = vmatpush.msra.mxu0 0.0
      %3922 = vmatpush.msra.mxu0 0.0
      %3923 = vmatpush.msra.mxu0 0.0
      %3924 = vmatpush.msra.mxu0 %v3876
      %3925 = vmatpush.msra.mxu0 %v3875
      %3926 = vmatpush.msra.mxu0 %v3874
      %3927 = vmatpush.msra.mxu0 %v3873
      %3928 = vmatmul.f32.gmra.mxu0 %v3907
      %v3929 = vpop.f32.mrf.mxu0
      %v3930 = vadd.f32 0.0, %v3929
      %3931 = vmatmul.f32.gmra.mxu0 %v3910
      %v3932 = vpop.f32.mrf.mxu0
      %v3933 = vadd.f32 0.0, %v3932
      %3934 = vdwg.mxu0
      %v3936 = vsel %vm2437, %v3848, 0
      %v3939 = vsel %vm2437, %v3849, 0
      %3941 = vmatpush.msra.mxu0 0.0
      %3942 = vmatpush.msra.mxu0 0.0
      %3943 = vmatpush.msra.mxu0 0.0
      %3944 = vmatpush.msra.mxu0 0.0
      %3945 = vmatpush.msra.mxu0 0.0
      %3946 = vmatpush.msra.mxu0 0.0
      %3947 = vmatpush.msra.mxu0 0.0
      %3948 = vmatpush.msra.mxu0 0.0
      %3949 = vmatpush.msra.mxu0 0.0
      %3950 = vmatpush.msra.mxu0 0.0
      %3951 = vmatpush.msra.mxu0 0.0
      %3952 = vmatpush.msra.mxu0 0.0
      %3953 = vmatpush.msra.mxu0 %v3876
      %3954 = vmatpush.msra.mxu0 %v3875
      %3955 = vmatpush.msra.mxu0 %v3874
      %3956 = vmatpush.msra.mxu0 %v3873
      %3957 = vmatmul.f32.gmra.mxu0 %v3936
      %v3958 = vpop.f32.mrf.mxu0
      %v3959 = vadd.f32 0.0, %v3958
      %3960 = vmatmul.f32.gmra.mxu0 %v3939
      %v3961 = vpop.f32.mrf.mxu0
      %v3962 = vadd.f32 0.0, %v3961
      %3963 = vdwg.mxu0
      %v3965 = vsel %vm2437, %v3850, 0
      %v3968 = vsel %vm2437, %v3851, 0
      %3970 = vmatpush.msra.mxu0 0.0
      %3971 = vmatpush.msra.mxu0 0.0
      %3972 = vmatpush.msra.mxu0 0.0
      %3973 = vmatpush.msra.mxu0 0.0
      %3974 = vmatpush.msra.mxu0 0.0
      %3975 = vmatpush.msra.mxu0 0.0
      %3976 = vmatpush.msra.mxu0 0.0
      %3977 = vmatpush.msra.mxu0 0.0
      %3978 = vmatpush.msra.mxu0 0.0
      %3979 = vmatpush.msra.mxu0 0.0
      %3980 = vmatpush.msra.mxu0 0.0
      %3981 = vmatpush.msra.mxu0 0.0
      %3982 = vmatpush.msra.mxu0 %v3876
      %3983 = vmatpush.msra.mxu0 %v3875
      %3984 = vmatpush.msra.mxu0 %v3874
      %3985 = vmatpush.msra.mxu0 %v3873
      %3986 = vmatmul.f32.gmra.mxu0 %v3965
      %v3987 = vpop.f32.mrf.mxu0
      %v3988 = vadd.f32 0.0, %v3987
      %3989 = vmatmul.f32.gmra.mxu0 %v3968
      %v3990 = vpop.f32.mrf.mxu0
      %v3991 = vadd.f32 0.0, %v3990
      %3992 = vdwg.mxu0
      %v3994 = vsel %vm2437, %v3852, 0
      %v3997 = vsel %vm2437, %v3853, 0
      %3999 = vmatpush.msra.mxu0 0.0
      %4000 = vmatpush.msra.mxu0 0.0
      %4001 = vmatpush.msra.mxu0 0.0
      %4002 = vmatpush.msra.mxu0 0.0
      %4003 = vmatpush.msra.mxu0 0.0
      %4004 = vmatpush.msra.mxu0 0.0
      %4005 = vmatpush.msra.mxu0 0.0
      %4006 = vmatpush.msra.mxu0 0.0
      %4007 = vmatpush.msra.mxu0 0.0
      %4008 = vmatpush.msra.mxu0 0.0
      %4009 = vmatpush.msra.mxu0 0.0
      %4010 = vmatpush.msra.mxu0 0.0
      %4011 = vmatpush.msra.mxu0 %v3876
      %4012 = vmatpush.msra.mxu0 %v3875
      %4013 = vmatpush.msra.mxu0 %v3874
      %4014 = vmatpush.msra.mxu0 %v3873
      %4015 = vmatmul.f32.gmra.mxu0 %v3994
      %v4016 = vpop.f32.mrf.mxu0
      %v4017 = vadd.f32 0.0, %v4016
      %4018 = vmatmul.f32.gmra.mxu0 %v3997
      %v4019 = vpop.f32.mrf.mxu0
      %v4020 = vadd.f32 0.0, %v4019
      %4021 = vdwg.mxu0
      %v4023 = vsel %vm2437, %v3854, 0
      %v4026 = vsel %vm2437, %v3855, 0
      %4028 = vmatpush.msra.mxu0 0.0
      %4029 = vmatpush.msra.mxu0 0.0
      %4030 = vmatpush.msra.mxu0 0.0
      %4031 = vmatpush.msra.mxu0 0.0
      %4032 = vmatpush.msra.mxu0 0.0
      %4033 = vmatpush.msra.mxu0 0.0
      %4034 = vmatpush.msra.mxu0 0.0
      %4035 = vmatpush.msra.mxu0 0.0
      %4036 = vmatpush.msra.mxu0 0.0
      %4037 = vmatpush.msra.mxu0 0.0
      %4038 = vmatpush.msra.mxu0 0.0
      %4039 = vmatpush.msra.mxu0 0.0
      %4040 = vmatpush.msra.mxu0 %v3876
      %4041 = vmatpush.msra.mxu0 %v3875
      %4042 = vmatpush.msra.mxu0 %v3874
      %4043 = vmatpush.msra.mxu0 %v3873
      %4044 = vmatmul.f32.gmra.mxu0 %v4023
      %v4045 = vpop.f32.mrf.mxu0
      %v4046 = vadd.f32 0.0, %v4045
      %4047 = vmatmul.f32.gmra.mxu0 %v4026
      %v4048 = vpop.f32.mrf.mxu0
      %v4049 = vadd.f32 0.0, %v4048
      %4050 = vdwg.mxu0
      %v4052 = vsel %vm2437, %v3856, 0
      %v4055 = vsel %vm2437, %v3857, 0
      %4057 = vmatpush.msra.mxu0 0.0
      %4058 = vmatpush.msra.mxu0 0.0
      %4059 = vmatpush.msra.mxu0 0.0
      %4060 = vmatpush.msra.mxu0 0.0
      %4061 = vmatpush.msra.mxu0 0.0
      %4062 = vmatpush.msra.mxu0 0.0
      %4063 = vmatpush.msra.mxu0 0.0
      %4064 = vmatpush.msra.mxu0 0.0
      %4065 = vmatpush.msra.mxu0 0.0
      %4066 = vmatpush.msra.mxu0 0.0
      %4067 = vmatpush.msra.mxu0 0.0
      %4068 = vmatpush.msra.mxu0 0.0
      %4069 = vmatpush.msra.mxu0 %v3876
      %4070 = vmatpush.msra.mxu0 %v3875
      %4071 = vmatpush.msra.mxu0 %v3874
      %4072 = vmatpush.msra.mxu0 %v3873
      %4073 = vmatmul.f32.gmra.mxu0 %v4052
      %v4074 = vpop.f32.mrf.mxu0
      %v4075 = vadd.f32 0.0, %v4074
      %4076 = vmatmul.f32.gmra.mxu0 %v4055
      %v4077 = vpop.f32.mrf.mxu0
      %v4078 = vadd.f32 0.0, %v4077
      %4079 = vdwg.mxu0
      %v4081 = vsel %vm2437, %v3858, 0
      %v4084 = vsel %vm2437, %v3859, 0
      %4086 = vmatpush.msra.mxu0 0.0
      %4087 = vmatpush.msra.mxu0 0.0
      %4088 = vmatpush.msra.mxu0 0.0
      %4089 = vmatpush.msra.mxu0 0.0
      %4090 = vmatpush.msra.mxu0 0.0
      %4091 = vmatpush.msra.mxu0 0.0
      %4092 = vmatpush.msra.mxu0 0.0
      %4093 = vmatpush.msra.mxu0 0.0
      %4094 = vmatpush.msra.mxu0 0.0
      %4095 = vmatpush.msra.mxu0 0.0
      %4096 = vmatpush.msra.mxu0 0.0
      %4097 = vmatpush.msra.mxu0 0.0
      %4098 = vmatpush.msra.mxu0 %v3876
      %4099 = vmatpush.msra.mxu0 %v3875
      %4100 = vmatpush.msra.mxu0 %v3874
      %4101 = vmatpush.msra.mxu0 %v3873
      %4102 = vmatmul.f32.gmra.mxu0 %v4081
      %v4103 = vpop.f32.mrf.mxu0
      %v4104 = vadd.f32 0.0, %v4103
      %4105 = vmatmul.f32.gmra.mxu0 %v4084
      %v4106 = vpop.f32.mrf.mxu0
      %v4107 = vadd.f32 0.0, %v4106
      %4108 = vdwg.mxu0
      %v4110 = vsel %vm2437, %v3860, 0
      %v4113 = vsel %vm2437, %v3861, 0
      %4115 = vmatpush.msra.mxu0 0.0
      %4116 = vmatpush.msra.mxu0 0.0
      %4117 = vmatpush.msra.mxu0 0.0
      %4118 = vmatpush.msra.mxu0 0.0
      %4119 = vmatpush.msra.mxu0 0.0
      %4120 = vmatpush.msra.mxu0 0.0
      %4121 = vmatpush.msra.mxu0 0.0
      %4122 = vmatpush.msra.mxu0 0.0
      %4123 = vmatpush.msra.mxu0 0.0
      %4124 = vmatpush.msra.mxu0 0.0
      %4125 = vmatpush.msra.mxu0 0.0
      %4126 = vmatpush.msra.mxu0 0.0
      %4127 = vmatpush.msra.mxu0 %v3876
      %4128 = vmatpush.msra.mxu0 %v3875
      %4129 = vmatpush.msra.mxu0 %v3874
      %4130 = vmatpush.msra.mxu0 %v3873
      %4131 = vmatmul.f32.gmra.mxu0 %v4110
      %v4132 = vpop.f32.mrf.mxu0
      %v4133 = vadd.f32 0.0, %v4132
      %4134 = vmatmul.f32.gmra.mxu0 %v4113
      %v4135 = vpop.f32.mrf.mxu0
      %v4136 = vadd.f32 0.0, %v4135
      %4137 = vdwg.mxu0
      %v4139 = vsel %vm2437, %v3862, 0
      %v4142 = vsel %vm2437, %v3863, 0
      %4144 = vmatpush.msra.mxu0 0.0
      %4145 = vmatpush.msra.mxu0 0.0
      %4146 = vmatpush.msra.mxu0 0.0
      %4147 = vmatpush.msra.mxu0 0.0
      %4148 = vmatpush.msra.mxu0 0.0
      %4149 = vmatpush.msra.mxu0 0.0
      %4150 = vmatpush.msra.mxu0 0.0
      %4151 = vmatpush.msra.mxu0 0.0
      %4152 = vmatpush.msra.mxu0 0.0
      %4153 = vmatpush.msra.mxu0 0.0
      %4154 = vmatpush.msra.mxu0 0.0
      %4155 = vmatpush.msra.mxu0 0.0
      %4156 = vmatpush.msra.mxu0 %v3876
      %4157 = vmatpush.msra.mxu0 %v3875
      %4158 = vmatpush.msra.mxu0 %v3874
      %4159 = vmatpush.msra.mxu0 %v3873
      %4160 = vmatmul.f32.gmra.mxu0 %v4139
      %v4161 = vpop.f32.mrf.mxu0
      %v4162 = vadd.f32 0.0, %v4161
      %4163 = vmatmul.f32.gmra.mxu0 %v4142
      %v4164 = vpop.f32.mrf.mxu0
      %v4165 = vadd.f32 0.0, %v4164
      %4166 = vdwg.mxu0
      %v4168 = vsel %vm2437, %v3864, 0
      %v4171 = vsel %vm2437, %v3865, 0
      %4173 = vmatpush.msra.mxu0 0.0
      %4174 = vmatpush.msra.mxu0 0.0
      %4175 = vmatpush.msra.mxu0 0.0
      %4176 = vmatpush.msra.mxu0 0.0
      %4177 = vmatpush.msra.mxu0 0.0
      %4178 = vmatpush.msra.mxu0 0.0
      %4179 = vmatpush.msra.mxu0 0.0
      %4180 = vmatpush.msra.mxu0 0.0
      %4181 = vmatpush.msra.mxu0 0.0
      %4182 = vmatpush.msra.mxu0 0.0
      %4183 = vmatpush.msra.mxu0 0.0
      %4184 = vmatpush.msra.mxu0 0.0
      %4185 = vmatpush.msra.mxu0 %v3876
      %4186 = vmatpush.msra.mxu0 %v3875
      %4187 = vmatpush.msra.mxu0 %v3874
      %4188 = vmatpush.msra.mxu0 %v3873
      %4189 = vmatmul.f32.gmra.mxu0 %v4168
      %v4190 = vpop.f32.mrf.mxu0
      %v4191 = vadd.f32 0.0, %v4190
      %4192 = vmatmul.f32.gmra.mxu0 %v4171
      %v4193 = vpop.f32.mrf.mxu0
      %v4194 = vadd.f32 0.0, %v4193
      %4195 = vdwg.mxu0
      %v4197 = vsel %vm2437, %v3866, 0
      %v4200 = vsel %vm2437, %v3867, 0
      %4202 = vmatpush.msra.mxu0 0.0
      %4203 = vmatpush.msra.mxu0 0.0
      %4204 = vmatpush.msra.mxu0 0.0
      %4205 = vmatpush.msra.mxu0 0.0
      %4206 = vmatpush.msra.mxu0 0.0
      %4207 = vmatpush.msra.mxu0 0.0
      %4208 = vmatpush.msra.mxu0 0.0
      %4209 = vmatpush.msra.mxu0 0.0
      %4210 = vmatpush.msra.mxu0 0.0
      %4211 = vmatpush.msra.mxu0 0.0
      %4212 = vmatpush.msra.mxu0 0.0
      %4213 = vmatpush.msra.mxu0 0.0
      %4214 = vmatpush.msra.mxu0 %v3876
      %4215 = vmatpush.msra.mxu0 %v3875
      %4216 = vmatpush.msra.mxu0 %v3874
      %4217 = vmatpush.msra.mxu0 %v3873
      %4218 = vmatmul.f32.gmra.mxu0 %v4197
      %v4219 = vpop.f32.mrf.mxu0
      %v4220 = vadd.f32 0.0, %v4219
      %4221 = vmatmul.f32.gmra.mxu0 %v4200
      %v4222 = vpop.f32.mrf.mxu0
      %v4223 = vadd.f32 0.0, %v4222
      %4224 = vdwg.mxu0
      %v4226 = vsel %vm2437, %v3868, 0
      %v4229 = vsel %vm2437, %v3869, 0
      %4231 = vmatpush.msra.mxu0 0.0
      %4232 = vmatpush.msra.mxu0 0.0
      %4233 = vmatpush.msra.mxu0 0.0
      %4234 = vmatpush.msra.mxu0 0.0
      %4235 = vmatpush.msra.mxu0 0.0
      %4236 = vmatpush.msra.mxu0 0.0
      %4237 = vmatpush.msra.mxu0 0.0
      %4238 = vmatpush.msra.mxu0 0.0
      %4239 = vmatpush.msra.mxu0 0.0
      %4240 = vmatpush.msra.mxu0 0.0
      %4241 = vmatpush.msra.mxu0 0.0
      %4242 = vmatpush.msra.mxu0 0.0
      %4243 = vmatpush.msra.mxu0 %v3876
      %4244 = vmatpush.msra.mxu0 %v3875
      %4245 = vmatpush.msra.mxu0 %v3874
      %4246 = vmatpush.msra.mxu0 %v3873
      %4247 = vmatmul.f32.gmra.mxu0 %v4226
      %v4248 = vpop.f32.mrf.mxu0
      %v4249 = vadd.f32 0.0, %v4248
      %4250 = vmatmul.f32.gmra.mxu0 %v4229
      %v4251 = vpop.f32.mrf.mxu0
      %v4252 = vadd.f32 0.0, %v4251
      %4253 = vdwg.mxu0
      %v4255 = vsel %vm2437, %v3870, 0
      %v4258 = vsel %vm2437, %v3871, 0
      %4260 = vmatpush.msra.mxu0 0.0
      %4261 = vmatpush.msra.mxu0 0.0
      %4262 = vmatpush.msra.mxu0 0.0
      %4263 = vmatpush.msra.mxu0 0.0
      %4264 = vmatpush.msra.mxu0 0.0
      %4265 = vmatpush.msra.mxu0 0.0
      %4266 = vmatpush.msra.mxu0 0.0
      %4267 = vmatpush.msra.mxu0 0.0
      %4268 = vmatpush.msra.mxu0 0.0
      %4269 = vmatpush.msra.mxu0 0.0
      %4270 = vmatpush.msra.mxu0 0.0
      %4271 = vmatpush.msra.mxu0 0.0
      %4272 = vmatpush.msra.mxu0 %v3876
      %4273 = vmatpush.msra.mxu0 %v3875
      %4274 = vmatpush.msra.mxu0 %v3874
      %4275 = vmatpush.msra.mxu0 %v3873
      %4276 = vmatmul.f32.gmra.mxu0 %v4255
      %v4277 = vpop.f32.mrf.mxu0
      %v4278 = vadd.f32 0.0, %v4277
      %4279 = vmatmul.f32.gmra.mxu0 %v4258
      %v4280 = vpop.f32.mrf.mxu0
      %v4281 = vadd.f32 0.0, %v4280
      %4282 = vdwg.mxu0
      %v4283 = vadd.f32 %v3816, %v3901
      %v4284 = vadd.f32 %v3817, %v3904
      %v4285 = vadd.f32 %v3818, %v3930
      %v4286 = vadd.f32 %v3819, %v3933
      %v4287 = vadd.f32 %v3820, %v3959
      %v4288 = vadd.f32 %v3821, %v3962
      %v4289 = vadd.f32 %v3822, %v3988
      %v4290 = vadd.f32 %v3823, %v3991
      %v4291 = vadd.f32 %v3824, %v4017
      %v4292 = vadd.f32 %v3825, %v4020
      %v4293 = vadd.f32 %v3826, %v4046
      %v4294 = vadd.f32 %v3827, %v4049
      %v4295 = vadd.f32 %v3828, %v4075
      %v4296 = vadd.f32 %v3829, %v4078
      %v4297 = vadd.f32 %v3830, %v4104
      %v4298 = vadd.f32 %v3831, %v4107
      %v4299 = vadd.f32 %v3832, %v4133
      %v4300 = vadd.f32 %v3833, %v4136
      %v4301 = vadd.f32 %v3834, %v4162
      %v4302 = vadd.f32 %v3835, %v4165
      %v4303 = vadd.f32 %v3836, %v4191
      %v4304 = vadd.f32 %v3837, %v4194
      %v4305 = vadd.f32 %v3838, %v4220
      %v4306 = vadd.f32 %v3839, %v4223
      %v4307 = vadd.f32 %v3840, %v4249
      %v4308 = vadd.f32 %v3841, %v4252
      %v4309 = vadd.f32 %v3842, %v4278
      %v4310 = vadd.f32 %v3843, %v4281
      %v4311 = vld [vmem:[%s2470 + $0x1] sm:$0xff]
      %v4312 = vld [vmem:[%s2470 + $0x9] sm:$0x3f]
      %v4313 = vld [vmem:[%s2470 + $0x11] sm:$0xff]
      %v4314 = vld [vmem:[%s2470 + $0x19] sm:$0x3f]
      %v4315 = vld [vmem:[%s2470 + $0x21] sm:$0xff]
      %v4316 = vld [vmem:[%s2470 + $0x29] sm:$0x3f]
      %v4317 = vld [vmem:[%s2470 + $0x31] sm:$0xff]
      %v4318 = vld [vmem:[%s2470 + $0x39] sm:$0x3f]
      %v4319 = vld [vmem:[%s2470 + $0x41] sm:$0xff]
      %v4320 = vld [vmem:[%s2470 + $0x49] sm:$0x3f]
      %v4321 = vld [vmem:[%s2470 + $0x51] sm:$0xff]
      %v4322 = vld [vmem:[%s2470 + $0x59] sm:$0x3f]
      %v4323 = vld [vmem:[%s2470 + $0x61] sm:$0xff]
      %v4324 = vld [vmem:[%s2470 + $0x69] sm:$0x3f]
      %v4325 = vld [vmem:[%s2470 + $0x71] sm:$0xff]
      %v4326 = vld [vmem:[%s2470 + $0x79] sm:$0x3f]
      %v4327 = vld [vmem:[%s2470 + $0x81] sm:$0xff]
      %v4328 = vld [vmem:[%s2470 + $0x89] sm:$0x3f]
      %v4329 = vld [vmem:[%s2470 + $0x91] sm:$0xff]
      %v4330 = vld [vmem:[%s2470 + $0x99] sm:$0x3f]
      %v4331 = vld [vmem:[%s2470 + $0xa1] sm:$0xff]
      %v4332 = vld [vmem:[%s2470 + $0xa9] sm:$0x3f]
      %v4333 = vld [vmem:[%s2470 + $0xb1] sm:$0xff]
      %v4334 = vld [vmem:[%s2470 + $0xb9] sm:$0x3f]
      %v4335 = vld [vmem:[%s2470 + $0xc1] sm:$0xff]
      %v4336 = vld [vmem:[%s2470 + $0xc9] sm:$0x3f]
      %v4337 = vld [vmem:[%s2470 + $0xd1] sm:$0xff]
      %v4338 = vld [vmem:[%s2470 + $0xd9] sm:$0x3f]
      %s4339 = scalar_lea.vmem %s3, 128
      %v4340 = vld [vmem:[%s4339] sm:$0xff]
      %v4341 = vld [vmem:[%s4339 + $0x8] sm:$0xff]
      %v4342 = vld [vmem:[%s4339 + $0x10] sm:$0xff]
      %v4343 = vld [vmem:[%s4339 + $0x18] sm:$0xff]
      %v4345 = vsel %vm2437, %v4311, 0
      %v4348 = vsel %vm2437, %v4312, 0
      %4350 = vmatpush.msra.mxu0 0.0
      %4351 = vmatpush.msra.mxu0 0.0
      %4352 = vmatpush.msra.mxu0 0.0
      %4353 = vmatpush.msra.mxu0 0.0
      %4354 = vmatpush.msra.mxu0 0.0
      %4355 = vmatpush.msra.mxu0 0.0
      %4356 = vmatpush.msra.mxu0 0.0
      %4357 = vmatpush.msra.mxu0 0.0
      %4358 = vmatpush.msra.mxu0 0.0
      %4359 = vmatpush.msra.mxu0 0.0
      %4360 = vmatpush.msra.mxu0 0.0
      %4361 = vmatpush.msra.mxu0 0.0
      %4362 = vmatpush.msra.mxu0 %v4343
      %4363 = vmatpush.msra.mxu0 %v4342
      %4364 = vmatpush.msra.mxu0 %v4341
      %4365 = vmatpush.msra.mxu0 %v4340
      %4366 = vmatmul.f32.gmra.mxu0 %v4345
      %v4367 = vpop.f32.mrf.mxu0
      %v4368 = vadd.f32 0.0, %v4367
      %4369 = vmatmul.f32.gmra.mxu0 %v4348
      %v4370 = vpop.f32.mrf.mxu0
      %v4371 = vadd.f32 0.0, %v4370
      %4372 = vdwg.mxu0
      %v4374 = vsel %vm2437, %v4313, 0
      %v4377 = vsel %vm2437, %v4314, 0
      %4379 = vmatpush.msra.mxu0 0.0
      %4380 = vmatpush.msra.mxu0 0.0
      %4381 = vmatpush.msra.mxu0 0.0
      %4382 = vmatpush.msra.mxu0 0.0
      %4383 = vmatpush.msra.mxu0 0.0
      %4384 = vmatpush.msra.mxu0 0.0
      %4385 = vmatpush.msra.mxu0 0.0
      %4386 = vmatpush.msra.mxu0 0.0
      %4387 = vmatpush.msra.mxu0 0.0
      %4388 = vmatpush.msra.mxu0 0.0
      %4389 = vmatpush.msra.mxu0 0.0
      %4390 = vmatpush.msra.mxu0 0.0
      %4391 = vmatpush.msra.mxu0 %v4343
      %4392 = vmatpush.msra.mxu0 %v4342
      %4393 = vmatpush.msra.mxu0 %v4341
      %4394 = vmatpush.msra.mxu0 %v4340
      %4395 = vmatmul.f32.gmra.mxu0 %v4374
      %v4396 = vpop.f32.mrf.mxu0
      %v4397 = vadd.f32 0.0, %v4396
      %4398 = vmatmul.f32.gmra.mxu0 %v4377
      %v4399 = vpop.f32.mrf.mxu0
      %v4400 = vadd.f32 0.0, %v4399
      %4401 = vdwg.mxu0
      %v4403 = vsel %vm2437, %v4315, 0
      %v4406 = vsel %vm2437, %v4316, 0
      %4408 = vmatpush.msra.mxu0 0.0
      %4409 = vmatpush.msra.mxu0 0.0
      %4410 = vmatpush.msra.mxu0 0.0
      %4411 = vmatpush.msra.mxu0 0.0
      %4412 = vmatpush.msra.mxu0 0.0
      %4413 = vmatpush.msra.mxu0 0.0
      %4414 = vmatpush.msra.mxu0 0.0
      %4415 = vmatpush.msra.mxu0 0.0
      %4416 = vmatpush.msra.mxu0 0.0
      %4417 = vmatpush.msra.mxu0 0.0
      %4418 = vmatpush.msra.mxu0 0.0
      %4419 = vmatpush.msra.mxu0 0.0
      %4420 = vmatpush.msra.mxu0 %v4343
      %4421 = vmatpush.msra.mxu0 %v4342
      %4422 = vmatpush.msra.mxu0 %v4341
      %4423 = vmatpush.msra.mxu0 %v4340
      %4424 = vmatmul.f32.gmra.mxu0 %v4403
      %v4425 = vpop.f32.mrf.mxu0
      %v4426 = vadd.f32 0.0, %v4425
      %4427 = vmatmul.f32.gmra.mxu0 %v4406
      %v4428 = vpop.f32.mrf.mxu0
      %v4429 = vadd.f32 0.0, %v4428
      %4430 = vdwg.mxu0
      %v4432 = vsel %vm2437, %v4317, 0
      %v4435 = vsel %vm2437, %v4318, 0
      %4437 = vmatpush.msra.mxu0 0.0
      %4438 = vmatpush.msra.mxu0 0.0
      %4439 = vmatpush.msra.mxu0 0.0
      %4440 = vmatpush.msra.mxu0 0.0
      %4441 = vmatpush.msra.mxu0 0.0
      %4442 = vmatpush.msra.mxu0 0.0
      %4443 = vmatpush.msra.mxu0 0.0
      %4444 = vmatpush.msra.mxu0 0.0
      %4445 = vmatpush.msra.mxu0 0.0
      %4446 = vmatpush.msra.mxu0 0.0
      %4447 = vmatpush.msra.mxu0 0.0
      %4448 = vmatpush.msra.mxu0 0.0
      %4449 = vmatpush.msra.mxu0 %v4343
      %4450 = vmatpush.msra.mxu0 %v4342
      %4451 = vmatpush.msra.mxu0 %v4341
      %4452 = vmatpush.msra.mxu0 %v4340
      %4453 = vmatmul.f32.gmra.mxu0 %v4432
      %v4454 = vpop.f32.mrf.mxu0
      %v4455 = vadd.f32 0.0, %v4454
      %4456 = vmatmul.f32.gmra.mxu0 %v4435
      %v4457 = vpop.f32.mrf.mxu0
      %v4458 = vadd.f32 0.0, %v4457
      %4459 = vdwg.mxu0
      %v4461 = vsel %vm2437, %v4319, 0
      %v4464 = vsel %vm2437, %v4320, 0
      %4466 = vmatpush.msra.mxu0 0.0
      %4467 = vmatpush.msra.mxu0 0.0
      %4468 = vmatpush.msra.mxu0 0.0
      %4469 = vmatpush.msra.mxu0 0.0
      %4470 = vmatpush.msra.mxu0 0.0
      %4471 = vmatpush.msra.mxu0 0.0
      %4472 = vmatpush.msra.mxu0 0.0
      %4473 = vmatpush.msra.mxu0 0.0
      %4474 = vmatpush.msra.mxu0 0.0
      %4475 = vmatpush.msra.mxu0 0.0
      %4476 = vmatpush.msra.mxu0 0.0
      %4477 = vmatpush.msra.mxu0 0.0
      %4478 = vmatpush.msra.mxu0 %v4343
      %4479 = vmatpush.msra.mxu0 %v4342
      %4480 = vmatpush.msra.mxu0 %v4341
      %4481 = vmatpush.msra.mxu0 %v4340
      %4482 = vmatmul.f32.gmra.mxu0 %v4461
      %v4483 = vpop.f32.mrf.mxu0
      %v4484 = vadd.f32 0.0, %v4483
      %4485 = vmatmul.f32.gmra.mxu0 %v4464
      %v4486 = vpop.f32.mrf.mxu0
      %v4487 = vadd.f32 0.0, %v4486
      %4488 = vdwg.mxu0
      %v4490 = vsel %vm2437, %v4321, 0
      %v4493 = vsel %vm2437, %v4322, 0
      %4495 = vmatpush.msra.mxu0 0.0
      %4496 = vmatpush.msra.mxu0 0.0
      %4497 = vmatpush.msra.mxu0 0.0
      %4498 = vmatpush.msra.mxu0 0.0
      %4499 = vmatpush.msra.mxu0 0.0
      %4500 = vmatpush.msra.mxu0 0.0
      %4501 = vmatpush.msra.mxu0 0.0
      %4502 = vmatpush.msra.mxu0 0.0
      %4503 = vmatpush.msra.mxu0 0.0
      %4504 = vmatpush.msra.mxu0 0.0
      %4505 = vmatpush.msra.mxu0 0.0
      %4506 = vmatpush.msra.mxu0 0.0
      %4507 = vmatpush.msra.mxu0 %v4343
      %4508 = vmatpush.msra.mxu0 %v4342
      %4509 = vmatpush.msra.mxu0 %v4341
      %4510 = vmatpush.msra.mxu0 %v4340
      %4511 = vmatmul.f32.gmra.mxu0 %v4490
      %v4512 = vpop.f32.mrf.mxu0
      %v4513 = vadd.f32 0.0, %v4512
      %4514 = vmatmul.f32.gmra.mxu0 %v4493
      %v4515 = vpop.f32.mrf.mxu0
      %v4516 = vadd.f32 0.0, %v4515
      %4517 = vdwg.mxu0
      %v4519 = vsel %vm2437, %v4323, 0
      %v4522 = vsel %vm2437, %v4324, 0
      %4524 = vmatpush.msra.mxu0 0.0
      %4525 = vmatpush.msra.mxu0 0.0
      %4526 = vmatpush.msra.mxu0 0.0
      %4527 = vmatpush.msra.mxu0 0.0
      %4528 = vmatpush.msra.mxu0 0.0
      %4529 = vmatpush.msra.mxu0 0.0
      %4530 = vmatpush.msra.mxu0 0.0
      %4531 = vmatpush.msra.mxu0 0.0
      %4532 = vmatpush.msra.mxu0 0.0
      %4533 = vmatpush.msra.mxu0 0.0
      %4534 = vmatpush.msra.mxu0 0.0
      %4535 = vmatpush.msra.mxu0 0.0
      %4536 = vmatpush.msra.mxu0 %v4343
      %4537 = vmatpush.msra.mxu0 %v4342
      %4538 = vmatpush.msra.mxu0 %v4341
      %4539 = vmatpush.msra.mxu0 %v4340
      %4540 = vmatmul.f32.gmra.mxu0 %v4519
      %v4541 = vpop.f32.mrf.mxu0
      %v4542 = vadd.f32 0.0, %v4541
      %4543 = vmatmul.f32.gmra.mxu0 %v4522
      %v4544 = vpop.f32.mrf.mxu0
      %v4545 = vadd.f32 0.0, %v4544
      %4546 = vdwg.mxu0
      %v4548 = vsel %vm2437, %v4325, 0
      %v4551 = vsel %vm2437, %v4326, 0
      %4553 = vmatpush.msra.mxu0 0.0
      %4554 = vmatpush.msra.mxu0 0.0
      %4555 = vmatpush.msra.mxu0 0.0
      %4556 = vmatpush.msra.mxu0 0.0
      %4557 = vmatpush.msra.mxu0 0.0
      %4558 = vmatpush.msra.mxu0 0.0
      %4559 = vmatpush.msra.mxu0 0.0
      %4560 = vmatpush.msra.mxu0 0.0
      %4561 = vmatpush.msra.mxu0 0.0
      %4562 = vmatpush.msra.mxu0 0.0
      %4563 = vmatpush.msra.mxu0 0.0
      %4564 = vmatpush.msra.mxu0 0.0
      %4565 = vmatpush.msra.mxu0 %v4343
      %4566 = vmatpush.msra.mxu0 %v4342
      %4567 = vmatpush.msra.mxu0 %v4341
      %4568 = vmatpush.msra.mxu0 %v4340
      %4569 = vmatmul.f32.gmra.mxu0 %v4548
      %v4570 = vpop.f32.mrf.mxu0
      %v4571 = vadd.f32 0.0, %v4570
      %4572 = vmatmul.f32.gmra.mxu0 %v4551
      %v4573 = vpop.f32.mrf.mxu0
      %v4574 = vadd.f32 0.0, %v4573
      %4575 = vdwg.mxu0
      %v4577 = vsel %vm2437, %v4327, 0
      %v4580 = vsel %vm2437, %v4328, 0
      %4582 = vmatpush.msra.mxu0 0.0
      %4583 = vmatpush.msra.mxu0 0.0
      %4584 = vmatpush.msra.mxu0 0.0
      %4585 = vmatpush.msra.mxu0 0.0
      %4586 = vmatpush.msra.mxu0 0.0
      %4587 = vmatpush.msra.mxu0 0.0
      %4588 = vmatpush.msra.mxu0 0.0
      %4589 = vmatpush.msra.mxu0 0.0
      %4590 = vmatpush.msra.mxu0 0.0
      %4591 = vmatpush.msra.mxu0 0.0
      %4592 = vmatpush.msra.mxu0 0.0
      %4593 = vmatpush.msra.mxu0 0.0
      %4594 = vmatpush.msra.mxu0 %v4343
      %4595 = vmatpush.msra.mxu0 %v4342
      %4596 = vmatpush.msra.mxu0 %v4341
      %4597 = vmatpush.msra.mxu0 %v4340
      %4598 = vmatmul.f32.gmra.mxu0 %v4577
      %v4599 = vpop.f32.mrf.mxu0
      %v4600 = vadd.f32 0.0, %v4599
      %4601 = vmatmul.f32.gmra.mxu0 %v4580
      %v4602 = vpop.f32.mrf.mxu0
      %v4603 = vadd.f32 0.0, %v4602
      %4604 = vdwg.mxu0
      %v4606 = vsel %vm2437, %v4329, 0
      %v4609 = vsel %vm2437, %v4330, 0
      %4611 = vmatpush.msra.mxu0 0.0
      %4612 = vmatpush.msra.mxu0 0.0
      %4613 = vmatpush.msra.mxu0 0.0
      %4614 = vmatpush.msra.mxu0 0.0
      %4615 = vmatpush.msra.mxu0 0.0
      %4616 = vmatpush.msra.mxu0 0.0
      %4617 = vmatpush.msra.mxu0 0.0
      %4618 = vmatpush.msra.mxu0 0.0
      %4619 = vmatpush.msra.mxu0 0.0
      %4620 = vmatpush.msra.mxu0 0.0
      %4621 = vmatpush.msra.mxu0 0.0
      %4622 = vmatpush.msra.mxu0 0.0
      %4623 = vmatpush.msra.mxu0 %v4343
      %4624 = vmatpush.msra.mxu0 %v4342
      %4625 = vmatpush.msra.mxu0 %v4341
      %4626 = vmatpush.msra.mxu0 %v4340
      %4627 = vmatmul.f32.gmra.mxu0 %v4606
      %v4628 = vpop.f32.mrf.mxu0
      %v4629 = vadd.f32 0.0, %v4628
      %4630 = vmatmul.f32.gmra.mxu0 %v4609
      %v4631 = vpop.f32.mrf.mxu0
      %v4632 = vadd.f32 0.0, %v4631
      %4633 = vdwg.mxu0
      %v4635 = vsel %vm2437, %v4331, 0
      %v4638 = vsel %vm2437, %v4332, 0
      %4640 = vmatpush.msra.mxu0 0.0
      %4641 = vmatpush.msra.mxu0 0.0
      %4642 = vmatpush.msra.mxu0 0.0
      %4643 = vmatpush.msra.mxu0 0.0
      %4644 = vmatpush.msra.mxu0 0.0
      %4645 = vmatpush.msra.mxu0 0.0
      %4646 = vmatpush.msra.mxu0 0.0
      %4647 = vmatpush.msra.mxu0 0.0
      %4648 = vmatpush.msra.mxu0 0.0
      %4649 = vmatpush.msra.mxu0 0.0
      %4650 = vmatpush.msra.mxu0 0.0
      %4651 = vmatpush.msra.mxu0 0.0
      %4652 = vmatpush.msra.mxu0 %v4343
      %4653 = vmatpush.msra.mxu0 %v4342
      %4654 = vmatpush.msra.mxu0 %v4341
      %4655 = vmatpush.msra.mxu0 %v4340
      %4656 = vmatmul.f32.gmra.mxu0 %v4635
      %v4657 = vpop.f32.mrf.mxu0
      %v4658 = vadd.f32 0.0, %v4657
      %4659 = vmatmul.f32.gmra.mxu0 %v4638
      %v4660 = vpop.f32.mrf.mxu0
      %v4661 = vadd.f32 0.0, %v4660
      %4662 = vdwg.mxu0
      %v4664 = vsel %vm2437, %v4333, 0
      %v4667 = vsel %vm2437, %v4334, 0
      %4669 = vmatpush.msra.mxu0 0.0
      %4670 = vmatpush.msra.mxu0 0.0
      %4671 = vmatpush.msra.mxu0 0.0
      %4672 = vmatpush.msra.mxu0 0.0
      %4673 = vmatpush.msra.mxu0 0.0
      %4674 = vmatpush.msra.mxu0 0.0
      %4675 = vmatpush.msra.mxu0 0.0
      %4676 = vmatpush.msra.mxu0 0.0
      %4677 = vmatpush.msra.mxu0 0.0
      %4678 = vmatpush.msra.mxu0 0.0
      %4679 = vmatpush.msra.mxu0 0.0
      %4680 = vmatpush.msra.mxu0 0.0
      %4681 = vmatpush.msra.mxu0 %v4343
      %4682 = vmatpush.msra.mxu0 %v4342
      %4683 = vmatpush.msra.mxu0 %v4341
      %4684 = vmatpush.msra.mxu0 %v4340
      %4685 = vmatmul.f32.gmra.mxu0 %v4664
      %v4686 = vpop.f32.mrf.mxu0
      %v4687 = vadd.f32 0.0, %v4686
      %4688 = vmatmul.f32.gmra.mxu0 %v4667
      %v4689 = vpop.f32.mrf.mxu0
      %v4690 = vadd.f32 0.0, %v4689
      %4691 = vdwg.mxu0
      %v4693 = vsel %vm2437, %v4335, 0
      %v4696 = vsel %vm2437, %v4336, 0
      %4698 = vmatpush.msra.mxu0 0.0
      %4699 = vmatpush.msra.mxu0 0.0
      %4700 = vmatpush.msra.mxu0 0.0
      %4701 = vmatpush.msra.mxu0 0.0
      %4702 = vmatpush.msra.mxu0 0.0
      %4703 = vmatpush.msra.mxu0 0.0
      %4704 = vmatpush.msra.mxu0 0.0
      %4705 = vmatpush.msra.mxu0 0.0
      %4706 = vmatpush.msra.mxu0 0.0
      %4707 = vmatpush.msra.mxu0 0.0
      %4708 = vmatpush.msra.mxu0 0.0
      %4709 = vmatpush.msra.mxu0 0.0
      %4710 = vmatpush.msra.mxu0 %v4343
      %4711 = vmatpush.msra.mxu0 %v4342
      %4712 = vmatpush.msra.mxu0 %v4341
      %4713 = vmatpush.msra.mxu0 %v4340
      %4714 = vmatmul.f32.gmra.mxu0 %v4693
      %v4715 = vpop.f32.mrf.mxu0
      %v4716 = vadd.f32 0.0, %v4715
      %4717 = vmatmul.f32.gmra.mxu0 %v4696
      %v4718 = vpop.f32.mrf.mxu0
      %v4719 = vadd.f32 0.0, %v4718
      %4720 = vdwg.mxu0
      %v4722 = vsel %vm2437, %v4337, 0
      %v4725 = vsel %vm2437, %v4338, 0
      %4727 = vmatpush.msra.mxu0 0.0
      %4728 = vmatpush.msra.mxu0 0.0
      %4729 = vmatpush.msra.mxu0 0.0
      %4730 = vmatpush.msra.mxu0 0.0
      %4731 = vmatpush.msra.mxu0 0.0
      %4732 = vmatpush.msra.mxu0 0.0
      %4733 = vmatpush.msra.mxu0 0.0
      %4734 = vmatpush.msra.mxu0 0.0
      %4735 = vmatpush.msra.mxu0 0.0
      %4736 = vmatpush.msra.mxu0 0.0
      %4737 = vmatpush.msra.mxu0 0.0
      %4738 = vmatpush.msra.mxu0 0.0
      %4739 = vmatpush.msra.mxu0 %v4343
      %4740 = vmatpush.msra.mxu0 %v4342
      %4741 = vmatpush.msra.mxu0 %v4341
      %4742 = vmatpush.msra.mxu0 %v4340
      %4743 = vmatmul.f32.gmra.mxu0 %v4722
      %v4744 = vpop.f32.mrf.mxu0
      %v4745 = vadd.f32 0.0, %v4744
      %4746 = vmatmul.f32.gmra.mxu0 %v4725
      %v4747 = vpop.f32.mrf.mxu0
      %v4748 = vadd.f32 0.0, %v4747
      %4749 = vdwg.mxu0
      %v4750 = vadd.f32 %v4283, %v4368
      %v4751 = vadd.f32 %v4284, %v4371
      %v4752 = vadd.f32 %v4285, %v4397
      %v4753 = vadd.f32 %v4286, %v4400
      %v4754 = vadd.f32 %v4287, %v4426
      %v4755 = vadd.f32 %v4288, %v4429
      %v4756 = vadd.f32 %v4289, %v4455
      %v4757 = vadd.f32 %v4290, %v4458
      %v4758 = vadd.f32 %v4291, %v4484
      %v4759 = vadd.f32 %v4292, %v4487
      %v4760 = vadd.f32 %v4293, %v4513
      %v4761 = vadd.f32 %v4294, %v4516
      %v4762 = vadd.f32 %v4295, %v4542
      %v4763 = vadd.f32 %v4296, %v4545
      %v4764 = vadd.f32 %v4297, %v4571
      %v4765 = vadd.f32 %v4298, %v4574
      %v4766 = vadd.f32 %v4299, %v4600
      %v4767 = vadd.f32 %v4300, %v4603
      %v4768 = vadd.f32 %v4301, %v4629
      %v4769 = vadd.f32 %v4302, %v4632
      %v4770 = vadd.f32 %v4303, %v4658
      %v4771 = vadd.f32 %v4304, %v4661
      %v4772 = vadd.f32 %v4305, %v4687
      %v4773 = vadd.f32 %v4306, %v4690
      %v4774 = vadd.f32 %v4307, %v4716
      %v4775 = vadd.f32 %v4308, %v4719
      %v4776 = vadd.f32 %v4309, %v4745
      %v4777 = vadd.f32 %v4310, %v4748
      %v4778 = vld [vmem:[%s2470 + $0x2] sm:$0xff]
      %v4779 = vld [vmem:[%s2470 + $0xa] sm:$0x3f]
      %v4780 = vld [vmem:[%s2470 + $0x12] sm:$0xff]
      %v4781 = vld [vmem:[%s2470 + $0x1a] sm:$0x3f]
      %v4782 = vld [vmem:[%s2470 + $0x22] sm:$0xff]
      %v4783 = vld [vmem:[%s2470 + $0x2a] sm:$0x3f]
      %v4784 = vld [vmem:[%s2470 + $0x32] sm:$0xff]
      %v4785 = vld [vmem:[%s2470 + $0x3a] sm:$0x3f]
      %v4786 = vld [vmem:[%s2470 + $0x42] sm:$0xff]
      %v4787 = vld [vmem:[%s2470 + $0x4a] sm:$0x3f]
      %v4788 = vld [vmem:[%s2470 + $0x52] sm:$0xff]
      %v4789 = vld [vmem:[%s2470 + $0x5a] sm:$0x3f]
      %v4790 = vld [vmem:[%s2470 + $0x62] sm:$0xff]
      %v4791 = vld [vmem:[%s2470 + $0x6a] sm:$0x3f]
      %v4792 = vld [vmem:[%s2470 + $0x72] sm:$0xff]
      %v4793 = vld [vmem:[%s2470 + $0x7a] sm:$0x3f]
      %v4794 = vld [vmem:[%s2470 + $0x82] sm:$0xff]
      %v4795 = vld [vmem:[%s2470 + $0x8a] sm:$0x3f]
      %v4796 = vld [vmem:[%s2470 + $0x92] sm:$0xff]
      %v4797 = vld [vmem:[%s2470 + $0x9a] sm:$0x3f]
      %v4798 = vld [vmem:[%s2470 + $0xa2] sm:$0xff]
      %v4799 = vld [vmem:[%s2470 + $0xaa] sm:$0x3f]
      %v4800 = vld [vmem:[%s2470 + $0xb2] sm:$0xff]
      %v4801 = vld [vmem:[%s2470 + $0xba] sm:$0x3f]
      %v4802 = vld [vmem:[%s2470 + $0xc2] sm:$0xff]
      %v4803 = vld [vmem:[%s2470 + $0xca] sm:$0x3f]
      %v4804 = vld [vmem:[%s2470 + $0xd2] sm:$0xff]
      %v4805 = vld [vmem:[%s2470 + $0xda] sm:$0x3f]
      %s4806 = scalar_lea.vmem %s3, 160
      %v4807 = vld [vmem:[%s4806] sm:$0xff]
      %v4808 = vld [vmem:[%s4806 + $0x8] sm:$0xff]
      %v4809 = vld [vmem:[%s4806 + $0x10] sm:$0xff]
      %v4810 = vld [vmem:[%s4806 + $0x18] sm:$0xff]
      %v4812 = vsel %vm2437, %v4778, 0
      %v4815 = vsel %vm2437, %v4779, 0
      %4817 = vmatpush.msra.mxu0 0.0
      %4818 = vmatpush.msra.mxu0 0.0
      %4819 = vmatpush.msra.mxu0 0.0
      %4820 = vmatpush.msra.mxu0 0.0
      %4821 = vmatpush.msra.mxu0 0.0
      %4822 = vmatpush.msra.mxu0 0.0
      %4823 = vmatpush.msra.mxu0 0.0
      %4824 = vmatpush.msra.mxu0 0.0
      %4825 = vmatpush.msra.mxu0 0.0
      %4826 = vmatpush.msra.mxu0 0.0
      %4827 = vmatpush.msra.mxu0 0.0
      %4828 = vmatpush.msra.mxu0 0.0
      %4829 = vmatpush.msra.mxu0 %v4810
      %4830 = vmatpush.msra.mxu0 %v4809
      %4831 = vmatpush.msra.mxu0 %v4808
      %4832 = vmatpush.msra.mxu0 %v4807
      %4833 = vmatmul.f32.gmra.mxu0 %v4812
      %v4834 = vpop.f32.mrf.mxu0
      %v4835 = vadd.f32 0.0, %v4834
      %4836 = vmatmul.f32.gmra.mxu0 %v4815
      %v4837 = vpop.f32.mrf.mxu0
      %v4838 = vadd.f32 0.0, %v4837
      %4839 = vdwg.mxu0
      %v4841 = vsel %vm2437, %v4780, 0
      %v4844 = vsel %vm2437, %v4781, 0
      %4846 = vmatpush.msra.mxu0 0.0
      %4847 = vmatpush.msra.mxu0 0.0
      %4848 = vmatpush.msra.mxu0 0.0
      %4849 = vmatpush.msra.mxu0 0.0
      %4850 = vmatpush.msra.mxu0 0.0
      %4851 = vmatpush.msra.mxu0 0.0
      %4852 = vmatpush.msra.mxu0 0.0
      %4853 = vmatpush.msra.mxu0 0.0
      %4854 = vmatpush.msra.mxu0 0.0
      %4855 = vmatpush.msra.mxu0 0.0
      %4856 = vmatpush.msra.mxu0 0.0
      %4857 = vmatpush.msra.mxu0 0.0
      %4858 = vmatpush.msra.mxu0 %v4810
      %4859 = vmatpush.msra.mxu0 %v4809
      %4860 = vmatpush.msra.mxu0 %v4808
      %4861 = vmatpush.msra.mxu0 %v4807
      %4862 = vmatmul.f32.gmra.mxu0 %v4841
      %v4863 = vpop.f32.mrf.mxu0
      %v4864 = vadd.f32 0.0, %v4863
      %4865 = vmatmul.f32.gmra.mxu0 %v4844
      %v4866 = vpop.f32.mrf.mxu0
      %v4867 = vadd.f32 0.0, %v4866
      %4868 = vdwg.mxu0
      %v4870 = vsel %vm2437, %v4782, 0
      %v4873 = vsel %vm2437, %v4783, 0
      %4875 = vmatpush.msra.mxu0 0.0
      %4876 = vmatpush.msra.mxu0 0.0
      %4877 = vmatpush.msra.mxu0 0.0
      %4878 = vmatpush.msra.mxu0 0.0
      %4879 = vmatpush.msra.mxu0 0.0
      %4880 = vmatpush.msra.mxu0 0.0
      %4881 = vmatpush.msra.mxu0 0.0
      %4882 = vmatpush.msra.mxu0 0.0
      %4883 = vmatpush.msra.mxu0 0.0
      %4884 = vmatpush.msra.mxu0 0.0
      %4885 = vmatpush.msra.mxu0 0.0
      %4886 = vmatpush.msra.mxu0 0.0
      %4887 = vmatpush.msra.mxu0 %v4810
      %4888 = vmatpush.msra.mxu0 %v4809
      %4889 = vmatpush.msra.mxu0 %v4808
      %4890 = vmatpush.msra.mxu0 %v4807
      %4891 = vmatmul.f32.gmra.mxu0 %v4870
      %v4892 = vpop.f32.mrf.mxu0
      %v4893 = vadd.f32 0.0, %v4892
      %4894 = vmatmul.f32.gmra.mxu0 %v4873
      %v4895 = vpop.f32.mrf.mxu0
      %v4896 = vadd.f32 0.0, %v4895
      %4897 = vdwg.mxu0
      %v4899 = vsel %vm2437, %v4784, 0
      %v4902 = vsel %vm2437, %v4785, 0
      %4904 = vmatpush.msra.mxu0 0.0
      %4905 = vmatpush.msra.mxu0 0.0
      %4906 = vmatpush.msra.mxu0 0.0
      %4907 = vmatpush.msra.mxu0 0.0
      %4908 = vmatpush.msra.mxu0 0.0
      %4909 = vmatpush.msra.mxu0 0.0
      %4910 = vmatpush.msra.mxu0 0.0
      %4911 = vmatpush.msra.mxu0 0.0
      %4912 = vmatpush.msra.mxu0 0.0
      %4913 = vmatpush.msra.mxu0 0.0
      %4914 = vmatpush.msra.mxu0 0.0
      %4915 = vmatpush.msra.mxu0 0.0
      %4916 = vmatpush.msra.mxu0 %v4810
      %4917 = vmatpush.msra.mxu0 %v4809
      %4918 = vmatpush.msra.mxu0 %v4808
      %4919 = vmatpush.msra.mxu0 %v4807
      %4920 = vmatmul.f32.gmra.mxu0 %v4899
      %v4921 = vpop.f32.mrf.mxu0
      %v4922 = vadd.f32 0.0, %v4921
      %4923 = vmatmul.f32.gmra.mxu0 %v4902
      %v4924 = vpop.f32.mrf.mxu0
      %v4925 = vadd.f32 0.0, %v4924
      %4926 = vdwg.mxu0
      %v4928 = vsel %vm2437, %v4786, 0
      %v4931 = vsel %vm2437, %v4787, 0
      %4933 = vmatpush.msra.mxu0 0.0
      %4934 = vmatpush.msra.mxu0 0.0
      %4935 = vmatpush.msra.mxu0 0.0
      %4936 = vmatpush.msra.mxu0 0.0
      %4937 = vmatpush.msra.mxu0 0.0
      %4938 = vmatpush.msra.mxu0 0.0
      %4939 = vmatpush.msra.mxu0 0.0
      %4940 = vmatpush.msra.mxu0 0.0
      %4941 = vmatpush.msra.mxu0 0.0
      %4942 = vmatpush.msra.mxu0 0.0
      %4943 = vmatpush.msra.mxu0 0.0
      %4944 = vmatpush.msra.mxu0 0.0
      %4945 = vmatpush.msra.mxu0 %v4810
      %4946 = vmatpush.msra.mxu0 %v4809
      %4947 = vmatpush.msra.mxu0 %v4808
      %4948 = vmatpush.msra.mxu0 %v4807
      %4949 = vmatmul.f32.gmra.mxu0 %v4928
      %v4950 = vpop.f32.mrf.mxu0
      %v4951 = vadd.f32 0.0, %v4950
      %4952 = vmatmul.f32.gmra.mxu0 %v4931
      %v4953 = vpop.f32.mrf.mxu0
      %v4954 = vadd.f32 0.0, %v4953
      %4955 = vdwg.mxu0
      %v4957 = vsel %vm2437, %v4788, 0
      %v4960 = vsel %vm2437, %v4789, 0
      %4962 = vmatpush.msra.mxu0 0.0
      %4963 = vmatpush.msra.mxu0 0.0
      %4964 = vmatpush.msra.mxu0 0.0
      %4965 = vmatpush.msra.mxu0 0.0
      %4966 = vmatpush.msra.mxu0 0.0
      %4967 = vmatpush.msra.mxu0 0.0
      %4968 = vmatpush.msra.mxu0 0.0
      %4969 = vmatpush.msra.mxu0 0.0
      %4970 = vmatpush.msra.mxu0 0.0
      %4971 = vmatpush.msra.mxu0 0.0
      %4972 = vmatpush.msra.mxu0 0.0
      %4973 = vmatpush.msra.mxu0 0.0
      %4974 = vmatpush.msra.mxu0 %v4810
      %4975 = vmatpush.msra.mxu0 %v4809
      %4976 = vmatpush.msra.mxu0 %v4808
      %4977 = vmatpush.msra.mxu0 %v4807
      %4978 = vmatmul.f32.gmra.mxu0 %v4957
      %v4979 = vpop.f32.mrf.mxu0
      %v4980 = vadd.f32 0.0, %v4979
      %4981 = vmatmul.f32.gmra.mxu0 %v4960
      %v4982 = vpop.f32.mrf.mxu0
      %v4983 = vadd.f32 0.0, %v4982
      %4984 = vdwg.mxu0
      %v4986 = vsel %vm2437, %v4790, 0
      %v4989 = vsel %vm2437, %v4791, 0
      %4991 = vmatpush.msra.mxu0 0.0
      %4992 = vmatpush.msra.mxu0 0.0
      %4993 = vmatpush.msra.mxu0 0.0
      %4994 = vmatpush.msra.mxu0 0.0
      %4995 = vmatpush.msra.mxu0 0.0
      %4996 = vmatpush.msra.mxu0 0.0
      %4997 = vmatpush.msra.mxu0 0.0
      %4998 = vmatpush.msra.mxu0 0.0
      %4999 = vmatpush.msra.mxu0 0.0
      %5000 = vmatpush.msra.mxu0 0.0
      %5001 = vmatpush.msra.mxu0 0.0
      %5002 = vmatpush.msra.mxu0 0.0
      %5003 = vmatpush.msra.mxu0 %v4810
      %5004 = vmatpush.msra.mxu0 %v4809
      %5005 = vmatpush.msra.mxu0 %v4808
      %5006 = vmatpush.msra.mxu0 %v4807
      %5007 = vmatmul.f32.gmra.mxu0 %v4986
      %v5008 = vpop.f32.mrf.mxu0
      %v5009 = vadd.f32 0.0, %v5008
      %5010 = vmatmul.f32.gmra.mxu0 %v4989
      %v5011 = vpop.f32.mrf.mxu0
      %v5012 = vadd.f32 0.0, %v5011
      %5013 = vdwg.mxu0
      %v5015 = vsel %vm2437, %v4792, 0
      %v5018 = vsel %vm2437, %v4793, 0
      %5020 = vmatpush.msra.mxu0 0.0
      %5021 = vmatpush.msra.mxu0 0.0
      %5022 = vmatpush.msra.mxu0 0.0
      %5023 = vmatpush.msra.mxu0 0.0
      %5024 = vmatpush.msra.mxu0 0.0
      %5025 = vmatpush.msra.mxu0 0.0
      %5026 = vmatpush.msra.mxu0 0.0
      %5027 = vmatpush.msra.mxu0 0.0
      %5028 = vmatpush.msra.mxu0 0.0
      %5029 = vmatpush.msra.mxu0 0.0
      %5030 = vmatpush.msra.mxu0 0.0
      %5031 = vmatpush.msra.mxu0 0.0
      %5032 = vmatpush.msra.mxu0 %v4810
      %5033 = vmatpush.msra.mxu0 %v4809
      %5034 = vmatpush.msra.mxu0 %v4808
      %5035 = vmatpush.msra.mxu0 %v4807
      %5036 = vmatmul.f32.gmra.mxu0 %v5015
      %v5037 = vpop.f32.mrf.mxu0
      %v5038 = vadd.f32 0.0, %v5037
      %5039 = vmatmul.f32.gmra.mxu0 %v5018
      %v5040 = vpop.f32.mrf.mxu0
      %v5041 = vadd.f32 0.0, %v5040
      %5042 = vdwg.mxu0
      %v5044 = vsel %vm2437, %v4794, 0
      %v5047 = vsel %vm2437, %v4795, 0
      %5049 = vmatpush.msra.mxu0 0.0
      %5050 = vmatpush.msra.mxu0 0.0
      %5051 = vmatpush.msra.mxu0 0.0
      %5052 = vmatpush.msra.mxu0 0.0
      %5053 = vmatpush.msra.mxu0 0.0
      %5054 = vmatpush.msra.mxu0 0.0
      %5055 = vmatpush.msra.mxu0 0.0
      %5056 = vmatpush.msra.mxu0 0.0
      %5057 = vmatpush.msra.mxu0 0.0
      %5058 = vmatpush.msra.mxu0 0.0
      %5059 = vmatpush.msra.mxu0 0.0
      %5060 = vmatpush.msra.mxu0 0.0
      %5061 = vmatpush.msra.mxu0 %v4810
      %5062 = vmatpush.msra.mxu0 %v4809
      %5063 = vmatpush.msra.mxu0 %v4808
      %5064 = vmatpush.msra.mxu0 %v4807
      %5065 = vmatmul.f32.gmra.mxu0 %v5044
      %v5066 = vpop.f32.mrf.mxu0
      %v5067 = vadd.f32 0.0, %v5066
      %5068 = vmatmul.f32.gmra.mxu0 %v5047
      %v5069 = vpop.f32.mrf.mxu0
      %v5070 = vadd.f32 0.0, %v5069
      %5071 = vdwg.mxu0
      %v5073 = vsel %vm2437, %v4796, 0
      %v5076 = vsel %vm2437, %v4797, 0
      %5078 = vmatpush.msra.mxu0 0.0
      %5079 = vmatpush.msra.mxu0 0.0
      %5080 = vmatpush.msra.mxu0 0.0
      %5081 = vmatpush.msra.mxu0 0.0
      %5082 = vmatpush.msra.mxu0 0.0
      %5083 = vmatpush.msra.mxu0 0.0
      %5084 = vmatpush.msra.mxu0 0.0
      %5085 = vmatpush.msra.mxu0 0.0
      %5086 = vmatpush.msra.mxu0 0.0
      %5087 = vmatpush.msra.mxu0 0.0
      %5088 = vmatpush.msra.mxu0 0.0
      %5089 = vmatpush.msra.mxu0 0.0
      %5090 = vmatpush.msra.mxu0 %v4810
      %5091 = vmatpush.msra.mxu0 %v4809
      %5092 = vmatpush.msra.mxu0 %v4808
      %5093 = vmatpush.msra.mxu0 %v4807
      %5094 = vmatmul.f32.gmra.mxu0 %v5073
      %v5095 = vpop.f32.mrf.mxu0
      %v5096 = vadd.f32 0.0, %v5095
      %5097 = vmatmul.f32.gmra.mxu0 %v5076
      %v5098 = vpop.f32.mrf.mxu0
      %v5099 = vadd.f32 0.0, %v5098
      %5100 = vdwg.mxu0
      %v5102 = vsel %vm2437, %v4798, 0
      %v5105 = vsel %vm2437, %v4799, 0
      %5107 = vmatpush.msra.mxu0 0.0
      %5108 = vmatpush.msra.mxu0 0.0
      %5109 = vmatpush.msra.mxu0 0.0
      %5110 = vmatpush.msra.mxu0 0.0
      %5111 = vmatpush.msra.mxu0 0.0
      %5112 = vmatpush.msra.mxu0 0.0
      %5113 = vmatpush.msra.mxu0 0.0
      %5114 = vmatpush.msra.mxu0 0.0
      %5115 = vmatpush.msra.mxu0 0.0
      %5116 = vmatpush.msra.mxu0 0.0
      %5117 = vmatpush.msra.mxu0 0.0
      %5118 = vmatpush.msra.mxu0 0.0
      %5119 = vmatpush.msra.mxu0 %v4810
      %5120 = vmatpush.msra.mxu0 %v4809
      %5121 = vmatpush.msra.mxu0 %v4808
      %5122 = vmatpush.msra.mxu0 %v4807
      %5123 = vmatmul.f32.gmra.mxu0 %v5102
      %v5124 = vpop.f32.mrf.mxu0
      %v5125 = vadd.f32 0.0, %v5124
      %5126 = vmatmul.f32.gmra.mxu0 %v5105
      %v5127 = vpop.f32.mrf.mxu0
      %v5128 = vadd.f32 0.0, %v5127
      %5129 = vdwg.mxu0
      %v5131 = vsel %vm2437, %v4800, 0
      %v5134 = vsel %vm2437, %v4801, 0
      %5136 = vmatpush.msra.mxu0 0.0
      %5137 = vmatpush.msra.mxu0 0.0
      %5138 = vmatpush.msra.mxu0 0.0
      %5139 = vmatpush.msra.mxu0 0.0
      %5140 = vmatpush.msra.mxu0 0.0
      %5141 = vmatpush.msra.mxu0 0.0
      %5142 = vmatpush.msra.mxu0 0.0
      %5143 = vmatpush.msra.mxu0 0.0
      %5144 = vmatpush.msra.mxu0 0.0
      %5145 = vmatpush.msra.mxu0 0.0
      %5146 = vmatpush.msra.mxu0 0.0
      %5147 = vmatpush.msra.mxu0 0.0
      %5148 = vmatpush.msra.mxu0 %v4810
      %5149 = vmatpush.msra.mxu0 %v4809
      %5150 = vmatpush.msra.mxu0 %v4808
      %5151 = vmatpush.msra.mxu0 %v4807
      %5152 = vmatmul.f32.gmra.mxu0 %v5131
      %v5153 = vpop.f32.mrf.mxu0
      %v5154 = vadd.f32 0.0, %v5153
      %5155 = vmatmul.f32.gmra.mxu0 %v5134
      %v5156 = vpop.f32.mrf.mxu0
      %v5157 = vadd.f32 0.0, %v5156
      %5158 = vdwg.mxu0
      %v5160 = vsel %vm2437, %v4802, 0
      %v5163 = vsel %vm2437, %v4803, 0
      %5165 = vmatpush.msra.mxu0 0.0
      %5166 = vmatpush.msra.mxu0 0.0
      %5167 = vmatpush.msra.mxu0 0.0
      %5168 = vmatpush.msra.mxu0 0.0
      %5169 = vmatpush.msra.mxu0 0.0
      %5170 = vmatpush.msra.mxu0 0.0
      %5171 = vmatpush.msra.mxu0 0.0
      %5172 = vmatpush.msra.mxu0 0.0
      %5173 = vmatpush.msra.mxu0 0.0
      %5174 = vmatpush.msra.mxu0 0.0
      %5175 = vmatpush.msra.mxu0 0.0
      %5176 = vmatpush.msra.mxu0 0.0
      %5177 = vmatpush.msra.mxu0 %v4810
      %5178 = vmatpush.msra.mxu0 %v4809
      %5179 = vmatpush.msra.mxu0 %v4808
      %5180 = vmatpush.msra.mxu0 %v4807
      %5181 = vmatmul.f32.gmra.mxu0 %v5160
      %v5182 = vpop.f32.mrf.mxu0
      %v5183 = vadd.f32 0.0, %v5182
      %5184 = vmatmul.f32.gmra.mxu0 %v5163
      %v5185 = vpop.f32.mrf.mxu0
      %v5186 = vadd.f32 0.0, %v5185
      %5187 = vdwg.mxu0
      %v5189 = vsel %vm2437, %v4804, 0
      %v5192 = vsel %vm2437, %v4805, 0
      %5194 = vmatpush.msra.mxu0 0.0
      %5195 = vmatpush.msra.mxu0 0.0
      %5196 = vmatpush.msra.mxu0 0.0
      %5197 = vmatpush.msra.mxu0 0.0
      %5198 = vmatpush.msra.mxu0 0.0
      %5199 = vmatpush.msra.mxu0 0.0
      %5200 = vmatpush.msra.mxu0 0.0
      %5201 = vmatpush.msra.mxu0 0.0
      %5202 = vmatpush.msra.mxu0 0.0
      %5203 = vmatpush.msra.mxu0 0.0
      %5204 = vmatpush.msra.mxu0 0.0
      %5205 = vmatpush.msra.mxu0 0.0
      %5206 = vmatpush.msra.mxu0 %v4810
      %5207 = vmatpush.msra.mxu0 %v4809
      %5208 = vmatpush.msra.mxu0 %v4808
      %5209 = vmatpush.msra.mxu0 %v4807
      %5210 = vmatmul.f32.gmra.mxu0 %v5189
      %v5211 = vpop.f32.mrf.mxu0
      %v5212 = vadd.f32 0.0, %v5211
      %5213 = vmatmul.f32.gmra.mxu0 %v5192
      %v5214 = vpop.f32.mrf.mxu0
      %v5215 = vadd.f32 0.0, %v5214
      %5216 = vdwg.mxu0
      %v5217 = vadd.f32 %v4750, %v4835
      %v5218 = vadd.f32 %v4751, %v4838
      %v5219 = vadd.f32 %v4752, %v4864
      %v5220 = vadd.f32 %v4753, %v4867
      %v5221 = vadd.f32 %v4754, %v4893
      %v5222 = vadd.f32 %v4755, %v4896
      %v5223 = vadd.f32 %v4756, %v4922
      %v5224 = vadd.f32 %v4757, %v4925
      %v5225 = vadd.f32 %v4758, %v4951
      %v5226 = vadd.f32 %v4759, %v4954
      %v5227 = vadd.f32 %v4760, %v4980
      %v5228 = vadd.f32 %v4761, %v4983
      %v5229 = vadd.f32 %v4762, %v5009
      %v5230 = vadd.f32 %v4763, %v5012
      %v5231 = vadd.f32 %v4764, %v5038
      %v5232 = vadd.f32 %v4765, %v5041
      %v5233 = vadd.f32 %v4766, %v5067
      %v5234 = vadd.f32 %v4767, %v5070
      %v5235 = vadd.f32 %v4768, %v5096
      %v5236 = vadd.f32 %v4769, %v5099
      %v5237 = vadd.f32 %v4770, %v5125
      %v5238 = vadd.f32 %v4771, %v5128
      %v5239 = vadd.f32 %v4772, %v5154
      %v5240 = vadd.f32 %v4773, %v5157
      %v5241 = vadd.f32 %v4774, %v5183
      %v5242 = vadd.f32 %v4775, %v5186
      %v5243 = vadd.f32 %v4776, %v5212
      %v5244 = vadd.f32 %v4777, %v5215
      %s5245 = scalar_lea.vmem [#allocation3], 32
      %v5246 = vld [vmem:[%s5245] sm:$0xff]
      %v5247 = vld [vmem:[%s5245 + $0x8] sm:$0x3f]
      %v5248 = vld [vmem:[%s5245 + $0x10] sm:$0xff]
      %v5249 = vld [vmem:[%s5245 + $0x18] sm:$0x3f]
      %v5250 = vld [vmem:[%s5245 + $0x20] sm:$0xff]
      %v5251 = vld [vmem:[%s5245 + $0x28] sm:$0x3f]
      %v5252 = vld [vmem:[%s5245 + $0x30] sm:$0xff]
      %v5253 = vld [vmem:[%s5245 + $0x38] sm:$0x3f]
      %v5254 = vld [vmem:[%s5245 + $0x40] sm:$0xff]
      %v5255 = vld [vmem:[%s5245 + $0x48] sm:$0x3f]
      %v5256 = vld [vmem:[%s5245 + $0x50] sm:$0xff]
      %v5257 = vld [vmem:[%s5245 + $0x58] sm:$0x3f]
      %v5258 = vld [vmem:[%s5245 + $0x60] sm:$0xff]
      %v5259 = vld [vmem:[%s5245 + $0x68] sm:$0x3f]
      %v5260 = vld [vmem:[%s5245 + $0x70] sm:$0xff]
      %v5261 = vld [vmem:[%s5245 + $0x78] sm:$0x3f]
      %v5262 = vld [vmem:[%s5245 + $0x80] sm:$0xff]
      %v5263 = vld [vmem:[%s5245 + $0x88] sm:$0x3f]
      %v5264 = vld [vmem:[%s5245 + $0x90] sm:$0xff]
      %v5265 = vld [vmem:[%s5245 + $0x98] sm:$0x3f]
      %v5266 = vld [vmem:[%s5245 + $0xa0] sm:$0xff]
      %v5267 = vld [vmem:[%s5245 + $0xa8] sm:$0x3f]
      %v5268 = vld [vmem:[%s5245 + $0xb0] sm:$0xff]
      %v5269 = vld [vmem:[%s5245 + $0xb8] sm:$0x3f]
      %v5270 = vld [vmem:[%s5245 + $0xc0] sm:$0xff]
      %v5271 = vld [vmem:[%s5245 + $0xc8] sm:$0x3f]
      %v5272 = vld [vmem:[%s5245 + $0xd0] sm:$0xff]
      %v5273 = vld [vmem:[%s5245 + $0xd8] sm:$0x3f]
      %s5274 = scalar_lea.vmem %s3, 192
      %v5275 = vld [vmem:[%s5274] sm:$0xff]
      %v5276 = vld [vmem:[%s5274 + $0x8] sm:$0xff]
      %v5277 = vld [vmem:[%s5274 + $0x10] sm:$0xff]
      %v5278 = vld [vmem:[%s5274 + $0x18] sm:$0xff]
      %v5280 = vsel %vm2437, %v5246, 0
      %v5283 = vsel %vm2437, %v5247, 0
      %5285 = vmatpush.msra.mxu0 0.0
      %5286 = vmatpush.msra.mxu0 0.0
      %5287 = vmatpush.msra.mxu0 0.0
      %5288 = vmatpush.msra.mxu0 0.0
      %5289 = vmatpush.msra.mxu0 0.0
      %5290 = vmatpush.msra.mxu0 0.0
      %5291 = vmatpush.msra.mxu0 0.0
      %5292 = vmatpush.msra.mxu0 0.0
      %5293 = vmatpush.msra.mxu0 0.0
      %5294 = vmatpush.msra.mxu0 0.0
      %5295 = vmatpush.msra.mxu0 0.0
      %5296 = vmatpush.msra.mxu0 0.0
      %5297 = vmatpush.msra.mxu0 %v5278
      %5298 = vmatpush.msra.mxu0 %v5277
      %5299 = vmatpush.msra.mxu0 %v5276
      %5300 = vmatpush.msra.mxu0 %v5275
      %5301 = vmatmul.f32.gmra.mxu0 %v5280
      %v5302 = vpop.f32.mrf.mxu0
      %v5303 = vadd.f32 0.0, %v5302
      %5304 = vmatmul.f32.gmra.mxu0 %v5283
      %v5305 = vpop.f32.mrf.mxu0
      %v5306 = vadd.f32 0.0, %v5305
      %5307 = vdwg.mxu0
      %v5309 = vsel %vm2437, %v5248, 0
      %v5312 = vsel %vm2437, %v5249, 0
      %5314 = vmatpush.msra.mxu0 0.0
      %5315 = vmatpush.msra.mxu0 0.0
      %5316 = vmatpush.msra.mxu0 0.0
      %5317 = vmatpush.msra.mxu0 0.0
      %5318 = vmatpush.msra.mxu0 0.0
      %5319 = vmatpush.msra.mxu0 0.0
      %5320 = vmatpush.msra.mxu0 0.0
      %5321 = vmatpush.msra.mxu0 0.0
      %5322 = vmatpush.msra.mxu0 0.0
      %5323 = vmatpush.msra.mxu0 0.0
      %5324 = vmatpush.msra.mxu0 0.0
      %5325 = vmatpush.msra.mxu0 0.0
      %5326 = vmatpush.msra.mxu0 %v5278
      %5327 = vmatpush.msra.mxu0 %v5277
      %5328 = vmatpush.msra.mxu0 %v5276
      %5329 = vmatpush.msra.mxu0 %v5275
      %5330 = vmatmul.f32.gmra.mxu0 %v5309
      %v5331 = vpop.f32.mrf.mxu0
      %v5332 = vadd.f32 0.0, %v5331
      %5333 = vmatmul.f32.gmra.mxu0 %v5312
      %v5334 = vpop.f32.mrf.mxu0
      %v5335 = vadd.f32 0.0, %v5334
      %5336 = vdwg.mxu0
      %v5338 = vsel %vm2437, %v5250, 0
      %v5341 = vsel %vm2437, %v5251, 0
      %5343 = vmatpush.msra.mxu0 0.0
      %5344 = vmatpush.msra.mxu0 0.0
      %5345 = vmatpush.msra.mxu0 0.0
      %5346 = vmatpush.msra.mxu0 0.0
      %5347 = vmatpush.msra.mxu0 0.0
      %5348 = vmatpush.msra.mxu0 0.0
      %5349 = vmatpush.msra.mxu0 0.0
      %5350 = vmatpush.msra.mxu0 0.0
      %5351 = vmatpush.msra.mxu0 0.0
      %5352 = vmatpush.msra.mxu0 0.0
      %5353 = vmatpush.msra.mxu0 0.0
      %5354 = vmatpush.msra.mxu0 0.0
      %5355 = vmatpush.msra.mxu0 %v5278
      %5356 = vmatpush.msra.mxu0 %v5277
      %5357 = vmatpush.msra.mxu0 %v5276
      %5358 = vmatpush.msra.mxu0 %v5275
      %5359 = vmatmul.f32.gmra.mxu0 %v5338
      %v5360 = vpop.f32.mrf.mxu0
      %v5361 = vadd.f32 0.0, %v5360
      %5362 = vmatmul.f32.gmra.mxu0 %v5341
      %v5363 = vpop.f32.mrf.mxu0
      %v5364 = vadd.f32 0.0, %v5363
      %5365 = vdwg.mxu0
      %v5367 = vsel %vm2437, %v5252, 0
      %v5370 = vsel %vm2437, %v5253, 0
      %5372 = vmatpush.msra.mxu0 0.0
      %5373 = vmatpush.msra.mxu0 0.0
      %5374 = vmatpush.msra.mxu0 0.0
      %5375 = vmatpush.msra.mxu0 0.0
      %5376 = vmatpush.msra.mxu0 0.0
      %5377 = vmatpush.msra.mxu0 0.0
      %5378 = vmatpush.msra.mxu0 0.0
      %5379 = vmatpush.msra.mxu0 0.0
      %5380 = vmatpush.msra.mxu0 0.0
      %5381 = vmatpush.msra.mxu0 0.0
      %5382 = vmatpush.msra.mxu0 0.0
      %5383 = vmatpush.msra.mxu0 0.0
      %5384 = vmatpush.msra.mxu0 %v5278
      %5385 = vmatpush.msra.mxu0 %v5277
      %5386 = vmatpush.msra.mxu0 %v5276
      %5387 = vmatpush.msra.mxu0 %v5275
      %5388 = vmatmul.f32.gmra.mxu0 %v5367
      %v5389 = vpop.f32.mrf.mxu0
      %v5390 = vadd.f32 0.0, %v5389
      %5391 = vmatmul.f32.gmra.mxu0 %v5370
      %v5392 = vpop.f32.mrf.mxu0
      %v5393 = vadd.f32 0.0, %v5392
      %5394 = vdwg.mxu0
      %v5396 = vsel %vm2437, %v5254, 0
      %v5399 = vsel %vm2437, %v5255, 0
      %5401 = vmatpush.msra.mxu0 0.0
      %5402 = vmatpush.msra.mxu0 0.0
      %5403 = vmatpush.msra.mxu0 0.0
      %5404 = vmatpush.msra.mxu0 0.0
      %5405 = vmatpush.msra.mxu0 0.0
      %5406 = vmatpush.msra.mxu0 0.0
      %5407 = vmatpush.msra.mxu0 0.0
      %5408 = vmatpush.msra.mxu0 0.0
      %5409 = vmatpush.msra.mxu0 0.0
      %5410 = vmatpush.msra.mxu0 0.0
      %5411 = vmatpush.msra.mxu0 0.0
      %5412 = vmatpush.msra.mxu0 0.0
      %5413 = vmatpush.msra.mxu0 %v5278
      %5414 = vmatpush.msra.mxu0 %v5277
      %5415 = vmatpush.msra.mxu0 %v5276
      %5416 = vmatpush.msra.mxu0 %v5275
      %5417 = vmatmul.f32.gmra.mxu0 %v5396
      %v5418 = vpop.f32.mrf.mxu0
      %v5419 = vadd.f32 0.0, %v5418
      %5420 = vmatmul.f32.gmra.mxu0 %v5399
      %v5421 = vpop.f32.mrf.mxu0
      %v5422 = vadd.f32 0.0, %v5421
      %5423 = vdwg.mxu0
      %v5425 = vsel %vm2437, %v5256, 0
      %v5428 = vsel %vm2437, %v5257, 0
      %5430 = vmatpush.msra.mxu0 0.0
      %5431 = vmatpush.msra.mxu0 0.0
      %5432 = vmatpush.msra.mxu0 0.0
      %5433 = vmatpush.msra.mxu0 0.0
      %5434 = vmatpush.msra.mxu0 0.0
      %5435 = vmatpush.msra.mxu0 0.0
      %5436 = vmatpush.msra.mxu0 0.0
      %5437 = vmatpush.msra.mxu0 0.0
      %5438 = vmatpush.msra.mxu0 0.0
      %5439 = vmatpush.msra.mxu0 0.0
      %5440 = vmatpush.msra.mxu0 0.0
      %5441 = vmatpush.msra.mxu0 0.0
      %5442 = vmatpush.msra.mxu0 %v5278
      %5443 = vmatpush.msra.mxu0 %v5277
      %5444 = vmatpush.msra.mxu0 %v5276
      %5445 = vmatpush.msra.mxu0 %v5275
      %5446 = vmatmul.f32.gmra.mxu0 %v5425
      %v5447 = vpop.f32.mrf.mxu0
      %v5448 = vadd.f32 0.0, %v5447
      %5449 = vmatmul.f32.gmra.mxu0 %v5428
      %v5450 = vpop.f32.mrf.mxu0
      %v5451 = vadd.f32 0.0, %v5450
      %5452 = vdwg.mxu0
      %v5454 = vsel %vm2437, %v5258, 0
      %v5457 = vsel %vm2437, %v5259, 0
      %5459 = vmatpush.msra.mxu0 0.0
      %5460 = vmatpush.msra.mxu0 0.0
      %5461 = vmatpush.msra.mxu0 0.0
      %5462 = vmatpush.msra.mxu0 0.0
      %5463 = vmatpush.msra.mxu0 0.0
      %5464 = vmatpush.msra.mxu0 0.0
      %5465 = vmatpush.msra.mxu0 0.0
      %5466 = vmatpush.msra.mxu0 0.0
      %5467 = vmatpush.msra.mxu0 0.0
      %5468 = vmatpush.msra.mxu0 0.0
      %5469 = vmatpush.msra.mxu0 0.0
      %5470 = vmatpush.msra.mxu0 0.0
      %5471 = vmatpush.msra.mxu0 %v5278
      %5472 = vmatpush.msra.mxu0 %v5277
      %5473 = vmatpush.msra.mxu0 %v5276
      %5474 = vmatpush.msra.mxu0 %v5275
      %5475 = vmatmul.f32.gmra.mxu0 %v5454
      %v5476 = vpop.f32.mrf.mxu0
      %v5477 = vadd.f32 0.0, %v5476
      %5478 = vmatmul.f32.gmra.mxu0 %v5457
      %v5479 = vpop.f32.mrf.mxu0
      %v5480 = vadd.f32 0.0, %v5479
      %5481 = vdwg.mxu0
      %v5483 = vsel %vm2437, %v5260, 0
      %v5486 = vsel %vm2437, %v5261, 0
      %5488 = vmatpush.msra.mxu0 0.0
      %5489 = vmatpush.msra.mxu0 0.0
      %5490 = vmatpush.msra.mxu0 0.0
      %5491 = vmatpush.msra.mxu0 0.0
      %5492 = vmatpush.msra.mxu0 0.0
      %5493 = vmatpush.msra.mxu0 0.0
      %5494 = vmatpush.msra.mxu0 0.0
      %5495 = vmatpush.msra.mxu0 0.0
      %5496 = vmatpush.msra.mxu0 0.0
      %5497 = vmatpush.msra.mxu0 0.0
      %5498 = vmatpush.msra.mxu0 0.0
      %5499 = vmatpush.msra.mxu0 0.0
      %5500 = vmatpush.msra.mxu0 %v5278
      %5501 = vmatpush.msra.mxu0 %v5277
      %5502 = vmatpush.msra.mxu0 %v5276
      %5503 = vmatpush.msra.mxu0 %v5275
      %5504 = vmatmul.f32.gmra.mxu0 %v5483
      %v5505 = vpop.f32.mrf.mxu0
      %v5506 = vadd.f32 0.0, %v5505
      %5507 = vmatmul.f32.gmra.mxu0 %v5486
      %v5508 = vpop.f32.mrf.mxu0
      %v5509 = vadd.f32 0.0, %v5508
      %5510 = vdwg.mxu0
      %v5512 = vsel %vm2437, %v5262, 0
      %v5515 = vsel %vm2437, %v5263, 0
      %5517 = vmatpush.msra.mxu0 0.0
      %5518 = vmatpush.msra.mxu0 0.0
      %5519 = vmatpush.msra.mxu0 0.0
      %5520 = vmatpush.msra.mxu0 0.0
      %5521 = vmatpush.msra.mxu0 0.0
      %5522 = vmatpush.msra.mxu0 0.0
      %5523 = vmatpush.msra.mxu0 0.0
      %5524 = vmatpush.msra.mxu0 0.0
      %5525 = vmatpush.msra.mxu0 0.0
      %5526 = vmatpush.msra.mxu0 0.0
      %5527 = vmatpush.msra.mxu0 0.0
      %5528 = vmatpush.msra.mxu0 0.0
      %5529 = vmatpush.msra.mxu0 %v5278
      %5530 = vmatpush.msra.mxu0 %v5277
      %5531 = vmatpush.msra.mxu0 %v5276
      %5532 = vmatpush.msra.mxu0 %v5275
      %5533 = vmatmul.f32.gmra.mxu0 %v5512
      %v5534 = vpop.f32.mrf.mxu0
      %v5535 = vadd.f32 0.0, %v5534
      %5536 = vmatmul.f32.gmra.mxu0 %v5515
      %v5537 = vpop.f32.mrf.mxu0
      %v5538 = vadd.f32 0.0, %v5537
      %5539 = vdwg.mxu0
      %v5541 = vsel %vm2437, %v5264, 0
      %v5544 = vsel %vm2437, %v5265, 0
      %5546 = vmatpush.msra.mxu0 0.0
      %5547 = vmatpush.msra.mxu0 0.0
      %5548 = vmatpush.msra.mxu0 0.0
      %5549 = vmatpush.msra.mxu0 0.0
      %5550 = vmatpush.msra.mxu0 0.0
      %5551 = vmatpush.msra.mxu0 0.0
      %5552 = vmatpush.msra.mxu0 0.0
      %5553 = vmatpush.msra.mxu0 0.0
      %5554 = vmatpush.msra.mxu0 0.0
      %5555 = vmatpush.msra.mxu0 0.0
      %5556 = vmatpush.msra.mxu0 0.0
      %5557 = vmatpush.msra.mxu0 0.0
      %5558 = vmatpush.msra.mxu0 %v5278
      %5559 = vmatpush.msra.mxu0 %v5277
      %5560 = vmatpush.msra.mxu0 %v5276
      %5561 = vmatpush.msra.mxu0 %v5275
      %5562 = vmatmul.f32.gmra.mxu0 %v5541
      %v5563 = vpop.f32.mrf.mxu0
      %v5564 = vadd.f32 0.0, %v5563
      %5565 = vmatmul.f32.gmra.mxu0 %v5544
      %v5566 = vpop.f32.mrf.mxu0
      %v5567 = vadd.f32 0.0, %v5566
      %5568 = vdwg.mxu0
      %v5570 = vsel %vm2437, %v5266, 0
      %v5573 = vsel %vm2437, %v5267, 0
      %5575 = vmatpush.msra.mxu0 0.0
      %5576 = vmatpush.msra.mxu0 0.0
      %5577 = vmatpush.msra.mxu0 0.0
      %5578 = vmatpush.msra.mxu0 0.0
      %5579 = vmatpush.msra.mxu0 0.0
      %5580 = vmatpush.msra.mxu0 0.0
      %5581 = vmatpush.msra.mxu0 0.0
      %5582 = vmatpush.msra.mxu0 0.0
      %5583 = vmatpush.msra.mxu0 0.0
      %5584 = vmatpush.msra.mxu0 0.0
      %5585 = vmatpush.msra.mxu0 0.0
      %5586 = vmatpush.msra.mxu0 0.0
      %5587 = vmatpush.msra.mxu0 %v5278
      %5588 = vmatpush.msra.mxu0 %v5277
      %5589 = vmatpush.msra.mxu0 %v5276
      %5590 = vmatpush.msra.mxu0 %v5275
      %5591 = vmatmul.f32.gmra.mxu0 %v5570
      %v5592 = vpop.f32.mrf.mxu0
      %v5593 = vadd.f32 0.0, %v5592
      %5594 = vmatmul.f32.gmra.mxu0 %v5573
      %v5595 = vpop.f32.mrf.mxu0
      %v5596 = vadd.f32 0.0, %v5595
      %5597 = vdwg.mxu0
      %v5599 = vsel %vm2437, %v5268, 0
      %v5602 = vsel %vm2437, %v5269, 0
      %5604 = vmatpush.msra.mxu0 0.0
      %5605 = vmatpush.msra.mxu0 0.0
      %5606 = vmatpush.msra.mxu0 0.0
      %5607 = vmatpush.msra.mxu0 0.0
      %5608 = vmatpush.msra.mxu0 0.0
      %5609 = vmatpush.msra.mxu0 0.0
      %5610 = vmatpush.msra.mxu0 0.0
      %5611 = vmatpush.msra.mxu0 0.0
      %5612 = vmatpush.msra.mxu0 0.0
      %5613 = vmatpush.msra.mxu0 0.0
      %5614 = vmatpush.msra.mxu0 0.0
      %5615 = vmatpush.msra.mxu0 0.0
      %5616 = vmatpush.msra.mxu0 %v5278
      %5617 = vmatpush.msra.mxu0 %v5277
      %5618 = vmatpush.msra.mxu0 %v5276
      %5619 = vmatpush.msra.mxu0 %v5275
      %5620 = vmatmul.f32.gmra.mxu0 %v5599
      %v5621 = vpop.f32.mrf.mxu0
      %v5622 = vadd.f32 0.0, %v5621
      %5623 = vmatmul.f32.gmra.mxu0 %v5602
      %v5624 = vpop.f32.mrf.mxu0
      %v5625 = vadd.f32 0.0, %v5624
      %5626 = vdwg.mxu0
      %v5628 = vsel %vm2437, %v5270, 0
      %v5631 = vsel %vm2437, %v5271, 0
      %5633 = vmatpush.msra.mxu0 0.0
      %5634 = vmatpush.msra.mxu0 0.0
      %5635 = vmatpush.msra.mxu0 0.0
      %5636 = vmatpush.msra.mxu0 0.0
      %5637 = vmatpush.msra.mxu0 0.0
      %5638 = vmatpush.msra.mxu0 0.0
      %5639 = vmatpush.msra.mxu0 0.0
      %5640 = vmatpush.msra.mxu0 0.0
      %5641 = vmatpush.msra.mxu0 0.0
      %5642 = vmatpush.msra.mxu0 0.0
      %5643 = vmatpush.msra.mxu0 0.0
      %5644 = vmatpush.msra.mxu0 0.0
      %5645 = vmatpush.msra.mxu0 %v5278
      %5646 = vmatpush.msra.mxu0 %v5277
      %5647 = vmatpush.msra.mxu0 %v5276
      %5648 = vmatpush.msra.mxu0 %v5275
      %5649 = vmatmul.f32.gmra.mxu0 %v5628
      %v5650 = vpop.f32.mrf.mxu0
      %v5651 = vadd.f32 0.0, %v5650
      %5652 = vmatmul.f32.gmra.mxu0 %v5631
      %v5653 = vpop.f32.mrf.mxu0
      %v5654 = vadd.f32 0.0, %v5653
      %5655 = vdwg.mxu0
      %v5657 = vsel %vm2437, %v5272, 0
      %v5660 = vsel %vm2437, %v5273, 0
      %5662 = vmatpush.msra.mxu0 0.0
      %5663 = vmatpush.msra.mxu0 0.0
      %5664 = vmatpush.msra.mxu0 0.0
      %5665 = vmatpush.msra.mxu0 0.0
      %5666 = vmatpush.msra.mxu0 0.0
      %5667 = vmatpush.msra.mxu0 0.0
      %5668 = vmatpush.msra.mxu0 0.0
      %5669 = vmatpush.msra.mxu0 0.0
      %5670 = vmatpush.msra.mxu0 0.0
      %5671 = vmatpush.msra.mxu0 0.0
      %5672 = vmatpush.msra.mxu0 0.0
      %5673 = vmatpush.msra.mxu0 0.0
      %5674 = vmatpush.msra.mxu0 %v5278
      %5675 = vmatpush.msra.mxu0 %v5277
      %5676 = vmatpush.msra.mxu0 %v5276
      %5677 = vmatpush.msra.mxu0 %v5275
      %5678 = vmatmul.f32.gmra.mxu0 %v5657
      %v5679 = vpop.f32.mrf.mxu0
      %v5680 = vadd.f32 0.0, %v5679
      %5681 = vmatmul.f32.gmra.mxu0 %v5660
      %v5682 = vpop.f32.mrf.mxu0
      %v5683 = vadd.f32 0.0, %v5682
      %5684 = vdwg.mxu0
      %v5685 = vadd.f32 %v5217, %v5303
      %v5686 = vadd.f32 %v5218, %v5306
      %v5687 = vadd.f32 %v5219, %v5332
      %v5688 = vadd.f32 %v5220, %v5335
      %v5689 = vadd.f32 %v5221, %v5361
      %v5690 = vadd.f32 %v5222, %v5364
      %v5691 = vadd.f32 %v5223, %v5390
      %v5692 = vadd.f32 %v5224, %v5393
      %v5693 = vadd.f32 %v5225, %v5419
      %v5694 = vadd.f32 %v5226, %v5422
      %v5695 = vadd.f32 %v5227, %v5448
      %v5696 = vadd.f32 %v5228, %v5451
      %v5697 = vadd.f32 %v5229, %v5477
      %v5698 = vadd.f32 %v5230, %v5480
      %v5699 = vadd.f32 %v5231, %v5506
      %v5700 = vadd.f32 %v5232, %v5509
      %v5701 = vadd.f32 %v5233, %v5535
      %v5702 = vadd.f32 %v5234, %v5538
      %v5703 = vadd.f32 %v5235, %v5564
      %v5704 = vadd.f32 %v5236, %v5567
      %v5705 = vadd.f32 %v5237, %v5593
      %v5706 = vadd.f32 %v5238, %v5596
      %v5707 = vadd.f32 %v5239, %v5622
      %v5708 = vadd.f32 %v5240, %v5625
      %v5709 = vadd.f32 %v5241, %v5651
      %v5710 = vadd.f32 %v5242, %v5654
      %v5711 = vadd.f32 %v5243, %v5680
      %v5712 = vadd.f32 %v5244, %v5683
      %v5713 = vld [vmem:[%s5245 + $0x1] sm:$0xff]
      %v5714 = vld [vmem:[%s5245 + $0x9] sm:$0x3f]
      %v5715 = vld [vmem:[%s5245 + $0x11] sm:$0xff]
      %v5716 = vld [vmem:[%s5245 + $0x19] sm:$0x3f]
      %v5717 = vld [vmem:[%s5245 + $0x21] sm:$0xff]
      %v5718 = vld [vmem:[%s5245 + $0x29] sm:$0x3f]
      %v5719 = vld [vmem:[%s5245 + $0x31] sm:$0xff]
      %v5720 = vld [vmem:[%s5245 + $0x39] sm:$0x3f]
      %v5721 = vld [vmem:[%s5245 + $0x41] sm:$0xff]
      %v5722 = vld [vmem:[%s5245 + $0x49] sm:$0x3f]
      %v5723 = vld [vmem:[%s5245 + $0x51] sm:$0xff]
      %v5724 = vld [vmem:[%s5245 + $0x59] sm:$0x3f]
      %v5725 = vld [vmem:[%s5245 + $0x61] sm:$0xff]
      %v5726 = vld [vmem:[%s5245 + $0x69] sm:$0x3f]
      %v5727 = vld [vmem:[%s5245 + $0x71] sm:$0xff]
      %v5728 = vld [vmem:[%s5245 + $0x79] sm:$0x3f]
      %v5729 = vld [vmem:[%s5245 + $0x81] sm:$0xff]
      %v5730 = vld [vmem:[%s5245 + $0x89] sm:$0x3f]
      %v5731 = vld [vmem:[%s5245 + $0x91] sm:$0xff]
      %v5732 = vld [vmem:[%s5245 + $0x99] sm:$0x3f]
      %v5733 = vld [vmem:[%s5245 + $0xa1] sm:$0xff]
      %v5734 = vld [vmem:[%s5245 + $0xa9] sm:$0x3f]
      %v5735 = vld [vmem:[%s5245 + $0xb1] sm:$0xff]
      %v5736 = vld [vmem:[%s5245 + $0xb9] sm:$0x3f]
      %v5737 = vld [vmem:[%s5245 + $0xc1] sm:$0xff]
      %v5738 = vld [vmem:[%s5245 + $0xc9] sm:$0x3f]
      %v5739 = vld [vmem:[%s5245 + $0xd1] sm:$0xff]
      %v5740 = vld [vmem:[%s5245 + $0xd9] sm:$0x3f]
      %s5741 = scalar_lea.vmem %s3, 224
      %v5742 = vld [vmem:[%s5741] sm:$0xff]
      %v5743 = vld [vmem:[%s5741 + $0x8] sm:$0xff]
      %v5744 = vld [vmem:[%s5741 + $0x10] sm:$0xff]
      %v5745 = vld [vmem:[%s5741 + $0x18] sm:$0xff]
      %v5747 = vsel %vm2437, %v5713, 0
      %v5750 = vsel %vm2437, %v5714, 0
      %5752 = vmatpush.msra.mxu0 0.0
      %5753 = vmatpush.msra.mxu0 0.0
      %5754 = vmatpush.msra.mxu0 0.0
      %5755 = vmatpush.msra.mxu0 0.0
      %5756 = vmatpush.msra.mxu0 0.0
      %5757 = vmatpush.msra.mxu0 0.0
      %5758 = vmatpush.msra.mxu0 0.0
      %5759 = vmatpush.msra.mxu0 0.0
      %5760 = vmatpush.msra.mxu0 0.0
      %5761 = vmatpush.msra.mxu0 0.0
      %5762 = vmatpush.msra.mxu0 0.0
      %5763 = vmatpush.msra.mxu0 0.0
      %5764 = vmatpush.msra.mxu0 %v5745
      %5765 = vmatpush.msra.mxu0 %v5744
      %5766 = vmatpush.msra.mxu0 %v5743
      %5767 = vmatpush.msra.mxu0 %v5742
      %5768 = vmatmul.f32.gmra.mxu0 %v5747
      %v5769 = vpop.f32.mrf.mxu0
      %v5770 = vadd.f32 0.0, %v5769
      %5771 = vmatmul.f32.gmra.mxu0 %v5750
      %v5772 = vpop.f32.mrf.mxu0
      %v5773 = vadd.f32 0.0, %v5772
      %5774 = vdwg.mxu0
      %v5776 = vsel %vm2437, %v5715, 0
      %v5779 = vsel %vm2437, %v5716, 0
      %5781 = vmatpush.msra.mxu0 0.0
      %5782 = vmatpush.msra.mxu0 0.0
      %5783 = vmatpush.msra.mxu0 0.0
      %5784 = vmatpush.msra.mxu0 0.0
      %5785 = vmatpush.msra.mxu0 0.0
      %5786 = vmatpush.msra.mxu0 0.0
      %5787 = vmatpush.msra.mxu0 0.0
      %5788 = vmatpush.msra.mxu0 0.0
      %5789 = vmatpush.msra.mxu0 0.0
      %5790 = vmatpush.msra.mxu0 0.0
      %5791 = vmatpush.msra.mxu0 0.0
      %5792 = vmatpush.msra.mxu0 0.0
      %5793 = vmatpush.msra.mxu0 %v5745
      %5794 = vmatpush.msra.mxu0 %v5744
      %5795 = vmatpush.msra.mxu0 %v5743
      %5796 = vmatpush.msra.mxu0 %v5742
      %5797 = vmatmul.f32.gmra.mxu0 %v5776
      %v5798 = vpop.f32.mrf.mxu0
      %v5799 = vadd.f32 0.0, %v5798
      %5800 = vmatmul.f32.gmra.mxu0 %v5779
      %v5801 = vpop.f32.mrf.mxu0
      %v5802 = vadd.f32 0.0, %v5801
      %5803 = vdwg.mxu0
      %v5805 = vsel %vm2437, %v5717, 0
      %v5808 = vsel %vm2437, %v5718, 0
      %5810 = vmatpush.msra.mxu0 0.0
      %5811 = vmatpush.msra.mxu0 0.0
      %5812 = vmatpush.msra.mxu0 0.0
      %5813 = vmatpush.msra.mxu0 0.0
      %5814 = vmatpush.msra.mxu0 0.0
      %5815 = vmatpush.msra.mxu0 0.0
      %5816 = vmatpush.msra.mxu0 0.0
      %5817 = vmatpush.msra.mxu0 0.0
      %5818 = vmatpush.msra.mxu0 0.0
      %5819 = vmatpush.msra.mxu0 0.0
      %5820 = vmatpush.msra.mxu0 0.0
      %5821 = vmatpush.msra.mxu0 0.0
      %5822 = vmatpush.msra.mxu0 %v5745
      %5823 = vmatpush.msra.mxu0 %v5744
      %5824 = vmatpush.msra.mxu0 %v5743
      %5825 = vmatpush.msra.mxu0 %v5742
      %5826 = vmatmul.f32.gmra.mxu0 %v5805
      %v5827 = vpop.f32.mrf.mxu0
      %v5828 = vadd.f32 0.0, %v5827
      %5829 = vmatmul.f32.gmra.mxu0 %v5808
      %v5830 = vpop.f32.mrf.mxu0
      %v5831 = vadd.f32 0.0, %v5830
      %5832 = vdwg.mxu0
      %v5834 = vsel %vm2437, %v5719, 0
      %v5837 = vsel %vm2437, %v5720, 0
      %5839 = vmatpush.msra.mxu0 0.0
      %5840 = vmatpush.msra.mxu0 0.0
      %5841 = vmatpush.msra.mxu0 0.0
      %5842 = vmatpush.msra.mxu0 0.0
      %5843 = vmatpush.msra.mxu0 0.0
      %5844 = vmatpush.msra.mxu0 0.0
      %5845 = vmatpush.msra.mxu0 0.0
      %5846 = vmatpush.msra.mxu0 0.0
      %5847 = vmatpush.msra.mxu0 0.0
      %5848 = vmatpush.msra.mxu0 0.0
      %5849 = vmatpush.msra.mxu0 0.0
      %5850 = vmatpush.msra.mxu0 0.0
      %5851 = vmatpush.msra.mxu0 %v5745
      %5852 = vmatpush.msra.mxu0 %v5744
      %5853 = vmatpush.msra.mxu0 %v5743
      %5854 = vmatpush.msra.mxu0 %v5742
      %5855 = vmatmul.f32.gmra.mxu0 %v5834
      %v5856 = vpop.f32.mrf.mxu0
      %v5857 = vadd.f32 0.0, %v5856
      %5858 = vmatmul.f32.gmra.mxu0 %v5837
      %v5859 = vpop.f32.mrf.mxu0
      %v5860 = vadd.f32 0.0, %v5859
      %5861 = vdwg.mxu0
      %v5863 = vsel %vm2437, %v5721, 0
      %v5866 = vsel %vm2437, %v5722, 0
      %5868 = vmatpush.msra.mxu0 0.0
      %5869 = vmatpush.msra.mxu0 0.0
      %5870 = vmatpush.msra.mxu0 0.0
      %5871 = vmatpush.msra.mxu0 0.0
      %5872 = vmatpush.msra.mxu0 0.0
      %5873 = vmatpush.msra.mxu0 0.0
      %5874 = vmatpush.msra.mxu0 0.0
      %5875 = vmatpush.msra.mxu0 0.0
      %5876 = vmatpush.msra.mxu0 0.0
      %5877 = vmatpush.msra.mxu0 0.0
      %5878 = vmatpush.msra.mxu0 0.0
      %5879 = vmatpush.msra.mxu0 0.0
      %5880 = vmatpush.msra.mxu0 %v5745
      %5881 = vmatpush.msra.mxu0 %v5744
      %5882 = vmatpush.msra.mxu0 %v5743
      %5883 = vmatpush.msra.mxu0 %v5742
      %5884 = vmatmul.f32.gmra.mxu0 %v5863
      %v5885 = vpop.f32.mrf.mxu0
      %v5886 = vadd.f32 0.0, %v5885
      %5887 = vmatmul.f32.gmra.mxu0 %v5866
      %v5888 = vpop.f32.mrf.mxu0
      %v5889 = vadd.f32 0.0, %v5888
      %5890 = vdwg.mxu0
      %v5892 = vsel %vm2437, %v5723, 0
      %v5895 = vsel %vm2437, %v5724, 0
      %5897 = vmatpush.msra.mxu0 0.0
      %5898 = vmatpush.msra.mxu0 0.0
      %5899 = vmatpush.msra.mxu0 0.0
      %5900 = vmatpush.msra.mxu0 0.0
      %5901 = vmatpush.msra.mxu0 0.0
      %5902 = vmatpush.msra.mxu0 0.0
      %5903 = vmatpush.msra.mxu0 0.0
      %5904 = vmatpush.msra.mxu0 0.0
      %5905 = vmatpush.msra.mxu0 0.0
      %5906 = vmatpush.msra.mxu0 0.0
      %5907 = vmatpush.msra.mxu0 0.0
      %5908 = vmatpush.msra.mxu0 0.0
      %5909 = vmatpush.msra.mxu0 %v5745
      %5910 = vmatpush.msra.mxu0 %v5744
      %5911 = vmatpush.msra.mxu0 %v5743
      %5912 = vmatpush.msra.mxu0 %v5742
      %5913 = vmatmul.f32.gmra.mxu0 %v5892
      %v5914 = vpop.f32.mrf.mxu0
      %v5915 = vadd.f32 0.0, %v5914
      %5916 = vmatmul.f32.gmra.mxu0 %v5895
      %v5917 = vpop.f32.mrf.mxu0
      %v5918 = vadd.f32 0.0, %v5917
      %5919 = vdwg.mxu0
      %v5921 = vsel %vm2437, %v5725, 0
      %v5924 = vsel %vm2437, %v5726, 0
      %5926 = vmatpush.msra.mxu0 0.0
      %5927 = vmatpush.msra.mxu0 0.0
      %5928 = vmatpush.msra.mxu0 0.0
      %5929 = vmatpush.msra.mxu0 0.0
      %5930 = vmatpush.msra.mxu0 0.0
      %5931 = vmatpush.msra.mxu0 0.0
      %5932 = vmatpush.msra.mxu0 0.0
      %5933 = vmatpush.msra.mxu0 0.0
      %5934 = vmatpush.msra.mxu0 0.0
      %5935 = vmatpush.msra.mxu0 0.0
      %5936 = vmatpush.msra.mxu0 0.0
      %5937 = vmatpush.msra.mxu0 0.0
      %5938 = vmatpush.msra.mxu0 %v5745
      %5939 = vmatpush.msra.mxu0 %v5744
      %5940 = vmatpush.msra.mxu0 %v5743
      %5941 = vmatpush.msra.mxu0 %v5742
      %5942 = vmatmul.f32.gmra.mxu0 %v5921
      %v5943 = vpop.f32.mrf.mxu0
      %v5944 = vadd.f32 0.0, %v5943
      %5945 = vmatmul.f32.gmra.mxu0 %v5924
      %v5946 = vpop.f32.mrf.mxu0
      %v5947 = vadd.f32 0.0, %v5946
      %5948 = vdwg.mxu0
      %v5950 = vsel %vm2437, %v5727, 0
      %v5953 = vsel %vm2437, %v5728, 0
      %5955 = vmatpush.msra.mxu0 0.0
      %5956 = vmatpush.msra.mxu0 0.0
      %5957 = vmatpush.msra.mxu0 0.0
      %5958 = vmatpush.msra.mxu0 0.0
      %5959 = vmatpush.msra.mxu0 0.0
      %5960 = vmatpush.msra.mxu0 0.0
      %5961 = vmatpush.msra.mxu0 0.0
      %5962 = vmatpush.msra.mxu0 0.0
      %5963 = vmatpush.msra.mxu0 0.0
      %5964 = vmatpush.msra.mxu0 0.0
      %5965 = vmatpush.msra.mxu0 0.0
      %5966 = vmatpush.msra.mxu0 0.0
      %5967 = vmatpush.msra.mxu0 %v5745
      %5968 = vmatpush.msra.mxu0 %v5744
      %5969 = vmatpush.msra.mxu0 %v5743
      %5970 = vmatpush.msra.mxu0 %v5742
      %5971 = vmatmul.f32.gmra.mxu0 %v5950
      %v5972 = vpop.f32.mrf.mxu0
      %v5973 = vadd.f32 0.0, %v5972
      %5974 = vmatmul.f32.gmra.mxu0 %v5953
      %v5975 = vpop.f32.mrf.mxu0
      %v5976 = vadd.f32 0.0, %v5975
      %5977 = vdwg.mxu0
      %v5979 = vsel %vm2437, %v5729, 0
      %v5982 = vsel %vm2437, %v5730, 0
      %5984 = vmatpush.msra.mxu0 0.0
      %5985 = vmatpush.msra.mxu0 0.0
      %5986 = vmatpush.msra.mxu0 0.0
      %5987 = vmatpush.msra.mxu0 0.0
      %5988 = vmatpush.msra.mxu0 0.0
      %5989 = vmatpush.msra.mxu0 0.0
      %5990 = vmatpush.msra.mxu0 0.0
      %5991 = vmatpush.msra.mxu0 0.0
      %5992 = vmatpush.msra.mxu0 0.0
      %5993 = vmatpush.msra.mxu0 0.0
      %5994 = vmatpush.msra.mxu0 0.0
      %5995 = vmatpush.msra.mxu0 0.0
      %5996 = vmatpush.msra.mxu0 %v5745
      %5997 = vmatpush.msra.mxu0 %v5744
      %5998 = vmatpush.msra.mxu0 %v5743
      %5999 = vmatpush.msra.mxu0 %v5742
      %6000 = vmatmul.f32.gmra.mxu0 %v5979
      %v6001 = vpop.f32.mrf.mxu0
      %v6002 = vadd.f32 0.0, %v6001
      %6003 = vmatmul.f32.gmra.mxu0 %v5982
      %v6004 = vpop.f32.mrf.mxu0
      %v6005 = vadd.f32 0.0, %v6004
      %6006 = vdwg.mxu0
      %v6008 = vsel %vm2437, %v5731, 0
      %v6011 = vsel %vm2437, %v5732, 0
      %6013 = vmatpush.msra.mxu0 0.0
      %6014 = vmatpush.msra.mxu0 0.0
      %6015 = vmatpush.msra.mxu0 0.0
      %6016 = vmatpush.msra.mxu0 0.0
      %6017 = vmatpush.msra.mxu0 0.0
      %6018 = vmatpush.msra.mxu0 0.0
      %6019 = vmatpush.msra.mxu0 0.0
      %6020 = vmatpush.msra.mxu0 0.0
      %6021 = vmatpush.msra.mxu0 0.0
      %6022 = vmatpush.msra.mxu0 0.0
      %6023 = vmatpush.msra.mxu0 0.0
      %6024 = vmatpush.msra.mxu0 0.0
      %6025 = vmatpush.msra.mxu0 %v5745
      %6026 = vmatpush.msra.mxu0 %v5744
      %6027 = vmatpush.msra.mxu0 %v5743
      %6028 = vmatpush.msra.mxu0 %v5742
      %6029 = vmatmul.f32.gmra.mxu0 %v6008
      %v6030 = vpop.f32.mrf.mxu0
      %v6031 = vadd.f32 0.0, %v6030
      %6032 = vmatmul.f32.gmra.mxu0 %v6011
      %v6033 = vpop.f32.mrf.mxu0
      %v6034 = vadd.f32 0.0, %v6033
      %6035 = vdwg.mxu0
      %v6037 = vsel %vm2437, %v5733, 0
      %v6040 = vsel %vm2437, %v5734, 0
      %6042 = vmatpush.msra.mxu0 0.0
      %6043 = vmatpush.msra.mxu0 0.0
      %6044 = vmatpush.msra.mxu0 0.0
      %6045 = vmatpush.msra.mxu0 0.0
      %6046 = vmatpush.msra.mxu0 0.0
      %6047 = vmatpush.msra.mxu0 0.0
      %6048 = vmatpush.msra.mxu0 0.0
      %6049 = vmatpush.msra.mxu0 0.0
      %6050 = vmatpush.msra.mxu0 0.0
      %6051 = vmatpush.msra.mxu0 0.0
      %6052 = vmatpush.msra.mxu0 0.0
      %6053 = vmatpush.msra.mxu0 0.0
      %6054 = vmatpush.msra.mxu0 %v5745
      %6055 = vmatpush.msra.mxu0 %v5744
      %6056 = vmatpush.msra.mxu0 %v5743
      %6057 = vmatpush.msra.mxu0 %v5742
      %6058 = vmatmul.f32.gmra.mxu0 %v6037
      %v6059 = vpop.f32.mrf.mxu0
      %v6060 = vadd.f32 0.0, %v6059
      %6061 = vmatmul.f32.gmra.mxu0 %v6040
      %v6062 = vpop.f32.mrf.mxu0
      %v6063 = vadd.f32 0.0, %v6062
      %6064 = vdwg.mxu0
      %v6066 = vsel %vm2437, %v5735, 0
      %v6069 = vsel %vm2437, %v5736, 0
      %6071 = vmatpush.msra.mxu0 0.0
      %6072 = vmatpush.msra.mxu0 0.0
      %6073 = vmatpush.msra.mxu0 0.0
      %6074 = vmatpush.msra.mxu0 0.0
      %6075 = vmatpush.msra.mxu0 0.0
      %6076 = vmatpush.msra.mxu0 0.0
      %6077 = vmatpush.msra.mxu0 0.0
      %6078 = vmatpush.msra.mxu0 0.0
      %6079 = vmatpush.msra.mxu0 0.0
      %6080 = vmatpush.msra.mxu0 0.0
      %6081 = vmatpush.msra.mxu0 0.0
      %6082 = vmatpush.msra.mxu0 0.0
      %6083 = vmatpush.msra.mxu0 %v5745
      %6084 = vmatpush.msra.mxu0 %v5744
      %6085 = vmatpush.msra.mxu0 %v5743
      %6086 = vmatpush.msra.mxu0 %v5742
      %6087 = vmatmul.f32.gmra.mxu0 %v6066
      %v6088 = vpop.f32.mrf.mxu0
      %v6089 = vadd.f32 0.0, %v6088
      %6090 = vmatmul.f32.gmra.mxu0 %v6069
      %v6091 = vpop.f32.mrf.mxu0
      %v6092 = vadd.f32 0.0, %v6091
      %6093 = vdwg.mxu0
      %v6095 = vsel %vm2437, %v5737, 0
      %v6098 = vsel %vm2437, %v5738, 0
      %6100 = vmatpush.msra.mxu0 0.0
      %6101 = vmatpush.msra.mxu0 0.0
      %6102 = vmatpush.msra.mxu0 0.0
      %6103 = vmatpush.msra.mxu0 0.0
      %6104 = vmatpush.msra.mxu0 0.0
      %6105 = vmatpush.msra.mxu0 0.0
      %6106 = vmatpush.msra.mxu0 0.0
      %6107 = vmatpush.msra.mxu0 0.0
      %6108 = vmatpush.msra.mxu0 0.0
      %6109 = vmatpush.msra.mxu0 0.0
      %6110 = vmatpush.msra.mxu0 0.0
      %6111 = vmatpush.msra.mxu0 0.0
      %6112 = vmatpush.msra.mxu0 %v5745
      %6113 = vmatpush.msra.mxu0 %v5744
      %6114 = vmatpush.msra.mxu0 %v5743
      %6115 = vmatpush.msra.mxu0 %v5742
      %6116 = vmatmul.f32.gmra.mxu0 %v6095
      %v6117 = vpop.f32.mrf.mxu0
      %v6118 = vadd.f32 0.0, %v6117
      %6119 = vmatmul.f32.gmra.mxu0 %v6098
      %v6120 = vpop.f32.mrf.mxu0
      %v6121 = vadd.f32 0.0, %v6120
      %6122 = vdwg.mxu0
      %v6124 = vsel %vm2437, %v5739, 0
      %v6127 = vsel %vm2437, %v5740, 0
      %6129 = vmatpush.msra.mxu0 0.0
      %6130 = vmatpush.msra.mxu0 0.0
      %6131 = vmatpush.msra.mxu0 0.0
      %6132 = vmatpush.msra.mxu0 0.0
      %6133 = vmatpush.msra.mxu0 0.0
      %6134 = vmatpush.msra.mxu0 0.0
      %6135 = vmatpush.msra.mxu0 0.0
      %6136 = vmatpush.msra.mxu0 0.0
      %6137 = vmatpush.msra.mxu0 0.0
      %6138 = vmatpush.msra.mxu0 0.0
      %6139 = vmatpush.msra.mxu0 0.0
      %6140 = vmatpush.msra.mxu0 0.0
      %6141 = vmatpush.msra.mxu0 %v5745
      %6142 = vmatpush.msra.mxu0 %v5744
      %6143 = vmatpush.msra.mxu0 %v5743
      %6144 = vmatpush.msra.mxu0 %v5742
      %6145 = vmatmul.f32.gmra.mxu0 %v6124
      %v6146 = vpop.f32.mrf.mxu0
      %v6147 = vadd.f32 0.0, %v6146
      %6148 = vmatmul.f32.gmra.mxu0 %v6127
      %v6149 = vpop.f32.mrf.mxu0
      %v6150 = vadd.f32 0.0, %v6149
      %6151 = vdwg.mxu0
      %v6152 = vadd.f32 %v5685, %v5770
      %v6153 = vadd.f32 %v5686, %v5773
      %v6154 = vadd.f32 %v5687, %v5799
      %v6155 = vadd.f32 %v5688, %v5802
      %v6156 = vadd.f32 %v5689, %v5828
      %v6157 = vadd.f32 %v5690, %v5831
      %v6158 = vadd.f32 %v5691, %v5857
      %v6159 = vadd.f32 %v5692, %v5860
      %v6160 = vadd.f32 %v5693, %v5886
      %v6161 = vadd.f32 %v5694, %v5889
      %v6162 = vadd.f32 %v5695, %v5915
      %v6163 = vadd.f32 %v5696, %v5918
      %v6164 = vadd.f32 %v5697, %v5944
      %v6165 = vadd.f32 %v5698, %v5947
      %v6166 = vadd.f32 %v5699, %v5973
      %v6167 = vadd.f32 %v5700, %v5976
      %v6168 = vadd.f32 %v5701, %v6002
      %v6169 = vadd.f32 %v5702, %v6005
      %v6170 = vadd.f32 %v5703, %v6031
      %v6171 = vadd.f32 %v5704, %v6034
      %v6172 = vadd.f32 %v5705, %v6060
      %v6173 = vadd.f32 %v5706, %v6063
      %v6174 = vadd.f32 %v5707, %v6089
      %v6175 = vadd.f32 %v5708, %v6092
      %v6176 = vadd.f32 %v5709, %v6118
      %v6177 = vadd.f32 %v5710, %v6121
      %v6178 = vadd.f32 %v5711, %v6147
      %v6179 = vadd.f32 %v5712, %v6150
      %v6180 = vld [vmem:[%s5245 + $0x2] sm:$0xff]
      %v6181 = vld [vmem:[%s5245 + $0xa] sm:$0x3f]
      %v6182 = vld [vmem:[%s5245 + $0x12] sm:$0xff]
      %v6183 = vld [vmem:[%s5245 + $0x1a] sm:$0x3f]
      %v6184 = vld [vmem:[%s5245 + $0x22] sm:$0xff]
      %v6185 = vld [vmem:[%s5245 + $0x2a] sm:$0x3f]
      %v6186 = vld [vmem:[%s5245 + $0x32] sm:$0xff]
      %v6187 = vld [vmem:[%s5245 + $0x3a] sm:$0x3f]
      %v6188 = vld [vmem:[%s5245 + $0x42] sm:$0xff]
      %v6189 = vld [vmem:[%s5245 + $0x4a] sm:$0x3f]
      %v6190 = vld [vmem:[%s5245 + $0x52] sm:$0xff]
      %v6191 = vld [vmem:[%s5245 + $0x5a] sm:$0x3f]
      %v6192 = vld [vmem:[%s5245 + $0x62] sm:$0xff]
      %v6193 = vld [vmem:[%s5245 + $0x6a] sm:$0x3f]
      %v6194 = vld [vmem:[%s5245 + $0x72] sm:$0xff]
      %v6195 = vld [vmem:[%s5245 + $0x7a] sm:$0x3f]
      %v6196 = vld [vmem:[%s5245 + $0x82] sm:$0xff]
      %v6197 = vld [vmem:[%s5245 + $0x8a] sm:$0x3f]
      %v6198 = vld [vmem:[%s5245 + $0x92] sm:$0xff]
      %v6199 = vld [vmem:[%s5245 + $0x9a] sm:$0x3f]
      %v6200 = vld [vmem:[%s5245 + $0xa2] sm:$0xff]
      %v6201 = vld [vmem:[%s5245 + $0xaa] sm:$0x3f]
      %v6202 = vld [vmem:[%s5245 + $0xb2] sm:$0xff]
      %v6203 = vld [vmem:[%s5245 + $0xba] sm:$0x3f]
      %v6204 = vld [vmem:[%s5245 + $0xc2] sm:$0xff]
      %v6205 = vld [vmem:[%s5245 + $0xca] sm:$0x3f]
      %v6206 = vld [vmem:[%s5245 + $0xd2] sm:$0xff]
      %v6207 = vld [vmem:[%s5245 + $0xda] sm:$0x3f]
      %s6208 = scalar_lea.vmem %s3, 256
      %v6209 = vld [vmem:[%s6208] sm:$0xff]
      %v6210 = vld [vmem:[%s6208 + $0x8] sm:$0xff]
      %v6211 = vld [vmem:[%s6208 + $0x10] sm:$0xff]
      %v6212 = vld [vmem:[%s6208 + $0x18] sm:$0xff]
      %v6214 = vsel %vm2437, %v6180, 0
      %v6217 = vsel %vm2437, %v6181, 0
      %6219 = vmatpush.msra.mxu0 0.0
      %6220 = vmatpush.msra.mxu0 0.0
      %6221 = vmatpush.msra.mxu0 0.0
      %6222 = vmatpush.msra.mxu0 0.0
      %6223 = vmatpush.msra.mxu0 0.0
      %6224 = vmatpush.msra.mxu0 0.0
      %6225 = vmatpush.msra.mxu0 0.0
      %6226 = vmatpush.msra.mxu0 0.0
      %6227 = vmatpush.msra.mxu0 0.0
      %6228 = vmatpush.msra.mxu0 0.0
      %6229 = vmatpush.msra.mxu0 0.0
      %6230 = vmatpush.msra.mxu0 0.0
      %6231 = vmatpush.msra.mxu0 %v6212
      %6232 = vmatpush.msra.mxu0 %v6211
      %6233 = vmatpush.msra.mxu0 %v6210
      %6234 = vmatpush.msra.mxu0 %v6209
      %6235 = vmatmul.f32.gmra.mxu0 %v6214
      %v6236 = vpop.f32.mrf.mxu0
      %v6237 = vadd.f32 0.0, %v6236
      %6238 = vmatmul.f32.gmra.mxu0 %v6217
      %v6239 = vpop.f32.mrf.mxu0
      %v6240 = vadd.f32 0.0, %v6239
      %6241 = vdwg.mxu0
      %v6243 = vsel %vm2437, %v6182, 0
      %v6246 = vsel %vm2437, %v6183, 0
      %6248 = vmatpush.msra.mxu0 0.0
      %6249 = vmatpush.msra.mxu0 0.0
      %6250 = vmatpush.msra.mxu0 0.0
      %6251 = vmatpush.msra.mxu0 0.0
      %6252 = vmatpush.msra.mxu0 0.0
      %6253 = vmatpush.msra.mxu0 0.0
      %6254 = vmatpush.msra.mxu0 0.0
      %6255 = vmatpush.msra.mxu0 0.0
      %6256 = vmatpush.msra.mxu0 0.0
      %6257 = vmatpush.msra.mxu0 0.0
      %6258 = vmatpush.msra.mxu0 0.0
      %6259 = vmatpush.msra.mxu0 0.0
      %6260 = vmatpush.msra.mxu0 %v6212
      %6261 = vmatpush.msra.mxu0 %v6211
      %6262 = vmatpush.msra.mxu0 %v6210
      %6263 = vmatpush.msra.mxu0 %v6209
      %6264 = vmatmul.f32.gmra.mxu0 %v6243
      %v6265 = vpop.f32.mrf.mxu0
      %v6266 = vadd.f32 0.0, %v6265
      %6267 = vmatmul.f32.gmra.mxu0 %v6246
      %v6268 = vpop.f32.mrf.mxu0
      %v6269 = vadd.f32 0.0, %v6268
      %6270 = vdwg.mxu0
      %v6272 = vsel %vm2437, %v6184, 0
      %v6275 = vsel %vm2437, %v6185, 0
      %6277 = vmatpush.msra.mxu0 0.0
      %6278 = vmatpush.msra.mxu0 0.0
      %6279 = vmatpush.msra.mxu0 0.0
      %6280 = vmatpush.msra.mxu0 0.0
      %6281 = vmatpush.msra.mxu0 0.0
      %6282 = vmatpush.msra.mxu0 0.0
      %6283 = vmatpush.msra.mxu0 0.0
      %6284 = vmatpush.msra.mxu0 0.0
      %6285 = vmatpush.msra.mxu0 0.0
      %6286 = vmatpush.msra.mxu0 0.0
      %6287 = vmatpush.msra.mxu0 0.0
      %6288 = vmatpush.msra.mxu0 0.0
      %6289 = vmatpush.msra.mxu0 %v6212
      %6290 = vmatpush.msra.mxu0 %v6211
      %6291 = vmatpush.msra.mxu0 %v6210
      %6292 = vmatpush.msra.mxu0 %v6209
      %6293 = vmatmul.f32.gmra.mxu0 %v6272
      %v6294 = vpop.f32.mrf.mxu0
      %v6295 = vadd.f32 0.0, %v6294
      %6296 = vmatmul.f32.gmra.mxu0 %v6275
      %v6297 = vpop.f32.mrf.mxu0
      %v6298 = vadd.f32 0.0, %v6297
      %6299 = vdwg.mxu0
      %v6301 = vsel %vm2437, %v6186, 0
      %v6304 = vsel %vm2437, %v6187, 0
      %6306 = vmatpush.msra.mxu0 0.0
      %6307 = vmatpush.msra.mxu0 0.0
      %6308 = vmatpush.msra.mxu0 0.0
      %6309 = vmatpush.msra.mxu0 0.0
      %6310 = vmatpush.msra.mxu0 0.0
      %6311 = vmatpush.msra.mxu0 0.0
      %6312 = vmatpush.msra.mxu0 0.0
      %6313 = vmatpush.msra.mxu0 0.0
      %6314 = vmatpush.msra.mxu0 0.0
      %6315 = vmatpush.msra.mxu0 0.0
      %6316 = vmatpush.msra.mxu0 0.0
      %6317 = vmatpush.msra.mxu0 0.0
      %6318 = vmatpush.msra.mxu0 %v6212
      %6319 = vmatpush.msra.mxu0 %v6211
      %6320 = vmatpush.msra.mxu0 %v6210
      %6321 = vmatpush.msra.mxu0 %v6209
      %6322 = vmatmul.f32.gmra.mxu0 %v6301
      %v6323 = vpop.f32.mrf.mxu0
      %v6324 = vadd.f32 0.0, %v6323
      %6325 = vmatmul.f32.gmra.mxu0 %v6304
      %v6326 = vpop.f32.mrf.mxu0
      %v6327 = vadd.f32 0.0, %v6326
      %6328 = vdwg.mxu0
      %v6330 = vsel %vm2437, %v6188, 0
      %v6333 = vsel %vm2437, %v6189, 0
      %6335 = vmatpush.msra.mxu0 0.0
      %6336 = vmatpush.msra.mxu0 0.0
      %6337 = vmatpush.msra.mxu0 0.0
      %6338 = vmatpush.msra.mxu0 0.0
      %6339 = vmatpush.msra.mxu0 0.0
      %6340 = vmatpush.msra.mxu0 0.0
      %6341 = vmatpush.msra.mxu0 0.0
      %6342 = vmatpush.msra.mxu0 0.0
      %6343 = vmatpush.msra.mxu0 0.0
      %6344 = vmatpush.msra.mxu0 0.0
      %6345 = vmatpush.msra.mxu0 0.0
      %6346 = vmatpush.msra.mxu0 0.0
      %6347 = vmatpush.msra.mxu0 %v6212
      %6348 = vmatpush.msra.mxu0 %v6211
      %6349 = vmatpush.msra.mxu0 %v6210
      %6350 = vmatpush.msra.mxu0 %v6209
      %6351 = vmatmul.f32.gmra.mxu0 %v6330
      %v6352 = vpop.f32.mrf.mxu0
      %v6353 = vadd.f32 0.0, %v6352
      %6354 = vmatmul.f32.gmra.mxu0 %v6333
      %v6355 = vpop.f32.mrf.mxu0
      %v6356 = vadd.f32 0.0, %v6355
      %6357 = vdwg.mxu0
      %v6359 = vsel %vm2437, %v6190, 0
      %v6362 = vsel %vm2437, %v6191, 0
      %6364 = vmatpush.msra.mxu0 0.0
      %6365 = vmatpush.msra.mxu0 0.0
      %6366 = vmatpush.msra.mxu0 0.0
      %6367 = vmatpush.msra.mxu0 0.0
      %6368 = vmatpush.msra.mxu0 0.0
      %6369 = vmatpush.msra.mxu0 0.0
      %6370 = vmatpush.msra.mxu0 0.0
      %6371 = vmatpush.msra.mxu0 0.0
      %6372 = vmatpush.msra.mxu0 0.0
      %6373 = vmatpush.msra.mxu0 0.0
      %6374 = vmatpush.msra.mxu0 0.0
      %6375 = vmatpush.msra.mxu0 0.0
      %6376 = vmatpush.msra.mxu0 %v6212
      %6377 = vmatpush.msra.mxu0 %v6211
      %6378 = vmatpush.msra.mxu0 %v6210
      %6379 = vmatpush.msra.mxu0 %v6209
      %6380 = vmatmul.f32.gmra.mxu0 %v6359
      %v6381 = vpop.f32.mrf.mxu0
      %v6382 = vadd.f32 0.0, %v6381
      %6383 = vmatmul.f32.gmra.mxu0 %v6362
      %v6384 = vpop.f32.mrf.mxu0
      %v6385 = vadd.f32 0.0, %v6384
      %6386 = vdwg.mxu0
      %v6388 = vsel %vm2437, %v6192, 0
      %v6391 = vsel %vm2437, %v6193, 0
      %6393 = vmatpush.msra.mxu0 0.0
      %6394 = vmatpush.msra.mxu0 0.0
      %6395 = vmatpush.msra.mxu0 0.0
      %6396 = vmatpush.msra.mxu0 0.0
      %6397 = vmatpush.msra.mxu0 0.0
      %6398 = vmatpush.msra.mxu0 0.0
      %6399 = vmatpush.msra.mxu0 0.0
      %6400 = vmatpush.msra.mxu0 0.0
      %6401 = vmatpush.msra.mxu0 0.0
      %6402 = vmatpush.msra.mxu0 0.0
      %6403 = vmatpush.msra.mxu0 0.0
      %6404 = vmatpush.msra.mxu0 0.0
      %6405 = vmatpush.msra.mxu0 %v6212
      %6406 = vmatpush.msra.mxu0 %v6211
      %6407 = vmatpush.msra.mxu0 %v6210
      %6408 = vmatpush.msra.mxu0 %v6209
      %6409 = vmatmul.f32.gmra.mxu0 %v6388
      %v6410 = vpop.f32.mrf.mxu0
      %v6411 = vadd.f32 0.0, %v6410
      %6412 = vmatmul.f32.gmra.mxu0 %v6391
      %v6413 = vpop.f32.mrf.mxu0
      %v6414 = vadd.f32 0.0, %v6413
      %6415 = vdwg.mxu0
      %v6417 = vsel %vm2437, %v6194, 0
      %v6420 = vsel %vm2437, %v6195, 0
      %6422 = vmatpush.msra.mxu0 0.0
      %6423 = vmatpush.msra.mxu0 0.0
      %6424 = vmatpush.msra.mxu0 0.0
      %6425 = vmatpush.msra.mxu0 0.0
      %6426 = vmatpush.msra.mxu0 0.0
      %6427 = vmatpush.msra.mxu0 0.0
      %6428 = vmatpush.msra.mxu0 0.0
      %6429 = vmatpush.msra.mxu0 0.0
      %6430 = vmatpush.msra.mxu0 0.0
      %6431 = vmatpush.msra.mxu0 0.0
      %6432 = vmatpush.msra.mxu0 0.0
      %6433 = vmatpush.msra.mxu0 0.0
      %6434 = vmatpush.msra.mxu0 %v6212
      %6435 = vmatpush.msra.mxu0 %v6211
      %6436 = vmatpush.msra.mxu0 %v6210
      %6437 = vmatpush.msra.mxu0 %v6209
      %6438 = vmatmul.f32.gmra.mxu0 %v6417
      %v6439 = vpop.f32.mrf.mxu0
      %v6440 = vadd.f32 0.0, %v6439
      %6441 = vmatmul.f32.gmra.mxu0 %v6420
      %v6442 = vpop.f32.mrf.mxu0
      %v6443 = vadd.f32 0.0, %v6442
      %6444 = vdwg.mxu0
      %v6446 = vsel %vm2437, %v6196, 0
      %v6449 = vsel %vm2437, %v6197, 0
      %6451 = vmatpush.msra.mxu0 0.0
      %6452 = vmatpush.msra.mxu0 0.0
      %6453 = vmatpush.msra.mxu0 0.0
      %6454 = vmatpush.msra.mxu0 0.0
      %6455 = vmatpush.msra.mxu0 0.0
      %6456 = vmatpush.msra.mxu0 0.0
      %6457 = vmatpush.msra.mxu0 0.0
      %6458 = vmatpush.msra.mxu0 0.0
      %6459 = vmatpush.msra.mxu0 0.0
      %6460 = vmatpush.msra.mxu0 0.0
      %6461 = vmatpush.msra.mxu0 0.0
      %6462 = vmatpush.msra.mxu0 0.0
      %6463 = vmatpush.msra.mxu0 %v6212
      %6464 = vmatpush.msra.mxu0 %v6211
      %6465 = vmatpush.msra.mxu0 %v6210
      %6466 = vmatpush.msra.mxu0 %v6209
      %6467 = vmatmul.f32.gmra.mxu0 %v6446
      %v6468 = vpop.f32.mrf.mxu0
      %v6469 = vadd.f32 0.0, %v6468
      %6470 = vmatmul.f32.gmra.mxu0 %v6449
      %v6471 = vpop.f32.mrf.mxu0
      %v6472 = vadd.f32 0.0, %v6471
      %6473 = vdwg.mxu0
      %v6475 = vsel %vm2437, %v6198, 0
      %v6478 = vsel %vm2437, %v6199, 0
      %6480 = vmatpush.msra.mxu0 0.0
      %6481 = vmatpush.msra.mxu0 0.0
      %6482 = vmatpush.msra.mxu0 0.0
      %6483 = vmatpush.msra.mxu0 0.0
      %6484 = vmatpush.msra.mxu0 0.0
      %6485 = vmatpush.msra.mxu0 0.0
      %6486 = vmatpush.msra.mxu0 0.0
      %6487 = vmatpush.msra.mxu0 0.0
      %6488 = vmatpush.msra.mxu0 0.0
      %6489 = vmatpush.msra.mxu0 0.0
      %6490 = vmatpush.msra.mxu0 0.0
      %6491 = vmatpush.msra.mxu0 0.0
      %6492 = vmatpush.msra.mxu0 %v6212
      %6493 = vmatpush.msra.mxu0 %v6211
      %6494 = vmatpush.msra.mxu0 %v6210
      %6495 = vmatpush.msra.mxu0 %v6209
      %6496 = vmatmul.f32.gmra.mxu0 %v6475
      %v6497 = vpop.f32.mrf.mxu0
      %v6498 = vadd.f32 0.0, %v6497
      %6499 = vmatmul.f32.gmra.mxu0 %v6478
      %v6500 = vpop.f32.mrf.mxu0
      %v6501 = vadd.f32 0.0, %v6500
      %6502 = vdwg.mxu0
      %v6504 = vsel %vm2437, %v6200, 0
      %v6507 = vsel %vm2437, %v6201, 0
      %6509 = vmatpush.msra.mxu0 0.0
      %6510 = vmatpush.msra.mxu0 0.0
      %6511 = vmatpush.msra.mxu0 0.0
      %6512 = vmatpush.msra.mxu0 0.0
      %6513 = vmatpush.msra.mxu0 0.0
      %6514 = vmatpush.msra.mxu0 0.0
      %6515 = vmatpush.msra.mxu0 0.0
      %6516 = vmatpush.msra.mxu0 0.0
      %6517 = vmatpush.msra.mxu0 0.0
      %6518 = vmatpush.msra.mxu0 0.0
      %6519 = vmatpush.msra.mxu0 0.0
      %6520 = vmatpush.msra.mxu0 0.0
      %6521 = vmatpush.msra.mxu0 %v6212
      %6522 = vmatpush.msra.mxu0 %v6211
      %6523 = vmatpush.msra.mxu0 %v6210
      %6524 = vmatpush.msra.mxu0 %v6209
      %6525 = vmatmul.f32.gmra.mxu0 %v6504
      %v6526 = vpop.f32.mrf.mxu0
      %v6527 = vadd.f32 0.0, %v6526
      %6528 = vmatmul.f32.gmra.mxu0 %v6507
      %v6529 = vpop.f32.mrf.mxu0
      %v6530 = vadd.f32 0.0, %v6529
      %6531 = vdwg.mxu0
      %v6533 = vsel %vm2437, %v6202, 0
      %v6536 = vsel %vm2437, %v6203, 0
      %6538 = vmatpush.msra.mxu0 0.0
      %6539 = vmatpush.msra.mxu0 0.0
      %6540 = vmatpush.msra.mxu0 0.0
      %6541 = vmatpush.msra.mxu0 0.0
      %6542 = vmatpush.msra.mxu0 0.0
      %6543 = vmatpush.msra.mxu0 0.0
      %6544 = vmatpush.msra.mxu0 0.0
      %6545 = vmatpush.msra.mxu0 0.0
      %6546 = vmatpush.msra.mxu0 0.0
      %6547 = vmatpush.msra.mxu0 0.0
      %6548 = vmatpush.msra.mxu0 0.0
      %6549 = vmatpush.msra.mxu0 0.0
      %6550 = vmatpush.msra.mxu0 %v6212
      %6551 = vmatpush.msra.mxu0 %v6211
      %6552 = vmatpush.msra.mxu0 %v6210
      %6553 = vmatpush.msra.mxu0 %v6209
      %6554 = vmatmul.f32.gmra.mxu0 %v6533
      %v6555 = vpop.f32.mrf.mxu0
      %v6556 = vadd.f32 0.0, %v6555
      %6557 = vmatmul.f32.gmra.mxu0 %v6536
      %v6558 = vpop.f32.mrf.mxu0
      %v6559 = vadd.f32 0.0, %v6558
      %6560 = vdwg.mxu0
      %v6562 = vsel %vm2437, %v6204, 0
      %v6565 = vsel %vm2437, %v6205, 0
      %6567 = vmatpush.msra.mxu0 0.0
      %6568 = vmatpush.msra.mxu0 0.0
      %6569 = vmatpush.msra.mxu0 0.0
      %6570 = vmatpush.msra.mxu0 0.0
      %6571 = vmatpush.msra.mxu0 0.0
      %6572 = vmatpush.msra.mxu0 0.0
      %6573 = vmatpush.msra.mxu0 0.0
      %6574 = vmatpush.msra.mxu0 0.0
      %6575 = vmatpush.msra.mxu0 0.0
      %6576 = vmatpush.msra.mxu0 0.0
      %6577 = vmatpush.msra.mxu0 0.0
      %6578 = vmatpush.msra.mxu0 0.0
      %6579 = vmatpush.msra.mxu0 %v6212
      %6580 = vmatpush.msra.mxu0 %v6211
      %6581 = vmatpush.msra.mxu0 %v6210
      %6582 = vmatpush.msra.mxu0 %v6209
      %6583 = vmatmul.f32.gmra.mxu0 %v6562
      %v6584 = vpop.f32.mrf.mxu0
      %v6585 = vadd.f32 0.0, %v6584
      %6586 = vmatmul.f32.gmra.mxu0 %v6565
      %v6587 = vpop.f32.mrf.mxu0
      %v6588 = vadd.f32 0.0, %v6587
      %6589 = vdwg.mxu0
      %v6591 = vsel %vm2437, %v6206, 0
      %v6594 = vsel %vm2437, %v6207, 0
      %6596 = vmatpush.msra.mxu0 0.0
      %6597 = vmatpush.msra.mxu0 0.0
      %6598 = vmatpush.msra.mxu0 0.0
      %6599 = vmatpush.msra.mxu0 0.0
      %6600 = vmatpush.msra.mxu0 0.0
      %6601 = vmatpush.msra.mxu0 0.0
      %6602 = vmatpush.msra.mxu0 0.0
      %6603 = vmatpush.msra.mxu0 0.0
      %6604 = vmatpush.msra.mxu0 0.0
      %6605 = vmatpush.msra.mxu0 0.0
      %6606 = vmatpush.msra.mxu0 0.0
      %6607 = vmatpush.msra.mxu0 0.0
      %6608 = vmatpush.msra.mxu0 %v6212
      %6609 = vmatpush.msra.mxu0 %v6211
      %6610 = vmatpush.msra.mxu0 %v6210
      %6611 = vmatpush.msra.mxu0 %v6209
      %6612 = vmatmul.f32.gmra.mxu0 %v6591
      %v6613 = vpop.f32.mrf.mxu0
      %v6614 = vadd.f32 0.0, %v6613
      %6615 = vmatmul.f32.gmra.mxu0 %v6594
      %v6616 = vpop.f32.mrf.mxu0
      %v6617 = vadd.f32 0.0, %v6616
      %6618 = vdwg.mxu0
      %v6619 = vadd.f32 %v6152, %v6237
      %v6620 = vadd.f32 %v6153, %v6240
      %v6621 = vadd.f32 %v6154, %v6266
      %v6622 = vadd.f32 %v6155, %v6269
      %v6623 = vadd.f32 %v6156, %v6295
      %v6624 = vadd.f32 %v6157, %v6298
      %v6625 = vadd.f32 %v6158, %v6324
      %v6626 = vadd.f32 %v6159, %v6327
      %v6627 = vadd.f32 %v6160, %v6353
      %v6628 = vadd.f32 %v6161, %v6356
      %v6629 = vadd.f32 %v6162, %v6382
      %v6630 = vadd.f32 %v6163, %v6385
      %v6631 = vadd.f32 %v6164, %v6411
      %v6632 = vadd.f32 %v6165, %v6414
      %v6633 = vadd.f32 %v6166, %v6440
      %v6634 = vadd.f32 %v6167, %v6443
      %v6635 = vadd.f32 %v6168, %v6469
      %v6636 = vadd.f32 %v6169, %v6472
      %v6637 = vadd.f32 %v6170, %v6498
      %v6638 = vadd.f32 %v6171, %v6501
      %v6639 = vadd.f32 %v6172, %v6527
      %v6640 = vadd.f32 %v6173, %v6530
      %v6641 = vadd.f32 %v6174, %v6556
      %v6642 = vadd.f32 %v6175, %v6559
      %v6643 = vadd.f32 %v6176, %v6585
      %v6644 = vadd.f32 %v6177, %v6588
      %v6645 = vadd.f32 %v6178, %v6614
      %v6646 = vadd.f32 %v6179, %v6617
      %v6647 = vld [vmem:[%s4] sm:$0x1]
      %v6649 = vperm.slane %v6647, 0
      %v6651 = vadd.f32 %v6619, %v6649
      %v6652 = vadd.f32 %v6620, %v6649
      %v6653 = vadd.f32 %v6621, %v6649
      %v6654 = vadd.f32 %v6622, %v6649
      %v6655 = vadd.f32 %v6623, %v6649
      %v6656 = vadd.f32 %v6624, %v6649
      %v6657 = vadd.f32 %v6625, %v6649
      %v6658 = vadd.f32 %v6626, %v6649
      %v6659 = vadd.f32 %v6627, %v6649
      %v6660 = vadd.f32 %v6628, %v6649
      %v6661 = vadd.f32 %v6629, %v6649
      %v6662 = vadd.f32 %v6630, %v6649
      %v6663 = vadd.f32 %v6631, %v6649
      %v6664 = vadd.f32 %v6632, %v6649
      %v6665 = vadd.f32 %v6633, %v6649
      %v6666 = vadd.f32 %v6634, %v6649
      %v6667 = vadd.f32 %v6635, %v6649
      %v6668 = vadd.f32 %v6636, %v6649
      %v6669 = vadd.f32 %v6637, %v6649
      %v6670 = vadd.f32 %v6638, %v6649
      %v6671 = vadd.f32 %v6639, %v6649
      %v6672 = vadd.f32 %v6640, %v6649
      %v6673 = vadd.f32 %v6641, %v6649
      %v6674 = vadd.f32 %v6642, %v6649
      %v6675 = vadd.f32 %v6643, %v6649
      %v6676 = vadd.f32 %v6644, %v6649
      %v6677 = vadd.f32 %v6645, %v6649
      %v6678 = vadd.f32 %v6646, %v6649
      %v6679 = vmax.f32 %v6651, 0.0
      %v6680 = vmax.f32 %v6652, 0.0
      %v6681 = vmax.f32 %v6653, 0.0
      %v6682 = vmax.f32 %v6654, 0.0
      %v6683 = vmax.f32 %v6655, 0.0
      %v6684 = vmax.f32 %v6656, 0.0
      %v6685 = vmax.f32 %v6657, 0.0
      %v6686 = vmax.f32 %v6658, 0.0
      %v6687 = vmax.f32 %v6659, 0.0
      %v6688 = vmax.f32 %v6660, 0.0
      %v6689 = vmax.f32 %v6661, 0.0
      %v6690 = vmax.f32 %v6662, 0.0
      %v6691 = vmax.f32 %v6663, 0.0
      %v6692 = vmax.f32 %v6664, 0.0
      %v6693 = vmax.f32 %v6665, 0.0
      %v6694 = vmax.f32 %v6666, 0.0
      %v6695 = vmax.f32 %v6667, 0.0
      %v6696 = vmax.f32 %v6668, 0.0
      %v6697 = vmax.f32 %v6669, 0.0
      %v6698 = vmax.f32 %v6670, 0.0
      %v6699 = vmax.f32 %v6671, 0.0
      %v6700 = vmax.f32 %v6672, 0.0
      %v6701 = vmax.f32 %v6673, 0.0
      %v6702 = vmax.f32 %v6674, 0.0
      %v6703 = vmax.f32 %v6675, 0.0
      %v6704 = vmax.f32 %v6676, 0.0
      %v6705 = vmax.f32 %v6677, 0.0
      %v6706 = vmax.f32 %v6678, 0.0
      %v6707 = vlaneseq
      %v6708 = vshrl.u32 %v6707, 7
      %v6709 = vlaneseq
      %v6710 = vand.u32 %v6709, 127
      %v6711 = vmul.u32 %v6708, 2
      %vm6712 = vcmp.eq.s32.totalorder %v6710, %v6711
      %v6713 = vsel %vm6712, 1, 0
      %v6714 = vcvt.s32.f32 %v6713
      %v6715 = vadd.s32 %v6711, 1
      %vm6716 = vcmp.eq.s32.totalorder %v6710, %v6715
      %v6717 = vsel %vm6716, 1, 0
      %v6718 = vcvt.s32.f32 %v6717
      %v6719 = vmax.f32 %v6679, %v6681
      %v6720 = vmax.f32 %v6680, %v6682
      %vm6721 = vcmask 113664
      %v6723 = vsel %vm6721, %v6714, 0
      %vm6725 = vcmask 1045504
      %v6727 = vsel %vm6725, %v6720, 0
      %6729 = vmatpush.msra.mxu0 0.0
      %6730 = vmatpush.msra.mxu0 0.0
      %6731 = vmatpush.msra.mxu0 0.0
      %6732 = vmatpush.msra.mxu0 0.0
      %6733 = vmatpush.msra.mxu0 0.0
      %6734 = vmatpush.msra.mxu0 0.0
      %6735 = vmatpush.msra.mxu0 0.0
      %6736 = vmatpush.msra.mxu0 0.0
      %6737 = vmatpush.msra.mxu0 0.0
      %6738 = vmatpush.msra.mxu0 0.0
      %6739 = vmatpush.msra.mxu0 0.0
      %6740 = vmatpush.msra.mxu0 0.0
      %6741 = vmatpush.msra.mxu0 0.0
      %6742 = vmatpush.msra.mxu0 0.0
      %6743 = vmatpush.msra.mxu0 %v6727
      %6744 = vmatpush.msra.mxu0 %v6719
      %6745 = vmatmul.f32.gmra.mxu0 %v6723
      %v6746 = vpop.f32.mrf.mxu0
      %v6747 = vadd.f32 0.0, %v6746
      %6748 = vdwg.mxu0
      %v6750 = vsel %vm6721, %v6718, 0
      %6752 = vmatpush.msra.mxu0 0.0
      %6753 = vmatpush.msra.mxu0 0.0
      %6754 = vmatpush.msra.mxu0 0.0
      %6755 = vmatpush.msra.mxu0 0.0
      %6756 = vmatpush.msra.mxu0 0.0
      %6757 = vmatpush.msra.mxu0 0.0
      %6758 = vmatpush.msra.mxu0 0.0
      %6759 = vmatpush.msra.mxu0 0.0
      %6760 = vmatpush.msra.mxu0 0.0
      %6761 = vmatpush.msra.mxu0 0.0
      %6762 = vmatpush.msra.mxu0 0.0
      %6763 = vmatpush.msra.mxu0 0.0
      %6764 = vmatpush.msra.mxu0 0.0
      %6765 = vmatpush.msra.mxu0 0.0
      %6766 = vmatpush.msra.mxu0 %v6727
      %6767 = vmatpush.msra.mxu0 %v6719
      %6768 = vmatmul.f32.gmra.mxu0 %v6750
      %v6769 = vpop.f32.mrf.mxu0
      %v6770 = vadd.f32 0.0, %v6769
      %6771 = vdwg.mxu0
      %v6772 = vmax.f32 %v6747, %v6770
      %vm6773 = vcmask 522240
      %6774 = vst.msk [vmem:[%s224] sm:$0x7f] %vm6773, %v6772
      %v6775 = vmax.f32 %v6683, %v6685
      %v6776 = vmax.f32 %v6684, %v6686
      %v6778 = vsel %vm6725, %v6776, 0
      %6780 = vmatpush.msra.mxu0 0.0
      %6781 = vmatpush.msra.mxu0 0.0
      %6782 = vmatpush.msra.mxu0 0.0
      %6783 = vmatpush.msra.mxu0 0.0
      %6784 = vmatpush.msra.mxu0 0.0
      %6785 = vmatpush.msra.mxu0 0.0
      %6786 = vmatpush.msra.mxu0 0.0
      %6787 = vmatpush.msra.mxu0 0.0
      %6788 = vmatpush.msra.mxu0 0.0
      %6789 = vmatpush.msra.mxu0 0.0
      %6790 = vmatpush.msra.mxu0 0.0
      %6791 = vmatpush.msra.mxu0 0.0
      %6792 = vmatpush.msra.mxu0 0.0
      %6793 = vmatpush.msra.mxu0 0.0
      %6794 = vmatpush.msra.mxu0 %v6778
      %6795 = vmatpush.msra.mxu0 %v6775
      %6796 = vmatmul.f32.gmra.mxu0 %v6723
      %v6797 = vpop.f32.mrf.mxu0
      %v6798 = vadd.f32 0.0, %v6797
      %6799 = vdwg.mxu0
      %6800 = vmatpush.msra.mxu0 0.0
      %6801 = vmatpush.msra.mxu0 0.0
      %6802 = vmatpush.msra.mxu0 0.0
      %6803 = vmatpush.msra.mxu0 0.0
      %6804 = vmatpush.msra.mxu0 0.0
      %6805 = vmatpush.msra.mxu0 0.0
      %6806 = vmatpush.msra.mxu0 0.0
      %6807 = vmatpush.msra.mxu0 0.0
      %6808 = vmatpush.msra.mxu0 0.0
      %6809 = vmatpush.msra.mxu0 0.0
      %6810 = vmatpush.msra.mxu0 0.0
      %6811 = vmatpush.msra.mxu0 0.0
      %6812 = vmatpush.msra.mxu0 0.0
      %6813 = vmatpush.msra.mxu0 0.0
      %6814 = vmatpush.msra.mxu0 %v6778
      %6815 = vmatpush.msra.mxu0 %v6775
      %6816 = vmatmul.f32.gmra.mxu0 %v6750
      %v6817 = vpop.f32.mrf.mxu0
      %v6818 = vadd.f32 0.0, %v6817
      %6819 = vdwg.mxu0
      %v6820 = vmax.f32 %v6798, %v6818
      %6821 = vst.msk [vmem:[%s224 + $0x7] sm:$0x7f] %vm6773, %v6820
      %v6822 = vmax.f32 %v6687, %v6689
      %v6823 = vmax.f32 %v6688, %v6690
      %v6825 = vsel %vm6725, %v6823, 0
      %6827 = vmatpush.msra.mxu0 0.0
      %6828 = vmatpush.msra.mxu0 0.0
      %6829 = vmatpush.msra.mxu0 0.0
      %6830 = vmatpush.msra.mxu0 0.0
      %6831 = vmatpush.msra.mxu0 0.0
      %6832 = vmatpush.msra.mxu0 0.0
      %6833 = vmatpush.msra.mxu0 0.0
      %6834 = vmatpush.msra.mxu0 0.0
      %6835 = vmatpush.msra.mxu0 0.0
      %6836 = vmatpush.msra.mxu0 0.0
      %6837 = vmatpush.msra.mxu0 0.0
      %6838 = vmatpush.msra.mxu0 0.0
      %6839 = vmatpush.msra.mxu0 0.0
      %6840 = vmatpush.msra.mxu0 0.0
      %6841 = vmatpush.msra.mxu0 %v6825
      %6842 = vmatpush.msra.mxu0 %v6822
      %6843 = vmatmul.f32.gmra.mxu0 %v6723
      %v6844 = vpop.f32.mrf.mxu0
      %v6845 = vadd.f32 0.0, %v6844
      %6846 = vdwg.mxu0
      %6847 = vmatpush.msra.mxu0 0.0
      %6848 = vmatpush.msra.mxu0 0.0
      %6849 = vmatpush.msra.mxu0 0.0
      %6850 = vmatpush.msra.mxu0 0.0
      %6851 = vmatpush.msra.mxu0 0.0
      %6852 = vmatpush.msra.mxu0 0.0
      %6853 = vmatpush.msra.mxu0 0.0
      %6854 = vmatpush.msra.mxu0 0.0
      %6855 = vmatpush.msra.mxu0 0.0
      %6856 = vmatpush.msra.mxu0 0.0
      %6857 = vmatpush.msra.mxu0 0.0
      %6858 = vmatpush.msra.mxu0 0.0
      %6859 = vmatpush.msra.mxu0 0.0
      %6860 = vmatpush.msra.mxu0 0.0
      %6861 = vmatpush.msra.mxu0 %v6825
      %6862 = vmatpush.msra.mxu0 %v6822
      %6863 = vmatmul.f32.gmra.mxu0 %v6750
      %v6864 = vpop.f32.mrf.mxu0
      %v6865 = vadd.f32 0.0, %v6864
      %6866 = vdwg.mxu0
      %v6867 = vmax.f32 %v6845, %v6865
      %6868 = vst.msk [vmem:[%s224 + $0xe] sm:$0x7f] %vm6773, %v6867
      %v6869 = vmax.f32 %v6691, %v6693
      %v6870 = vmax.f32 %v6692, %v6694
      %v6872 = vsel %vm6725, %v6870, 0
      %6874 = vmatpush.msra.mxu0 0.0
      %6875 = vmatpush.msra.mxu0 0.0
      %6876 = vmatpush.msra.mxu0 0.0
      %6877 = vmatpush.msra.mxu0 0.0
      %6878 = vmatpush.msra.mxu0 0.0
      %6879 = vmatpush.msra.mxu0 0.0
      %6880 = vmatpush.msra.mxu0 0.0
      %6881 = vmatpush.msra.mxu0 0.0
      %6882 = vmatpush.msra.mxu0 0.0
      %6883 = vmatpush.msra.mxu0 0.0
      %6884 = vmatpush.msra.mxu0 0.0
      %6885 = vmatpush.msra.mxu0 0.0
      %6886 = vmatpush.msra.mxu0 0.0
      %6887 = vmatpush.msra.mxu0 0.0
      %6888 = vmatpush.msra.mxu0 %v6872
      %6889 = vmatpush.msra.mxu0 %v6869
      %6890 = vmatmul.f32.gmra.mxu0 %v6723
      %v6891 = vpop.f32.mrf.mxu0
      %v6892 = vadd.f32 0.0, %v6891
      %6893 = vdwg.mxu0
      %6894 = vmatpush.msra.mxu0 0.0
      %6895 = vmatpush.msra.mxu0 0.0
      %6896 = vmatpush.msra.mxu0 0.0
      %6897 = vmatpush.msra.mxu0 0.0
      %6898 = vmatpush.msra.mxu0 0.0
      %6899 = vmatpush.msra.mxu0 0.0
      %6900 = vmatpush.msra.mxu0 0.0
      %6901 = vmatpush.msra.mxu0 0.0
      %6902 = vmatpush.msra.mxu0 0.0
      %6903 = vmatpush.msra.mxu0 0.0
      %6904 = vmatpush.msra.mxu0 0.0
      %6905 = vmatpush.msra.mxu0 0.0
      %6906 = vmatpush.msra.mxu0 0.0
      %6907 = vmatpush.msra.mxu0 0.0
      %6908 = vmatpush.msra.mxu0 %v6872
      %6909 = vmatpush.msra.mxu0 %v6869
      %6910 = vmatmul.f32.gmra.mxu0 %v6750
      %v6911 = vpop.f32.mrf.mxu0
      %v6912 = vadd.f32 0.0, %v6911
      %6913 = vdwg.mxu0
      %v6914 = vmax.f32 %v6892, %v6912
      %6915 = vst.msk [vmem:[%s224 + $0x15] sm:$0x7f] %vm6773, %v6914
      %v6916 = vmax.f32 %v6695, %v6697
      %v6917 = vmax.f32 %v6696, %v6698
      %v6919 = vsel %vm6725, %v6917, 0
      %6921 = vmatpush.msra.mxu0 0.0
      %6922 = vmatpush.msra.mxu0 0.0
      %6923 = vmatpush.msra.mxu0 0.0
      %6924 = vmatpush.msra.mxu0 0.0
      %6925 = vmatpush.msra.mxu0 0.0
      %6926 = vmatpush.msra.mxu0 0.0
      %6927 = vmatpush.msra.mxu0 0.0
      %6928 = vmatpush.msra.mxu0 0.0
      %6929 = vmatpush.msra.mxu0 0.0
      %6930 = vmatpush.msra.mxu0 0.0
      %6931 = vmatpush.msra.mxu0 0.0
      %6932 = vmatpush.msra.mxu0 0.0
      %6933 = vmatpush.msra.mxu0 0.0
      %6934 = vmatpush.msra.mxu0 0.0
      %6935 = vmatpush.msra.mxu0 %v6919
      %6936 = vmatpush.msra.mxu0 %v6916
      %6937 = vmatmul.f32.gmra.mxu0 %v6723
      %v6938 = vpop.f32.mrf.mxu0
      %v6939 = vadd.f32 0.0, %v6938
      %6940 = vdwg.mxu0
      %6941 = vmatpush.msra.mxu0 0.0
      %6942 = vmatpush.msra.mxu0 0.0
      %6943 = vmatpush.msra.mxu0 0.0
      %6944 = vmatpush.msra.mxu0 0.0
      %6945 = vmatpush.msra.mxu0 0.0
      %6946 = vmatpush.msra.mxu0 0.0
      %6947 = vmatpush.msra.mxu0 0.0
      %6948 = vmatpush.msra.mxu0 0.0
      %6949 = vmatpush.msra.mxu0 0.0
      %6950 = vmatpush.msra.mxu0 0.0
      %6951 = vmatpush.msra.mxu0 0.0
      %6952 = vmatpush.msra.mxu0 0.0
      %6953 = vmatpush.msra.mxu0 0.0
      %6954 = vmatpush.msra.mxu0 0.0
      %6955 = vmatpush.msra.mxu0 %v6919
      %6956 = vmatpush.msra.mxu0 %v6916
      %6957 = vmatmul.f32.gmra.mxu0 %v6750
      %v6958 = vpop.f32.mrf.mxu0
      %v6959 = vadd.f32 0.0, %v6958
      %6960 = vdwg.mxu0
      %v6961 = vmax.f32 %v6939, %v6959
      %6962 = vst.msk [vmem:[%s224 + $0x1c] sm:$0x7f] %vm6773, %v6961
      %v6963 = vmax.f32 %v6699, %v6701
      %v6964 = vmax.f32 %v6700, %v6702
      %v6966 = vsel %vm6725, %v6964, 0
      %6968 = vmatpush.msra.mxu0 0.0
      %6969 = vmatpush.msra.mxu0 0.0
      %6970 = vmatpush.msra.mxu0 0.0
      %6971 = vmatpush.msra.mxu0 0.0
      %6972 = vmatpush.msra.mxu0 0.0
      %6973 = vmatpush.msra.mxu0 0.0
      %6974 = vmatpush.msra.mxu0 0.0
      %6975 = vmatpush.msra.mxu0 0.0
      %6976 = vmatpush.msra.mxu0 0.0
      %6977 = vmatpush.msra.mxu0 0.0
      %6978 = vmatpush.msra.mxu0 0.0
      %6979 = vmatpush.msra.mxu0 0.0
      %6980 = vmatpush.msra.mxu0 0.0
      %6981 = vmatpush.msra.mxu0 0.0
      %6982 = vmatpush.msra.mxu0 %v6966
      %6983 = vmatpush.msra.mxu0 %v6963
      %6984 = vmatmul.f32.gmra.mxu0 %v6723
      %v6985 = vpop.f32.mrf.mxu0
      %v6986 = vadd.f32 0.0, %v6985
      %6987 = vdwg.mxu0
      %6988 = vmatpush.msra.mxu0 0.0
      %6989 = vmatpush.msra.mxu0 0.0
      %6990 = vmatpush.msra.mxu0 0.0
      %6991 = vmatpush.msra.mxu0 0.0
      %6992 = vmatpush.msra.mxu0 0.0
      %6993 = vmatpush.msra.mxu0 0.0
      %6994 = vmatpush.msra.mxu0 0.0
      %6995 = vmatpush.msra.mxu0 0.0
      %6996 = vmatpush.msra.mxu0 0.0
      %6997 = vmatpush.msra.mxu0 0.0
      %6998 = vmatpush.msra.mxu0 0.0
      %6999 = vmatpush.msra.mxu0 0.0
      %7000 = vmatpush.msra.mxu0 0.0
      %7001 = vmatpush.msra.mxu0 0.0
      %7002 = vmatpush.msra.mxu0 %v6966
      %7003 = vmatpush.msra.mxu0 %v6963
      %7004 = vmatmul.f32.gmra.mxu0 %v6750
      %v7005 = vpop.f32.mrf.mxu0
      %v7006 = vadd.f32 0.0, %v7005
      %7007 = vdwg.mxu0
      %v7008 = vmax.f32 %v6986, %v7006
      %7009 = vst.msk [vmem:[%s224 + $0x23] sm:$0x7f] %vm6773, %v7008
      %v7010 = vmax.f32 %v6703, %v6705
      %v7011 = vmax.f32 %v6704, %v6706
      %v7013 = vsel %vm6725, %v7011, 0
      %7015 = vmatpush.msra.mxu0 0.0
      %7016 = vmatpush.msra.mxu0 0.0
      %7017 = vmatpush.msra.mxu0 0.0
      %7018 = vmatpush.msra.mxu0 0.0
      %7019 = vmatpush.msra.mxu0 0.0
      %7020 = vmatpush.msra.mxu0 0.0
      %7021 = vmatpush.msra.mxu0 0.0
      %7022 = vmatpush.msra.mxu0 0.0
      %7023 = vmatpush.msra.mxu0 0.0
      %7024 = vmatpush.msra.mxu0 0.0
      %7025 = vmatpush.msra.mxu0 0.0
      %7026 = vmatpush.msra.mxu0 0.0
      %7027 = vmatpush.msra.mxu0 0.0
      %7028 = vmatpush.msra.mxu0 0.0
      %7029 = vmatpush.msra.mxu0 %v7013
      %7030 = vmatpush.msra.mxu0 %v7010
      %7031 = vmatmul.f32.gmra.mxu0 %v6723
      %v7032 = vpop.f32.mrf.mxu0
      %v7033 = vadd.f32 0.0, %v7032
      %7034 = vdwg.mxu0
      %7035 = vmatpush.msra.mxu0 0.0
      %7036 = vmatpush.msra.mxu0 0.0
      %7037 = vmatpush.msra.mxu0 0.0
      %7038 = vmatpush.msra.mxu0 0.0
      %7039 = vmatpush.msra.mxu0 0.0
      %7040 = vmatpush.msra.mxu0 0.0
      %7041 = vmatpush.msra.mxu0 0.0
      %7042 = vmatpush.msra.mxu0 0.0
      %7043 = vmatpush.msra.mxu0 0.0
      %7044 = vmatpush.msra.mxu0 0.0
      %7045 = vmatpush.msra.mxu0 0.0
      %7046 = vmatpush.msra.mxu0 0.0
      %7047 = vmatpush.msra.mxu0 0.0
      %7048 = vmatpush.msra.mxu0 0.0
      %7049 = vmatpush.msra.mxu0 %v7013
      %7050 = vmatpush.msra.mxu0 %v7010
      %7051 = vmatmul.f32.gmra.mxu0 %v6750
      %v7052 = vpop.f32.mrf.mxu0
      %v7053 = vadd.f32 0.0, %v7052
      %7054 = vdwg.mxu0
      %v7055 = vmax.f32 %v7033, %v7053
      %7056 = vst.msk [vmem:[%s224 + $0x2a] sm:$0x7f] %vm6773, %v7055
      %p7057 = scmp.lt.s32.totalorder %s16, 1
      %s7058 = scalar_select %p7057, %s16, 1
      %s7059 = smul.addr %s7058, 7
      %s7060 = smul.addr %s7059, 8
      %s7061 = scalar_lea.vmem %s5, %s7060
      // Predicated region
      $region41: #{cnn_forward.2} parent=39 // pred_check
        %p7062 = pneg %p144
      $region42: #{cnn_forward.2} parent=39 // pred_check_branch
        %7064 = sbr.rel (%p7062) target = $region44
      $region43: #{cnn_forward.2} parent=39 // pred_region
        _
      $region44: #{cnn_forward.2} parent=39 // pred_fallthru
        _
    $region40: #{cnn_forward.2} parent=5 // pred_fallthru
      _
    %p7065 = scmp.le.s32.totalorder 2, %s11
    // Predicated region
    $region45: #{cnn_forward.2} parent=5 // pred_check
      %p7066 = pneg %p7065
    $region46: #{cnn_forward.2} parent=5 // pred_check_branch
      %7068 = sbr.rel (%p7066) target = $region48
    $region47: #{cnn_forward.2} parent=5 // pred_region
      %s7069 = ssub.s32 %s11, 2
      // Predicated region
      $region49: #{cnn_forward.2} parent=47 // pred_check
        %p7070 = pneg %p150
      $region50: #{cnn_forward.2} parent=47 // pred_check_branch
        %7072 = sbr.rel (%p7070) target = $region52
      $region51: #{cnn_forward.2} parent=47 // pred_region
        %p7073 = scmp.lt.s32.totalorder %s17, 1
        %s7074 = scalar_select %p7073, %s17, 1
        %s7075 = smul.addr %s7074, 7
        %s7076 = smul.addr %s7075, 8
        %s7077 = scalar_lea.vmem %s5, %s7076
      $region52: #{cnn_forward.2} parent=47 // pred_fallthru
        _
    $region48: #{cnn_forward.2} parent=5 // pred_fallthru
      _
  $region6: #{cnn_forward.2} parent=0 // loop_footer
    %s15 = sadd.s32 1, %s11
  $region7: #{cnn_forward.2} parent=0 // loop_footer_branch
    %10 = sbr.rel target = $region3
  $region8: #{cnn_forward.2} parent=0 // loop_exit
    _

</llo_original>
